<compile_context>
chip_gen: v6e
topology: v6e:2x2x1
jax: 0.10.0
libtpu: 0.0.40
codegen_flags: <defaults>
</compile_context>

<pallas_src>
import jax
import jax.numpy as jnp
from jax.experimental import pallas as pl
from jax.experimental.pallas import tpu as pltpu

# ---- hyper-parameters -------------------------------------------------------
D = 32                     # model dim
H = 4                      # attention heads
DH = 16                    # dim per head
INNER_A = H * DH           # attention inner dim = 64
MULT = 4                   # feed-forward expansion
FF_INNER = D * MULT        # 128
CONV_EXP = 1
INNER_C = D * CONV_EXP     # conv inner dim = 32
K = 7                      # depthwise conv kernel size
PAD_L = K // 2
GN_GROUPS = 32
EPS = 1e-5
SCALE = DH ** -0.5

B, N, M = 2, 16, 24        # batch, query seq len, context seq len
BN, BM = B * N, B * M

assert INNER_C == GN_GROUPS  # one channel per GroupNorm group in this config
# TODO(synk): generalize GroupNorm statistics for INNER_C > GN_GROUPS (multi-channel groups).


# ---- slab layouts (shared between wrapper pack and kernel reads) -------------
MAT_LANES = 128
_MAT_LAYOUT = {}           # name -> (row0, nrows, lane0, nlanes)
_MAT_ROWS = 0


def _mat_block(*entries):
    """Allocate one row block; entries sit side-by-side along lanes."""
    global _MAT_ROWS
    lane = 0
    nrows = entries[0][1]
    for name, r, c in entries:
        assert r == nrows
        _MAT_LAYOUT[name] = (_MAT_ROWS, r, lane, c)
        lane += c
    assert lane <= MAT_LANES
    _MAT_ROWS += nrows


for _s in ("ff1", "ff1kv", "ff2"):
    _mat_block((f"{_s}_w1", D, FF_INNER))        # (32,128) lane-dense
    _mat_block((f"{_s}_w2t", D, FF_INNER))       # w2 stored transposed (32,128)
for _s in ("conv", "convkv"):
    _mat_block((f"{_s}_pw1a", D, INNER_C),       # GLU "out" half of pointwise conv 1
               (f"{_s}_pw1b", D, INNER_C),       # GLU "gate" half
               (f"{_s}_pw2", INNER_C, D))        # pointwise conv 2
_mat_block(("attn_wq", D, INNER_A), ("attn_wk", D, INNER_A))
_mat_block(("attn_wv", D, INNER_A))
_mat_block(("attn_wo", DH, H * D))               # to_out packed per-head along lanes
MAT_ROWS = _MAT_ROWS                              # 336 rows (multiple of 8)

VEC_LANES = 128
_VEC_LAYOUT = {}           # name -> (row0, nrows, ncols)
_VEC_ROWS = 0


def _vec(name, rows, cols):
    global _VEC_ROWS
    _VEC_LAYOUT[name] = (_VEC_ROWS, rows, cols)
    _VEC_ROWS += rows


for _s in ("ff1", "ff1kv", "ff2"):
    _vec(f"{_s}_ln_g", 1, D)
    _vec(f"{_s}_ln_b", 1, D)
    _vec(f"{_s}_b1", 1, FF_INNER)
    _vec(f"{_s}_b2", 1, D)
for _s in ("conv", "convkv"):
    _vec(f"{_s}_ln_g", 1, D)
    _vec(f"{_s}_ln_b", 1, D)
    _vec(f"{_s}_pw1ba", 1, INNER_C)
    _vec(f"{_s}_pw1bb", 1, INNER_C)
    _vec(f"{_s}_dw_w", K, INNER_C)
    _vec(f"{_s}_dw_b", 1, INNER_C)
    _vec(f"{_s}_gn_g", 1, INNER_C)
    _vec(f"{_s}_gn_b", 1, INNER_C)
    _vec(f"{_s}_pw2_b", 1, D)
_vec("attn_ln_g", 1, D)
_vec("attn_ln_b", 1, D)
_vec("attn_bq", 1, INNER_A)
_vec("attn_bk", 1, INNER_A)
_vec("attn_bv", 1, INNER_A)
_vec("attn_bo", 1, D)
_vec("post_g", 1, D)
_vec("post_b", 1, D)
VEC_ROWS = -(-_VEC_ROWS // 8) * 8                 # 56 rows


# ---- parameter packing (host side) -------------------------------------------
def pack_params(p):
    """Pack module parameters into (mat_slab bf16, vec_slab f32) with constant folding."""
    mat = jnp.zeros((MAT_ROWS, MAT_LANES), jnp.float32)
    vec = jnp.zeros((VEC_ROWS, VEC_LANES), jnp.float32)

    def mset(m, name, val):
        r0, nr, l0, nc = _MAT_LAYOUT[name]
        assert val.shape == (nr, nc), (name, val.shape, (nr, nc))
        return m.at[r0:r0 + nr, l0:l0 + nc].set(val.astype(jnp.float32))

    def vset(v, name, val):
        r0, nr, nc = _VEC_LAYOUT[name]
        val = jnp.asarray(val, jnp.float32).reshape(nr, nc)
        return v.at[r0:r0 + nr, 0:nc].set(val)

    # Feed-forwards: Scale(0.5) folded into the second linear.
    for s in ("ff1", "ff1kv", "ff2"):
        q = p[s]
        mat = mset(mat, f"{s}_w1", q["w1"])
        mat = mset(mat, f"{s}_w2t", (0.5 * q["w2"]).T)
        vec = vset(vec, f"{s}_ln_g", q["ln_g"])
        vec = vset(vec, f"{s}_ln_b", q["ln_b"])
        vec = vset(vec, f"{s}_b1", q["b1"])
        vec = vset(vec, f"{s}_b2", 0.5 * q["b2"])

    # Conformer conv modules: pointwise conv 1 split into GLU out / gate halves.
    for s in ("conv", "convkv"):
        q = p[s]
        mat = mset(mat, f"{s}_pw1a", q["pw1_w"][:, :INNER_C])
        mat = mset(mat, f"{s}_pw1b", q["pw1_w"][:, INNER_C:])
        mat = mset(mat, f"{s}_pw2", q["pw2_w"])
        vec = vset(vec, f"{s}_ln_g", q["ln_g"])
        vec = vset(vec, f"{s}_ln_b", q["ln_b"])
        vec = vset(vec, f"{s}_pw1ba", q["pw1_b"][:, :INNER_C])
        vec = vset(vec, f"{s}_pw1bb", q["pw1_b"][:, INNER_C:])
        vec = vset(vec, f"{s}_dw_w", q["dw_w"])
        vec = vset(vec, f"{s}_dw_b", q["dw_b"])
        vec = vset(vec, f"{s}_gn_g", q["gn_g"])
        vec = vset(vec, f"{s}_gn_b", q["gn_b"])
        vec = vset(vec, f"{s}_pw2_b", q["pw2_b"])

    # Attention: dim_head**-0.5 folded into to_q; to_kv split; to_out packed per head.
    q = p["attn"]
    mat = mset(mat, "attn_wq", SCALE * q["wq"])
    mat = mset(mat, "attn_wk", q["wkv"][:, :INNER_A])
    mat = mset(mat, "attn_wv", q["wkv"][:, INNER_A:])
    wo_heads = jnp.concatenate([q["wo"][h * DH:(h + 1) * DH, :] for h in range(H)], axis=1)
    mat = mset(mat, "attn_wo", wo_heads)                     # (16, 128)
    vec = vset(vec, "attn_ln_g", q["ln_g"])
    vec = vset(vec, "attn_ln_b", q["ln_b"])
    vec = vset(vec, "attn_bq", SCALE * q["bq"])
    vec = vset(vec, "attn_bk", q["bkv"][:, :INNER_A])
    vec = vset(vec, "attn_bv", q["bkv"][:, INNER_A:])
    vec = vset(vec, "attn_bo", q["bo"])

    vec = vset(vec, "post_g", p["post_g"])
    vec = vset(vec, "post_b", p["post_b"])
    return mat.astype(jnp.bfloat16), vec


# ---- in-kernel helpers --------------------------------------------------------
def _mread(ref, name):
    r0, nr, l0, nc = _MAT_LAYOUT[name]
    return ref[r0:r0 + nr, l0:l0 + nc]


def _vread(ref, name):
    r0, nr, nc = _VEC_LAYOUT[name]
    return ref[r0:r0 + nr, 0:nc]


def _layernorm(v, g, b):
    m = jnp.mean(v, axis=-1, keepdims=True)
    c = v - m
    var = jnp.mean(c * c, axis=-1, keepdims=True)
    return c * jax.lax.rsqrt(var + EPS) * g + b


def _swish(v):
    return v * jax.nn.sigmoid(v)


def _bdot(a_f32, w_bf16):
    # bf16 MXU operands, f32 accumulation.
    return jnp.dot(a_f32.astype(jnp.bfloat16), w_bf16, preferred_element_type=jnp.float32)


def _ff_block(v, mref, vref, s):
    # Scale(0.5, PreNorm(dim, FeedForward(dim, mult))); the 0.5 is folded into w2/b2.
    h = _layernorm(v, _vread(vref, f"{s}_ln_g"), _vread(vref, f"{s}_ln_b"))
    h = _bdot(h, _mread(mref, f"{s}_w1")) + _vread(vref, f"{s}_b1")
    h = _swish(h)
    # w2 stored transposed (lane-dense): h @ w2 == dot_general(h, w2t, contract dim 1 of both).
    h = jax.lax.dot_general(h.astype(jnp.bfloat16), _mread(mref, f"{s}_w2t"),
                            (((1,), (1,)), ((), ())),
                            preferred_element_type=jnp.float32)
    return h + _vread(vref, f"{s}_b2")


def _conv_block(v, mref, vref, s, t_in, oh_bt, oh_tb, T):
    # ConformerConvModule: LN -> pointwise conv -> GLU -> depthwise conv ->
    # GroupNorm -> Swish -> pointwise conv (dropout p=0).
    rows = v.shape[0]
    h = _layernorm(v, _vread(vref, f"{s}_ln_g"), _vread(vref, f"{s}_ln_b"))
    hb = h.astype(jnp.bfloat16)
    a = jnp.dot(hb, _mread(mref, f"{s}_pw1a"),
                preferred_element_type=jnp.float32) + _vread(vref, f"{s}_pw1ba")
    g = jnp.dot(hb, _mread(mref, f"{s}_pw1b"),
                preferred_element_type=jnp.float32) + _vread(vref, f"{s}_pw1bb")
    h = a * jax.nn.sigmoid(g)                              # GLU, (rows, INNER_C) f32

    # Depthwise "same" conv: pltpu.roll follows jnp.roll (roll(h,s)[t]==h[(t-s)%n]),
    # so shift=(-o)%rows yields h[t+o]; the validity mask zeroes both the zero-pad
    # boundary and cross-batch leakage at the seam of the folded layout.
    dw_r0, _, dw_nc = _VEC_LAYOUT[f"{s}_dw_w"]
    acc = jnp.zeros((rows, INNER_C), jnp.float32)
    for k in range(K):
        o = k - PAD_L
        shifted = pltpu.roll(h, (-o) % rows, axis=0) if o != 0 else h
        valid = ((t_in + o) >= 0) & ((t_in + o) < T)       # (rows, 1)
        tap = vref[dw_r0 + k:dw_r0 + k + 1, 0:dw_nc]       # (1, INNER_C) f32
        acc = acc + jnp.where(valid, shifted, 0.0) * tap
    h = acc + _vread(vref, f"{s}_dw_b")

    # GroupNorm(32, 32): one channel per group -> per-(sample, channel) stats over
    # time, computed with one-hot batch-membership matmuls (MXU, not XLU).
    inv_t = 1.0 / T
    mean = jnp.dot(oh_tb, jnp.dot(oh_bt, h, preferred_element_type=jnp.float32),
                   preferred_element_type=jnp.float32) * inv_t
    d = h - mean
    var = jnp.dot(oh_tb, jnp.dot(oh_bt, d * d, preferred_element_type=jnp.float32),
                  preferred_element_type=jnp.float32) * inv_t
    h = d * jax.lax.rsqrt(var + EPS) * _vread(vref, f"{s}_gn_g") + _vread(vref, f"{s}_gn_b")

    h = _swish(h)
    return _bdot(h, _mread(mref, f"{s}_pw2")) + _vread(vref, f"{s}_pw2_b")


def _attention(x, ctx, mref, vref, same_batch):
    # PreNorm(dim, Attention): only the query stream is layer-normed; k/v from raw context.
    xn = _layernorm(x, _vread(vref, "attn_ln_g"), _vread(vref, "attn_ln_b")).astype(jnp.bfloat16)
    cb = ctx.astype(jnp.bfloat16)

    wq_r0, wq_nr, wq_l0, _ = _MAT_LAYOUT["attn_wq"]
    wk_r0, wk_nr, wk_l0, _ = _MAT_LAYOUT["attn_wk"]
    wv_r0, wv_nr, wv_l0, _ = _MAT_LAYOUT["attn_wv"]
    wo_r0, wo_nr, wo_l0, _ = _MAT_LAYOUT["attn_wo"]
    bq_r0, _, _ = _VEC_LAYOUT["attn_bq"]
    bk_r0, _, _ = _VEC_LAYOUT["attn_bk"]
    bv_r0, _, _ = _VEC_LAYOUT["attn_bv"]

    out = jnp.zeros((x.shape[0], D), jnp.float32)
    for h in range(H):
        wq_h = mref[wq_r0:wq_r0 + wq_nr, wq_l0 + h * DH:wq_l0 + (h + 1) * DH]
        wk_h = mref[wk_r0:wk_r0 + wk_nr, wk_l0 + h * DH:wk_l0 + (h + 1) * DH]
        wv_h = mref[wv_r0:wv_r0 + wv_nr, wv_l0 + h * DH:wv_l0 + (h + 1) * DH]
        wo_h = mref[wo_r0:wo_r0 + wo_nr, wo_l0 + h * D:wo_l0 + (h + 1) * D]
        bq_h = vref[bq_r0:bq_r0 + 1, h * DH:(h + 1) * DH]
        bk_h = vref[bk_r0:bk_r0 + 1, h * DH:(h + 1) * DH]
        bv_h = vref[bv_r0:bv_r0 + 1, h * DH:(h + 1) * DH]

        q = jnp.dot(xn, wq_h, preferred_element_type=jnp.float32) + bq_h   # (BN, DH), scale folded
        k = jnp.dot(cb, wk_h, preferred_element_type=jnp.float32) + bk_h   # (BM, DH)
        v = jnp.dot(cb, wv_h, preferred_element_type=jnp.float32) + bv_h   # (BM, DH)

        dots = jax.lax.dot_general(q.astype(jnp.bfloat16), k.astype(jnp.bfloat16),
                                   (((1,), (1,)), ((), ())),
                                   preferred_element_type=jnp.float32)     # (BN, BM)
        dots = jnp.where(same_batch, dots, -1e30)
        dots = dots - jnp.max(dots, axis=-1, keepdims=True)
        e = jnp.exp(dots)
        p = e / jnp.sum(e, axis=-1, keepdims=True)                          # exact softmax
        o = jnp.dot(p.astype(jnp.bfloat16), v.astype(jnp.bfloat16),
                    preferred_element_type=jnp.float32)                     # (BN, DH)
        out = out + jnp.dot(o.astype(jnp.bfloat16), wo_h,
                            preferred_element_type=jnp.float32)             # to_out, per-head slice
    return out + _vread(vref, "attn_bo")


# ---- the Pallas kernel (single invocation, whole problem resident in VMEM) ---
def _cross_conformer_kernel(x_ref, ctx_ref, mat_ref, vec_ref, out_ref):
    x = x_ref[...].astype(jnp.float32)      # (B*N, D) batch folded into sublanes
    c = ctx_ref[...].astype(jnp.float32)    # (B*M, D)

    def stream_aux(rows, T):
        # time-within-batch + one-hot batch membership (no vector // or %).
        t = jax.lax.broadcasted_iota(jnp.int32, (rows, 1), 0)
        t_in = t
        for b in range(1, B):
            t_in = jnp.where(t >= b * T, t - b * T, t_in)
        rt = jax.lax.broadcasted_iota(jnp.int32, (rows, B), 0)
        bc = jax.lax.broadcasted_iota(jnp.int32, (rows, B), 1)
        oh_tb = ((rt >= bc * T) & (rt < (bc + 1) * T)).astype(jnp.float32)   # (rows, B)
        br = jax.lax.broadcasted_iota(jnp.int32, (B, rows), 0)
        rc = jax.lax.broadcasted_iota(jnp.int32, (B, rows), 1)
        oh_bt = ((rc >= br * T) & (rc < (br + 1) * T)).astype(jnp.float32)   # (B, rows)
        return t_in, oh_bt, oh_tb

    x_tin, x_bt, x_tb = stream_aux(BN, N)
    c_tin, c_bt, c_tb = stream_aux(BM, M)

    # block-diagonal batch mask for the folded attention layout
    qi = jax.lax.broadcasted_iota(jnp.int32, (BN, BM), 0)
    kj = jax.lax.broadcasted_iota(jnp.int32, (BN, BM), 1)
    same_batch = None
    for b in range(B):
        blk = ((qi >= b * N) & (qi < (b + 1) * N) & (kj >= b * M) & (kj < (b + 1) * M))
        same_batch = blk if same_batch is None else (same_batch | blk)

    x = x + _ff_block(x, mat_ref, vec_ref, "ff1")
    c = c + _ff_block(c, mat_ref, vec_ref, "ff1kv")
    x = x + _conv_block(x, mat_ref, vec_ref, "conv", x_tin, x_bt, x_tb, N)
    c = c + _conv_block(c, mat_ref, vec_ref, "convkv", c_tin, c_bt, c_tb, M)
    x = x + _attention(x, c, mat_ref, vec_ref, same_batch)
    x = x + _ff_block(x, mat_ref, vec_ref, "ff2")
    x = _layernorm(x, _vread(vec_ref, "post_g"), _vread(vec_ref, "post_b"))

    # output is only 4 vregs: the masked (D=32-lane) store is noise (per review).
    out_ref[...] = x.astype(out_ref.dtype)


# ---- wrapper -----------------------------------------------------------------
@jax.jit
def cross_conformer_block(x, context, mat_slab, vec_slab):
    xf = x.reshape(BN, D)            # fold batch into the sublane axis (free reshape)
    cf = context.reshape(BM, D)
    out = pl.pallas_call(
        _cross_conformer_kernel,
        out_shape=jax.ShapeDtypeStruct((BN, D), jnp.float32),
        in_specs=[pl.BlockSpec(memory_space=pltpu.MemorySpace.VMEM)] * 4,
        out_specs=pl.BlockSpec(memory_space=pltpu.MemorySpace.VMEM),
    )(xf, cf, mat_slab, vec_slab)
    return out.reshape(B, N, D)


# ---- deterministic parameter init (shapes follow the PyTorch __init__) -------
_S = 0.05


def _init_ff(key):
    k = jax.random.split(key, 6)
    return dict(
        ln_g=1.0 + _S * jax.random.normal(k[0], (1, D), jnp.float32),
        ln_b=_S * jax.random.normal(k[1], (1, D), jnp.float32),
        w1=_S * jax.random.normal(k[2], (D, FF_INNER), jnp.float32),
        b1=_S * jax.random.normal(k[3], (1, FF_INNER), jnp.float32),
        w2=_S * jax.random.normal(k[4], (FF_INNER, D), jnp.float32),
        b2=_S * jax.random.normal(k[5], (1, D), jnp.float32),
    )


def _init_conv(key):
    k = jax.random.split(key, 10)
    return dict(
        ln_g=1.0 + _S * jax.random.normal(k[0], (1, D), jnp.float32),
        ln_b=_S * jax.random.normal(k[1], (1, D), jnp.float32),
        pw1_w=_S * jax.random.normal(k[2], (D, 2 * INNER_C), jnp.float32),
        pw1_b=_S * jax.random.normal(k[3], (1, 2 * INNER_C), jnp.float32),
        dw_w=_S * jax.random.normal(k[4], (K, INNER_C), jnp.float32),
        dw_b=_S * jax.random.normal(k[5], (1, INNER_C), jnp.float32),
        gn_g=1.0 + _S * jax.random.normal(k[6], (1, INNER_C), jnp.float32),
        gn_b=_S * jax.random.normal(k[7], (1, INNER_C), jnp.float32),
        pw2_w=_S * jax.random.normal(k[8], (INNER_C, D), jnp.float32),
        pw2_b=_S * jax.random.normal(k[9], (1, D), jnp.float32),
    )


def _init_attn(key):
    k = jax.random.split(key, 8)
    return dict(
        ln_g=1.0 + _S * jax.random.normal(k[0], (1, D), jnp.float32),
        ln_b=_S * jax.random.normal(k[1], (1, D), jnp.float32),
        wq=_S * jax.random.normal(k[2], (D, INNER_A), jnp.float32),
        bq=_S * jax.random.normal(k[3], (1, INNER_A), jnp.float32),
        wkv=_S * jax.random.normal(k[4], (D, 2 * INNER_A), jnp.float32),
        bkv=_S * jax.random.normal(k[5], (1, 2 * INNER_A), jnp.float32),
        wo=_S * jax.random.normal(k[6], (INNER_A, D), jnp.float32),
        bo=_S * jax.random.normal(k[7], (1, D), jnp.float32),
    )


if __name__ == "__main__":
    key = jax.random.PRNGKey(0)
    kx, kc, kp = jax.random.split(key, 3)
    x = jax.random.normal(kx, (B, N, D), jnp.float32)
    context = jax.random.normal(kc, (B, M, D), jnp.float32)

    ks = jax.random.split(kp, 6)
    params = dict(
        ff1=_init_ff(ks[0]),
        ff1kv=_init_ff(ks[1]),
        conv=_init_conv(ks[2]),
        convkv=_init_conv(ks[3]),
        attn=_init_attn(ks[4]),
        ff2=_init_ff(ks[5]),
        post_g=jnp.ones((1, D), jnp.float32),
        post_b=jnp.zeros((1, D), jnp.float32),
    )
    mat_slab, vec_slab = pack_params(params)   # bf16 matrices (~86 KB) + f32 vectors (~28 KB)

    out = cross_conformer_block(x, context, mat_slab, vec_slab)
    out = jax.block_until_ready(out)
    assert out.shape == (B, N, D) and out.dtype == jnp.float32
    assert bool(jnp.all(jnp.isfinite(out)))
    print("KERNEL_OK")
</pallas_src>

<mosaic_0001>
module attributes {stable_mosaic.version = 11 : i64} {
  func.func @_cross_conformer_kernel(%arg0: memref<32x32xf32, #tpu.memory_space<vmem>>, %arg1: memref<48x32xf32, #tpu.memory_space<vmem>>, %arg2: memref<336x128xbf16, #tpu.memory_space<vmem>>, %arg3: memref<56x128xf32, #tpu.memory_space<vmem>>, %arg4: memref<32x32xf32, #tpu.memory_space<vmem>>) attributes {dimension_semantics = [], scalar_prefetch = 0 : i64, scratch_operands = 0 : i64, tpu.core_type = #tpu.core_type<tc>} {
    %c0 = arith.constant 0 : index
    %c0_0 = arith.constant 0 : index
    %0 = vector.load %arg0[%c0, %c0_0] : memref<32x32xf32, #tpu.memory_space<vmem>>, vector<32x32xf32>
    %c0_1 = arith.constant 0 : index
    %c0_2 = arith.constant 0 : index
    %1 = vector.load %arg1[%c0_1, %c0_2] : memref<48x32xf32, #tpu.memory_space<vmem>>, vector<48x32xf32>
    %2 = tpu.iota {dimensions = array<i32: 0>} : vector<32x1xi32>
    %c16_i32 = arith.constant 16 : i32
    %3 = vector.broadcast %c16_i32 : i32 to vector<32x1xi32>
    %4 = arith.cmpi sge, %2, %3 : vector<32x1xi32>
    %c16_i32_3 = arith.constant 16 : i32
    %5 = vector.broadcast %c16_i32_3 : i32 to vector<32x1xi32>
    %6 = arith.subi %2, %5 : vector<32x1xi32>
    %7 = arith.select %4, %6, %2 : vector<32x1xi1>, vector<32x1xi32>
    %8 = tpu.iota {dimensions = array<i32: 0>} : vector<32x2xi32>
    %9 = tpu.iota {dimensions = array<i32: 1>} : vector<32x2xi32>
    %c16_i32_4 = arith.constant 16 : i32
    %10 = vector.broadcast %c16_i32_4 : i32 to vector<32x2xi32>
    %11 = arith.muli %9, %10 : vector<32x2xi32>
    %12 = arith.cmpi sge, %8, %11 : vector<32x2xi32>
    %c1_i32 = arith.constant 1 : i32
    %13 = vector.broadcast %c1_i32 : i32 to vector<32x2xi32>
    %14 = arith.addi %9, %13 : vector<32x2xi32>
    %c16_i32_5 = arith.constant 16 : i32
    %15 = vector.broadcast %c16_i32_5 : i32 to vector<32x2xi32>
    %16 = arith.muli %14, %15 : vector<32x2xi32>
    %17 = arith.cmpi slt, %8, %16 : vector<32x2xi32>
    %18 = arith.andi %12, %17 : vector<32x2xi1>
    %19 = arith.extui %18 : vector<32x2xi1> to vector<32x2xi32>
    %20 = arith.sitofp %19 : vector<32x2xi32> to vector<32x2xf32>
    %21 = tpu.iota {dimensions = array<i32: 0>} : vector<2x32xi32>
    %22 = tpu.iota {dimensions = array<i32: 1>} : vector<2x32xi32>
    %c16_i32_6 = arith.constant 16 : i32
    %23 = vector.broadcast %c16_i32_6 : i32 to vector<2x32xi32>
    %24 = arith.muli %21, %23 : vector<2x32xi32>
    %25 = arith.cmpi sge, %22, %24 : vector<2x32xi32>
    %c1_i32_7 = arith.constant 1 : i32
    %26 = vector.broadcast %c1_i32_7 : i32 to vector<2x32xi32>
    %27 = arith.addi %21, %26 : vector<2x32xi32>
    %c16_i32_8 = arith.constant 16 : i32
    %28 = vector.broadcast %c16_i32_8 : i32 to vector<2x32xi32>
    %29 = arith.muli %27, %28 : vector<2x32xi32>
    %30 = arith.cmpi slt, %22, %29 : vector<2x32xi32>
    %31 = arith.andi %25, %30 : vector<2x32xi1>
    %32 = arith.extui %31 : vector<2x32xi1> to vector<2x32xi32>
    %33 = arith.sitofp %32 : vector<2x32xi32> to vector<2x32xf32>
    %34 = tpu.iota {dimensions = array<i32: 0>} : vector<48x1xi32>
    %c24_i32 = arith.constant 24 : i32
    %35 = vector.broadcast %c24_i32 : i32 to vector<48x1xi32>
    %36 = arith.cmpi sge, %34, %35 : vector<48x1xi32>
    %c24_i32_9 = arith.constant 24 : i32
    %37 = vector.broadcast %c24_i32_9 : i32 to vector<48x1xi32>
    %38 = arith.subi %34, %37 : vector<48x1xi32>
    %39 = arith.select %36, %38, %34 : vector<48x1xi1>, vector<48x1xi32>
    %40 = tpu.iota {dimensions = array<i32: 0>} : vector<48x2xi32>
    %41 = tpu.iota {dimensions = array<i32: 1>} : vector<48x2xi32>
    %c24_i32_10 = arith.constant 24 : i32
    %42 = vector.broadcast %c24_i32_10 : i32 to vector<48x2xi32>
    %43 = arith.muli %41, %42 : vector<48x2xi32>
    %44 = arith.cmpi sge, %40, %43 : vector<48x2xi32>
    %c1_i32_11 = arith.constant 1 : i32
    %45 = vector.broadcast %c1_i32_11 : i32 to vector<48x2xi32>
    %46 = arith.addi %41, %45 : vector<48x2xi32>
    %c24_i32_12 = arith.constant 24 : i32
    %47 = vector.broadcast %c24_i32_12 : i32 to vector<48x2xi32>
    %48 = arith.muli %46, %47 : vector<48x2xi32>
    %49 = arith.cmpi slt, %40, %48 : vector<48x2xi32>
    %50 = arith.andi %44, %49 : vector<48x2xi1>
    %51 = arith.extui %50 : vector<48x2xi1> to vector<48x2xi32>
    %52 = arith.sitofp %51 : vector<48x2xi32> to vector<48x2xf32>
    %53 = tpu.iota {dimensions = array<i32: 0>} : vector<2x48xi32>
    %54 = tpu.iota {dimensions = array<i32: 1>} : vector<2x48xi32>
    %c24_i32_13 = arith.constant 24 : i32
    %55 = vector.broadcast %c24_i32_13 : i32 to vector<2x48xi32>
    %56 = arith.muli %53, %55 : vector<2x48xi32>
    %57 = arith.cmpi sge, %54, %56 : vector<2x48xi32>
    %c1_i32_14 = arith.constant 1 : i32
    %58 = vector.broadcast %c1_i32_14 : i32 to vector<2x48xi32>
    %59 = arith.addi %53, %58 : vector<2x48xi32>
    %c24_i32_15 = arith.constant 24 : i32
    %60 = vector.broadcast %c24_i32_15 : i32 to vector<2x48xi32>
    %61 = arith.muli %59, %60 : vector<2x48xi32>
    %62 = arith.cmpi slt, %54, %61 : vector<2x48xi32>
    %63 = arith.andi %57, %62 : vector<2x48xi1>
    %64 = arith.extui %63 : vector<2x48xi1> to vector<2x48xi32>
    %65 = arith.sitofp %64 : vector<2x48xi32> to vector<2x48xf32>
    %66 = tpu.iota {dimensions = array<i32: 0>} : vector<32x48xi32>
    %67 = tpu.iota {dimensions = array<i32: 1>} : vector<32x48xi32>
    %c0_i32 = arith.constant 0 : i32
    %68 = vector.broadcast %c0_i32 : i32 to vector<32x48xi32>
    %69 = arith.cmpi sge, %66, %68 : vector<32x48xi32>
    %c16_i32_16 = arith.constant 16 : i32
    %70 = vector.broadcast %c16_i32_16 : i32 to vector<32x48xi32>
    %71 = arith.cmpi slt, %66, %70 : vector<32x48xi32>
    %72 = arith.andi %69, %71 : vector<32x48xi1>
    %c0_i32_17 = arith.constant 0 : i32
    %73 = vector.broadcast %c0_i32_17 : i32 to vector<32x48xi32>
    %74 = arith.cmpi sge, %67, %73 : vector<32x48xi32>
    %75 = arith.andi %72, %74 : vector<32x48xi1>
    %c24_i32_18 = arith.constant 24 : i32
    %76 = vector.broadcast %c24_i32_18 : i32 to vector<32x48xi32>
    %77 = arith.cmpi slt, %67, %76 : vector<32x48xi32>
    %78 = arith.andi %75, %77 : vector<32x48xi1>
    %c16_i32_19 = arith.constant 16 : i32
    %79 = vector.broadcast %c16_i32_19 : i32 to vector<32x48xi32>
    %80 = arith.cmpi sge, %66, %79 : vector<32x48xi32>
    %c32_i32 = arith.constant 32 : i32
    %81 = vector.broadcast %c32_i32 : i32 to vector<32x48xi32>
    %82 = arith.cmpi slt, %66, %81 : vector<32x48xi32>
    %83 = arith.andi %80, %82 : vector<32x48xi1>
    %c24_i32_20 = arith.constant 24 : i32
    %84 = vector.broadcast %c24_i32_20 : i32 to vector<32x48xi32>
    %85 = arith.cmpi sge, %67, %84 : vector<32x48xi32>
    %86 = arith.andi %83, %85 : vector<32x48xi1>
    %c48_i32 = arith.constant 48 : i32
    %87 = vector.broadcast %c48_i32 : i32 to vector<32x48xi32>
    %88 = arith.cmpi slt, %67, %87 : vector<32x48xi32>
    %89 = arith.andi %86, %88 : vector<32x48xi1>
    %90 = arith.ori %78, %89 : vector<32x48xi1>
    %c0_21 = arith.constant 0 : index
    %c0_22 = arith.constant 0 : index
    %91 = vector.load %arg3[%c0_21, %c0_22] : memref<56x128xf32, #tpu.memory_space<vmem>>, vector<1x32xf32>
    %c1 = arith.constant 1 : index
    %c0_23 = arith.constant 0 : index
    %92 = vector.load %arg3[%c1, %c0_23] : memref<56x128xf32, #tpu.memory_space<vmem>>, vector<1x32xf32>
    %cst = arith.constant dense<0.000000e+00> : vector<32xf32>
    %93 = vector.multi_reduction <add>, %0, %cst [1] : vector<32x32xf32> to vector<32xf32>
    %94 = vector.shape_cast %93 : vector<32xf32> to vector<32x1xf32>
    %cst_24 = arith.constant 3.200000e+01 : f32
    %95 = vector.broadcast %cst_24 : f32 to vector<32x1xf32>
    %96 = arith.divf %94, %95 : vector<32x1xf32>
    %97 = vector.broadcast %96 : vector<32x1xf32> to vector<32x32xf32>
    %98 = arith.subf %0, %97 : vector<32x32xf32>
    %99 = arith.mulf %98, %98 : vector<32x32xf32>
    %cst_25 = arith.constant dense<0.000000e+00> : vector<32xf32>
    %100 = vector.multi_reduction <add>, %99, %cst_25 [1] : vector<32x32xf32> to vector<32xf32>
    %101 = vector.shape_cast %100 : vector<32xf32> to vector<32x1xf32>
    %cst_26 = arith.constant 3.200000e+01 : f32
    %102 = vector.broadcast %cst_26 : f32 to vector<32x1xf32>
    %103 = arith.divf %101, %102 : vector<32x1xf32>
    %cst_27 = arith.constant 9.99999974E-6 : f32
    %104 = vector.broadcast %cst_27 : f32 to vector<32x1xf32>
    %105 = arith.addf %103, %104 : vector<32x1xf32>
    %106 = math.rsqrt %105 : vector<32x1xf32>
    %107 = vector.broadcast %106 : vector<32x1xf32> to vector<32x32xf32>
    %108 = arith.mulf %98, %107 : vector<32x32xf32>
    %109 = vector.broadcast %91 : vector<1x32xf32> to vector<32x32xf32>
    %110 = arith.mulf %108, %109 : vector<32x32xf32>
    %111 = vector.broadcast %92 : vector<1x32xf32> to vector<32x32xf32>
    %112 = arith.addf %110, %111 : vector<32x32xf32>
    %c0_28 = arith.constant 0 : index
    %c0_29 = arith.constant 0 : index
    %113 = vector.load %arg2[%c0_28, %c0_29] : memref<336x128xbf16, #tpu.memory_space<vmem>>, vector<32x128xbf16>
    %114 = arith.truncf %112 : vector<32x32xf32> to vector<32x32xbf16>
    %cst_30 = arith.constant dense<0.000000e+00> : vector<32x128xf32>
    %115 = tpu.matmul %114, %113, %cst_30 {dimension_numbers = #tpu.dot_dimension_numbers<[1], [0], [0], [1], [0, 0, 1, 1], [], []>} : vector<32x32xbf16>, vector<32x128xbf16>, vector<32x128xf32> -> vector<32x128xf32>
    %c2 = arith.constant 2 : index
    %c0_31 = arith.constant 0 : index
    %116 = vector.load %arg3[%c2, %c0_31] : memref<56x128xf32, #tpu.memory_space<vmem>>, vector<1x128xf32>
    %117 = vector.broadcast %116 : vector<1x128xf32> to vector<32x128xf32>
    %118 = arith.addf %115, %117 : vector<32x128xf32>
    %119 = arith.negf %118 : vector<32x128xf32>
    %120 = math.exp %119 : vector<32x128xf32>
    %cst_32 = arith.constant 1.000000e+00 : f32
    %121 = vector.broadcast %cst_32 : f32 to vector<32x128xf32>
    %122 = arith.addf %121, %120 : vector<32x128xf32>
    %123 = arith.divf %121, %122 : vector<32x128xf32>
    %124 = arith.mulf %118, %123 : vector<32x128xf32>
    %125 = arith.truncf %124 : vector<32x128xf32> to vector<32x128xbf16>
    %c32 = arith.constant 32 : index
    %c0_33 = arith.constant 0 : index
    %126 = vector.load %arg2[%c32, %c0_33] : memref<336x128xbf16, #tpu.memory_space<vmem>>, vector<32x128xbf16>
    %cst_34 = arith.constant dense<0.000000e+00> : vector<32x32xf32>
    %127 = tpu.matmul %125, %126, %cst_34 {dimension_numbers = #tpu.dot_dimension_numbers<[1], [1], [0], [0], [0, 0, 1, 0], [], []>} : vector<32x128xbf16>, vector<32x128xbf16>, vector<32x32xf32> -> vector<32x32xf32>
    %c3 = arith.constant 3 : index
    %c0_35 = arith.constant 0 : index
    %128 = vector.load %arg3[%c3, %c0_35] : memref<56x128xf32, #tpu.memory_space<vmem>>, vector<1x32xf32>
    %129 = vector.broadcast %128 : vector<1x32xf32> to vector<32x32xf32>
    %130 = arith.addf %127, %129 : vector<32x32xf32>
    %131 = arith.addf %0, %130 : vector<32x32xf32>
    %c4 = arith.constant 4 : index
    %c0_36 = arith.constant 0 : index
    %132 = vector.load %arg3[%c4, %c0_36] : memref<56x128xf32, #tpu.memory_space<vmem>>, vector<1x32xf32>
    %c5 = arith.constant 5 : index
    %c0_37 = arith.constant 0 : index
    %133 = vector.load %arg3[%c5, %c0_37] : memref<56x128xf32, #tpu.memory_space<vmem>>, vector<1x32xf32>
    %cst_38 = arith.constant dense<0.000000e+00> : vector<48xf32>
    %134 = vector.multi_reduction <add>, %1, %cst_38 [1] : vector<48x32xf32> to vector<48xf32>
    %135 = vector.shape_cast %134 : vector<48xf32> to vector<48x1xf32>
    %cst_39 = arith.constant 3.200000e+01 : f32
    %136 = vector.broadcast %cst_39 : f32 to vector<48x1xf32>
    %137 = arith.divf %135, %136 : vector<48x1xf32>
    %138 = vector.broadcast %137 : vector<48x1xf32> to vector<48x32xf32>
    %139 = arith.subf %1, %138 : vector<48x32xf32>
    %140 = arith.mulf %139, %139 : vector<48x32xf32>
    %cst_40 = arith.constant dense<0.000000e+00> : vector<48xf32>
    %141 = vector.multi_reduction <add>, %140, %cst_40 [1] : vector<48x32xf32> to vector<48xf32>
    %142 = vector.shape_cast %141 : vector<48xf32> to vector<48x1xf32>
    %cst_41 = arith.constant 3.200000e+01 : f32
    %143 = vector.broadcast %cst_41 : f32 to vector<48x1xf32>
    %144 = arith.divf %142, %143 : vector<48x1xf32>
    %cst_42 = arith.constant 9.99999974E-6 : f32
    %145 = vector.broadcast %cst_42 : f32 to vector<48x1xf32>
    %146 = arith.addf %144, %145 : vector<48x1xf32>
    %147 = math.rsqrt %146 : vector<48x1xf32>
    %148 = vector.broadcast %147 : vector<48x1xf32> to vector<48x32xf32>
    %149 = arith.mulf %139, %148 : vector<48x32xf32>
    %150 = vector.broadcast %132 : vector<1x32xf32> to vector<48x32xf32>
    %151 = arith.mulf %149, %150 : vector<48x32xf32>
    %152 = vector.broadcast %133 : vector<1x32xf32> to vector<48x32xf32>
    %153 = arith.addf %151, %152 : vector<48x32xf32>
    %c64 = arith.constant 64 : index
    %c0_43 = arith.constant 0 : index
    %154 = vector.load %arg2[%c64, %c0_43] : memref<336x128xbf16, #tpu.memory_space<vmem>>, vector<32x128xbf16>
    %155 = arith.truncf %153 : vector<48x32xf32> to vector<48x32xbf16>
    %cst_44 = arith.constant dense<0.000000e+00> : vector<48x128xf32>
    %156 = tpu.matmul %155, %154, %cst_44 {dimension_numbers = #tpu.dot_dimension_numbers<[1], [0], [0], [1], [0, 0, 1, 1], [], []>} : vector<48x32xbf16>, vector<32x128xbf16>, vector<48x128xf32> -> vector<48x128xf32>
    %c6 = arith.constant 6 : index
    %c0_45 = arith.constant 0 : index
    %157 = vector.load %arg3[%c6, %c0_45] : memref<56x128xf32, #tpu.memory_space<vmem>>, vector<1x128xf32>
    %158 = vector.broadcast %157 : vector<1x128xf32> to vector<48x128xf32>
    %159 = arith.addf %156, %158 : vector<48x128xf32>
    %160 = arith.negf %159 : vector<48x128xf32>
    %161 = math.exp %160 : vector<48x128xf32>
    %cst_46 = arith.constant 1.000000e+00 : f32
    %162 = vector.broadcast %cst_46 : f32 to vector<48x128xf32>
    %163 = arith.addf %162, %161 : vector<48x128xf32>
    %164 = arith.divf %162, %163 : vector<48x128xf32>
    %165 = arith.mulf %159, %164 : vector<48x128xf32>
    %166 = arith.truncf %165 : vector<48x128xf32> to vector<48x128xbf16>
    %c96 = arith.constant 96 : index
    %c0_47 = arith.constant 0 : index
    %167 = vector.load %arg2[%c96, %c0_47] : memref<336x128xbf16, #tpu.memory_space<vmem>>, vector<32x128xbf16>
    %cst_48 = arith.constant dense<0.000000e+00> : vector<48x32xf32>
    %168 = tpu.matmul %166, %167, %cst_48 {dimension_numbers = #tpu.dot_dimension_numbers<[1], [1], [0], [0], [0, 0, 1, 0], [], []>} : vector<48x128xbf16>, vector<32x128xbf16>, vector<48x32xf32> -> vector<48x32xf32>
    %c7 = arith.constant 7 : index
    %c0_49 = arith.constant 0 : index
    %169 = vector.load %arg3[%c7, %c0_49] : memref<56x128xf32, #tpu.memory_space<vmem>>, vector<1x32xf32>
    %170 = vector.broadcast %169 : vector<1x32xf32> to vector<48x32xf32>
    %171 = arith.addf %168, %170 : vector<48x32xf32>
    %172 = arith.addf %1, %171 : vector<48x32xf32>
    %c12 = arith.constant 12 : index
    %c0_50 = arith.constant 0 : index
    %173 = vector.load %arg3[%c12, %c0_50] : memref<56x128xf32, #tpu.memory_space<vmem>>, vector<1x32xf32>
    %c13 = arith.constant 13 : index
    %c0_51 = arith.constant 0 : index
    %174 = vector.load %arg3[%c13, %c0_51] : memref<56x128xf32, #tpu.memory_space<vmem>>, vector<1x32xf32>
    %cst_52 = arith.constant dense<0.000000e+00> : vector<32xf32>
    %175 = vector.multi_reduction <add>, %131, %cst_52 [1] : vector<32x32xf32> to vector<32xf32>
    %176 = vector.shape_cast %175 : vector<32xf32> to vector<32x1xf32>
    %cst_53 = arith.constant 3.200000e+01 : f32
    %177 = vector.broadcast %cst_53 : f32 to vector<32x1xf32>
    %178 = arith.divf %176, %177 : vector<32x1xf32>
    %179 = vector.broadcast %178 : vector<32x1xf32> to vector<32x32xf32>
    %180 = arith.subf %131, %179 : vector<32x32xf32>
    %181 = arith.mulf %180, %180 : vector<32x32xf32>
    %cst_54 = arith.constant dense<0.000000e+00> : vector<32xf32>
    %182 = vector.multi_reduction <add>, %181, %cst_54 [1] : vector<32x32xf32> to vector<32xf32>
    %183 = vector.shape_cast %182 : vector<32xf32> to vector<32x1xf32>
    %cst_55 = arith.constant 3.200000e+01 : f32
    %184 = vector.broadcast %cst_55 : f32 to vector<32x1xf32>
    %185 = arith.divf %183, %184 : vector<32x1xf32>
    %cst_56 = arith.constant 9.99999974E-6 : f32
    %186 = vector.broadcast %cst_56 : f32 to vector<32x1xf32>
    %187 = arith.addf %185, %186 : vector<32x1xf32>
    %188 = math.rsqrt %187 : vector<32x1xf32>
    %189 = vector.broadcast %188 : vector<32x1xf32> to vector<32x32xf32>
    %190 = arith.mulf %180, %189 : vector<32x32xf32>
    %191 = vector.broadcast %173 : vector<1x32xf32> to vector<32x32xf32>
    %192 = arith.mulf %190, %191 : vector<32x32xf32>
    %193 = vector.broadcast %174 : vector<1x32xf32> to vector<32x32xf32>
    %194 = arith.addf %192, %193 : vector<32x32xf32>
    %195 = arith.truncf %194 : vector<32x32xf32> to vector<32x32xbf16>
    %c192 = arith.constant 192 : index
    %c0_57 = arith.constant 0 : index
    %196 = vector.load %arg2[%c192, %c0_57] : memref<336x128xbf16, #tpu.memory_space<vmem>>, vector<32x32xbf16>
    %cst_58 = arith.constant dense<0.000000e+00> : vector<32x32xf32>
    %197 = tpu.matmul %195, %196, %cst_58 {dimension_numbers = #tpu.dot_dimension_numbers<[1], [0], [0], [1], [0, 0, 1, 1], [], []>} : vector<32x32xbf16>, vector<32x32xbf16>, vector<32x32xf32> -> vector<32x32xf32>
    %c14 = arith.constant 14 : index
    %c0_59 = arith.constant 0 : index
    %198 = vector.load %arg3[%c14, %c0_59] : memref<56x128xf32, #tpu.memory_space<vmem>>, vector<1x32xf32>
    %199 = vector.broadcast %198 : vector<1x32xf32> to vector<32x32xf32>
    %200 = arith.addf %197, %199 : vector<32x32xf32>
    %c192_60 = arith.constant 192 : index
    %c32_61 = arith.constant 32 : index
    %201 = vector.load %arg2[%c192_60, %c32_61] : memref<336x128xbf16, #tpu.memory_space<vmem>>, vector<32x32xbf16>
    %cst_62 = arith.constant dense<0.000000e+00> : vector<32x32xf32>
    %202 = tpu.matmul %195, %201, %cst_62 {dimension_numbers = #tpu.dot_dimension_numbers<[1], [0], [0], [1], [0, 0, 1, 1], [], []>} : vector<32x32xbf16>, vector<32x32xbf16>, vector<32x32xf32> -> vector<32x32xf32>
    %c15 = arith.constant 15 : index
    %c0_63 = arith.constant 0 : index
    %203 = vector.load %arg3[%c15, %c0_63] : memref<56x128xf32, #tpu.memory_space<vmem>>, vector<1x32xf32>
    %204 = vector.broadcast %203 : vector<1x32xf32> to vector<32x32xf32>
    %205 = arith.addf %202, %204 : vector<32x32xf32>
    %206 = arith.negf %205 : vector<32x32xf32>
    %207 = math.exp %206 : vector<32x32xf32>
    %cst_64 = arith.constant 1.000000e+00 : f32
    %208 = vector.broadcast %cst_64 : f32 to vector<32x32xf32>
    %209 = arith.addf %208, %207 : vector<32x32xf32>
    %210 = arith.divf %208, %209 : vector<32x32xf32>
    %211 = arith.mulf %200, %210 : vector<32x32xf32>
    %cst_65 = arith.constant 0.000000e+00 : f32
    %212 = vector.broadcast %cst_65 : f32 to vector<32x32xf32>
    %c3_i32 = arith.constant 3 : i32
    %213 = tpu.dynamic_rotate %211 by %c3_i32 dim 0 : vector<32x32xf32>, i32 -> vector<32x32xf32>
    %c-3_i32 = arith.constant -3 : i32
    %214 = vector.broadcast %c-3_i32 : i32 to vector<32x1xi32>
    %215 = arith.addi %7, %214 : vector<32x1xi32>
    %c0_i32_66 = arith.constant 0 : i32
    %216 = vector.broadcast %c0_i32_66 : i32 to vector<32x1xi32>
    %217 = arith.cmpi sge, %215, %216 : vector<32x1xi32>
    %c-3_i32_67 = arith.constant -3 : i32
    %218 = vector.broadcast %c-3_i32_67 : i32 to vector<32x1xi32>
    %219 = arith.addi %7, %218 : vector<32x1xi32>
    %c16_i32_68 = arith.constant 16 : i32
    %220 = vector.broadcast %c16_i32_68 : i32 to vector<32x1xi32>
    %221 = arith.cmpi slt, %219, %220 : vector<32x1xi32>
    %222 = arith.andi %217, %221 : vector<32x1xi1>
    %c16 = arith.constant 16 : index
    %c0_69 = arith.constant 0 : index
    %223 = vector.load %arg3[%c16, %c0_69] : memref<56x128xf32, #tpu.memory_space<vmem>>, vector<1x32xf32>
    %cst_70 = arith.constant 0.000000e+00 : f32
    %224 = vector.shape_cast %222 : vector<32x1xi1> to vector<32x1xi1>
    %225 = vector.broadcast %224 : vector<32x1xi1> to vector<32x32xi1>
    %226 = vector.broadcast %cst_70 : f32 to vector<32x32xf32>
    %227 = arith.select %225, %213, %226 : vector<32x32xi1>, vector<32x32xf32>
    %228 = vector.broadcast %223 : vector<1x32xf32> to vector<32x32xf32>
    %229 = arith.mulf %227, %228 : vector<32x32xf32>
    %230 = arith.addf %212, %229 : vector<32x32xf32>
    %c2_i32 = arith.constant 2 : i32
    %231 = tpu.dynamic_rotate %211 by %c2_i32 dim 0 : vector<32x32xf32>, i32 -> vector<32x32xf32>
    %c-2_i32 = arith.constant -2 : i32
    %232 = vector.broadcast %c-2_i32 : i32 to vector<32x1xi32>
    %233 = arith.addi %7, %232 : vector<32x1xi32>
    %c0_i32_71 = arith.constant 0 : i32
    %234 = vector.broadcast %c0_i32_71 : i32 to vector<32x1xi32>
    %235 = arith.cmpi sge, %233, %234 : vector<32x1xi32>
    %c-2_i32_72 = arith.constant -2 : i32
    %236 = vector.broadcast %c-2_i32_72 : i32 to vector<32x1xi32>
    %237 = arith.addi %7, %236 : vector<32x1xi32>
    %c16_i32_73 = arith.constant 16 : i32
    %238 = vector.broadcast %c16_i32_73 : i32 to vector<32x1xi32>
    %239 = arith.cmpi slt, %237, %238 : vector<32x1xi32>
    %240 = arith.andi %235, %239 : vector<32x1xi1>
    %c17 = arith.constant 17 : index
    %c0_74 = arith.constant 0 : index
    %241 = vector.load %arg3[%c17, %c0_74] : memref<56x128xf32, #tpu.memory_space<vmem>>, vector<1x32xf32>
    %cst_75 = arith.constant 0.000000e+00 : f32
    %242 = vector.shape_cast %240 : vector<32x1xi1> to vector<32x1xi1>
    %243 = vector.broadcast %242 : vector<32x1xi1> to vector<32x32xi1>
    %244 = vector.broadcast %cst_75 : f32 to vector<32x32xf32>
    %245 = arith.select %243, %231, %244 : vector<32x32xi1>, vector<32x32xf32>
    %246 = vector.broadcast %241 : vector<1x32xf32> to vector<32x32xf32>
    %247 = arith.mulf %245, %246 : vector<32x32xf32>
    %248 = arith.addf %230, %247 : vector<32x32xf32>
    %c1_i32_76 = arith.constant 1 : i32
    %249 = tpu.dynamic_rotate %211 by %c1_i32_76 dim 0 : vector<32x32xf32>, i32 -> vector<32x32xf32>
    %c-1_i32 = arith.constant -1 : i32
    %250 = vector.broadcast %c-1_i32 : i32 to vector<32x1xi32>
    %251 = arith.addi %7, %250 : vector<32x1xi32>
    %c0_i32_77 = arith.constant 0 : i32
    %252 = vector.broadcast %c0_i32_77 : i32 to vector<32x1xi32>
    %253 = arith.cmpi sge, %251, %252 : vector<32x1xi32>
    %c-1_i32_78 = arith.constant -1 : i32
    %254 = vector.broadcast %c-1_i32_78 : i32 to vector<32x1xi32>
    %255 = arith.addi %7, %254 : vector<32x1xi32>
    %c16_i32_79 = arith.constant 16 : i32
    %256 = vector.broadcast %c16_i32_79 : i32 to vector<32x1xi32>
    %257 = arith.cmpi slt, %255, %256 : vector<32x1xi32>
    %258 = arith.andi %253, %257 : vector<32x1xi1>
    %c18 = arith.constant 18 : index
    %c0_80 = arith.constant 0 : index
    %259 = vector.load %arg3[%c18, %c0_80] : memref<56x128xf32, #tpu.memory_space<vmem>>, vector<1x32xf32>
    %cst_81 = arith.constant 0.000000e+00 : f32
    %260 = vector.shape_cast %258 : vector<32x1xi1> to vector<32x1xi1>
    %261 = vector.broadcast %260 : vector<32x1xi1> to vector<32x32xi1>
    %262 = vector.broadcast %cst_81 : f32 to vector<32x32xf32>
    %263 = arith.select %261, %249, %262 : vector<32x32xi1>, vector<32x32xf32>
    %264 = vector.broadcast %259 : vector<1x32xf32> to vector<32x32xf32>
    %265 = arith.mulf %263, %264 : vector<32x32xf32>
    %266 = arith.addf %248, %265 : vector<32x32xf32>
    %c0_i32_82 = arith.constant 0 : i32
    %267 = vector.broadcast %c0_i32_82 : i32 to vector<32x1xi32>
    %268 = arith.addi %7, %267 : vector<32x1xi32>
    %c0_i32_83 = arith.constant 0 : i32
    %269 = vector.broadcast %c0_i32_83 : i32 to vector<32x1xi32>
    %270 = arith.cmpi sge, %268, %269 : vector<32x1xi32>
    %c0_i32_84 = arith.constant 0 : i32
    %271 = vector.broadcast %c0_i32_84 : i32 to vector<32x1xi32>
    %272 = arith.addi %7, %271 : vector<32x1xi32>
    %c16_i32_85 = arith.constant 16 : i32
    %273 = vector.broadcast %c16_i32_85 : i32 to vector<32x1xi32>
    %274 = arith.cmpi slt, %272, %273 : vector<32x1xi32>
    %275 = arith.andi %270, %274 : vector<32x1xi1>
    %c19 = arith.constant 19 : index
    %c0_86 = arith.constant 0 : index
    %276 = vector.load %arg3[%c19, %c0_86] : memref<56x128xf32, #tpu.memory_space<vmem>>, vector<1x32xf32>
    %cst_87 = arith.constant 0.000000e+00 : f32
    %277 = vector.shape_cast %275 : vector<32x1xi1> to vector<32x1xi1>
    %278 = vector.broadcast %277 : vector<32x1xi1> to vector<32x32xi1>
    %279 = vector.broadcast %cst_87 : f32 to vector<32x32xf32>
    %280 = arith.select %278, %211, %279 : vector<32x32xi1>, vector<32x32xf32>
    %281 = vector.broadcast %276 : vector<1x32xf32> to vector<32x32xf32>
    %282 = arith.mulf %280, %281 : vector<32x32xf32>
    %283 = arith.addf %266, %282 : vector<32x32xf32>
    %c31_i32 = arith.constant 31 : i32
    %284 = tpu.dynamic_rotate %211 by %c31_i32 dim 0 : vector<32x32xf32>, i32 -> vector<32x32xf32>
    %c1_i32_88 = arith.constant 1 : i32
    %285 = vector.broadcast %c1_i32_88 : i32 to vector<32x1xi32>
    %286 = arith.addi %7, %285 : vector<32x1xi32>
    %c0_i32_89 = arith.constant 0 : i32
    %287 = vector.broadcast %c0_i32_89 : i32 to vector<32x1xi32>
    %288 = arith.cmpi sge, %286, %287 : vector<32x1xi32>
    %c1_i32_90 = arith.constant 1 : i32
    %289 = vector.broadcast %c1_i32_90 : i32 to vector<32x1xi32>
    %290 = arith.addi %7, %289 : vector<32x1xi32>
    %c16_i32_91 = arith.constant 16 : i32
    %291 = vector.broadcast %c16_i32_91 : i32 to vector<32x1xi32>
    %292 = arith.cmpi slt, %290, %291 : vector<32x1xi32>
    %293 = arith.andi %288, %292 : vector<32x1xi1>
    %c20 = arith.constant 20 : index
    %c0_92 = arith.constant 0 : index
    %294 = vector.load %arg3[%c20, %c0_92] : memref<56x128xf32, #tpu.memory_space<vmem>>, vector<1x32xf32>
    %cst_93 = arith.constant 0.000000e+00 : f32
    %295 = vector.shape_cast %293 : vector<32x1xi1> to vector<32x1xi1>
    %296 = vector.broadcast %295 : vector<32x1xi1> to vector<32x32xi1>
    %297 = vector.broadcast %cst_93 : f32 to vector<32x32xf32>
    %298 = arith.select %296, %284, %297 : vector<32x32xi1>, vector<32x32xf32>
    %299 = vector.broadcast %294 : vector<1x32xf32> to vector<32x32xf32>
    %300 = arith.mulf %298, %299 : vector<32x32xf32>
    %301 = arith.addf %283, %300 : vector<32x32xf32>
    %c30_i32 = arith.constant 30 : i32
    %302 = tpu.dynamic_rotate %211 by %c30_i32 dim 0 : vector<32x32xf32>, i32 -> vector<32x32xf32>
    %c2_i32_94 = arith.constant 2 : i32
    %303 = vector.broadcast %c2_i32_94 : i32 to vector<32x1xi32>
    %304 = arith.addi %7, %303 : vector<32x1xi32>
    %c0_i32_95 = arith.constant 0 : i32
    %305 = vector.broadcast %c0_i32_95 : i32 to vector<32x1xi32>
    %306 = arith.cmpi sge, %304, %305 : vector<32x1xi32>
    %c2_i32_96 = arith.constant 2 : i32
    %307 = vector.broadcast %c2_i32_96 : i32 to vector<32x1xi32>
    %308 = arith.addi %7, %307 : vector<32x1xi32>
    %c16_i32_97 = arith.constant 16 : i32
    %309 = vector.broadcast %c16_i32_97 : i32 to vector<32x1xi32>
    %310 = arith.cmpi slt, %308, %309 : vector<32x1xi32>
    %311 = arith.andi %306, %310 : vector<32x1xi1>
    %c21 = arith.constant 21 : index
    %c0_98 = arith.constant 0 : index
    %312 = vector.load %arg3[%c21, %c0_98] : memref<56x128xf32, #tpu.memory_space<vmem>>, vector<1x32xf32>
    %cst_99 = arith.constant 0.000000e+00 : f32
    %313 = vector.shape_cast %311 : vector<32x1xi1> to vector<32x1xi1>
    %314 = vector.broadcast %313 : vector<32x1xi1> to vector<32x32xi1>
    %315 = vector.broadcast %cst_99 : f32 to vector<32x32xf32>
    %316 = arith.select %314, %302, %315 : vector<32x32xi1>, vector<32x32xf32>
    %317 = vector.broadcast %312 : vector<1x32xf32> to vector<32x32xf32>
    %318 = arith.mulf %316, %317 : vector<32x32xf32>
    %319 = arith.addf %301, %318 : vector<32x32xf32>
    %c29_i32 = arith.constant 29 : i32
    %320 = tpu.dynamic_rotate %211 by %c29_i32 dim 0 : vector<32x32xf32>, i32 -> vector<32x32xf32>
    %c3_i32_100 = arith.constant 3 : i32
    %321 = vector.broadcast %c3_i32_100 : i32 to vector<32x1xi32>
    %322 = arith.addi %7, %321 : vector<32x1xi32>
    %c0_i32_101 = arith.constant 0 : i32
    %323 = vector.broadcast %c0_i32_101 : i32 to vector<32x1xi32>
    %324 = arith.cmpi sge, %322, %323 : vector<32x1xi32>
    %c3_i32_102 = arith.constant 3 : i32
    %325 = vector.broadcast %c3_i32_102 : i32 to vector<32x1xi32>
    %326 = arith.addi %7, %325 : vector<32x1xi32>
    %c16_i32_103 = arith.constant 16 : i32
    %327 = vector.broadcast %c16_i32_103 : i32 to vector<32x1xi32>
    %328 = arith.cmpi slt, %326, %327 : vector<32x1xi32>
    %329 = arith.andi %324, %328 : vector<32x1xi1>
    %c22 = arith.constant 22 : index
    %c0_104 = arith.constant 0 : index
    %330 = vector.load %arg3[%c22, %c0_104] : memref<56x128xf32, #tpu.memory_space<vmem>>, vector<1x32xf32>
    %cst_105 = arith.constant 0.000000e+00 : f32
    %331 = vector.shape_cast %329 : vector<32x1xi1> to vector<32x1xi1>
    %332 = vector.broadcast %331 : vector<32x1xi1> to vector<32x32xi1>
    %333 = vector.broadcast %cst_105 : f32 to vector<32x32xf32>
    %334 = arith.select %332, %320, %333 : vector<32x32xi1>, vector<32x32xf32>
    %335 = vector.broadcast %330 : vector<1x32xf32> to vector<32x32xf32>
    %336 = arith.mulf %334, %335 : vector<32x32xf32>
    %337 = arith.addf %319, %336 : vector<32x32xf32>
    %c23 = arith.constant 23 : index
    %c0_106 = arith.constant 0 : index
    %338 = vector.load %arg3[%c23, %c0_106] : memref<56x128xf32, #tpu.memory_space<vmem>>, vector<1x32xf32>
    %339 = vector.broadcast %338 : vector<1x32xf32> to vector<32x32xf32>
    %340 = arith.addf %337, %339 : vector<32x32xf32>
    %cst_107 = arith.constant dense<0.000000e+00> : vector<2x32xf32>
    %341 = tpu.matmul %33, %340, %cst_107 {dimension_numbers = #tpu.dot_dimension_numbers<[1], [0], [0], [1], [0, 0, 1, 1], [], []>} : vector<2x32xf32>, vector<32x32xf32>, vector<2x32xf32> -> vector<2x32xf32>
    %cst_108 = arith.constant dense<0.000000e+00> : vector<32x32xf32>
    %342 = tpu.matmul %20, %341, %cst_108 {dimension_numbers = #tpu.dot_dimension_numbers<[1], [0], [0], [1], [0, 0, 1, 1], [], []>} : vector<32x2xf32>, vector<2x32xf32>, vector<32x32xf32> -> vector<32x32xf32>
    %cst_109 = arith.constant 6.250000e-02 : f32
    %343 = vector.broadcast %cst_109 : f32 to vector<32x32xf32>
    %344 = arith.mulf %342, %343 : vector<32x32xf32>
    %345 = arith.subf %340, %344 : vector<32x32xf32>
    %346 = arith.mulf %345, %345 : vector<32x32xf32>
    %cst_110 = arith.constant dense<0.000000e+00> : vector<2x32xf32>
    %347 = tpu.matmul %33, %346, %cst_110 {dimension_numbers = #tpu.dot_dimension_numbers<[1], [0], [0], [1], [0, 0, 1, 1], [], []>} : vector<2x32xf32>, vector<32x32xf32>, vector<2x32xf32> -> vector<2x32xf32>
    %cst_111 = arith.constant dense<0.000000e+00> : vector<32x32xf32>
    %348 = tpu.matmul %20, %347, %cst_111 {dimension_numbers = #tpu.dot_dimension_numbers<[1], [0], [0], [1], [0, 0, 1, 1], [], []>} : vector<32x2xf32>, vector<2x32xf32>, vector<32x32xf32> -> vector<32x32xf32>
    %cst_112 = arith.constant 6.250000e-02 : f32
    %349 = vector.broadcast %cst_112 : f32 to vector<32x32xf32>
    %350 = arith.mulf %348, %349 : vector<32x32xf32>
    %cst_113 = arith.constant 9.99999974E-6 : f32
    %351 = vector.broadcast %cst_113 : f32 to vector<32x32xf32>
    %352 = arith.addf %350, %351 : vector<32x32xf32>
    %353 = math.rsqrt %352 : vector<32x32xf32>
    %354 = arith.mulf %345, %353 : vector<32x32xf32>
    %c24 = arith.constant 24 : index
    %c0_114 = arith.constant 0 : index
    %355 = vector.load %arg3[%c24, %c0_114] : memref<56x128xf32, #tpu.memory_space<vmem>>, vector<1x32xf32>
    %356 = vector.broadcast %355 : vector<1x32xf32> to vector<32x32xf32>
    %357 = arith.mulf %354, %356 : vector<32x32xf32>
    %c25 = arith.constant 25 : index
    %c0_115 = arith.constant 0 : index
    %358 = vector.load %arg3[%c25, %c0_115] : memref<56x128xf32, #tpu.memory_space<vmem>>, vector<1x32xf32>
    %359 = vector.broadcast %358 : vector<1x32xf32> to vector<32x32xf32>
    %360 = arith.addf %357, %359 : vector<32x32xf32>
    %361 = arith.negf %360 : vector<32x32xf32>
    %362 = math.exp %361 : vector<32x32xf32>
    %cst_116 = arith.constant 1.000000e+00 : f32
    %363 = vector.broadcast %cst_116 : f32 to vector<32x32xf32>
    %364 = arith.addf %363, %362 : vector<32x32xf32>
    %365 = arith.divf %363, %364 : vector<32x32xf32>
    %366 = arith.mulf %360, %365 : vector<32x32xf32>
    %c192_117 = arith.constant 192 : index
    %c64_118 = arith.constant 64 : index
    %367 = vector.load %arg2[%c192_117, %c64_118] : memref<336x128xbf16, #tpu.memory_space<vmem>>, vector<32x32xbf16>
    %368 = arith.truncf %366 : vector<32x32xf32> to vector<32x32xbf16>
    %cst_119 = arith.constant dense<0.000000e+00> : vector<32x32xf32>
    %369 = tpu.matmul %368, %367, %cst_119 {dimension_numbers = #tpu.dot_dimension_numbers<[1], [0], [0], [1], [0, 0, 1, 1], [], []>} : vector<32x32xbf16>, vector<32x32xbf16>, vector<32x32xf32> -> vector<32x32xf32>
    %c26 = arith.constant 26 : index
    %c0_120 = arith.constant 0 : index
    %370 = vector.load %arg3[%c26, %c0_120] : memref<56x128xf32, #tpu.memory_space<vmem>>, vector<1x32xf32>
    %371 = vector.broadcast %370 : vector<1x32xf32> to vector<32x32xf32>
    %372 = arith.addf %369, %371 : vector<32x32xf32>
    %373 = arith.addf %131, %372 : vector<32x32xf32>
    %c27 = arith.constant 27 : index
    %c0_121 = arith.constant 0 : index
    %374 = vector.load %arg3[%c27, %c0_121] : memref<56x128xf32, #tpu.memory_space<vmem>>, vector<1x32xf32>
    %c28 = arith.constant 28 : index
    %c0_122 = arith.constant 0 : index
    %375 = vector.load %arg3[%c28, %c0_122] : memref<56x128xf32, #tpu.memory_space<vmem>>, vector<1x32xf32>
    %cst_123 = arith.constant dense<0.000000e+00> : vector<48xf32>
    %376 = vector.multi_reduction <add>, %172, %cst_123 [1] : vector<48x32xf32> to vector<48xf32>
    %377 = vector.shape_cast %376 : vector<48xf32> to vector<48x1xf32>
    %cst_124 = arith.constant 3.200000e+01 : f32
    %378 = vector.broadcast %cst_124 : f32 to vector<48x1xf32>
    %379 = arith.divf %377, %378 : vector<48x1xf32>
    %380 = vector.broadcast %379 : vector<48x1xf32> to vector<48x32xf32>
    %381 = arith.subf %172, %380 : vector<48x32xf32>
    %382 = arith.mulf %381, %381 : vector<48x32xf32>
    %cst_125 = arith.constant dense<0.000000e+00> : vector<48xf32>
    %383 = vector.multi_reduction <add>, %382, %cst_125 [1] : vector<48x32xf32> to vector<48xf32>
    %384 = vector.shape_cast %383 : vector<48xf32> to vector<48x1xf32>
    %cst_126 = arith.constant 3.200000e+01 : f32
    %385 = vector.broadcast %cst_126 : f32 to vector<48x1xf32>
    %386 = arith.divf %384, %385 : vector<48x1xf32>
    %cst_127 = arith.constant 9.99999974E-6 : f32
    %387 = vector.broadcast %cst_127 : f32 to vector<48x1xf32>
    %388 = arith.addf %386, %387 : vector<48x1xf32>
    %389 = math.rsqrt %388 : vector<48x1xf32>
    %390 = vector.broadcast %389 : vector<48x1xf32> to vector<48x32xf32>
    %391 = arith.mulf %381, %390 : vector<48x32xf32>
    %392 = vector.broadcast %374 : vector<1x32xf32> to vector<48x32xf32>
    %393 = arith.mulf %391, %392 : vector<48x32xf32>
    %394 = vector.broadcast %375 : vector<1x32xf32> to vector<48x32xf32>
    %395 = arith.addf %393, %394 : vector<48x32xf32>
    %396 = arith.truncf %395 : vector<48x32xf32> to vector<48x32xbf16>
    %c224 = arith.constant 224 : index
    %c0_128 = arith.constant 0 : index
    %397 = vector.load %arg2[%c224, %c0_128] : memref<336x128xbf16, #tpu.memory_space<vmem>>, vector<32x32xbf16>
    %cst_129 = arith.constant dense<0.000000e+00> : vector<48x32xf32>
    %398 = tpu.matmul %396, %397, %cst_129 {dimension_numbers = #tpu.dot_dimension_numbers<[1], [0], [0], [1], [0, 0, 1, 1], [], []>} : vector<48x32xbf16>, vector<32x32xbf16>, vector<48x32xf32> -> vector<48x32xf32>
    %c29 = arith.constant 29 : index
    %c0_130 = arith.constant 0 : index
    %399 = vector.load %arg3[%c29, %c0_130] : memref<56x128xf32, #tpu.memory_space<vmem>>, vector<1x32xf32>
    %400 = vector.broadcast %399 : vector<1x32xf32> to vector<48x32xf32>
    %401 = arith.addf %398, %400 : vector<48x32xf32>
    %c224_131 = arith.constant 224 : index
    %c32_132 = arith.constant 32 : index
    %402 = vector.load %arg2[%c224_131, %c32_132] : memref<336x128xbf16, #tpu.memory_space<vmem>>, vector<32x32xbf16>
    %cst_133 = arith.constant dense<0.000000e+00> : vector<48x32xf32>
    %403 = tpu.matmul %396, %402, %cst_133 {dimension_numbers = #tpu.dot_dimension_numbers<[1], [0], [0], [1], [0, 0, 1, 1], [], []>} : vector<48x32xbf16>, vector<32x32xbf16>, vector<48x32xf32> -> vector<48x32xf32>
    %c30 = arith.constant 30 : index
    %c0_134 = arith.constant 0 : index
    %404 = vector.load %arg3[%c30, %c0_134] : memref<56x128xf32, #tpu.memory_space<vmem>>, vector<1x32xf32>
    %405 = vector.broadcast %404 : vector<1x32xf32> to vector<48x32xf32>
    %406 = arith.addf %403, %405 : vector<48x32xf32>
    %407 = arith.negf %406 : vector<48x32xf32>
    %408 = math.exp %407 : vector<48x32xf32>
    %cst_135 = arith.constant 1.000000e+00 : f32
    %409 = vector.broadcast %cst_135 : f32 to vector<48x32xf32>
    %410 = arith.addf %409, %408 : vector<48x32xf32>
    %411 = arith.divf %409, %410 : vector<48x32xf32>
    %412 = arith.mulf %401, %411 : vector<48x32xf32>
    %cst_136 = arith.constant 0.000000e+00 : f32
    %413 = vector.broadcast %cst_136 : f32 to vector<48x32xf32>
    %c3_i32_137 = arith.constant 3 : i32
    %414 = tpu.dynamic_rotate %412 by %c3_i32_137 dim 0 : vector<48x32xf32>, i32 -> vector<48x32xf32>
    %c-3_i32_138 = arith.constant -3 : i32
    %415 = vector.broadcast %c-3_i32_138 : i32 to vector<48x1xi32>
    %416 = arith.addi %39, %415 : vector<48x1xi32>
    %c0_i32_139 = arith.constant 0 : i32
    %417 = vector.broadcast %c0_i32_139 : i32 to vector<48x1xi32>
    %418 = arith.cmpi sge, %416, %417 : vector<48x1xi32>
    %c-3_i32_140 = arith.constant -3 : i32
    %419 = vector.broadcast %c-3_i32_140 : i32 to vector<48x1xi32>
    %420 = arith.addi %39, %419 : vector<48x1xi32>
    %c24_i32_141 = arith.constant 24 : i32
    %421 = vector.broadcast %c24_i32_141 : i32 to vector<48x1xi32>
    %422 = arith.cmpi slt, %420, %421 : vector<48x1xi32>
    %423 = arith.andi %418, %422 : vector<48x1xi1>
    %c31 = arith.constant 31 : index
    %c0_142 = arith.constant 0 : index
    %424 = vector.load %arg3[%c31, %c0_142] : memref<56x128xf32, #tpu.memory_space<vmem>>, vector<1x32xf32>
    %cst_143 = arith.constant 0.000000e+00 : f32
    %425 = vector.shape_cast %423 : vector<48x1xi1> to vector<48x1xi1>
    %426 = vector.broadcast %425 : vector<48x1xi1> to vector<48x32xi1>
    %427 = vector.broadcast %cst_143 : f32 to vector<48x32xf32>
    %428 = arith.select %426, %414, %427 : vector<48x32xi1>, vector<48x32xf32>
    %429 = vector.broadcast %424 : vector<1x32xf32> to vector<48x32xf32>
    %430 = arith.mulf %428, %429 : vector<48x32xf32>
    %431 = arith.addf %413, %430 : vector<48x32xf32>
    %c2_i32_144 = arith.constant 2 : i32
    %432 = tpu.dynamic_rotate %412 by %c2_i32_144 dim 0 : vector<48x32xf32>, i32 -> vector<48x32xf32>
    %c-2_i32_145 = arith.constant -2 : i32
    %433 = vector.broadcast %c-2_i32_145 : i32 to vector<48x1xi32>
    %434 = arith.addi %39, %433 : vector<48x1xi32>
    %c0_i32_146 = arith.constant 0 : i32
    %435 = vector.broadcast %c0_i32_146 : i32 to vector<48x1xi32>
    %436 = arith.cmpi sge, %434, %435 : vector<48x1xi32>
    %c-2_i32_147 = arith.constant -2 : i32
    %437 = vector.broadcast %c-2_i32_147 : i32 to vector<48x1xi32>
    %438 = arith.addi %39, %437 : vector<48x1xi32>
    %c24_i32_148 = arith.constant 24 : i32
    %439 = vector.broadcast %c24_i32_148 : i32 to vector<48x1xi32>
    %440 = arith.cmpi slt, %438, %439 : vector<48x1xi32>
    %441 = arith.andi %436, %440 : vector<48x1xi1>
    %c32_149 = arith.constant 32 : index
    %c0_150 = arith.constant 0 : index
    %442 = vector.load %arg3[%c32_149, %c0_150] : memref<56x128xf32, #tpu.memory_space<vmem>>, vector<1x32xf32>
    %cst_151 = arith.constant 0.000000e+00 : f32
    %443 = vector.shape_cast %441 : vector<48x1xi1> to vector<48x1xi1>
    %444 = vector.broadcast %443 : vector<48x1xi1> to vector<48x32xi1>
    %445 = vector.broadcast %cst_151 : f32 to vector<48x32xf32>
    %446 = arith.select %444, %432, %445 : vector<48x32xi1>, vector<48x32xf32>
    %447 = vector.broadcast %442 : vector<1x32xf32> to vector<48x32xf32>
    %448 = arith.mulf %446, %447 : vector<48x32xf32>
    %449 = arith.addf %431, %448 : vector<48x32xf32>
    %c1_i32_152 = arith.constant 1 : i32
    %450 = tpu.dynamic_rotate %412 by %c1_i32_152 dim 0 : vector<48x32xf32>, i32 -> vector<48x32xf32>
    %c-1_i32_153 = arith.constant -1 : i32
    %451 = vector.broadcast %c-1_i32_153 : i32 to vector<48x1xi32>
    %452 = arith.addi %39, %451 : vector<48x1xi32>
    %c0_i32_154 = arith.constant 0 : i32
    %453 = vector.broadcast %c0_i32_154 : i32 to vector<48x1xi32>
    %454 = arith.cmpi sge, %452, %453 : vector<48x1xi32>
    %c-1_i32_155 = arith.constant -1 : i32
    %455 = vector.broadcast %c-1_i32_155 : i32 to vector<48x1xi32>
    %456 = arith.addi %39, %455 : vector<48x1xi32>
    %c24_i32_156 = arith.constant 24 : i32
    %457 = vector.broadcast %c24_i32_156 : i32 to vector<48x1xi32>
    %458 = arith.cmpi slt, %456, %457 : vector<48x1xi32>
    %459 = arith.andi %454, %458 : vector<48x1xi1>
    %c33 = arith.constant 33 : index
    %c0_157 = arith.constant 0 : index
    %460 = vector.load %arg3[%c33, %c0_157] : memref<56x128xf32, #tpu.memory_space<vmem>>, vector<1x32xf32>
    %cst_158 = arith.constant 0.000000e+00 : f32
    %461 = vector.shape_cast %459 : vector<48x1xi1> to vector<48x1xi1>
    %462 = vector.broadcast %461 : vector<48x1xi1> to vector<48x32xi1>
    %463 = vector.broadcast %cst_158 : f32 to vector<48x32xf32>
    %464 = arith.select %462, %450, %463 : vector<48x32xi1>, vector<48x32xf32>
    %465 = vector.broadcast %460 : vector<1x32xf32> to vector<48x32xf32>
    %466 = arith.mulf %464, %465 : vector<48x32xf32>
    %467 = arith.addf %449, %466 : vector<48x32xf32>
    %c0_i32_159 = arith.constant 0 : i32
    %468 = vector.broadcast %c0_i32_159 : i32 to vector<48x1xi32>
    %469 = arith.addi %39, %468 : vector<48x1xi32>
    %c0_i32_160 = arith.constant 0 : i32
    %470 = vector.broadcast %c0_i32_160 : i32 to vector<48x1xi32>
    %471 = arith.cmpi sge, %469, %470 : vector<48x1xi32>
    %c0_i32_161 = arith.constant 0 : i32
    %472 = vector.broadcast %c0_i32_161 : i32 to vector<48x1xi32>
    %473 = arith.addi %39, %472 : vector<48x1xi32>
    %c24_i32_162 = arith.constant 24 : i32
    %474 = vector.broadcast %c24_i32_162 : i32 to vector<48x1xi32>
    %475 = arith.cmpi slt, %473, %474 : vector<48x1xi32>
    %476 = arith.andi %471, %475 : vector<48x1xi1>
    %c34 = arith.constant 34 : index
    %c0_163 = arith.constant 0 : index
    %477 = vector.load %arg3[%c34, %c0_163] : memref<56x128xf32, #tpu.memory_space<vmem>>, vector<1x32xf32>
    %cst_164 = arith.constant 0.000000e+00 : f32
    %478 = vector.shape_cast %476 : vector<48x1xi1> to vector<48x1xi1>
    %479 = vector.broadcast %478 : vector<48x1xi1> to vector<48x32xi1>
    %480 = vector.broadcast %cst_164 : f32 to vector<48x32xf32>
    %481 = arith.select %479, %412, %480 : vector<48x32xi1>, vector<48x32xf32>
    %482 = vector.broadcast %477 : vector<1x32xf32> to vector<48x32xf32>
    %483 = arith.mulf %481, %482 : vector<48x32xf32>
    %484 = arith.addf %467, %483 : vector<48x32xf32>
    %c47_i32 = arith.constant 47 : i32
    %485 = tpu.dynamic_rotate %412 by %c47_i32 dim 0 : vector<48x32xf32>, i32 -> vector<48x32xf32>
    %c1_i32_165 = arith.constant 1 : i32
    %486 = vector.broadcast %c1_i32_165 : i32 to vector<48x1xi32>
    %487 = arith.addi %39, %486 : vector<48x1xi32>
    %c0_i32_166 = arith.constant 0 : i32
    %488 = vector.broadcast %c0_i32_166 : i32 to vector<48x1xi32>
    %489 = arith.cmpi sge, %487, %488 : vector<48x1xi32>
    %c1_i32_167 = arith.constant 1 : i32
    %490 = vector.broadcast %c1_i32_167 : i32 to vector<48x1xi32>
    %491 = arith.addi %39, %490 : vector<48x1xi32>
    %c24_i32_168 = arith.constant 24 : i32
    %492 = vector.broadcast %c24_i32_168 : i32 to vector<48x1xi32>
    %493 = arith.cmpi slt, %491, %492 : vector<48x1xi32>
    %494 = arith.andi %489, %493 : vector<48x1xi1>
    %c35 = arith.constant 35 : index
    %c0_169 = arith.constant 0 : index
    %495 = vector.load %arg3[%c35, %c0_169] : memref<56x128xf32, #tpu.memory_space<vmem>>, vector<1x32xf32>
    %cst_170 = arith.constant 0.000000e+00 : f32
    %496 = vector.shape_cast %494 : vector<48x1xi1> to vector<48x1xi1>
    %497 = vector.broadcast %496 : vector<48x1xi1> to vector<48x32xi1>
    %498 = vector.broadcast %cst_170 : f32 to vector<48x32xf32>
    %499 = arith.select %497, %485, %498 : vector<48x32xi1>, vector<48x32xf32>
    %500 = vector.broadcast %495 : vector<1x32xf32> to vector<48x32xf32>
    %501 = arith.mulf %499, %500 : vector<48x32xf32>
    %502 = arith.addf %484, %501 : vector<48x32xf32>
    %c46_i32 = arith.constant 46 : i32
    %503 = tpu.dynamic_rotate %412 by %c46_i32 dim 0 : vector<48x32xf32>, i32 -> vector<48x32xf32>
    %c2_i32_171 = arith.constant 2 : i32
    %504 = vector.broadcast %c2_i32_171 : i32 to vector<48x1xi32>
    %505 = arith.addi %39, %504 : vector<48x1xi32>
    %c0_i32_172 = arith.constant 0 : i32
    %506 = vector.broadcast %c0_i32_172 : i32 to vector<48x1xi32>
    %507 = arith.cmpi sge, %505, %506 : vector<48x1xi32>
    %c2_i32_173 = arith.constant 2 : i32
    %508 = vector.broadcast %c2_i32_173 : i32 to vector<48x1xi32>
    %509 = arith.addi %39, %508 : vector<48x1xi32>
    %c24_i32_174 = arith.constant 24 : i32
    %510 = vector.broadcast %c24_i32_174 : i32 to vector<48x1xi32>
    %511 = arith.cmpi slt, %509, %510 : vector<48x1xi32>
    %512 = arith.andi %507, %511 : vector<48x1xi1>
    %c36 = arith.constant 36 : index
    %c0_175 = arith.constant 0 : index
    %513 = vector.load %arg3[%c36, %c0_175] : memref<56x128xf32, #tpu.memory_space<vmem>>, vector<1x32xf32>
    %cst_176 = arith.constant 0.000000e+00 : f32
    %514 = vector.shape_cast %512 : vector<48x1xi1> to vector<48x1xi1>
    %515 = vector.broadcast %514 : vector<48x1xi1> to vector<48x32xi1>
    %516 = vector.broadcast %cst_176 : f32 to vector<48x32xf32>
    %517 = arith.select %515, %503, %516 : vector<48x32xi1>, vector<48x32xf32>
    %518 = vector.broadcast %513 : vector<1x32xf32> to vector<48x32xf32>
    %519 = arith.mulf %517, %518 : vector<48x32xf32>
    %520 = arith.addf %502, %519 : vector<48x32xf32>
    %c45_i32 = arith.constant 45 : i32
    %521 = tpu.dynamic_rotate %412 by %c45_i32 dim 0 : vector<48x32xf32>, i32 -> vector<48x32xf32>
    %c3_i32_177 = arith.constant 3 : i32
    %522 = vector.broadcast %c3_i32_177 : i32 to vector<48x1xi32>
    %523 = arith.addi %39, %522 : vector<48x1xi32>
    %c0_i32_178 = arith.constant 0 : i32
    %524 = vector.broadcast %c0_i32_178 : i32 to vector<48x1xi32>
    %525 = arith.cmpi sge, %523, %524 : vector<48x1xi32>
    %c3_i32_179 = arith.constant 3 : i32
    %526 = vector.broadcast %c3_i32_179 : i32 to vector<48x1xi32>
    %527 = arith.addi %39, %526 : vector<48x1xi32>
    %c24_i32_180 = arith.constant 24 : i32
    %528 = vector.broadcast %c24_i32_180 : i32 to vector<48x1xi32>
    %529 = arith.cmpi slt, %527, %528 : vector<48x1xi32>
    %530 = arith.andi %525, %529 : vector<48x1xi1>
    %c37 = arith.constant 37 : index
    %c0_181 = arith.constant 0 : index
    %531 = vector.load %arg3[%c37, %c0_181] : memref<56x128xf32, #tpu.memory_space<vmem>>, vector<1x32xf32>
    %cst_182 = arith.constant 0.000000e+00 : f32
    %532 = vector.shape_cast %530 : vector<48x1xi1> to vector<48x1xi1>
    %533 = vector.broadcast %532 : vector<48x1xi1> to vector<48x32xi1>
    %534 = vector.broadcast %cst_182 : f32 to vector<48x32xf32>
    %535 = arith.select %533, %521, %534 : vector<48x32xi1>, vector<48x32xf32>
    %536 = vector.broadcast %531 : vector<1x32xf32> to vector<48x32xf32>
    %537 = arith.mulf %535, %536 : vector<48x32xf32>
    %538 = arith.addf %520, %537 : vector<48x32xf32>
    %c38 = arith.constant 38 : index
    %c0_183 = arith.constant 0 : index
    %539 = vector.load %arg3[%c38, %c0_183] : memref<56x128xf32, #tpu.memory_space<vmem>>, vector<1x32xf32>
    %540 = vector.broadcast %539 : vector<1x32xf32> to vector<48x32xf32>
    %541 = arith.addf %538, %540 : vector<48x32xf32>
    %cst_184 = arith.constant dense<0.000000e+00> : vector<2x32xf32>
    %542 = tpu.matmul %65, %541, %cst_184 {dimension_numbers = #tpu.dot_dimension_numbers<[1], [0], [0], [1], [0, 0, 1, 1], [], []>} : vector<2x48xf32>, vector<48x32xf32>, vector<2x32xf32> -> vector<2x32xf32>
    %cst_185 = arith.constant dense<0.000000e+00> : vector<48x32xf32>
    %543 = tpu.matmul %52, %542, %cst_185 {dimension_numbers = #tpu.dot_dimension_numbers<[1], [0], [0], [1], [0, 0, 1, 1], [], []>} : vector<48x2xf32>, vector<2x32xf32>, vector<48x32xf32> -> vector<48x32xf32>
    %cst_186 = arith.constant 0.0416666679 : f32
    %544 = vector.broadcast %cst_186 : f32 to vector<48x32xf32>
    %545 = arith.mulf %543, %544 : vector<48x32xf32>
    %546 = arith.subf %541, %545 : vector<48x32xf32>
    %547 = arith.mulf %546, %546 : vector<48x32xf32>
    %cst_187 = arith.constant dense<0.000000e+00> : vector<2x32xf32>
    %548 = tpu.matmul %65, %547, %cst_187 {dimension_numbers = #tpu.dot_dimension_numbers<[1], [0], [0], [1], [0, 0, 1, 1], [], []>} : vector<2x48xf32>, vector<48x32xf32>, vector<2x32xf32> -> vector<2x32xf32>
    %cst_188 = arith.constant dense<0.000000e+00> : vector<48x32xf32>
    %549 = tpu.matmul %52, %548, %cst_188 {dimension_numbers = #tpu.dot_dimension_numbers<[1], [0], [0], [1], [0, 0, 1, 1], [], []>} : vector<48x2xf32>, vector<2x32xf32>, vector<48x32xf32> -> vector<48x32xf32>
    %cst_189 = arith.constant 0.0416666679 : f32
    %550 = vector.broadcast %cst_189 : f32 to vector<48x32xf32>
    %551 = arith.mulf %549, %550 : vector<48x32xf32>
    %cst_190 = arith.constant 9.99999974E-6 : f32
    %552 = vector.broadcast %cst_190 : f32 to vector<48x32xf32>
    %553 = arith.addf %551, %552 : vector<48x32xf32>
    %554 = math.rsqrt %553 : vector<48x32xf32>
    %555 = arith.mulf %546, %554 : vector<48x32xf32>
    %c39 = arith.constant 39 : index
    %c0_191 = arith.constant 0 : index
    %556 = vector.load %arg3[%c39, %c0_191] : memref<56x128xf32, #tpu.memory_space<vmem>>, vector<1x32xf32>
    %557 = vector.broadcast %556 : vector<1x32xf32> to vector<48x32xf32>
    %558 = arith.mulf %555, %557 : vector<48x32xf32>
    %c40 = arith.constant 40 : index
    %c0_192 = arith.constant 0 : index
    %559 = vector.load %arg3[%c40, %c0_192] : memref<56x128xf32, #tpu.memory_space<vmem>>, vector<1x32xf32>
    %560 = vector.broadcast %559 : vector<1x32xf32> to vector<48x32xf32>
    %561 = arith.addf %558, %560 : vector<48x32xf32>
    %562 = arith.negf %561 : vector<48x32xf32>
    %563 = math.exp %562 : vector<48x32xf32>
    %cst_193 = arith.constant 1.000000e+00 : f32
    %564 = vector.broadcast %cst_193 : f32 to vector<48x32xf32>
    %565 = arith.addf %564, %563 : vector<48x32xf32>
    %566 = arith.divf %564, %565 : vector<48x32xf32>
    %567 = arith.mulf %561, %566 : vector<48x32xf32>
    %c224_194 = arith.constant 224 : index
    %c64_195 = arith.constant 64 : index
    %568 = vector.load %arg2[%c224_194, %c64_195] : memref<336x128xbf16, #tpu.memory_space<vmem>>, vector<32x32xbf16>
    %569 = arith.truncf %567 : vector<48x32xf32> to vector<48x32xbf16>
    %cst_196 = arith.constant dense<0.000000e+00> : vector<48x32xf32>
    %570 = tpu.matmul %569, %568, %cst_196 {dimension_numbers = #tpu.dot_dimension_numbers<[1], [0], [0], [1], [0, 0, 1, 1], [], []>} : vector<48x32xbf16>, vector<32x32xbf16>, vector<48x32xf32> -> vector<48x32xf32>
    %c41 = arith.constant 41 : index
    %c0_197 = arith.constant 0 : index
    %571 = vector.load %arg3[%c41, %c0_197] : memref<56x128xf32, #tpu.memory_space<vmem>>, vector<1x32xf32>
    %572 = vector.broadcast %571 : vector<1x32xf32> to vector<48x32xf32>
    %573 = arith.addf %570, %572 : vector<48x32xf32>
    %574 = arith.addf %172, %573 : vector<48x32xf32>
    %c42 = arith.constant 42 : index
    %c0_198 = arith.constant 0 : index
    %575 = vector.load %arg3[%c42, %c0_198] : memref<56x128xf32, #tpu.memory_space<vmem>>, vector<1x32xf32>
    %c43 = arith.constant 43 : index
    %c0_199 = arith.constant 0 : index
    %576 = vector.load %arg3[%c43, %c0_199] : memref<56x128xf32, #tpu.memory_space<vmem>>, vector<1x32xf32>
    %cst_200 = arith.constant dense<0.000000e+00> : vector<32xf32>
    %577 = vector.multi_reduction <add>, %373, %cst_200 [1] : vector<32x32xf32> to vector<32xf32>
    %578 = vector.shape_cast %577 : vector<32xf32> to vector<32x1xf32>
    %cst_201 = arith.constant 3.200000e+01 : f32
    %579 = vector.broadcast %cst_201 : f32 to vector<32x1xf32>
    %580 = arith.divf %578, %579 : vector<32x1xf32>
    %581 = vector.broadcast %580 : vector<32x1xf32> to vector<32x32xf32>
    %582 = arith.subf %373, %581 : vector<32x32xf32>
    %583 = arith.mulf %582, %582 : vector<32x32xf32>
    %cst_202 = arith.constant dense<0.000000e+00> : vector<32xf32>
    %584 = vector.multi_reduction <add>, %583, %cst_202 [1] : vector<32x32xf32> to vector<32xf32>
    %585 = vector.shape_cast %584 : vector<32xf32> to vector<32x1xf32>
    %cst_203 = arith.constant 3.200000e+01 : f32
    %586 = vector.broadcast %cst_203 : f32 to vector<32x1xf32>
    %587 = arith.divf %585, %586 : vector<32x1xf32>
    %cst_204 = arith.constant 9.99999974E-6 : f32
    %588 = vector.broadcast %cst_204 : f32 to vector<32x1xf32>
    %589 = arith.addf %587, %588 : vector<32x1xf32>
    %590 = math.rsqrt %589 : vector<32x1xf32>
    %591 = vector.broadcast %590 : vector<32x1xf32> to vector<32x32xf32>
    %592 = arith.mulf %582, %591 : vector<32x32xf32>
    %593 = vector.broadcast %575 : vector<1x32xf32> to vector<32x32xf32>
    %594 = arith.mulf %592, %593 : vector<32x32xf32>
    %595 = vector.broadcast %576 : vector<1x32xf32> to vector<32x32xf32>
    %596 = arith.addf %594, %595 : vector<32x32xf32>
    %597 = arith.truncf %596 : vector<32x32xf32> to vector<32x32xbf16>
    %598 = arith.truncf %574 : vector<48x32xf32> to vector<48x32xbf16>
    %cst_205 = arith.constant 0.000000e+00 : f32
    %599 = vector.broadcast %cst_205 : f32 to vector<32x32xf32>
    %c256 = arith.constant 256 : index
    %c0_206 = arith.constant 0 : index
    %600 = vector.load %arg2[%c256, %c0_206] : memref<336x128xbf16, #tpu.memory_space<vmem>>, vector<32x16xbf16>
    %c256_207 = arith.constant 256 : index
    %c64_208 = arith.constant 64 : index
    %601 = vector.load %arg2[%c256_207, %c64_208] : memref<336x128xbf16, #tpu.memory_space<vmem>>, vector<32x16xbf16>
    %c288 = arith.constant 288 : index
    %c0_209 = arith.constant 0 : index
    %602 = vector.load %arg2[%c288, %c0_209] : memref<336x128xbf16, #tpu.memory_space<vmem>>, vector<32x16xbf16>
    %c320 = arith.constant 320 : index
    %c0_210 = arith.constant 0 : index
    %603 = vector.load %arg2[%c320, %c0_210] : memref<336x128xbf16, #tpu.memory_space<vmem>>, vector<16x32xbf16>
    %c44 = arith.constant 44 : index
    %c0_211 = arith.constant 0 : index
    %604 = vector.load %arg3[%c44, %c0_211] : memref<56x128xf32, #tpu.memory_space<vmem>>, vector<1x16xf32>
    %c45 = arith.constant 45 : index
    %c0_212 = arith.constant 0 : index
    %605 = vector.load %arg3[%c45, %c0_212] : memref<56x128xf32, #tpu.memory_space<vmem>>, vector<1x16xf32>
    %c46 = arith.constant 46 : index
    %c0_213 = arith.constant 0 : index
    %606 = vector.load %arg3[%c46, %c0_213] : memref<56x128xf32, #tpu.memory_space<vmem>>, vector<1x16xf32>
    %cst_214 = arith.constant dense<0.000000e+00> : vector<32x16xf32>
    %607 = tpu.matmul %597, %600, %cst_214 {dimension_numbers = #tpu.dot_dimension_numbers<[1], [0], [0], [1], [0, 0, 1, 1], [], []>} : vector<32x32xbf16>, vector<32x16xbf16>, vector<32x16xf32> -> vector<32x16xf32>
    %608 = vector.broadcast %604 : vector<1x16xf32> to vector<32x16xf32>
    %609 = arith.addf %607, %608 : vector<32x16xf32>
    %cst_215 = arith.constant dense<0.000000e+00> : vector<48x16xf32>
    %610 = tpu.matmul %598, %601, %cst_215 {dimension_numbers = #tpu.dot_dimension_numbers<[1], [0], [0], [1], [0, 0, 1, 1], [], []>} : vector<48x32xbf16>, vector<32x16xbf16>, vector<48x16xf32> -> vector<48x16xf32>
    %611 = vector.broadcast %605 : vector<1x16xf32> to vector<48x16xf32>
    %612 = arith.addf %610, %611 : vector<48x16xf32>
    %cst_216 = arith.constant dense<0.000000e+00> : vector<48x16xf32>
    %613 = tpu.matmul %598, %602, %cst_216 {dimension_numbers = #tpu.dot_dimension_numbers<[1], [0], [0], [1], [0, 0, 1, 1], [], []>} : vector<48x32xbf16>, vector<32x16xbf16>, vector<48x16xf32> -> vector<48x16xf32>
    %614 = vector.broadcast %606 : vector<1x16xf32> to vector<48x16xf32>
    %615 = arith.addf %613, %614 : vector<48x16xf32>
    %616 = arith.truncf %609 : vector<32x16xf32> to vector<32x16xbf16>
    %617 = arith.truncf %612 : vector<48x16xf32> to vector<48x16xbf16>
    %cst_217 = arith.constant dense<0.000000e+00> : vector<32x48xf32>
    %618 = tpu.matmul %616, %617, %cst_217 {dimension_numbers = #tpu.dot_dimension_numbers<[1], [1], [0], [0], [0, 0, 1, 0], [], []>} : vector<32x16xbf16>, vector<48x16xbf16>, vector<32x48xf32> -> vector<32x48xf32>
    %cst_218 = arith.constant -1.000000e+30 : f32
    %619 = vector.broadcast %cst_218 : f32 to vector<32x48xf32>
    %620 = arith.select %90, %618, %619 : vector<32x48xi1>, vector<32x48xf32>
    %cst_219 = arith.constant dense<0xFF800000> : vector<32xf32>
    %621 = vector.multi_reduction <maximumf>, %620, %cst_219 [1] : vector<32x48xf32> to vector<32xf32>
    %622 = vector.shape_cast %621 : vector<32xf32> to vector<32x1xf32>
    %623 = vector.broadcast %622 : vector<32x1xf32> to vector<32x48xf32>
    %624 = arith.subf %620, %623 : vector<32x48xf32>
    %625 = math.exp %624 : vector<32x48xf32>
    %cst_220 = arith.constant dense<0.000000e+00> : vector<32xf32>
    %626 = vector.multi_reduction <add>, %625, %cst_220 [1] : vector<32x48xf32> to vector<32xf32>
    %627 = vector.shape_cast %626 : vector<32xf32> to vector<32x1xf32>
    %628 = vector.broadcast %627 : vector<32x1xf32> to vector<32x48xf32>
    %629 = arith.divf %625, %628 : vector<32x48xf32>
    %630 = arith.truncf %629 : vector<32x48xf32> to vector<32x48xbf16>
    %631 = arith.truncf %615 : vector<48x16xf32> to vector<48x16xbf16>
    %cst_221 = arith.constant dense<0.000000e+00> : vector<32x16xf32>
    %632 = tpu.matmul %630, %631, %cst_221 {dimension_numbers = #tpu.dot_dimension_numbers<[1], [0], [0], [1], [0, 0, 1, 1], [], []>} : vector<32x48xbf16>, vector<48x16xbf16>, vector<32x16xf32> -> vector<32x16xf32>
    %633 = arith.truncf %632 : vector<32x16xf32> to vector<32x16xbf16>
    %cst_222 = arith.constant dense<0.000000e+00> : vector<32x32xf32>
    %634 = tpu.matmul %633, %603, %cst_222 {dimension_numbers = #tpu.dot_dimension_numbers<[1], [0], [0], [1], [0, 0, 1, 1], [], []>} : vector<32x16xbf16>, vector<16x32xbf16>, vector<32x32xf32> -> vector<32x32xf32>
    %635 = arith.addf %599, %634 : vector<32x32xf32>
    %c256_223 = arith.constant 256 : index
    %c16_224 = arith.constant 16 : index
    %636 = vector.load %arg2[%c256_223, %c16_224] : memref<336x128xbf16, #tpu.memory_space<vmem>>, vector<32x16xbf16>
    %c256_225 = arith.constant 256 : index
    %c80 = arith.constant 80 : index
    %637 = vector.load %arg2[%c256_225, %c80] : memref<336x128xbf16, #tpu.memory_space<vmem>>, vector<32x16xbf16>
    %c288_226 = arith.constant 288 : index
    %c16_227 = arith.constant 16 : index
    %638 = vector.load %arg2[%c288_226, %c16_227] : memref<336x128xbf16, #tpu.memory_space<vmem>>, vector<32x16xbf16>
    %c320_228 = arith.constant 320 : index
    %c32_229 = arith.constant 32 : index
    %639 = vector.load %arg2[%c320_228, %c32_229] : memref<336x128xbf16, #tpu.memory_space<vmem>>, vector<16x32xbf16>
    %c44_230 = arith.constant 44 : index
    %c16_231 = arith.constant 16 : index
    %640 = vector.load %arg3[%c44_230, %c16_231] : memref<56x128xf32, #tpu.memory_space<vmem>>, vector<1x16xf32>
    %c45_232 = arith.constant 45 : index
    %c16_233 = arith.constant 16 : index
    %641 = vector.load %arg3[%c45_232, %c16_233] : memref<56x128xf32, #tpu.memory_space<vmem>>, vector<1x16xf32>
    %c46_234 = arith.constant 46 : index
    %c16_235 = arith.constant 16 : index
    %642 = vector.load %arg3[%c46_234, %c16_235] : memref<56x128xf32, #tpu.memory_space<vmem>>, vector<1x16xf32>
    %cst_236 = arith.constant dense<0.000000e+00> : vector<32x16xf32>
    %643 = tpu.matmul %597, %636, %cst_236 {dimension_numbers = #tpu.dot_dimension_numbers<[1], [0], [0], [1], [0, 0, 1, 1], [], []>} : vector<32x32xbf16>, vector<32x16xbf16>, vector<32x16xf32> -> vector<32x16xf32>
    %644 = vector.broadcast %640 : vector<1x16xf32> to vector<32x16xf32>
    %645 = arith.addf %643, %644 : vector<32x16xf32>
    %cst_237 = arith.constant dense<0.000000e+00> : vector<48x16xf32>
    %646 = tpu.matmul %598, %637, %cst_237 {dimension_numbers = #tpu.dot_dimension_numbers<[1], [0], [0], [1], [0, 0, 1, 1], [], []>} : vector<48x32xbf16>, vector<32x16xbf16>, vector<48x16xf32> -> vector<48x16xf32>
    %647 = vector.broadcast %641 : vector<1x16xf32> to vector<48x16xf32>
    %648 = arith.addf %646, %647 : vector<48x16xf32>
    %cst_238 = arith.constant dense<0.000000e+00> : vector<48x16xf32>
    %649 = tpu.matmul %598, %638, %cst_238 {dimension_numbers = #tpu.dot_dimension_numbers<[1], [0], [0], [1], [0, 0, 1, 1], [], []>} : vector<48x32xbf16>, vector<32x16xbf16>, vector<48x16xf32> -> vector<48x16xf32>
    %650 = vector.broadcast %642 : vector<1x16xf32> to vector<48x16xf32>
    %651 = arith.addf %649, %650 : vector<48x16xf32>
    %652 = arith.truncf %645 : vector<32x16xf32> to vector<32x16xbf16>
    %653 = arith.truncf %648 : vector<48x16xf32> to vector<48x16xbf16>
    %cst_239 = arith.constant dense<0.000000e+00> : vector<32x48xf32>
    %654 = tpu.matmul %652, %653, %cst_239 {dimension_numbers = #tpu.dot_dimension_numbers<[1], [1], [0], [0], [0, 0, 1, 0], [], []>} : vector<32x16xbf16>, vector<48x16xbf16>, vector<32x48xf32> -> vector<32x48xf32>
    %cst_240 = arith.constant -1.000000e+30 : f32
    %655 = vector.broadcast %cst_240 : f32 to vector<32x48xf32>
    %656 = arith.select %90, %654, %655 : vector<32x48xi1>, vector<32x48xf32>
    %cst_241 = arith.constant dense<0xFF800000> : vector<32xf32>
    %657 = vector.multi_reduction <maximumf>, %656, %cst_241 [1] : vector<32x48xf32> to vector<32xf32>
    %658 = vector.shape_cast %657 : vector<32xf32> to vector<32x1xf32>
    %659 = vector.broadcast %658 : vector<32x1xf32> to vector<32x48xf32>
    %660 = arith.subf %656, %659 : vector<32x48xf32>
    %661 = math.exp %660 : vector<32x48xf32>
    %cst_242 = arith.constant dense<0.000000e+00> : vector<32xf32>
    %662 = vector.multi_reduction <add>, %661, %cst_242 [1] : vector<32x48xf32> to vector<32xf32>
    %663 = vector.shape_cast %662 : vector<32xf32> to vector<32x1xf32>
    %664 = vector.broadcast %663 : vector<32x1xf32> to vector<32x48xf32>
    %665 = arith.divf %661, %664 : vector<32x48xf32>
    %666 = arith.truncf %665 : vector<32x48xf32> to vector<32x48xbf16>
    %667 = arith.truncf %651 : vector<48x16xf32> to vector<48x16xbf16>
    %cst_243 = arith.constant dense<0.000000e+00> : vector<32x16xf32>
    %668 = tpu.matmul %666, %667, %cst_243 {dimension_numbers = #tpu.dot_dimension_numbers<[1], [0], [0], [1], [0, 0, 1, 1], [], []>} : vector<32x48xbf16>, vector<48x16xbf16>, vector<32x16xf32> -> vector<32x16xf32>
    %669 = arith.truncf %668 : vector<32x16xf32> to vector<32x16xbf16>
    %cst_244 = arith.constant dense<0.000000e+00> : vector<32x32xf32>
    %670 = tpu.matmul %669, %639, %cst_244 {dimension_numbers = #tpu.dot_dimension_numbers<[1], [0], [0], [1], [0, 0, 1, 1], [], []>} : vector<32x16xbf16>, vector<16x32xbf16>, vector<32x32xf32> -> vector<32x32xf32>
    %671 = arith.addf %635, %670 : vector<32x32xf32>
    %c256_245 = arith.constant 256 : index
    %c32_246 = arith.constant 32 : index
    %672 = vector.load %arg2[%c256_245, %c32_246] : memref<336x128xbf16, #tpu.memory_space<vmem>>, vector<32x16xbf16>
    %c256_247 = arith.constant 256 : index
    %c96_248 = arith.constant 96 : index
    %673 = vector.load %arg2[%c256_247, %c96_248] : memref<336x128xbf16, #tpu.memory_space<vmem>>, vector<32x16xbf16>
    %c288_249 = arith.constant 288 : index
    %c32_250 = arith.constant 32 : index
    %674 = vector.load %arg2[%c288_249, %c32_250] : memref<336x128xbf16, #tpu.memory_space<vmem>>, vector<32x16xbf16>
    %c320_251 = arith.constant 320 : index
    %c64_252 = arith.constant 64 : index
    %675 = vector.load %arg2[%c320_251, %c64_252] : memref<336x128xbf16, #tpu.memory_space<vmem>>, vector<16x32xbf16>
    %c44_253 = arith.constant 44 : index
    %c32_254 = arith.constant 32 : index
    %676 = vector.load %arg3[%c44_253, %c32_254] : memref<56x128xf32, #tpu.memory_space<vmem>>, vector<1x16xf32>
    %c45_255 = arith.constant 45 : index
    %c32_256 = arith.constant 32 : index
    %677 = vector.load %arg3[%c45_255, %c32_256] : memref<56x128xf32, #tpu.memory_space<vmem>>, vector<1x16xf32>
    %c46_257 = arith.constant 46 : index
    %c32_258 = arith.constant 32 : index
    %678 = vector.load %arg3[%c46_257, %c32_258] : memref<56x128xf32, #tpu.memory_space<vmem>>, vector<1x16xf32>
    %cst_259 = arith.constant dense<0.000000e+00> : vector<32x16xf32>
    %679 = tpu.matmul %597, %672, %cst_259 {dimension_numbers = #tpu.dot_dimension_numbers<[1], [0], [0], [1], [0, 0, 1, 1], [], []>} : vector<32x32xbf16>, vector<32x16xbf16>, vector<32x16xf32> -> vector<32x16xf32>
    %680 = vector.broadcast %676 : vector<1x16xf32> to vector<32x16xf32>
    %681 = arith.addf %679, %680 : vector<32x16xf32>
    %cst_260 = arith.constant dense<0.000000e+00> : vector<48x16xf32>
    %682 = tpu.matmul %598, %673, %cst_260 {dimension_numbers = #tpu.dot_dimension_numbers<[1], [0], [0], [1], [0, 0, 1, 1], [], []>} : vector<48x32xbf16>, vector<32x16xbf16>, vector<48x16xf32> -> vector<48x16xf32>
    %683 = vector.broadcast %677 : vector<1x16xf32> to vector<48x16xf32>
    %684 = arith.addf %682, %683 : vector<48x16xf32>
    %cst_261 = arith.constant dense<0.000000e+00> : vector<48x16xf32>
    %685 = tpu.matmul %598, %674, %cst_261 {dimension_numbers = #tpu.dot_dimension_numbers<[1], [0], [0], [1], [0, 0, 1, 1], [], []>} : vector<48x32xbf16>, vector<32x16xbf16>, vector<48x16xf32> -> vector<48x16xf32>
    %686 = vector.broadcast %678 : vector<1x16xf32> to vector<48x16xf32>
    %687 = arith.addf %685, %686 : vector<48x16xf32>
    %688 = arith.truncf %681 : vector<32x16xf32> to vector<32x16xbf16>
    %689 = arith.truncf %684 : vector<48x16xf32> to vector<48x16xbf16>
    %cst_262 = arith.constant dense<0.000000e+00> : vector<32x48xf32>
    %690 = tpu.matmul %688, %689, %cst_262 {dimension_numbers = #tpu.dot_dimension_numbers<[1], [1], [0], [0], [0, 0, 1, 0], [], []>} : vector<32x16xbf16>, vector<48x16xbf16>, vector<32x48xf32> -> vector<32x48xf32>
    %cst_263 = arith.constant -1.000000e+30 : f32
    %691 = vector.broadcast %cst_263 : f32 to vector<32x48xf32>
    %692 = arith.select %90, %690, %691 : vector<32x48xi1>, vector<32x48xf32>
    %cst_264 = arith.constant dense<0xFF800000> : vector<32xf32>
    %693 = vector.multi_reduction <maximumf>, %692, %cst_264 [1] : vector<32x48xf32> to vector<32xf32>
    %694 = vector.shape_cast %693 : vector<32xf32> to vector<32x1xf32>
    %695 = vector.broadcast %694 : vector<32x1xf32> to vector<32x48xf32>
    %696 = arith.subf %692, %695 : vector<32x48xf32>
    %697 = math.exp %696 : vector<32x48xf32>
    %cst_265 = arith.constant dense<0.000000e+00> : vector<32xf32>
    %698 = vector.multi_reduction <add>, %697, %cst_265 [1] : vector<32x48xf32> to vector<32xf32>
    %699 = vector.shape_cast %698 : vector<32xf32> to vector<32x1xf32>
    %700 = vector.broadcast %699 : vector<32x1xf32> to vector<32x48xf32>
    %701 = arith.divf %697, %700 : vector<32x48xf32>
    %702 = arith.truncf %701 : vector<32x48xf32> to vector<32x48xbf16>
    %703 = arith.truncf %687 : vector<48x16xf32> to vector<48x16xbf16>
    %cst_266 = arith.constant dense<0.000000e+00> : vector<32x16xf32>
    %704 = tpu.matmul %702, %703, %cst_266 {dimension_numbers = #tpu.dot_dimension_numbers<[1], [0], [0], [1], [0, 0, 1, 1], [], []>} : vector<32x48xbf16>, vector<48x16xbf16>, vector<32x16xf32> -> vector<32x16xf32>
    %705 = arith.truncf %704 : vector<32x16xf32> to vector<32x16xbf16>
    %cst_267 = arith.constant dense<0.000000e+00> : vector<32x32xf32>
    %706 = tpu.matmul %705, %675, %cst_267 {dimension_numbers = #tpu.dot_dimension_numbers<[1], [0], [0], [1], [0, 0, 1, 1], [], []>} : vector<32x16xbf16>, vector<16x32xbf16>, vector<32x32xf32> -> vector<32x32xf32>
    %707 = arith.addf %671, %706 : vector<32x32xf32>
    %c256_268 = arith.constant 256 : index
    %c48 = arith.constant 48 : index
    %708 = vector.load %arg2[%c256_268, %c48] : memref<336x128xbf16, #tpu.memory_space<vmem>>, vector<32x16xbf16>
    %c256_269 = arith.constant 256 : index
    %c112 = arith.constant 112 : index
    %709 = vector.load %arg2[%c256_269, %c112] : memref<336x128xbf16, #tpu.memory_space<vmem>>, vector<32x16xbf16>
    %c288_270 = arith.constant 288 : index
    %c48_271 = arith.constant 48 : index
    %710 = vector.load %arg2[%c288_270, %c48_271] : memref<336x128xbf16, #tpu.memory_space<vmem>>, vector<32x16xbf16>
    %c320_272 = arith.constant 320 : index
    %c96_273 = arith.constant 96 : index
    %711 = vector.load %arg2[%c320_272, %c96_273] : memref<336x128xbf16, #tpu.memory_space<vmem>>, vector<16x32xbf16>
    %c44_274 = arith.constant 44 : index
    %c48_275 = arith.constant 48 : index
    %712 = vector.load %arg3[%c44_274, %c48_275] : memref<56x128xf32, #tpu.memory_space<vmem>>, vector<1x16xf32>
    %c45_276 = arith.constant 45 : index
    %c48_277 = arith.constant 48 : index
    %713 = vector.load %arg3[%c45_276, %c48_277] : memref<56x128xf32, #tpu.memory_space<vmem>>, vector<1x16xf32>
    %c46_278 = arith.constant 46 : index
    %c48_279 = arith.constant 48 : index
    %714 = vector.load %arg3[%c46_278, %c48_279] : memref<56x128xf32, #tpu.memory_space<vmem>>, vector<1x16xf32>
    %cst_280 = arith.constant dense<0.000000e+00> : vector<32x16xf32>
    %715 = tpu.matmul %597, %708, %cst_280 {dimension_numbers = #tpu.dot_dimension_numbers<[1], [0], [0], [1], [0, 0, 1, 1], [], []>} : vector<32x32xbf16>, vector<32x16xbf16>, vector<32x16xf32> -> vector<32x16xf32>
    %716 = vector.broadcast %712 : vector<1x16xf32> to vector<32x16xf32>
    %717 = arith.addf %715, %716 : vector<32x16xf32>
    %cst_281 = arith.constant dense<0.000000e+00> : vector<48x16xf32>
    %718 = tpu.matmul %598, %709, %cst_281 {dimension_numbers = #tpu.dot_dimension_numbers<[1], [0], [0], [1], [0, 0, 1, 1], [], []>} : vector<48x32xbf16>, vector<32x16xbf16>, vector<48x16xf32> -> vector<48x16xf32>
    %719 = vector.broadcast %713 : vector<1x16xf32> to vector<48x16xf32>
    %720 = arith.addf %718, %719 : vector<48x16xf32>
    %cst_282 = arith.constant dense<0.000000e+00> : vector<48x16xf32>
    %721 = tpu.matmul %598, %710, %cst_282 {dimension_numbers = #tpu.dot_dimension_numbers<[1], [0], [0], [1], [0, 0, 1, 1], [], []>} : vector<48x32xbf16>, vector<32x16xbf16>, vector<48x16xf32> -> vector<48x16xf32>
    %722 = vector.broadcast %714 : vector<1x16xf32> to vector<48x16xf32>
    %723 = arith.addf %721, %722 : vector<48x16xf32>
    %724 = arith.truncf %717 : vector<32x16xf32> to vector<32x16xbf16>
    %725 = arith.truncf %720 : vector<48x16xf32> to vector<48x16xbf16>
    %cst_283 = arith.constant dense<0.000000e+00> : vector<32x48xf32>
    %726 = tpu.matmul %724, %725, %cst_283 {dimension_numbers = #tpu.dot_dimension_numbers<[1], [1], [0], [0], [0, 0, 1, 0], [], []>} : vector<32x16xbf16>, vector<48x16xbf16>, vector<32x48xf32> -> vector<32x48xf32>
    %cst_284 = arith.constant -1.000000e+30 : f32
    %727 = vector.broadcast %cst_284 : f32 to vector<32x48xf32>
    %728 = arith.select %90, %726, %727 : vector<32x48xi1>, vector<32x48xf32>
    %cst_285 = arith.constant dense<0xFF800000> : vector<32xf32>
    %729 = vector.multi_reduction <maximumf>, %728, %cst_285 [1] : vector<32x48xf32> to vector<32xf32>
    %730 = vector.shape_cast %729 : vector<32xf32> to vector<32x1xf32>
    %731 = vector.broadcast %730 : vector<32x1xf32> to vector<32x48xf32>
    %732 = arith.subf %728, %731 : vector<32x48xf32>
    %733 = math.exp %732 : vector<32x48xf32>
    %cst_286 = arith.constant dense<0.000000e+00> : vector<32xf32>
    %734 = vector.multi_reduction <add>, %733, %cst_286 [1] : vector<32x48xf32> to vector<32xf32>
    %735 = vector.shape_cast %734 : vector<32xf32> to vector<32x1xf32>
    %736 = vector.broadcast %735 : vector<32x1xf32> to vector<32x48xf32>
    %737 = arith.divf %733, %736 : vector<32x48xf32>
    %738 = arith.truncf %737 : vector<32x48xf32> to vector<32x48xbf16>
    %739 = arith.truncf %723 : vector<48x16xf32> to vector<48x16xbf16>
    %cst_287 = arith.constant dense<0.000000e+00> : vector<32x16xf32>
    %740 = tpu.matmul %738, %739, %cst_287 {dimension_numbers = #tpu.dot_dimension_numbers<[1], [0], [0], [1], [0, 0, 1, 1], [], []>} : vector<32x48xbf16>, vector<48x16xbf16>, vector<32x16xf32> -> vector<32x16xf32>
    %741 = arith.truncf %740 : vector<32x16xf32> to vector<32x16xbf16>
    %cst_288 = arith.constant dense<0.000000e+00> : vector<32x32xf32>
    %742 = tpu.matmul %741, %711, %cst_288 {dimension_numbers = #tpu.dot_dimension_numbers<[1], [0], [0], [1], [0, 0, 1, 1], [], []>} : vector<32x16xbf16>, vector<16x32xbf16>, vector<32x32xf32> -> vector<32x32xf32>
    %743 = arith.addf %707, %742 : vector<32x32xf32>
    %c47 = arith.constant 47 : index
    %c0_289 = arith.constant 0 : index
    %744 = vector.load %arg3[%c47, %c0_289] : memref<56x128xf32, #tpu.memory_space<vmem>>, vector<1x32xf32>
    %745 = vector.broadcast %744 : vector<1x32xf32> to vector<32x32xf32>
    %746 = arith.addf %743, %745 : vector<32x32xf32>
    %747 = arith.addf %373, %746 : vector<32x32xf32>
    %c8 = arith.constant 8 : index
    %c0_290 = arith.constant 0 : index
    %748 = vector.load %arg3[%c8, %c0_290] : memref<56x128xf32, #tpu.memory_space<vmem>>, vector<1x32xf32>
    %c9 = arith.constant 9 : index
    %c0_291 = arith.constant 0 : index
    %749 = vector.load %arg3[%c9, %c0_291] : memref<56x128xf32, #tpu.memory_space<vmem>>, vector<1x32xf32>
    %cst_292 = arith.constant dense<0.000000e+00> : vector<32xf32>
    %750 = vector.multi_reduction <add>, %747, %cst_292 [1] : vector<32x32xf32> to vector<32xf32>
    %751 = vector.shape_cast %750 : vector<32xf32> to vector<32x1xf32>
    %cst_293 = arith.constant 3.200000e+01 : f32
    %752 = vector.broadcast %cst_293 : f32 to vector<32x1xf32>
    %753 = arith.divf %751, %752 : vector<32x1xf32>
    %754 = vector.broadcast %753 : vector<32x1xf32> to vector<32x32xf32>
    %755 = arith.subf %747, %754 : vector<32x32xf32>
    %756 = arith.mulf %755, %755 : vector<32x32xf32>
    %cst_294 = arith.constant dense<0.000000e+00> : vector<32xf32>
    %757 = vector.multi_reduction <add>, %756, %cst_294 [1] : vector<32x32xf32> to vector<32xf32>
    %758 = vector.shape_cast %757 : vector<32xf32> to vector<32x1xf32>
    %cst_295 = arith.constant 3.200000e+01 : f32
    %759 = vector.broadcast %cst_295 : f32 to vector<32x1xf32>
    %760 = arith.divf %758, %759 : vector<32x1xf32>
    %cst_296 = arith.constant 9.99999974E-6 : f32
    %761 = vector.broadcast %cst_296 : f32 to vector<32x1xf32>
    %762 = arith.addf %760, %761 : vector<32x1xf32>
    %763 = math.rsqrt %762 : vector<32x1xf32>
    %764 = vector.broadcast %763 : vector<32x1xf32> to vector<32x32xf32>
    %765 = arith.mulf %755, %764 : vector<32x32xf32>
    %766 = vector.broadcast %748 : vector<1x32xf32> to vector<32x32xf32>
    %767 = arith.mulf %765, %766 : vector<32x32xf32>
    %768 = vector.broadcast %749 : vector<1x32xf32> to vector<32x32xf32>
    %769 = arith.addf %767, %768 : vector<32x32xf32>
    %c128 = arith.constant 128 : index
    %c0_297 = arith.constant 0 : index
    %770 = vector.load %arg2[%c128, %c0_297] : memref<336x128xbf16, #tpu.memory_space<vmem>>, vector<32x128xbf16>
    %771 = arith.truncf %769 : vector<32x32xf32> to vector<32x32xbf16>
    %cst_298 = arith.constant dense<0.000000e+00> : vector<32x128xf32>
    %772 = tpu.matmul %771, %770, %cst_298 {dimension_numbers = #tpu.dot_dimension_numbers<[1], [0], [0], [1], [0, 0, 1, 1], [], []>} : vector<32x32xbf16>, vector<32x128xbf16>, vector<32x128xf32> -> vector<32x128xf32>
    %c10 = arith.constant 10 : index
    %c0_299 = arith.constant 0 : index
    %773 = vector.load %arg3[%c10, %c0_299] : memref<56x128xf32, #tpu.memory_space<vmem>>, vector<1x128xf32>
    %774 = vector.broadcast %773 : vector<1x128xf32> to vector<32x128xf32>
    %775 = arith.addf %772, %774 : vector<32x128xf32>
    %776 = arith.negf %775 : vector<32x128xf32>
    %777 = math.exp %776 : vector<32x128xf32>
    %cst_300 = arith.constant 1.000000e+00 : f32
    %778 = vector.broadcast %cst_300 : f32 to vector<32x128xf32>
    %779 = arith.addf %778, %777 : vector<32x128xf32>
    %780 = arith.divf %778, %779 : vector<32x128xf32>
    %781 = arith.mulf %775, %780 : vector<32x128xf32>
    %782 = arith.truncf %781 : vector<32x128xf32> to vector<32x128xbf16>
    %c160 = arith.constant 160 : index
    %c0_301 = arith.constant 0 : index
    %783 = vector.load %arg2[%c160, %c0_301] : memref<336x128xbf16, #tpu.memory_space<vmem>>, vector<32x128xbf16>
    %cst_302 = arith.constant dense<0.000000e+00> : vector<32x32xf32>
    %784 = tpu.matmul %782, %783, %cst_302 {dimension_numbers = #tpu.dot_dimension_numbers<[1], [1], [0], [0], [0, 0, 1, 0], [], []>} : vector<32x128xbf16>, vector<32x128xbf16>, vector<32x32xf32> -> vector<32x32xf32>
    %c11 = arith.constant 11 : index
    %c0_303 = arith.constant 0 : index
    %785 = vector.load %arg3[%c11, %c0_303] : memref<56x128xf32, #tpu.memory_space<vmem>>, vector<1x32xf32>
    %786 = vector.broadcast %785 : vector<1x32xf32> to vector<32x32xf32>
    %787 = arith.addf %784, %786 : vector<32x32xf32>
    %788 = arith.addf %747, %787 : vector<32x32xf32>
    %c48_304 = arith.constant 48 : index
    %c0_305 = arith.constant 0 : index
    %789 = vector.load %arg3[%c48_304, %c0_305] : memref<56x128xf32, #tpu.memory_space<vmem>>, vector<1x32xf32>
    %c49 = arith.constant 49 : index
    %c0_306 = arith.constant 0 : index
    %790 = vector.load %arg3[%c49, %c0_306] : memref<56x128xf32, #tpu.memory_space<vmem>>, vector<1x32xf32>
    %cst_307 = arith.constant dense<0.000000e+00> : vector<32xf32>
    %791 = vector.multi_reduction <add>, %788, %cst_307 [1] : vector<32x32xf32> to vector<32xf32>
    %792 = vector.shape_cast %791 : vector<32xf32> to vector<32x1xf32>
    %cst_308 = arith.constant 3.200000e+01 : f32
    %793 = vector.broadcast %cst_308 : f32 to vector<32x1xf32>
    %794 = arith.divf %792, %793 : vector<32x1xf32>
    %795 = vector.broadcast %794 : vector<32x1xf32> to vector<32x32xf32>
    %796 = arith.subf %788, %795 : vector<32x32xf32>
    %797 = arith.mulf %796, %796 : vector<32x32xf32>
    %cst_309 = arith.constant dense<0.000000e+00> : vector<32xf32>
    %798 = vector.multi_reduction <add>, %797, %cst_309 [1] : vector<32x32xf32> to vector<32xf32>
    %799 = vector.shape_cast %798 : vector<32xf32> to vector<32x1xf32>
    %cst_310 = arith.constant 3.200000e+01 : f32
    %800 = vector.broadcast %cst_310 : f32 to vector<32x1xf32>
    %801 = arith.divf %799, %800 : vector<32x1xf32>
    %cst_311 = arith.constant 9.99999974E-6 : f32
    %802 = vector.broadcast %cst_311 : f32 to vector<32x1xf32>
    %803 = arith.addf %801, %802 : vector<32x1xf32>
    %804 = math.rsqrt %803 : vector<32x1xf32>
    %805 = vector.broadcast %804 : vector<32x1xf32> to vector<32x32xf32>
    %806 = arith.mulf %796, %805 : vector<32x32xf32>
    %807 = vector.broadcast %789 : vector<1x32xf32> to vector<32x32xf32>
    %808 = arith.mulf %806, %807 : vector<32x32xf32>
    %809 = vector.broadcast %790 : vector<1x32xf32> to vector<32x32xf32>
    %810 = arith.addf %808, %809 : vector<32x32xf32>
    %c0_312 = arith.constant 0 : index
    %c0_313 = arith.constant 0 : index
    %811 = vector.load %arg4[%c0_312, %c0_313] : memref<32x32xf32, #tpu.memory_space<vmem>>, vector<32x32xf32>
    tpu.vector_store %arg4[%c0_312, %c0_313], %810 {strides = array<i32>} : memref<32x32xf32, #tpu.memory_space<vmem>>, vector<32x32xf32>,
    return
  }
}

</mosaic_0001>

<llo_original>
// kernel: cross_conformer_block.1
$region0: #{cross_conformer_block.1}
  #allocation0 [shape = 'u32[]', space=smem, size = 0x4, offset = 0x4, fixed_abs, tag = 'smem constant byte address 0x4 - core index']
  #allocation1 [shape = 'u32[144,128]{1,0:T(1,128)}', space=vmem, size = 0x12000, scoped, tag = 'internal scratch']
  %s0 = inlined_call_operand.hbm [shape: f32[32,32], index: 0, kind: input, shape index: {}]
  %s1 = inlined_call_operand.hbm [shape: f32[48,32], index: 1, kind: input, shape index: {}]
  %s2 = inlined_call_operand.hbm [shape: bf16[336,128], index: 2, kind: input, shape index: {}]
  %s3 = inlined_call_operand.hbm [shape: f32[56,128], index: 3, kind: input, shape index: {}]
  %s4 = inlined_call_operand.hbm [shape: f32[32,32], index: 4, kind: output, shape index: {}]
  %s5 = sld [smem:[#allocation0]]
  $region42: #{cross_conformer_block.1} parent=0
    _
  %s7 = ssub.s32 1, %s5
  %s8 = scalar_select 0, %s7, %s5
  $region1: #{cross_conformer_block.1} parent=0
    #allocation2 [shape = 'u8[16384]{0}', space=vmem, size = 0x4000, scoped, tag = 'input window, operand 0, single buffered']
    #allocation3 [shape = 's32[1]{0}', space=sflag, size = 0x4, scoped, tag = 'scoped memory for cross_conformer_block.1']
    #allocation4 [shape = 's32[1]{0}', space=sflag, size = 0x4, scoped, tag = 'scoped memory for cross_conformer_block.1']
    #allocation5 [shape = 'u8[24576]{0}', space=vmem, size = 0x6000, scoped, tag = 'input window, operand 1, single buffered']
    #allocation6 [shape = 's32[1]{0}', space=sflag, size = 0x4, scoped, tag = 'scoped memory for cross_conformer_block.1']
    #allocation7 [shape = 'u8[86016]{0}', space=vmem, size = 0x15000, scoped, tag = 'input window, operand 2, single buffered']
    #allocation8 [shape = 'u8[28672]{0}', space=vmem, size = 0x7000, scoped, tag = 'input window, operand 3, single buffered']
    #allocation9 [shape = 's32[1]{0}', space=sflag, size = 0x4, scoped, tag = 'scoped memory for cross_conformer_block.1']
    #allocation10 [shape = 'u8[16384]{0}', space=vmem, size = 0x4000, scoped, tag = 'output window, operand 0, single buffered']
    %9 = vsyncpa [#allocation3], 0
    %10 = vsyncpa [#allocation6], 0
    %11 = vsyncpa [#allocation9], 0
    %12 = vsyncpa [#allocation4], 0
    // Predicated region
    $region2: #{cross_conformer_block.1} parent=1 // pred_check
      _
    $region3: #{cross_conformer_block.1} parent=1 // pred_check_branch
      %14 = sbr.rel (0) target = $region5
    $region4: #{cross_conformer_block.1} parent=1 // pred_region
      %s16 = ssub.s32 512, 512
      %17 = vsyncadd [#allocation3], %s16
      %s18 = sshll.u32 [#allocation2], 4
      %s19 = int_to_ptr.vmem [resolvable:$true] %s18
      %24 = dma.hbm_to_vmem [thread:$0]  %s0, 512, %s19, [#allocation3], 128, 128, 8
    $region5: #{cross_conformer_block.1} parent=1 // pred_fallthru
      _
    // Predicated region
    $region6: #{cross_conformer_block.1} parent=1 // pred_check
      _
    $region7: #{cross_conformer_block.1} parent=1 // pred_check_branch
      %26 = sbr.rel (0) target = $region9
    $region8: #{cross_conformer_block.1} parent=1 // pred_region
      %s28 = ssub.s32 768, 768
      %29 = vsyncadd [#allocation6], %s28
      %s30 = sshll.u32 [#allocation5], 4
      %s31 = int_to_ptr.vmem [resolvable:$true] %s30
      %36 = dma.hbm_to_vmem [thread:$0]  %s1, 768, %s31, [#allocation6], 128, 128, 8
    $region9: #{cross_conformer_block.1} parent=1 // pred_fallthru
      _
    // Predicated region
    $region10: #{cross_conformer_block.1} parent=1 // pred_check
      _
    $region11: #{cross_conformer_block.1} parent=1 // pred_check_branch
      %38 = sbr.rel (0) target = $region13
    $region12: #{cross_conformer_block.1} parent=1 // pred_region
      %s40 = ssub.s32 2688, 2688
      %41 = vsyncadd [#allocation6], %s40
      %s42 = sshll.u32 [#allocation7], 4
      %s43 = int_to_ptr.vmem [resolvable:$true] %s42
      %48 = dma.hbm_to_vmem [thread:$0]  %s2, 2688, %s43, [#allocation6], 64, 64, 4
    $region13: #{cross_conformer_block.1} parent=1 // pred_fallthru
      _
    // Predicated region
    $region14: #{cross_conformer_block.1} parent=1 // pred_check
      _
    $region15: #{cross_conformer_block.1} parent=1 // pred_check_branch
      %50 = sbr.rel (0) target = $region17
    $region16: #{cross_conformer_block.1} parent=1 // pred_region
      %s52 = ssub.s32 896, 896
      %53 = vsyncadd [#allocation9], %s52
      %s54 = sshll.u32 [#allocation8], 4
      %s55 = int_to_ptr.vmem [resolvable:$true] %s54
      %60 = dma.hbm_to_vmem [thread:$0]  %s3, 896, %s55, [#allocation9], 128, 128, 8
    $region17: #{cross_conformer_block.1} parent=1 // pred_fallthru
      _
    // Predicated region
    $region18: #{cross_conformer_block.1} parent=1 // pred_check
      _
    $region19: #{cross_conformer_block.1} parent=1 // pred_check_branch
      %62 = sbr.rel (0) target = $region21
    $region20: #{cross_conformer_block.1} parent=1 // pred_region
      %63 = dma.done [#allocation3], 512
    $region21: #{cross_conformer_block.1} parent=1 // pred_fallthru
      _
    // Predicated region
    $region22: #{cross_conformer_block.1} parent=1 // pred_check
      _
    $region23: #{cross_conformer_block.1} parent=1 // pred_check_branch
      %65 = sbr.rel (0) target = $region25
    $region24: #{cross_conformer_block.1} parent=1 // pred_region
      %66 = dma.done [#allocation6], 768
    $region25: #{cross_conformer_block.1} parent=1 // pred_fallthru
      _
    // Predicated region
    $region26: #{cross_conformer_block.1} parent=1 // pred_check
      _
    $region27: #{cross_conformer_block.1} parent=1 // pred_check_branch
      %68 = sbr.rel (0) target = $region29
    $region28: #{cross_conformer_block.1} parent=1 // pred_region
      %69 = dma.done [#allocation6], 2688
    $region29: #{cross_conformer_block.1} parent=1 // pred_fallthru
      _
    // Predicated region
    $region30: #{cross_conformer_block.1} parent=1 // pred_check
      _
    $region31: #{cross_conformer_block.1} parent=1 // pred_check_branch
      %71 = sbr.rel (0) target = $region33
    $region32: #{cross_conformer_block.1} parent=1 // pred_region
      %72 = dma.done [#allocation9], 896
    $region33: #{cross_conformer_block.1} parent=1 // pred_fallthru
      _
    %v74 = vld [vmem:[#allocation2] sm:$0xff]
    %v75 = vld [vmem:[#allocation2 + $0x8] sm:$0xff]
    %v76 = vld [vmem:[#allocation2 + $0x10] sm:$0xff]
    %v77 = vld [vmem:[#allocation2 + $0x18] sm:$0xff]
    %v78 = vld [vmem:[#allocation5] sm:$0xff]
    %v79 = vld [vmem:[#allocation5 + $0x8] sm:$0xff]
    %v80 = vld [vmem:[#allocation5 + $0x10] sm:$0xff]
    %v81 = vld [vmem:[#allocation5 + $0x18] sm:$0xff]
    %v82 = vld [vmem:[#allocation5 + $0x20] sm:$0xff]
    %v83 = vld [vmem:[#allocation5 + $0x28] sm:$0xff]
    %v84 = vlaneseq
    %v85 = vshrl.u32 %v84, 7
    %v86 = vadd.s32 %v85, 8
    %v87 = vadd.s32 %v85, 16
    %v88 = vadd.s32 %v85, 24
    %vm89 = vcmp.ge.s32.totalorder %v85, 16
    %vm90 = vcmp.ge.s32.totalorder %v86, 16
    %vm91 = vcmp.ge.s32.totalorder %v87, 16
    %vm92 = vcmp.ge.s32.totalorder %v88, 16
    %v93 = vsub.s32 %v85, 16
    %v94 = vsub.s32 %v86, 16
    %v95 = vsub.s32 %v88, 16
    %v96 = vsel %vm89, %v93, %v85
    %v97 = vsel %vm90, %v94, %v86
    %v98 = vsel %vm91, %v85, %v87
    %v99 = vsel %vm92, %v95, %v88
    %v100 = vlaneseq
    %v101 = vand.u32 %v100, 127
    %v102 = vmul.u32 %v101, 16
    %vm103 = vcmp.ge.s32.totalorder %v85, %v102
    %vm104 = vcmp.ge.s32.totalorder %v86, %v102
    %vm105 = vcmp.ge.s32.totalorder %v87, %v102
    %vm106 = vcmp.ge.s32.totalorder %v88, %v102
    %v107 = vadd.s32 %v101, 1
    %v108 = vmul.u32 %v107, 16
    %vm109 = vcmp.lt.s32.totalorder %v85, %v108
    %vm110 = vcmp.lt.s32.totalorder %v86, %v108
    %vm111 = vcmp.lt.s32.totalorder %v87, %v108
    %vm112 = vcmp.lt.s32.totalorder %v88, %v108
    %vm113 = vmand %vm103, %vm109
    %vm114 = vmand %vm104, %vm110
    %vm115 = vmand %vm105, %vm111
    %vm116 = vmand %vm106, %vm112
    %v117 = vsel %vm113, 1, 0
    %v118 = vsel %vm114, 1, 0
    %v119 = vsel %vm115, 1, 0
    %v120 = vsel %vm116, 1, 0
    %v121 = vcvt.s32.f32 %v117
    %v122 = vcvt.s32.f32 %v118
    %v123 = vcvt.s32.f32 %v119
    %v124 = vcvt.s32.f32 %v120
    %v125 = vmul.u32 %v85, 16
    %vm126 = vcmp.ge.s32.totalorder %v101, %v125
    %v127 = vadd.s32 %v85, 1
    %v128 = vmul.u32 %v127, 16
    %vm129 = vcmp.lt.s32.totalorder %v101, %v128
    %vm130 = vmand %vm126, %vm129
    %v131 = vsel %vm130, 1, 0
    %v132 = vcvt.s32.f32 %v131
    %v133 = vadd.s32 %v85, 32
    %v134 = vadd.s32 %v85, 40
    %vm135 = vcmp.ge.s32.totalorder %v85, 24
    %vm136 = vcmp.ge.s32.totalorder %v86, 24
    %vm137 = vcmp.ge.s32.totalorder %v87, 24
    %vm138 = vcmp.ge.s32.totalorder %v88, 24
    %vm139 = vcmp.ge.s32.totalorder %v133, 24
    %vm140 = vcmp.ge.s32.totalorder %v134, 24
    %v141 = vsub.s32 %v85, 24
    %v142 = vsub.s32 %v86, 24
    %v143 = vsub.s32 %v87, 24
    %v144 = vsub.s32 %v133, 24
    %v145 = vsub.s32 %v134, 24
    %v146 = vsel %vm135, %v141, %v85
    %v147 = vsel %vm136, %v142, %v86
    %v148 = vsel %vm137, %v143, %v87
    %v149 = vsel %vm138, %v85, %v88
    %v150 = vsel %vm139, %v144, %v133
    %v151 = vsel %vm140, %v145, %v134
    %v152 = vmul.u32 %v101, 24
    %vm153 = vcmp.ge.s32.totalorder %v85, %v152
    %vm154 = vcmp.ge.s32.totalorder %v86, %v152
    %vm155 = vcmp.ge.s32.totalorder %v87, %v152
    %vm156 = vcmp.ge.s32.totalorder %v88, %v152
    %vm157 = vcmp.ge.s32.totalorder %v133, %v152
    %vm158 = vcmp.ge.s32.totalorder %v134, %v152
    %v159 = vmul.u32 %v107, 24
    %vm160 = vcmp.lt.s32.totalorder %v85, %v159
    %vm161 = vcmp.lt.s32.totalorder %v86, %v159
    %vm162 = vcmp.lt.s32.totalorder %v87, %v159
    %vm163 = vcmp.lt.s32.totalorder %v88, %v159
    %vm164 = vcmp.lt.s32.totalorder %v133, %v159
    %vm165 = vcmp.lt.s32.totalorder %v134, %v159
    %vm166 = vmand %vm153, %vm160
    %vm167 = vmand %vm154, %vm161
    %vm168 = vmand %vm155, %vm162
    %vm169 = vmand %vm156, %vm163
    %vm170 = vmand %vm157, %vm164
    %vm171 = vmand %vm158, %vm165
    %v172 = vsel %vm166, 1, 0
    %v173 = vsel %vm167, 1, 0
    %v174 = vsel %vm168, 1, 0
    %v175 = vsel %vm169, 1, 0
    %v176 = vsel %vm170, 1, 0
    %v177 = vsel %vm171, 1, 0
    %v178 = vcvt.s32.f32 %v172
    %v179 = vcvt.s32.f32 %v173
    %v180 = vcvt.s32.f32 %v174
    %v181 = vcvt.s32.f32 %v175
    %v182 = vcvt.s32.f32 %v176
    %v183 = vcvt.s32.f32 %v177
    %v184 = vmul.u32 %v85, 24
    %vm185 = vcmp.ge.s32.totalorder %v101, %v184
    %v186 = vmul.u32 %v127, 24
    %vm187 = vcmp.lt.s32.totalorder %v101, %v186
    %vm188 = vmand %vm185, %vm187
    %v189 = vsel %vm188, 1, 0
    %v190 = vcvt.s32.f32 %v189
    %vm191 = vcmp.ge.s32.totalorder %v85, 0
    %vm192 = vcmp.ge.s32.totalorder %v86, 0
    %vm193 = vcmp.ge.s32.totalorder %v87, 0
    %vm194 = vcmp.ge.s32.totalorder %v88, 0
    %vm195 = vcmp.lt.s32.totalorder %v85, 16
    %vm196 = vcmp.lt.s32.totalorder %v86, 16
    %vm197 = vcmp.lt.s32.totalorder %v87, 16
    %vm198 = vcmp.lt.s32.totalorder %v88, 16
    %vm199 = vmand %vm191, %vm195
    %vm200 = vmand %vm192, %vm196
    %vm201 = vmand %vm193, %vm197
    %vm202 = vmand %vm194, %vm198
    %vm203 = vcmp.ge.s32.totalorder %v101, 0
    %vm204 = vmand %vm199, %vm203
    %vm205 = vmand %vm200, %vm203
    %vm206 = vmand %vm201, %vm203
    %vm207 = vmand %vm202, %vm203
    %vm208 = vcmp.lt.s32.totalorder %v101, 24
    %vm209 = vmand %vm204, %vm208
    %vm210 = vmand %vm205, %vm208
    %vm211 = vmand %vm206, %vm208
    %vm212 = vmand %vm207, %vm208
    %vm213 = vcmp.lt.s32.totalorder %v85, 32
    %vm214 = vcmp.lt.s32.totalorder %v86, 32
    %vm215 = vcmp.lt.s32.totalorder %v87, 32
    %vm216 = vcmp.lt.s32.totalorder %v88, 32
    %vm217 = vmand %vm89, %vm213
    %vm218 = vmand %vm90, %vm214
    %vm219 = vmand %vm91, %vm215
    %vm220 = vmand %vm92, %vm216
    %vm221 = vcmp.ge.s32.totalorder %v101, 24
    %vm222 = vmand %vm217, %vm221
    %vm223 = vmand %vm218, %vm221
    %vm224 = vmand %vm219, %vm221
    %vm225 = vmand %vm220, %vm221
    %vm226 = vcmp.lt.s32.totalorder %v101, 48
    %vm227 = vmand %vm222, %vm226
    %vm228 = vmand %vm223, %vm226
    %vm229 = vmand %vm224, %vm226
    %vm230 = vmand %vm225, %vm226
    %vm231 = vmor %vm209, %vm227
    %vm232 = vmor %vm210, %vm228
    %vm233 = vmor %vm211, %vm229
    %vm234 = vmor %vm212, %vm230
    %v235 = vld [vmem:[#allocation8] sm:$0x1]
    %v236 = vld [vmem:[#allocation8 + $0x1] sm:$0x1]
    %vm237 = vcmask 261120
    %v238 = vsel %vm237, %v74, 0.0
    %239 = vadd.xlane.f32.xlu0 %v238
    %v240 = vpop.xlane.xlu0 %239
    %v241 = vsel %vm237, %v75, 0.0
    %242 = vadd.xlane.f32.xlu0 %v241
    %v243 = vpop.xlane.xlu0 %242
    %v244 = vsel %vm237, %v76, 0.0
    %245 = vadd.xlane.f32.xlu0 %v244
    %v246 = vpop.xlane.xlu0 %245
    %v247 = vsel %vm237, %v77, 0.0
    %248 = vadd.xlane.f32.xlu0 %v247
    %v249 = vpop.xlane.xlu0 %248
    %v250 = vrcp.pop 32.0
    %v251 = vmul.f32 %v240, %v250
    %v252 = vmul.f32 %v243, %v250
    %v253 = vmul.f32 %v246, %v250
    %v254 = vmul.f32 %v249, %v250
    %v255 = vsub.f32 %v74, %v251
    %v256 = vsub.f32 %v75, %v252
    %v257 = vsub.f32 %v76, %v253
    %v258 = vsub.f32 %v77, %v254
    %v259 = vmul.f32 %v255, %v255
    %v260 = vmul.f32 %v256, %v256
    %v261 = vmul.f32 %v257, %v257
    %v262 = vmul.f32 %v258, %v258
    %v263 = vsel %vm237, %v259, 0.0
    %264 = vadd.xlane.f32.xlu0 %v263
    %v265 = vpop.xlane.xlu0 %264
    %v266 = vsel %vm237, %v260, 0.0
    %267 = vadd.xlane.f32.xlu0 %v266
    %v268 = vpop.xlane.xlu0 %267
    %v269 = vsel %vm237, %v261, 0.0
    %270 = vadd.xlane.f32.xlu0 %v269
    %v271 = vpop.xlane.xlu0 %270
    %v272 = vsel %vm237, %v262, 0.0
    %273 = vadd.xlane.f32.xlu0 %v272
    %v274 = vpop.xlane.xlu0 %273
    %v275 = vmul.f32 %v265, %v250
    %v276 = vmul.f32 %v268, %v250
    %v277 = vmul.f32 %v271, %v250
    %v278 = vmul.f32 %v274, %v250
    %v279 = vadd.f32 %v275, 1e-05
    %v280 = vadd.f32 %v276, 1e-05
    %v281 = vadd.f32 %v277, 1e-05
    %v282 = vadd.f32 %v278, 1e-05
    %v283 = vrsqrt.pop %v279
    %v284 = vrsqrt.pop %v280
    %v285 = vrsqrt.pop %v281
    %v286 = vrsqrt.pop %v282
    %v287 = vmul.f32 %v255, %v283
    %v288 = vmul.f32 %v256, %v284
    %v289 = vmul.f32 %v257, %v285
    %v290 = vmul.f32 %v258, %v286
    %v291 = vlaneseq
    %v292 = vshrl.u32 %v291, 7
    %v293 = vsub.s32 0, %v292
    %v294 = vrot.slane %v235, %v293
    %v295 = vmul.f32 %v287, %v294
    %v296 = vmul.f32 %v288, %v294
    %v297 = vmul.f32 %v289, %v294
    %v298 = vmul.f32 %v290, %v294
    %v299 = vlaneseq
    %v300 = vshrl.u32 %v299, 7
    %v301 = vsub.s32 0, %v300
    %v302 = vrot.slane %v236, %v301
    %v303 = vadd.f32 %v295, %v302
    %v304 = vadd.f32 %v296, %v302
    %v305 = vadd.f32 %v297, %v302
    %v306 = vadd.f32 %v298, %v302
    %v307 = vld [vmem:[#allocation7] sm:$0xf]
    %v308 = vld [vmem:[#allocation7 + $0x4] sm:$0xf]
    %v309 = vld [vmem:[#allocation7 + $0x8] sm:$0xf]
    %v310 = vld [vmem:[#allocation7 + $0xc] sm:$0xf]
    %v311 = vpack.c.bf16 %v304, %v303
    %v312 = vpack.c.bf16 %v306, %v305
    %v313 = vld [vmem:[#allocation8 + $0x2] sm:$0x1]
    %v314 = vlaneseq
    %v315 = vshrl.u32 %v314, 7
    %v316 = vsub.s32 0, %v315
    %v317 = vrot.slane %v313, %v316
    %v322 = vunpack.c.l.b16 %v307
    %v323 = vunpack.c.l.b16 %v308
    %v324 = vunpack.c.l.b16 %v309
    %v325 = vunpack.c.l.b16 %v310
    %v326 = vpack.c.b16 %v323, %v322
    %v327 = vpack.c.b16 %v325, %v324
    %v331 = vsel %vm237, %v311, 0
    %v334 = vsel %vm237, %v312, 0
    %336 = vmatprep.subr.bf16.mxu0 0
    %337 = vmatpush1.bf16.msra.mxu0 0
    %338 = vmatprep.subr.bf16.mxu0 0
    %339 = vmatpush1.bf16.msra.mxu0 0
    %340 = vmatprep.subr.bf16.mxu0 0
    %341 = vmatpush1.bf16.msra.mxu0 0
    %342 = vmatprep.subr.bf16.mxu0 0
    %343 = vmatpush1.bf16.msra.mxu0 0
    %344 = vmatprep.subr.bf16.mxu0 0
    %345 = vmatpush1.bf16.msra.mxu0 0
    %346 = vmatprep.subr.bf16.mxu0 0
    %347 = vmatpush1.bf16.msra.mxu0 0
    %348 = vmatprep.subr.bf16.mxu0 0
    %349 = vmatpush1.bf16.msra.mxu0 %v327
    %350 = vmatprep.subr.bf16.mxu0 0
    %351 = vmatpush1.bf16.msra.mxu0 %v326
    %352 = vmatprep.subr.bf16.mxu0 0
    %353 = vmatpush2.bf16.msra.mxu0 0
    %354 = vmatprep.subr.bf16.mxu0 0
    %355 = vmatpush2.bf16.msra.mxu0 0
    %356 = vmatprep.subr.bf16.mxu0 0
    %357 = vmatpush2.bf16.msra.mxu0 0
    %358 = vmatprep.subr.bf16.mxu0 0
    %359 = vmatpush2.bf16.msra.mxu0 0
    %360 = vmatprep.subr.bf16.mxu0 0
    %361 = vmatpush2.bf16.msra.mxu0 0
    %362 = vmatprep.subr.bf16.mxu0 0
    %363 = vmatpush2.bf16.msra.mxu0 0
    %364 = vmatprep.subr.bf16.mxu0 0
    %365 = vmatpush2.bf16.msra.mxu0 0
    %366 = vmatprep.subr.bf16.mxu0 0
    %367 = vmatpush2.bf16.msra.mxu0 0
    %368 = vmatprep.mubr.bf16.mxu0 0
    %369 = vmatmul.mubr.bf16.gmra.mxu0 %v331
    %v370 = vpop.f32.mrf.mxu0
    %v371 = vadd.f32 %v317, %v370
    %v372 = vpop.f32.mrf.mxu0
    %v373 = vpop.f32.mrf.mxu0
    %v374 = vadd.f32 %v317, %v373
    %v375 = vpop.f32.mrf.mxu0
    %376 = vmatprep.mubr.bf16.mxu0 0
    %377 = vmatmul.mubr.bf16.gmra.mxu0 %v334
    %v378 = vpop.f32.mrf.mxu0
    %v379 = vadd.f32 %v317, %v378
    %v380 = vpop.f32.mrf.mxu0
    %v381 = vpop.f32.mrf.mxu0
    %v382 = vadd.f32 %v317, %v381
    %v383 = vpop.f32.mrf.mxu0
    %384 = vdwg.mxu0
    %v385 = vxor.u32 %v371, 2147483648
    %v386 = vxor.u32 %v374, 2147483648
    %v387 = vxor.u32 %v379, 2147483648
    %v388 = vxor.u32 %v382, 2147483648
    %v389 = vmul.f32 %v385, 1.442695
    %v390 = vpow.pop %v389
    %v391 = vmul.f32 %v386, 1.442695
    %v392 = vpow.pop %v391
    %v393 = vmul.f32 %v387, 1.442695
    %v394 = vpow.pop %v393
    %v395 = vmul.f32 %v388, 1.442695
    %v396 = vpow.pop %v395
    %v397 = vadd.f32 %v390, 1.0
    %v398 = vadd.f32 %v392, 1.0
    %v399 = vadd.f32 %v394, 1.0
    %v400 = vadd.f32 %v396, 1.0
    %v401 = vrcp.pop %v397
    %v402 = vmul.f32 1.0, %v401
    %v403 = vrcp.pop %v398
    %v404 = vmul.f32 1.0, %v403
    %v405 = vrcp.pop %v399
    %v406 = vmul.f32 1.0, %v405
    %v407 = vrcp.pop %v400
    %v408 = vmul.f32 1.0, %v407
    %v409 = vmul.f32 %v371, %v402
    %v410 = vmul.f32 %v374, %v404
    %v411 = vmul.f32 %v379, %v406
    %v412 = vmul.f32 %v382, %v408
    %v413 = vpack.c.bf16 %v410, %v409
    %v414 = vpack.c.bf16 %v412, %v411
    %v415 = vld [vmem:[#allocation7 + $0x10] sm:$0xf]
    %v416 = vld [vmem:[#allocation7 + $0x14] sm:$0xf]
    %v417 = vld [vmem:[#allocation7 + $0x18] sm:$0xf]
    %v418 = vld [vmem:[#allocation7 + $0x1c] sm:$0xf]
    %v419 = vld [vmem:[#allocation8 + $0x3] sm:$0x1]
    %v420 = vlaneseq
    %v421 = vshrl.u32 %v420, 7
    %v422 = vsub.s32 0, %v421
    %v423 = vrot.slane %v419, %v422
    %v428 = vunpack.c.l.b16 %v415
    %v429 = vunpack.c.l.b16 %v416
    %v430 = vunpack.c.l.b16 %v417
    %v431 = vunpack.c.l.b16 %v418
    %v432 = vpack.c.b16 %v429, %v428
    %v433 = vpack.c.b16 %v431, %v430
    %436 = vmatprep.subr.bf16.mxu0 0
    %437 = vmatpush1.bf16.xpose.msra.mxu0 0
    %438 = vmatprep.subr.bf16.mxu0 0
    %439 = vmatpush1.bf16.xpose.msra.mxu0 0
    %440 = vmatprep.subr.bf16.mxu0 0
    %441 = vmatpush1.bf16.xpose.msra.mxu0 0
    %442 = vmatprep.subr.bf16.mxu0 0
    %443 = vmatpush1.bf16.xpose.msra.mxu0 0
    %444 = vmatprep.subr.bf16.mxu0 0
    %445 = vmatpush1.bf16.xpose.msra.mxu0 0
    %446 = vmatprep.subr.bf16.mxu0 0
    %447 = vmatpush1.bf16.xpose.msra.mxu0 0
    %448 = vmatprep.subr.bf16.mxu0 0
    %449 = vmatpush1.bf16.xpose.msra.mxu0 %v433
    %450 = vmatprep.subr.bf16.mxu0 0
    %451 = vmatpush1.bf16.xpose.msra.mxu0 %v432
    %452 = vmatprep.subr.bf16.mxu0 0
    %453 = vmatpush2.bf16.xpose.msra.mxu0 0
    %454 = vmatprep.subr.bf16.mxu0 0
    %455 = vmatpush2.bf16.xpose.msra.mxu0 0
    %456 = vmatprep.subr.bf16.mxu0 0
    %457 = vmatpush2.bf16.xpose.msra.mxu0 0
    %458 = vmatprep.subr.bf16.mxu0 0
    %459 = vmatpush2.bf16.xpose.msra.mxu0 0
    %460 = vmatprep.subr.bf16.mxu0 0
    %461 = vmatpush2.bf16.xpose.msra.mxu0 0
    %462 = vmatprep.subr.bf16.mxu0 0
    %463 = vmatpush2.bf16.xpose.msra.mxu0 0
    %464 = vmatprep.subr.bf16.mxu0 0
    %465 = vmatpush2.bf16.xpose.msra.mxu0 0
    %466 = vmatprep.subr.bf16.mxu0 0
    %467 = vmatpush2.bf16.xpose.msra.mxu0 0
    %468 = vmatprep.mubr.bf16.mxu0 0
    %469 = vmatmul.mubr.bf16.gmra.mxu0 %v413
    %v470 = vpop.f32.mrf.mxu0
    %v471 = vadd.f32 %v423, %v470
    %v472 = vpop.f32.mrf.mxu0
    %v473 = vpop.f32.mrf.mxu0
    %v474 = vadd.f32 %v423, %v473
    %v475 = vpop.f32.mrf.mxu0
    %476 = vmatprep.mubr.bf16.mxu0 0
    %477 = vmatmul.mubr.bf16.gmra.mxu0 %v414
    %v478 = vpop.f32.mrf.mxu0
    %v479 = vadd.f32 %v423, %v478
    %v480 = vpop.f32.mrf.mxu0
    %v481 = vpop.f32.mrf.mxu0
    %v482 = vadd.f32 %v423, %v481
    %v483 = vpop.f32.mrf.mxu0
    %484 = vdwg.mxu0
    %v485 = vadd.f32 %v74, %v471
    %v486 = vadd.f32 %v75, %v474
    %v487 = vadd.f32 %v76, %v479
    %v488 = vadd.f32 %v77, %v482
    %v489 = vld [vmem:[#allocation8 + $0x4] sm:$0x1]
    %v490 = vld [vmem:[#allocation8 + $0x5] sm:$0x1]
    %v491 = vsel %vm237, %v78, 0.0
    %492 = vadd.xlane.f32.xlu0 %v491
    %v493 = vpop.xlane.xlu0 %492
    %v494 = vsel %vm237, %v79, 0.0
    %495 = vadd.xlane.f32.xlu0 %v494
    %v496 = vpop.xlane.xlu0 %495
    %v497 = vsel %vm237, %v80, 0.0
    %498 = vadd.xlane.f32.xlu0 %v497
    %v499 = vpop.xlane.xlu0 %498
    %v500 = vsel %vm237, %v81, 0.0
    %501 = vadd.xlane.f32.xlu0 %v500
    %v502 = vpop.xlane.xlu0 %501
    %v503 = vsel %vm237, %v82, 0.0
    %504 = vadd.xlane.f32.xlu0 %v503
    %v505 = vpop.xlane.xlu0 %504
    %v506 = vsel %vm237, %v83, 0.0
    %507 = vadd.xlane.f32.xlu0 %v506
    %v508 = vpop.xlane.xlu0 %507
    %v509 = vmul.f32 %v493, %v250
    %v510 = vmul.f32 %v496, %v250
    %v511 = vmul.f32 %v499, %v250
    %v512 = vmul.f32 %v502, %v250
    %v513 = vmul.f32 %v505, %v250
    %v514 = vmul.f32 %v508, %v250
    %v515 = vsub.f32 %v78, %v509
    %v516 = vsub.f32 %v79, %v510
    %v517 = vsub.f32 %v80, %v511
    %v518 = vsub.f32 %v81, %v512
    %v519 = vsub.f32 %v82, %v513
    %v520 = vsub.f32 %v83, %v514
    %v521 = vmul.f32 %v515, %v515
    %v522 = vmul.f32 %v516, %v516
    %v523 = vmul.f32 %v517, %v517
    %v524 = vmul.f32 %v518, %v518
    %v525 = vmul.f32 %v519, %v519
    %v526 = vmul.f32 %v520, %v520
    %v527 = vsel %vm237, %v521, 0.0
    %528 = vadd.xlane.f32.xlu0 %v527
    %v529 = vpop.xlane.xlu0 %528
    %v530 = vsel %vm237, %v522, 0.0
    %531 = vadd.xlane.f32.xlu0 %v530
    %v532 = vpop.xlane.xlu0 %531
    %v533 = vsel %vm237, %v523, 0.0
    %534 = vadd.xlane.f32.xlu0 %v533
    %v535 = vpop.xlane.xlu0 %534
    %v536 = vsel %vm237, %v524, 0.0
    %537 = vadd.xlane.f32.xlu0 %v536
    %v538 = vpop.xlane.xlu0 %537
    %v539 = vsel %vm237, %v525, 0.0
    %540 = vadd.xlane.f32.xlu0 %v539
    %v541 = vpop.xlane.xlu0 %540
    %v542 = vsel %vm237, %v526, 0.0
    %543 = vadd.xlane.f32.xlu0 %v542
    %v544 = vpop.xlane.xlu0 %543
    %v545 = vmul.f32 %v529, %v250
    %v546 = vmul.f32 %v532, %v250
    %v547 = vmul.f32 %v535, %v250
    %v548 = vmul.f32 %v538, %v250
    %v549 = vmul.f32 %v541, %v250
    %v550 = vmul.f32 %v544, %v250
    %v551 = vadd.f32 %v545, 1e-05
    %v552 = vadd.f32 %v546, 1e-05
    %v553 = vadd.f32 %v547, 1e-05
    %v554 = vadd.f32 %v548, 1e-05
    %v555 = vadd.f32 %v549, 1e-05
    %v556 = vadd.f32 %v550, 1e-05
    %v557 = vrsqrt.pop %v551
    %v558 = vrsqrt.pop %v552
    %v559 = vrsqrt.pop %v553
    %v560 = vrsqrt.pop %v554
    %v561 = vrsqrt.pop %v555
    %v562 = vrsqrt.pop %v556
    %v563 = vmul.f32 %v515, %v557
    %v564 = vmul.f32 %v516, %v558
    %v565 = vmul.f32 %v517, %v559
    %v566 = vmul.f32 %v518, %v560
    %v567 = vmul.f32 %v519, %v561
    %v568 = vmul.f32 %v520, %v562
    %v569 = vlaneseq
    %v570 = vshrl.u32 %v569, 7
    %v571 = vsub.s32 0, %v570
    %v572 = vrot.slane %v489, %v571
    %v573 = vmul.f32 %v563, %v572
    %v574 = vmul.f32 %v564, %v572
    %v575 = vmul.f32 %v565, %v572
    %v576 = vmul.f32 %v566, %v572
    %v577 = vmul.f32 %v567, %v572
    %v578 = vmul.f32 %v568, %v572
    %v579 = vlaneseq
    %v580 = vshrl.u32 %v579, 7
    %v581 = vsub.s32 0, %v580
    %v582 = vrot.slane %v490, %v581
    %v583 = vadd.f32 %v573, %v582
    %v584 = vadd.f32 %v574, %v582
    %v585 = vadd.f32 %v575, %v582
    %v586 = vadd.f32 %v576, %v582
    %v587 = vadd.f32 %v577, %v582
    %v588 = vadd.f32 %v578, %v582
    %v589 = vld [vmem:[#allocation7 + $0x20] sm:$0xf]
    %v590 = vld [vmem:[#allocation7 + $0x24] sm:$0xf]
    %v591 = vld [vmem:[#allocation7 + $0x28] sm:$0xf]
    %v592 = vld [vmem:[#allocation7 + $0x2c] sm:$0xf]
    %v593 = vpack.c.bf16 %v584, %v583
    %v594 = vpack.c.bf16 %v586, %v585
    %v595 = vpack.c.bf16 %v588, %v587
    %v596 = vld [vmem:[#allocation8 + $0x6] sm:$0x1]
    %v597 = vlaneseq
    %v598 = vshrl.u32 %v597, 7
    %v599 = vsub.s32 0, %v598
    %v600 = vrot.slane %v596, %v599
    %v605 = vunpack.c.l.b16 %v589
    %v606 = vunpack.c.l.b16 %v590
    %v607 = vunpack.c.l.b16 %v591
    %v608 = vunpack.c.l.b16 %v592
    %v609 = vpack.c.b16 %v606, %v605
    %v610 = vpack.c.b16 %v608, %v607
    %v614 = vsel %vm237, %v593, 0
    %v617 = vsel %vm237, %v594, 0
    %v620 = vsel %vm237, %v595, 0
    %622 = vmatprep.subr.bf16.mxu0 0
    %623 = vmatpush1.bf16.msra.mxu0 0
    %624 = vmatprep.subr.bf16.mxu0 0
    %625 = vmatpush1.bf16.msra.mxu0 0
    %626 = vmatprep.subr.bf16.mxu0 0
    %627 = vmatpush1.bf16.msra.mxu0 0
    %628 = vmatprep.subr.bf16.mxu0 0
    %629 = vmatpush1.bf16.msra.mxu0 0
    %630 = vmatprep.subr.bf16.mxu0 0
    %631 = vmatpush1.bf16.msra.mxu0 0
    %632 = vmatprep.subr.bf16.mxu0 0
    %633 = vmatpush1.bf16.msra.mxu0 0
    %634 = vmatprep.subr.bf16.mxu0 0
    %635 = vmatpush1.bf16.msra.mxu0 %v610
    %636 = vmatprep.subr.bf16.mxu0 0
    %637 = vmatpush1.bf16.msra.mxu0 %v609
    %638 = vmatprep.subr.bf16.mxu0 0
    %639 = vmatpush2.bf16.msra.mxu0 0
    %640 = vmatprep.subr.bf16.mxu0 0
    %641 = vmatpush2.bf16.msra.mxu0 0
    %642 = vmatprep.subr.bf16.mxu0 0
    %643 = vmatpush2.bf16.msra.mxu0 0
    %644 = vmatprep.subr.bf16.mxu0 0
    %645 = vmatpush2.bf16.msra.mxu0 0
    %646 = vmatprep.subr.bf16.mxu0 0
    %647 = vmatpush2.bf16.msra.mxu0 0
    %648 = vmatprep.subr.bf16.mxu0 0
    %649 = vmatpush2.bf16.msra.mxu0 0
    %650 = vmatprep.subr.bf16.mxu0 0
    %651 = vmatpush2.bf16.msra.mxu0 0
    %652 = vmatprep.subr.bf16.mxu0 0
    %653 = vmatpush2.bf16.msra.mxu0 0
    %654 = vmatprep.mubr.bf16.mxu0 0
    %655 = vmatmul.mubr.bf16.gmra.mxu0 %v614
    %v656 = vpop.f32.mrf.mxu0
    %v657 = vadd.f32 %v600, %v656
    %v658 = vpop.f32.mrf.mxu0
    %v659 = vpop.f32.mrf.mxu0
    %v660 = vadd.f32 %v600, %v659
    %v661 = vpop.f32.mrf.mxu0
    %662 = vmatprep.mubr.bf16.mxu0 0
    %663 = vmatmul.mubr.bf16.gmra.mxu0 %v617
    %v664 = vpop.f32.mrf.mxu0
    %v665 = vadd.f32 %v600, %v664
    %v666 = vpop.f32.mrf.mxu0
    %v667 = vpop.f32.mrf.mxu0
    %v668 = vadd.f32 %v600, %v667
    %v669 = vpop.f32.mrf.mxu0
    %670 = vmatprep.mubr.bf16.mxu0 0
    %671 = vmatmul.mubr.bf16.gmra.mxu0 %v620
    %v672 = vpop.f32.mrf.mxu0
    %v673 = vadd.f32 %v600, %v672
    %v674 = vpop.f32.mrf.mxu0
    %v675 = vpop.f32.mrf.mxu0
    %v676 = vadd.f32 %v600, %v675
    %v677 = vpop.f32.mrf.mxu0
    %678 = vdwg.mxu0
    %v679 = vxor.u32 %v657, 2147483648
    %v680 = vxor.u32 %v660, 2147483648
    %v681 = vxor.u32 %v665, 2147483648
    %v682 = vxor.u32 %v668, 2147483648
    %v683 = vxor.u32 %v673, 2147483648
    %v684 = vxor.u32 %v676, 2147483648
    %v685 = vmul.f32 %v679, 1.442695
    %v686 = vpow.pop %v685
    %v687 = vmul.f32 %v680, 1.442695
    %v688 = vpow.pop %v687
    %v689 = vmul.f32 %v681, 1.442695
    %v690 = vpow.pop %v689
    %v691 = vmul.f32 %v682, 1.442695
    %v692 = vpow.pop %v691
    %v693 = vmul.f32 %v683, 1.442695
    %v694 = vpow.pop %v693
    %v695 = vmul.f32 %v684, 1.442695
    %v696 = vpow.pop %v695
    %v697 = vadd.f32 %v686, 1.0
    %v698 = vadd.f32 %v688, 1.0
    %v699 = vadd.f32 %v690, 1.0
    %v700 = vadd.f32 %v692, 1.0
    %v701 = vadd.f32 %v694, 1.0
    %v702 = vadd.f32 %v696, 1.0
    %v703 = vrcp.pop %v697
    %v704 = vmul.f32 1.0, %v703
    %v705 = vrcp.pop %v698
    %v706 = vmul.f32 1.0, %v705
    %v707 = vrcp.pop %v699
    %v708 = vmul.f32 1.0, %v707
    %v709 = vrcp.pop %v700
    %v710 = vmul.f32 1.0, %v709
    %v711 = vrcp.pop %v701
    %v712 = vmul.f32 1.0, %v711
    %v713 = vrcp.pop %v702
    %v714 = vmul.f32 1.0, %v713
    %v715 = vmul.f32 %v657, %v704
    %v716 = vmul.f32 %v660, %v706
    %v717 = vmul.f32 %v665, %v708
    %v718 = vmul.f32 %v668, %v710
    %v719 = vmul.f32 %v673, %v712
    %v720 = vmul.f32 %v676, %v714
    %v721 = vpack.c.bf16 %v716, %v715
    %v722 = vpack.c.bf16 %v718, %v717
    %v723 = vpack.c.bf16 %v720, %v719
    %v724 = vld [vmem:[#allocation7 + $0x30] sm:$0xf]
    %v725 = vld [vmem:[#allocation7 + $0x34] sm:$0xf]
    %v726 = vld [vmem:[#allocation7 + $0x38] sm:$0xf]
    %v727 = vld [vmem:[#allocation7 + $0x3c] sm:$0xf]
    %v728 = vld [vmem:[#allocation8 + $0x7] sm:$0x1]
    %v729 = vlaneseq
    %v730 = vshrl.u32 %v729, 7
    %v731 = vsub.s32 0, %v730
    %v732 = vrot.slane %v728, %v731
    %v737 = vunpack.c.l.b16 %v724
    %v738 = vunpack.c.l.b16 %v725
    %v739 = vunpack.c.l.b16 %v726
    %v740 = vunpack.c.l.b16 %v727
    %v741 = vpack.c.b16 %v738, %v737
    %v742 = vpack.c.b16 %v740, %v739
    %745 = vmatprep.subr.bf16.mxu0 0
    %746 = vmatpush1.bf16.xpose.msra.mxu0 0
    %747 = vmatprep.subr.bf16.mxu0 0
    %748 = vmatpush1.bf16.xpose.msra.mxu0 0
    %749 = vmatprep.subr.bf16.mxu0 0
    %750 = vmatpush1.bf16.xpose.msra.mxu0 0
    %751 = vmatprep.subr.bf16.mxu0 0
    %752 = vmatpush1.bf16.xpose.msra.mxu0 0
    %753 = vmatprep.subr.bf16.mxu0 0
    %754 = vmatpush1.bf16.xpose.msra.mxu0 0
    %755 = vmatprep.subr.bf16.mxu0 0
    %756 = vmatpush1.bf16.xpose.msra.mxu0 0
    %757 = vmatprep.subr.bf16.mxu0 0
    %758 = vmatpush1.bf16.xpose.msra.mxu0 %v742
    %759 = vmatprep.subr.bf16.mxu0 0
    %760 = vmatpush1.bf16.xpose.msra.mxu0 %v741
    %761 = vmatprep.subr.bf16.mxu0 0
    %762 = vmatpush2.bf16.xpose.msra.mxu0 0
    %763 = vmatprep.subr.bf16.mxu0 0
    %764 = vmatpush2.bf16.xpose.msra.mxu0 0
    %765 = vmatprep.subr.bf16.mxu0 0
    %766 = vmatpush2.bf16.xpose.msra.mxu0 0
    %767 = vmatprep.subr.bf16.mxu0 0
    %768 = vmatpush2.bf16.xpose.msra.mxu0 0
    %769 = vmatprep.subr.bf16.mxu0 0
    %770 = vmatpush2.bf16.xpose.msra.mxu0 0
    %771 = vmatprep.subr.bf16.mxu0 0
    %772 = vmatpush2.bf16.xpose.msra.mxu0 0
    %773 = vmatprep.subr.bf16.mxu0 0
    %774 = vmatpush2.bf16.xpose.msra.mxu0 0
    %775 = vmatprep.subr.bf16.mxu0 0
    %776 = vmatpush2.bf16.xpose.msra.mxu0 0
    %777 = vmatprep.mubr.bf16.mxu0 0
    %778 = vmatmul.mubr.bf16.gmra.mxu0 %v721
    %v779 = vpop.f32.mrf.mxu0
    %v780 = vadd.f32 %v732, %v779
    %v781 = vpop.f32.mrf.mxu0
    %v782 = vpop.f32.mrf.mxu0
    %v783 = vadd.f32 %v732, %v782
    %v784 = vpop.f32.mrf.mxu0
    %785 = vmatprep.mubr.bf16.mxu0 0
    %786 = vmatmul.mubr.bf16.gmra.mxu0 %v722
    %v787 = vpop.f32.mrf.mxu0
    %v788 = vadd.f32 %v732, %v787
    %v789 = vpop.f32.mrf.mxu0
    %v790 = vpop.f32.mrf.mxu0
    %v791 = vadd.f32 %v732, %v790
    %v792 = vpop.f32.mrf.mxu0
    %793 = vmatprep.mubr.bf16.mxu0 0
    %794 = vmatmul.mubr.bf16.gmra.mxu0 %v723
    %v795 = vpop.f32.mrf.mxu0
    %v796 = vadd.f32 %v732, %v795
    %v797 = vpop.f32.mrf.mxu0
    %v798 = vpop.f32.mrf.mxu0
    %v799 = vadd.f32 %v732, %v798
    %v800 = vpop.f32.mrf.mxu0
    %801 = vdwg.mxu0
    %v802 = vadd.f32 %v78, %v780
    %v803 = vadd.f32 %v79, %v783
    %v804 = vadd.f32 %v80, %v788
    %v805 = vadd.f32 %v81, %v791
    %v806 = vadd.f32 %v82, %v796
    %v807 = vadd.f32 %v83, %v799
    %v808 = vld [vmem:[#allocation8 + $0xc] sm:$0x1]
    %v809 = vld [vmem:[#allocation8 + $0xd] sm:$0x1]
    %v810 = vsel %vm237, %v485, 0.0
    %811 = vadd.xlane.f32.xlu0 %v810
    %v812 = vpop.xlane.xlu0 %811
    %v813 = vsel %vm237, %v486, 0.0
    %814 = vadd.xlane.f32.xlu0 %v813
    %v815 = vpop.xlane.xlu0 %814
    %v816 = vsel %vm237, %v487, 0.0
    %817 = vadd.xlane.f32.xlu0 %v816
    %v818 = vpop.xlane.xlu0 %817
    %v819 = vsel %vm237, %v488, 0.0
    %820 = vadd.xlane.f32.xlu0 %v819
    %v821 = vpop.xlane.xlu0 %820
    %v822 = vmul.f32 %v812, %v250
    %v823 = vmul.f32 %v815, %v250
    %v824 = vmul.f32 %v818, %v250
    %v825 = vmul.f32 %v821, %v250
    %v826 = vsub.f32 %v485, %v822
    %v827 = vsub.f32 %v486, %v823
    %v828 = vsub.f32 %v487, %v824
    %v829 = vsub.f32 %v488, %v825
    %v830 = vmul.f32 %v826, %v826
    %v831 = vmul.f32 %v827, %v827
    %v832 = vmul.f32 %v828, %v828
    %v833 = vmul.f32 %v829, %v829
    %v834 = vsel %vm237, %v830, 0.0
    %835 = vadd.xlane.f32.xlu0 %v834
    %v836 = vpop.xlane.xlu0 %835
    %v837 = vsel %vm237, %v831, 0.0
    %838 = vadd.xlane.f32.xlu0 %v837
    %v839 = vpop.xlane.xlu0 %838
    %v840 = vsel %vm237, %v832, 0.0
    %841 = vadd.xlane.f32.xlu0 %v840
    %v842 = vpop.xlane.xlu0 %841
    %v843 = vsel %vm237, %v833, 0.0
    %844 = vadd.xlane.f32.xlu0 %v843
    %v845 = vpop.xlane.xlu0 %844
    %v846 = vmul.f32 %v836, %v250
    %v847 = vmul.f32 %v839, %v250
    %v848 = vmul.f32 %v842, %v250
    %v849 = vmul.f32 %v845, %v250
    %v850 = vadd.f32 %v846, 1e-05
    %v851 = vadd.f32 %v847, 1e-05
    %v852 = vadd.f32 %v848, 1e-05
    %v853 = vadd.f32 %v849, 1e-05
    %v854 = vrsqrt.pop %v850
    %v855 = vrsqrt.pop %v851
    %v856 = vrsqrt.pop %v852
    %v857 = vrsqrt.pop %v853
    %v858 = vmul.f32 %v826, %v854
    %v859 = vmul.f32 %v827, %v855
    %v860 = vmul.f32 %v828, %v856
    %v861 = vmul.f32 %v829, %v857
    %v862 = vlaneseq
    %v863 = vshrl.u32 %v862, 7
    %v864 = vsub.s32 0, %v863
    %v865 = vrot.slane %v808, %v864
    %v866 = vmul.f32 %v858, %v865
    %v867 = vmul.f32 %v859, %v865
    %v868 = vmul.f32 %v860, %v865
    %v869 = vmul.f32 %v861, %v865
    %v870 = vlaneseq
    %v871 = vshrl.u32 %v870, 7
    %v872 = vsub.s32 0, %v871
    %v873 = vrot.slane %v809, %v872
    %v874 = vadd.f32 %v866, %v873
    %v875 = vadd.f32 %v867, %v873
    %v876 = vadd.f32 %v868, %v873
    %v877 = vadd.f32 %v869, %v873
    %v878 = vpack.c.bf16 %v875, %v874
    %v879 = vpack.c.bf16 %v877, %v876
    %v880 = vld [vmem:[#allocation7 + $0x60] sm:$0xf]
    %v881 = vld [vmem:[#allocation7 + $0x64] sm:$0xf]
    %v882 = vld [vmem:[#allocation7 + $0x68] sm:$0xf]
    %v883 = vld [vmem:[#allocation7 + $0x6c] sm:$0xf]
    %v884 = vld [vmem:[#allocation8 + $0xe] sm:$0x1]
    %v885 = vlaneseq
    %v886 = vshrl.u32 %v885, 7
    %v887 = vsub.s32 0, %v886
    %v888 = vrot.slane %v884, %v887
    %v893 = vunpack.c.l.b16 %v880
    %v894 = vunpack.c.l.b16 %v881
    %v895 = vunpack.c.l.b16 %v882
    %v896 = vunpack.c.l.b16 %v883
    %v897 = vpack.c.b16 %v894, %v893
    %v898 = vpack.c.b16 %v896, %v895
    %v902 = vsel %vm237, %v878, 0
    %v905 = vsel %vm237, %v879, 0
    %907 = vmatprep.subr.bf16.mxu0 0
    %908 = vmatpush1.bf16.msra.mxu0 0
    %909 = vmatprep.subr.bf16.mxu0 0
    %910 = vmatpush1.bf16.msra.mxu0 0
    %911 = vmatprep.subr.bf16.mxu0 0
    %912 = vmatpush1.bf16.msra.mxu0 0
    %913 = vmatprep.subr.bf16.mxu0 0
    %914 = vmatpush1.bf16.msra.mxu0 0
    %915 = vmatprep.subr.bf16.mxu0 0
    %916 = vmatpush1.bf16.msra.mxu0 0
    %917 = vmatprep.subr.bf16.mxu0 0
    %918 = vmatpush1.bf16.msra.mxu0 0
    %919 = vmatprep.subr.bf16.mxu0 0
    %920 = vmatpush1.bf16.msra.mxu0 %v898
    %921 = vmatprep.subr.bf16.mxu0 0
    %922 = vmatpush1.bf16.msra.mxu0 %v897
    %923 = vmatprep.subr.bf16.mxu0 0
    %924 = vmatpush2.bf16.msra.mxu0 0
    %925 = vmatprep.subr.bf16.mxu0 0
    %926 = vmatpush2.bf16.msra.mxu0 0
    %927 = vmatprep.subr.bf16.mxu0 0
    %928 = vmatpush2.bf16.msra.mxu0 0
    %929 = vmatprep.subr.bf16.mxu0 0
    %930 = vmatpush2.bf16.msra.mxu0 0
    %931 = vmatprep.subr.bf16.mxu0 0
    %932 = vmatpush2.bf16.msra.mxu0 0
    %933 = vmatprep.subr.bf16.mxu0 0
    %934 = vmatpush2.bf16.msra.mxu0 0
    %935 = vmatprep.subr.bf16.mxu0 0
    %936 = vmatpush2.bf16.msra.mxu0 0
    %937 = vmatprep.subr.bf16.mxu0 0
    %938 = vmatpush2.bf16.msra.mxu0 0
    %939 = vmatprep.mubr.bf16.mxu0 0
    %940 = vmatmul.mubr.bf16.gmra.mxu0 %v902
    %v941 = vpop.f32.mrf.mxu0
    %v942 = vadd.f32 %v888, %v941
    %v943 = vpop.f32.mrf.mxu0
    %v944 = vpop.f32.mrf.mxu0
    %v945 = vadd.f32 %v888, %v944
    %v946 = vpop.f32.mrf.mxu0
    %947 = vmatprep.mubr.bf16.mxu0 0
    %948 = vmatmul.mubr.bf16.gmra.mxu0 %v905
    %v949 = vpop.f32.mrf.mxu0
    %v950 = vadd.f32 %v888, %v949
    %v951 = vpop.f32.mrf.mxu0
    %v952 = vpop.f32.mrf.mxu0
    %v953 = vadd.f32 %v888, %v952
    %v954 = vpop.f32.mrf.mxu0
    %955 = vdwg.mxu0
    %v956 = vld [vmem:[#allocation8 + $0xf] sm:$0x1]
    %v957 = vlaneseq
    %v958 = vshrl.u32 %v957, 7
    %v959 = vsub.s32 0, %v958
    %v960 = vrot.slane %v956, %v959
    %961 = vrot.lane.b32.xlu0 %v897, 96
    %v962 = vpop.permute.xlu0 %961
    %963 = vrot.lane.b32.xlu0 %v898, 96
    %v964 = vpop.permute.xlu0 %963
    %967 = vmatprep.subr.bf16.mxu0 0
    %968 = vmatpush1.bf16.msra.mxu0 0
    %969 = vmatprep.subr.bf16.mxu0 0
    %970 = vmatpush1.bf16.msra.mxu0 0
    %971 = vmatprep.subr.bf16.mxu0 0
    %972 = vmatpush1.bf16.msra.mxu0 0
    %973 = vmatprep.subr.bf16.mxu0 0
    %974 = vmatpush1.bf16.msra.mxu0 0
    %975 = vmatprep.subr.bf16.mxu0 0
    %976 = vmatpush1.bf16.msra.mxu0 0
    %977 = vmatprep.subr.bf16.mxu0 0
    %978 = vmatpush1.bf16.msra.mxu0 0
    %979 = vmatprep.subr.bf16.mxu0 0
    %980 = vmatpush1.bf16.msra.mxu0 %v964
    %981 = vmatprep.subr.bf16.mxu0 0
    %982 = vmatpush1.bf16.msra.mxu0 %v962
    %983 = vmatprep.subr.bf16.mxu0 0
    %984 = vmatpush2.bf16.msra.mxu0 0
    %985 = vmatprep.subr.bf16.mxu0 0
    %986 = vmatpush2.bf16.msra.mxu0 0
    %987 = vmatprep.subr.bf16.mxu0 0
    %988 = vmatpush2.bf16.msra.mxu0 0
    %989 = vmatprep.subr.bf16.mxu0 0
    %990 = vmatpush2.bf16.msra.mxu0 0
    %991 = vmatprep.subr.bf16.mxu0 0
    %992 = vmatpush2.bf16.msra.mxu0 0
    %993 = vmatprep.subr.bf16.mxu0 0
    %994 = vmatpush2.bf16.msra.mxu0 0
    %995 = vmatprep.subr.bf16.mxu0 0
    %996 = vmatpush2.bf16.msra.mxu0 0
    %997 = vmatprep.subr.bf16.mxu0 0
    %998 = vmatpush2.bf16.msra.mxu0 0
    %999 = vmatprep.mubr.bf16.mxu0 0
    %1000 = vmatmul.mubr.bf16.gmra.mxu0 %v902
    %v1001 = vpop.f32.mrf.mxu0
    %v1002 = vadd.f32 %v960, %v1001
    %v1003 = vpop.f32.mrf.mxu0
    %v1004 = vpop.f32.mrf.mxu0
    %v1005 = vadd.f32 %v960, %v1004
    %v1006 = vpop.f32.mrf.mxu0
    %1007 = vmatprep.mubr.bf16.mxu0 0
    %1008 = vmatmul.mubr.bf16.gmra.mxu0 %v905
    %v1009 = vpop.f32.mrf.mxu0
    %v1010 = vadd.f32 %v960, %v1009
    %v1011 = vpop.f32.mrf.mxu0
    %v1012 = vpop.f32.mrf.mxu0
    %v1013 = vadd.f32 %v960, %v1012
    %v1014 = vpop.f32.mrf.mxu0
    %1015 = vdwg.mxu0
    %v1016 = vxor.u32 %v1002, 2147483648
    %v1017 = vxor.u32 %v1005, 2147483648
    %v1018 = vxor.u32 %v1010, 2147483648
    %v1019 = vxor.u32 %v1013, 2147483648
    %v1020 = vmul.f32 %v1016, 1.442695
    %v1021 = vpow.pop %v1020
    %v1022 = vmul.f32 %v1017, 1.442695
    %v1023 = vpow.pop %v1022
    %v1024 = vmul.f32 %v1018, 1.442695
    %v1025 = vpow.pop %v1024
    %v1026 = vmul.f32 %v1019, 1.442695
    %v1027 = vpow.pop %v1026
    %v1028 = vadd.f32 %v1021, 1.0
    %v1029 = vadd.f32 %v1023, 1.0
    %v1030 = vadd.f32 %v1025, 1.0
    %v1031 = vadd.f32 %v1027, 1.0
    %v1032 = vrcp.pop %v1028
    %v1033 = vmul.f32 1.0, %v1032
    %v1034 = vrcp.pop %v1029
    %v1035 = vmul.f32 1.0, %v1034
    %v1036 = vrcp.pop %v1030
    %v1037 = vmul.f32 1.0, %v1036
    %v1038 = vrcp.pop %v1031
    %v1039 = vmul.f32 1.0, %v1038
    %v1040 = vmul.f32 %v942, %v1033
    %v1041 = vmul.f32 %v945, %v1035
    %v1042 = vmul.f32 %v950, %v1037
    %v1043 = vmul.f32 %v953, %v1039
    %v1044 = vrot.slane %v1040, 5
    %v1045 = vrot.slane %v1041, 5
    %v1046 = vrot.slane %v1042, 5
    %v1047 = vrot.slane %v1043, 5
    %vm1048 = vcmp.lt.s32.totalorder %v85, 3
    %v1049 = vsel %vm1048, %v1046, %v1047
    %v1050 = vsel %vm1048, %v1045, %v1046
    %v1051 = vsel %vm1048, %v1044, %v1045
    %v1052 = vsel %vm1048, %v1047, %v1044
    %v1053 = vadd.s32 %v96, 4294967293
    %v1054 = vadd.s32 %v97, 4294967293
    %v1055 = vadd.s32 %v98, 4294967293
    %v1056 = vadd.s32 %v99, 4294967293
    %vm1057 = vcmp.ge.s32.totalorder %v1053, 0
    %vm1058 = vcmp.ge.s32.totalorder %v1054, 0
    %vm1059 = vcmp.ge.s32.totalorder %v1055, 0
    %vm1060 = vcmp.ge.s32.totalorder %v1056, 0
    %vm1061 = vcmp.lt.s32.totalorder %v1053, 16
    %vm1062 = vcmp.lt.s32.totalorder %v1054, 16
    %vm1063 = vcmp.lt.s32.totalorder %v1055, 16
    %vm1064 = vcmp.lt.s32.totalorder %v1056, 16
    %vm1065 = vmand %vm1057, %vm1061
    %vm1066 = vmand %vm1058, %vm1062
    %vm1067 = vmand %vm1059, %vm1063
    %vm1068 = vmand %vm1060, %vm1064
    %v1069 = vld [vmem:[#allocation8 + $0x10] sm:$0x1]
    %v1070 = vsel %vm1065, 1, 0
    %v1071 = vsel %vm1066, 1, 0
    %v1072 = vsel %vm1067, 1, 0
    %v1073 = vsel %vm1068, 1, 0
    %vm1074 = vcmp.eq.s32.totalorder %v1070, 1
    %vm1075 = vcmp.eq.s32.totalorder %v1071, 1
    %vm1076 = vcmp.eq.s32.totalorder %v1072, 1
    %vm1077 = vcmp.eq.s32.totalorder %v1073, 1
    %v1078 = vsel %vm1074, %v1052, 0.0
    %v1079 = vsel %vm1075, %v1051, 0.0
    %v1080 = vsel %vm1076, %v1050, 0.0
    %v1081 = vsel %vm1077, %v1049, 0.0
    %v1082 = vlaneseq
    %v1083 = vshrl.u32 %v1082, 7
    %v1084 = vsub.s32 0, %v1083
    %v1085 = vrot.slane %v1069, %v1084
    %v1086 = vmul.f32 %v1078, %v1085
    %v1087 = vmul.f32 %v1079, %v1085
    %v1088 = vmul.f32 %v1080, %v1085
    %v1089 = vmul.f32 %v1081, %v1085
    %v1090 = vadd.f32 %v1086, 0.0
    %v1091 = vadd.f32 %v1087, 0.0
    %v1092 = vadd.f32 %v1088, 0.0
    %v1093 = vadd.f32 %v1089, 0.0
    %v1094 = vrot.slane %v1040, 6
    %v1095 = vrot.slane %v1041, 6
    %v1096 = vrot.slane %v1042, 6
    %v1097 = vrot.slane %v1043, 6
    %vm1098 = vcmp.lt.s32.totalorder %v85, 2
    %v1099 = vsel %vm1098, %v1096, %v1097
    %v1100 = vsel %vm1098, %v1095, %v1096
    %v1101 = vsel %vm1098, %v1094, %v1095
    %v1102 = vsel %vm1098, %v1097, %v1094
    %v1103 = vadd.s32 %v96, 4294967294
    %v1104 = vadd.s32 %v97, 4294967294
    %v1105 = vadd.s32 %v98, 4294967294
    %v1106 = vadd.s32 %v99, 4294967294
    %vm1107 = vcmp.ge.s32.totalorder %v1103, 0
    %vm1108 = vcmp.ge.s32.totalorder %v1104, 0
    %vm1109 = vcmp.ge.s32.totalorder %v1105, 0
    %vm1110 = vcmp.ge.s32.totalorder %v1106, 0
    %vm1111 = vcmp.lt.s32.totalorder %v1103, 16
    %vm1112 = vcmp.lt.s32.totalorder %v1104, 16
    %vm1113 = vcmp.lt.s32.totalorder %v1105, 16
    %vm1114 = vcmp.lt.s32.totalorder %v1106, 16
    %vm1115 = vmand %vm1107, %vm1111
    %vm1116 = vmand %vm1108, %vm1112
    %vm1117 = vmand %vm1109, %vm1113
    %vm1118 = vmand %vm1110, %vm1114
    %v1119 = vld [vmem:[#allocation8 + $0x11] sm:$0x1]
    %v1120 = vsel %vm1115, 1, 0
    %v1121 = vsel %vm1116, 1, 0
    %v1122 = vsel %vm1117, 1, 0
    %v1123 = vsel %vm1118, 1, 0
    %vm1124 = vcmp.eq.s32.totalorder %v1120, 1
    %vm1125 = vcmp.eq.s32.totalorder %v1121, 1
    %vm1126 = vcmp.eq.s32.totalorder %v1122, 1
    %vm1127 = vcmp.eq.s32.totalorder %v1123, 1
    %v1128 = vsel %vm1124, %v1102, 0.0
    %v1129 = vsel %vm1125, %v1101, 0.0
    %v1130 = vsel %vm1126, %v1100, 0.0
    %v1131 = vsel %vm1127, %v1099, 0.0
    %v1132 = vlaneseq
    %v1133 = vshrl.u32 %v1132, 7
    %v1134 = vsub.s32 0, %v1133
    %v1135 = vrot.slane %v1119, %v1134
    %v1136 = vmul.f32 %v1128, %v1135
    %v1137 = vmul.f32 %v1129, %v1135
    %v1138 = vmul.f32 %v1130, %v1135
    %v1139 = vmul.f32 %v1131, %v1135
    %v1140 = vadd.f32 %v1090, %v1136
    %v1141 = vadd.f32 %v1091, %v1137
    %v1142 = vadd.f32 %v1092, %v1138
    %v1143 = vadd.f32 %v1093, %v1139
    %v1144 = vrot.slane %v1040, 7
    %v1145 = vrot.slane %v1041, 7
    %v1146 = vrot.slane %v1042, 7
    %v1147 = vrot.slane %v1043, 7
    %vm1148 = vcmp.lt.s32.totalorder %v85, 1
    %v1149 = vsel %vm1148, %v1146, %v1147
    %v1150 = vsel %vm1148, %v1145, %v1146
    %v1151 = vsel %vm1148, %v1144, %v1145
    %v1152 = vsel %vm1148, %v1147, %v1144
    %v1153 = vadd.s32 %v96, 4294967295
    %v1154 = vadd.s32 %v97, 4294967295
    %v1155 = vadd.s32 %v98, 4294967295
    %v1156 = vadd.s32 %v99, 4294967295
    %vm1157 = vcmp.ge.s32.totalorder %v1153, 0
    %vm1158 = vcmp.ge.s32.totalorder %v1154, 0
    %vm1159 = vcmp.ge.s32.totalorder %v1155, 0
    %vm1160 = vcmp.ge.s32.totalorder %v1156, 0
    %vm1161 = vcmp.lt.s32.totalorder %v1153, 16
    %vm1162 = vcmp.lt.s32.totalorder %v1154, 16
    %vm1163 = vcmp.lt.s32.totalorder %v1155, 16
    %vm1164 = vcmp.lt.s32.totalorder %v1156, 16
    %vm1165 = vmand %vm1157, %vm1161
    %vm1166 = vmand %vm1158, %vm1162
    %vm1167 = vmand %vm1159, %vm1163
    %vm1168 = vmand %vm1160, %vm1164
    %v1169 = vld [vmem:[#allocation8 + $0x12] sm:$0x1]
    %v1170 = vsel %vm1165, 1, 0
    %v1171 = vsel %vm1166, 1, 0
    %v1172 = vsel %vm1167, 1, 0
    %v1173 = vsel %vm1168, 1, 0
    %vm1174 = vcmp.eq.s32.totalorder %v1170, 1
    %vm1175 = vcmp.eq.s32.totalorder %v1171, 1
    %vm1176 = vcmp.eq.s32.totalorder %v1172, 1
    %vm1177 = vcmp.eq.s32.totalorder %v1173, 1
    %v1178 = vsel %vm1174, %v1152, 0.0
    %v1179 = vsel %vm1175, %v1151, 0.0
    %v1180 = vsel %vm1176, %v1150, 0.0
    %v1181 = vsel %vm1177, %v1149, 0.0
    %v1182 = vlaneseq
    %v1183 = vshrl.u32 %v1182, 7
    %v1184 = vsub.s32 0, %v1183
    %v1185 = vrot.slane %v1169, %v1184
    %v1186 = vmul.f32 %v1178, %v1185
    %v1187 = vmul.f32 %v1179, %v1185
    %v1188 = vmul.f32 %v1180, %v1185
    %v1189 = vmul.f32 %v1181, %v1185
    %v1190 = vadd.f32 %v1140, %v1186
    %v1191 = vadd.f32 %v1141, %v1187
    %v1192 = vadd.f32 %v1142, %v1188
    %v1193 = vadd.f32 %v1143, %v1189
    %vm1194 = vcmp.ge.s32.totalorder %v96, 0
    %vm1195 = vcmp.ge.s32.totalorder %v97, 0
    %vm1196 = vcmp.ge.s32.totalorder %v98, 0
    %vm1197 = vcmp.ge.s32.totalorder %v99, 0
    %vm1198 = vcmp.lt.s32.totalorder %v96, 16
    %vm1199 = vcmp.lt.s32.totalorder %v97, 16
    %vm1200 = vcmp.lt.s32.totalorder %v98, 16
    %vm1201 = vcmp.lt.s32.totalorder %v99, 16
    %vm1202 = vmand %vm1194, %vm1198
    %vm1203 = vmand %vm1195, %vm1199
    %vm1204 = vmand %vm1196, %vm1200
    %vm1205 = vmand %vm1197, %vm1201
    %v1206 = vld [vmem:[#allocation8 + $0x13] sm:$0x1]
    %v1207 = vsel %vm1202, 1, 0
    %v1208 = vsel %vm1203, 1, 0
    %v1209 = vsel %vm1204, 1, 0
    %v1210 = vsel %vm1205, 1, 0
    %vm1211 = vcmp.eq.s32.totalorder %v1207, 1
    %vm1212 = vcmp.eq.s32.totalorder %v1208, 1
    %vm1213 = vcmp.eq.s32.totalorder %v1209, 1
    %vm1214 = vcmp.eq.s32.totalorder %v1210, 1
    %v1215 = vsel %vm1211, %v1040, 0.0
    %v1216 = vsel %vm1212, %v1041, 0.0
    %v1217 = vsel %vm1213, %v1042, 0.0
    %v1218 = vsel %vm1214, %v1043, 0.0
    %v1219 = vlaneseq
    %v1220 = vshrl.u32 %v1219, 7
    %v1221 = vsub.s32 0, %v1220
    %v1222 = vrot.slane %v1206, %v1221
    %v1223 = vmul.f32 %v1215, %v1222
    %v1224 = vmul.f32 %v1216, %v1222
    %v1225 = vmul.f32 %v1217, %v1222
    %v1226 = vmul.f32 %v1218, %v1222
    %v1227 = vadd.f32 %v1190, %v1223
    %v1228 = vadd.f32 %v1191, %v1224
    %v1229 = vadd.f32 %v1192, %v1225
    %v1230 = vadd.f32 %v1193, %v1226
    %v1231 = vrot.slane %v1040, 1
    %v1232 = vrot.slane %v1041, 1
    %v1233 = vrot.slane %v1042, 1
    %v1234 = vrot.slane %v1043, 1
    %vm1235 = vcmp.lt.s32.totalorder %v85, 7
    %v1236 = vsel %vm1235, %v1233, %v1234
    %v1237 = vsel %vm1235, %v1232, %v1233
    %v1238 = vsel %vm1235, %v1231, %v1232
    %v1239 = vsel %vm1235, %v1234, %v1231
    %v1240 = vadd.s32 %v96, 1
    %v1241 = vadd.s32 %v97, 1
    %v1242 = vadd.s32 %v98, 1
    %v1243 = vadd.s32 %v99, 1
    %vm1244 = vcmp.ge.s32.totalorder %v1240, 0
    %vm1245 = vcmp.ge.s32.totalorder %v1241, 0
    %vm1246 = vcmp.ge.s32.totalorder %v1242, 0
    %vm1247 = vcmp.ge.s32.totalorder %v1243, 0
    %vm1248 = vcmp.lt.s32.totalorder %v1240, 16
    %vm1249 = vcmp.lt.s32.totalorder %v1241, 16
    %vm1250 = vcmp.lt.s32.totalorder %v1242, 16
    %vm1251 = vcmp.lt.s32.totalorder %v1243, 16
    %vm1252 = vmand %vm1244, %vm1248
    %vm1253 = vmand %vm1245, %vm1249
    %vm1254 = vmand %vm1246, %vm1250
    %vm1255 = vmand %vm1247, %vm1251
    %v1256 = vld [vmem:[#allocation8 + $0x14] sm:$0x1]
    %v1257 = vsel %vm1252, 1, 0
    %v1258 = vsel %vm1253, 1, 0
    %v1259 = vsel %vm1254, 1, 0
    %v1260 = vsel %vm1255, 1, 0
    %vm1261 = vcmp.eq.s32.totalorder %v1257, 1
    %vm1262 = vcmp.eq.s32.totalorder %v1258, 1
    %vm1263 = vcmp.eq.s32.totalorder %v1259, 1
    %vm1264 = vcmp.eq.s32.totalorder %v1260, 1
    %v1265 = vsel %vm1261, %v1238, 0.0
    %v1266 = vsel %vm1262, %v1237, 0.0
    %v1267 = vsel %vm1263, %v1236, 0.0
    %v1268 = vsel %vm1264, %v1239, 0.0
    %v1269 = vlaneseq
    %v1270 = vshrl.u32 %v1269, 7
    %v1271 = vsub.s32 0, %v1270
    %v1272 = vrot.slane %v1256, %v1271
    %v1273 = vmul.f32 %v1265, %v1272
    %v1274 = vmul.f32 %v1266, %v1272
    %v1275 = vmul.f32 %v1267, %v1272
    %v1276 = vmul.f32 %v1268, %v1272
    %v1277 = vadd.f32 %v1227, %v1273
    %v1278 = vadd.f32 %v1228, %v1274
    %v1279 = vadd.f32 %v1229, %v1275
    %v1280 = vadd.f32 %v1230, %v1276
    %v1281 = vrot.slane %v1040, 2
    %v1282 = vrot.slane %v1041, 2
    %v1283 = vrot.slane %v1042, 2
    %v1284 = vrot.slane %v1043, 2
    %vm1285 = vcmp.lt.s32.totalorder %v85, 6
    %v1286 = vsel %vm1285, %v1283, %v1284
    %v1287 = vsel %vm1285, %v1282, %v1283
    %v1288 = vsel %vm1285, %v1281, %v1282
    %v1289 = vsel %vm1285, %v1284, %v1281
    %v1290 = vadd.s32 %v96, 2
    %v1291 = vadd.s32 %v97, 2
    %v1292 = vadd.s32 %v98, 2
    %v1293 = vadd.s32 %v99, 2
    %vm1294 = vcmp.ge.s32.totalorder %v1290, 0
    %vm1295 = vcmp.ge.s32.totalorder %v1291, 0
    %vm1296 = vcmp.ge.s32.totalorder %v1292, 0
    %vm1297 = vcmp.ge.s32.totalorder %v1293, 0
    %vm1298 = vcmp.lt.s32.totalorder %v1290, 16
    %vm1299 = vcmp.lt.s32.totalorder %v1291, 16
    %vm1300 = vcmp.lt.s32.totalorder %v1292, 16
    %vm1301 = vcmp.lt.s32.totalorder %v1293, 16
    %vm1302 = vmand %vm1294, %vm1298
    %vm1303 = vmand %vm1295, %vm1299
    %vm1304 = vmand %vm1296, %vm1300
    %vm1305 = vmand %vm1297, %vm1301
    %v1306 = vld [vmem:[#allocation8 + $0x15] sm:$0x1]
    %v1307 = vsel %vm1302, 1, 0
    %v1308 = vsel %vm1303, 1, 0
    %v1309 = vsel %vm1304, 1, 0
    %v1310 = vsel %vm1305, 1, 0
    %vm1311 = vcmp.eq.s32.totalorder %v1307, 1
    %vm1312 = vcmp.eq.s32.totalorder %v1308, 1
    %vm1313 = vcmp.eq.s32.totalorder %v1309, 1
    %vm1314 = vcmp.eq.s32.totalorder %v1310, 1
    %v1315 = vsel %vm1311, %v1288, 0.0
    %v1316 = vsel %vm1312, %v1287, 0.0
    %v1317 = vsel %vm1313, %v1286, 0.0
    %v1318 = vsel %vm1314, %v1289, 0.0
    %v1319 = vlaneseq
    %v1320 = vshrl.u32 %v1319, 7
    %v1321 = vsub.s32 0, %v1320
    %v1322 = vrot.slane %v1306, %v1321
    %v1323 = vmul.f32 %v1315, %v1322
    %v1324 = vmul.f32 %v1316, %v1322
    %v1325 = vmul.f32 %v1317, %v1322
    %v1326 = vmul.f32 %v1318, %v1322
    %v1327 = vadd.f32 %v1277, %v1323
    %v1328 = vadd.f32 %v1278, %v1324
    %v1329 = vadd.f32 %v1279, %v1325
    %v1330 = vadd.f32 %v1280, %v1326
    %v1331 = vrot.slane %v1040, 3
    %v1332 = vrot.slane %v1041, 3
    %v1333 = vrot.slane %v1042, 3
    %v1334 = vrot.slane %v1043, 3
    %vm1335 = vcmp.lt.s32.totalorder %v85, 5
    %v1336 = vsel %vm1335, %v1333, %v1334
    %v1337 = vsel %vm1335, %v1332, %v1333
    %v1338 = vsel %vm1335, %v1331, %v1332
    %v1339 = vsel %vm1335, %v1334, %v1331
    %v1340 = vadd.s32 %v96, 3
    %v1341 = vadd.s32 %v97, 3
    %v1342 = vadd.s32 %v98, 3
    %v1343 = vadd.s32 %v99, 3
    %vm1344 = vcmp.ge.s32.totalorder %v1340, 0
    %vm1345 = vcmp.ge.s32.totalorder %v1341, 0
    %vm1346 = vcmp.ge.s32.totalorder %v1342, 0
    %vm1347 = vcmp.ge.s32.totalorder %v1343, 0
    %vm1348 = vcmp.lt.s32.totalorder %v1340, 16
    %vm1349 = vcmp.lt.s32.totalorder %v1341, 16
    %vm1350 = vcmp.lt.s32.totalorder %v1342, 16
    %vm1351 = vcmp.lt.s32.totalorder %v1343, 16
    %vm1352 = vmand %vm1344, %vm1348
    %vm1353 = vmand %vm1345, %vm1349
    %vm1354 = vmand %vm1346, %vm1350
    %vm1355 = vmand %vm1347, %vm1351
    %v1356 = vld [vmem:[#allocation8 + $0x16] sm:$0x1]
    %v1357 = vsel %vm1352, 1, 0
    %v1358 = vsel %vm1353, 1, 0
    %v1359 = vsel %vm1354, 1, 0
    %v1360 = vsel %vm1355, 1, 0
    %vm1361 = vcmp.eq.s32.totalorder %v1357, 1
    %vm1362 = vcmp.eq.s32.totalorder %v1358, 1
    %vm1363 = vcmp.eq.s32.totalorder %v1359, 1
    %vm1364 = vcmp.eq.s32.totalorder %v1360, 1
    %v1365 = vsel %vm1361, %v1338, 0.0
    %v1366 = vsel %vm1362, %v1337, 0.0
    %v1367 = vsel %vm1363, %v1336, 0.0
    %v1368 = vsel %vm1364, %v1339, 0.0
    %v1369 = vlaneseq
    %v1370 = vshrl.u32 %v1369, 7
    %v1371 = vsub.s32 0, %v1370
    %v1372 = vrot.slane %v1356, %v1371
    %v1373 = vmul.f32 %v1365, %v1372
    %v1374 = vmul.f32 %v1366, %v1372
    %v1375 = vmul.f32 %v1367, %v1372
    %v1376 = vmul.f32 %v1368, %v1372
    %v1377 = vadd.f32 %v1327, %v1373
    %v1378 = vadd.f32 %v1328, %v1374
    %v1379 = vadd.f32 %v1329, %v1375
    %v1380 = vadd.f32 %v1330, %v1376
    %v1381 = vld [vmem:[#allocation8 + $0x17] sm:$0x1]
    %v1382 = vlaneseq
    %v1383 = vshrl.u32 %v1382, 7
    %v1384 = vsub.s32 0, %v1383
    %v1385 = vrot.slane %v1381, %v1384
    %v1386 = vadd.f32 %v1377, %v1385
    %v1387 = vadd.f32 %v1378, %v1385
    %v1388 = vadd.f32 %v1379, %v1385
    %v1389 = vadd.f32 %v1380, %v1385
    %v1391 = vsel %vm237, %v132, 0
    %1393 = vmatprep.subr.mxu0 0.0
    %1394 = vmatpush1.msra.mxu0 0.0
    %1395 = vmatprep.subr.mxu0 0.0
    %1396 = vmatpush1.msra.mxu0 0.0
    %1397 = vmatprep.subr.mxu0 0.0
    %1398 = vmatpush1.msra.mxu0 0.0
    %1399 = vmatprep.subr.mxu0 0.0
    %1400 = vmatpush1.msra.mxu0 0.0
    %1401 = vmatprep.subr.mxu0 0.0
    %1402 = vmatpush1.msra.mxu0 0.0
    %1403 = vmatprep.subr.mxu0 0.0
    %1404 = vmatpush1.msra.mxu0 0.0
    %1405 = vmatprep.subr.mxu0 0.0
    %1406 = vmatpush1.msra.mxu0 0.0
    %1407 = vmatprep.subr.mxu0 0.0
    %1408 = vmatpush1.msra.mxu0 0.0
    %1409 = vmatprep.subr.mxu0 0.0
    %1410 = vmatpush1.msra.mxu0 0.0
    %1411 = vmatprep.subr.mxu0 0.0
    %1412 = vmatpush1.msra.mxu0 0.0
    %1413 = vmatprep.subr.mxu0 0.0
    %1414 = vmatpush1.msra.mxu0 0.0
    %1415 = vmatprep.subr.mxu0 0.0
    %1416 = vmatpush1.msra.mxu0 0.0
    %1417 = vmatprep.subr.mxu0 0.0
    %1418 = vmatpush1.msra.mxu0 %v1389
    %1419 = vmatprep.subr.mxu0 0.0
    %1420 = vmatpush1.msra.mxu0 %v1388
    %1421 = vmatprep.subr.mxu0 0.0
    %1422 = vmatpush1.msra.mxu0 %v1387
    %1423 = vmatprep.subr.mxu0 0.0
    %1424 = vmatpush1.msra.mxu0 %v1386
    %1425 = vmatprep.subr.mxu0 0.0
    %1426 = vmatpush2.msra.mxu0 0.0
    %1427 = vmatprep.subr.mxu0 0.0
    %1428 = vmatpush2.msra.mxu0 0.0
    %1429 = vmatprep.subr.mxu0 0.0
    %1430 = vmatpush2.msra.mxu0 0.0
    %1431 = vmatprep.subr.mxu0 0.0
    %1432 = vmatpush2.msra.mxu0 0.0
    %1433 = vmatprep.subr.mxu0 0.0
    %1434 = vmatpush2.msra.mxu0 0.0
    %1435 = vmatprep.subr.mxu0 0.0
    %1436 = vmatpush2.msra.mxu0 0.0
    %1437 = vmatprep.subr.mxu0 0.0
    %1438 = vmatpush2.msra.mxu0 0.0
    %1439 = vmatprep.subr.mxu0 0.0
    %1440 = vmatpush2.msra.mxu0 0.0
    %1441 = vmatprep.subr.mxu0 0.0
    %1442 = vmatpush2.msra.mxu0 0.0
    %1443 = vmatprep.subr.mxu0 0.0
    %1444 = vmatpush2.msra.mxu0 0.0
    %1445 = vmatprep.subr.mxu0 0.0
    %1446 = vmatpush2.msra.mxu0 0.0
    %1447 = vmatprep.subr.mxu0 0.0
    %1448 = vmatpush2.msra.mxu0 0.0
    %1449 = vmatprep.subr.mxu0 0.0
    %1450 = vmatpush2.msra.mxu0 0.0
    %1451 = vmatprep.subr.mxu0 0.0
    %1452 = vmatpush2.msra.mxu0 0.0
    %1453 = vmatprep.subr.mxu0 0.0
    %1454 = vmatpush2.msra.mxu0 0.0
    %1455 = vmatprep.subr.mxu0 0.0
    %1456 = vmatpush2.msra.mxu0 0.0
    %1457 = vmatprep.mubr.f32.mxu0 0.0
    %1458 = vmatmul.mubr.f32.gmra.mxu0 %v1391
    %v1459 = vpop.f32.mrf.mxu0
    %v1460 = vadd.f32 0.0, %v1459
    %v1461 = vpop.f32.mrf.mxu0
    %1462 = vdwg.mxu0
    %vm1463 = vcmask 15360
    %v1465 = vsel %vm1463, %v121, 0
    %v1468 = vsel %vm1463, %v122, 0
    %v1471 = vsel %vm1463, %v123, 0
    %v1474 = vsel %vm1463, %v124, 0
    %vm1476 = vcmask 1041408
    %v1478 = vsel %vm1476, %v1460, 0
    %1480 = vmatprep.subr.mxu0 0.0
    %1481 = vmatpush1.msra.mxu0 0.0
    %1482 = vmatprep.subr.mxu0 0.0
    %1483 = vmatpush1.msra.mxu0 0.0
    %1484 = vmatprep.subr.mxu0 0.0
    %1485 = vmatpush1.msra.mxu0 0.0
    %1486 = vmatprep.subr.mxu0 0.0
    %1487 = vmatpush1.msra.mxu0 0.0
    %1488 = vmatprep.subr.mxu0 0.0
    %1489 = vmatpush1.msra.mxu0 0.0
    %1490 = vmatprep.subr.mxu0 0.0
    %1491 = vmatpush1.msra.mxu0 0.0
    %1492 = vmatprep.subr.mxu0 0.0
    %1493 = vmatpush1.msra.mxu0 0.0
    %1494 = vmatprep.subr.mxu0 0.0
    %1495 = vmatpush1.msra.mxu0 0.0
    %1496 = vmatprep.subr.mxu0 0.0
    %1497 = vmatpush1.msra.mxu0 0.0
    %1498 = vmatprep.subr.mxu0 0.0
    %1499 = vmatpush1.msra.mxu0 0.0
    %1500 = vmatprep.subr.mxu0 0.0
    %1501 = vmatpush1.msra.mxu0 0.0
    %1502 = vmatprep.subr.mxu0 0.0
    %1503 = vmatpush1.msra.mxu0 0.0
    %1504 = vmatprep.subr.mxu0 0.0
    %1505 = vmatpush1.msra.mxu0 0.0
    %1506 = vmatprep.subr.mxu0 0.0
    %1507 = vmatpush1.msra.mxu0 0.0
    %1508 = vmatprep.subr.mxu0 0.0
    %1509 = vmatpush1.msra.mxu0 0.0
    %1510 = vmatprep.subr.mxu0 0.0
    %1511 = vmatpush1.msra.mxu0 %v1478
    %1512 = vmatprep.subr.mxu0 0.0
    %1513 = vmatpush2.msra.mxu0 0.0
    %1514 = vmatprep.subr.mxu0 0.0
    %1515 = vmatpush2.msra.mxu0 0.0
    %1516 = vmatprep.subr.mxu0 0.0
    %1517 = vmatpush2.msra.mxu0 0.0
    %1518 = vmatprep.subr.mxu0 0.0
    %1519 = vmatpush2.msra.mxu0 0.0
    %1520 = vmatprep.subr.mxu0 0.0
    %1521 = vmatpush2.msra.mxu0 0.0
    %1522 = vmatprep.subr.mxu0 0.0
    %1523 = vmatpush2.msra.mxu0 0.0
    %1524 = vmatprep.subr.mxu0 0.0
    %1525 = vmatpush2.msra.mxu0 0.0
    %1526 = vmatprep.subr.mxu0 0.0
    %1527 = vmatpush2.msra.mxu0 0.0
    %1528 = vmatprep.subr.mxu0 0.0
    %1529 = vmatpush2.msra.mxu0 0.0
    %1530 = vmatprep.subr.mxu0 0.0
    %1531 = vmatpush2.msra.mxu0 0.0
    %1532 = vmatprep.subr.mxu0 0.0
    %1533 = vmatpush2.msra.mxu0 0.0
    %1534 = vmatprep.subr.mxu0 0.0
    %1535 = vmatpush2.msra.mxu0 0.0
    %1536 = vmatprep.subr.mxu0 0.0
    %1537 = vmatpush2.msra.mxu0 0.0
    %1538 = vmatprep.subr.mxu0 0.0
    %1539 = vmatpush2.msra.mxu0 0.0
    %1540 = vmatprep.subr.mxu0 0.0
    %1541 = vmatpush2.msra.mxu0 0.0
    %1542 = vmatprep.subr.mxu0 0.0
    %1543 = vmatpush2.msra.mxu0 0.0
    %1544 = vmatprep.mubr.f32.mxu0 0.0
    %1545 = vmatmul.mubr.f32.gmra.mxu0 %v1465
    %v1546 = vpop.f32.mrf.mxu0
    %v1547 = vadd.f32 0.0, %v1546
    %v1548 = vpop.f32.mrf.mxu0
    %1549 = vmatprep.mubr.f32.mxu0 0.0
    %1550 = vmatmul.mubr.f32.gmra.mxu0 %v1468
    %v1551 = vpop.f32.mrf.mxu0
    %v1552 = vadd.f32 0.0, %v1551
    %v1553 = vpop.f32.mrf.mxu0
    %1554 = vmatprep.mubr.f32.mxu0 0.0
    %1555 = vmatmul.mubr.f32.gmra.mxu0 %v1471
    %v1556 = vpop.f32.mrf.mxu0
    %v1557 = vadd.f32 0.0, %v1556
    %v1558 = vpop.f32.mrf.mxu0
    %1559 = vmatprep.mubr.f32.mxu0 0.0
    %1560 = vmatmul.mubr.f32.gmra.mxu0 %v1474
    %v1561 = vpop.f32.mrf.mxu0
    %v1562 = vadd.f32 0.0, %v1561
    %v1563 = vpop.f32.mrf.mxu0
    %1564 = vdwg.mxu0
    %v1565 = vmul.f32 %v1547, 0.0625
    %v1566 = vmul.f32 %v1552, 0.0625
    %v1567 = vmul.f32 %v1557, 0.0625
    %v1568 = vmul.f32 %v1562, 0.0625
    %v1569 = vsub.f32 %v1386, %v1565
    %v1570 = vsub.f32 %v1387, %v1566
    %v1571 = vsub.f32 %v1388, %v1567
    %v1572 = vsub.f32 %v1389, %v1568
    %v1573 = vmul.f32 %v1569, %v1569
    %v1574 = vmul.f32 %v1570, %v1570
    %v1575 = vmul.f32 %v1571, %v1571
    %v1576 = vmul.f32 %v1572, %v1572
    %1577 = vmatprep.subr.mxu0 0.0
    %1578 = vmatpush1.msra.mxu0 0.0
    %1579 = vmatprep.subr.mxu0 0.0
    %1580 = vmatpush1.msra.mxu0 0.0
    %1581 = vmatprep.subr.mxu0 0.0
    %1582 = vmatpush1.msra.mxu0 0.0
    %1583 = vmatprep.subr.mxu0 0.0
    %1584 = vmatpush1.msra.mxu0 0.0
    %1585 = vmatprep.subr.mxu0 0.0
    %1586 = vmatpush1.msra.mxu0 0.0
    %1587 = vmatprep.subr.mxu0 0.0
    %1588 = vmatpush1.msra.mxu0 0.0
    %1589 = vmatprep.subr.mxu0 0.0
    %1590 = vmatpush1.msra.mxu0 0.0
    %1591 = vmatprep.subr.mxu0 0.0
    %1592 = vmatpush1.msra.mxu0 0.0
    %1593 = vmatprep.subr.mxu0 0.0
    %1594 = vmatpush1.msra.mxu0 0.0
    %1595 = vmatprep.subr.mxu0 0.0
    %1596 = vmatpush1.msra.mxu0 0.0
    %1597 = vmatprep.subr.mxu0 0.0
    %1598 = vmatpush1.msra.mxu0 0.0
    %1599 = vmatprep.subr.mxu0 0.0
    %1600 = vmatpush1.msra.mxu0 0.0
    %1601 = vmatprep.subr.mxu0 0.0
    %1602 = vmatpush1.msra.mxu0 %v1576
    %1603 = vmatprep.subr.mxu0 0.0
    %1604 = vmatpush1.msra.mxu0 %v1575
    %1605 = vmatprep.subr.mxu0 0.0
    %1606 = vmatpush1.msra.mxu0 %v1574
    %1607 = vmatprep.subr.mxu0 0.0
    %1608 = vmatpush1.msra.mxu0 %v1573
    %1609 = vmatprep.subr.mxu0 0.0
    %1610 = vmatpush2.msra.mxu0 0.0
    %1611 = vmatprep.subr.mxu0 0.0
    %1612 = vmatpush2.msra.mxu0 0.0
    %1613 = vmatprep.subr.mxu0 0.0
    %1614 = vmatpush2.msra.mxu0 0.0
    %1615 = vmatprep.subr.mxu0 0.0
    %1616 = vmatpush2.msra.mxu0 0.0
    %1617 = vmatprep.subr.mxu0 0.0
    %1618 = vmatpush2.msra.mxu0 0.0
    %1619 = vmatprep.subr.mxu0 0.0
    %1620 = vmatpush2.msra.mxu0 0.0
    %1621 = vmatprep.subr.mxu0 0.0
    %1622 = vmatpush2.msra.mxu0 0.0
    %1623 = vmatprep.subr.mxu0 0.0
    %1624 = vmatpush2.msra.mxu0 0.0
    %1625 = vmatprep.subr.mxu0 0.0
    %1626 = vmatpush2.msra.mxu0 0.0
    %1627 = vmatprep.subr.mxu0 0.0
    %1628 = vmatpush2.msra.mxu0 0.0
    %1629 = vmatprep.subr.mxu0 0.0
    %1630 = vmatpush2.msra.mxu0 0.0
    %1631 = vmatprep.subr.mxu0 0.0
    %1632 = vmatpush2.msra.mxu0 0.0
    %1633 = vmatprep.subr.mxu0 0.0
    %1634 = vmatpush2.msra.mxu0 0.0
    %1635 = vmatprep.subr.mxu0 0.0
    %1636 = vmatpush2.msra.mxu0 0.0
    %1637 = vmatprep.subr.mxu0 0.0
    %1638 = vmatpush2.msra.mxu0 0.0
    %1639 = vmatprep.subr.mxu0 0.0
    %1640 = vmatpush2.msra.mxu0 0.0
    %1641 = vmatprep.mubr.f32.mxu0 0.0
    %1642 = vmatmul.mubr.f32.gmra.mxu0 %v1391
    %v1643 = vpop.f32.mrf.mxu0
    %v1644 = vadd.f32 0.0, %v1643
    %v1645 = vpop.f32.mrf.mxu0
    %1646 = vdwg.mxu0
    %v1648 = vsel %vm1476, %v1644, 0
    %1650 = vmatprep.subr.mxu0 0.0
    %1651 = vmatpush1.msra.mxu0 0.0
    %1652 = vmatprep.subr.mxu0 0.0
    %1653 = vmatpush1.msra.mxu0 0.0
    %1654 = vmatprep.subr.mxu0 0.0
    %1655 = vmatpush1.msra.mxu0 0.0
    %1656 = vmatprep.subr.mxu0 0.0
    %1657 = vmatpush1.msra.mxu0 0.0
    %1658 = vmatprep.subr.mxu0 0.0
    %1659 = vmatpush1.msra.mxu0 0.0
    %1660 = vmatprep.subr.mxu0 0.0
    %1661 = vmatpush1.msra.mxu0 0.0
    %1662 = vmatprep.subr.mxu0 0.0
    %1663 = vmatpush1.msra.mxu0 0.0
    %1664 = vmatprep.subr.mxu0 0.0
    %1665 = vmatpush1.msra.mxu0 0.0
    %1666 = vmatprep.subr.mxu0 0.0
    %1667 = vmatpush1.msra.mxu0 0.0
    %1668 = vmatprep.subr.mxu0 0.0
    %1669 = vmatpush1.msra.mxu0 0.0
    %1670 = vmatprep.subr.mxu0 0.0
    %1671 = vmatpush1.msra.mxu0 0.0
    %1672 = vmatprep.subr.mxu0 0.0
    %1673 = vmatpush1.msra.mxu0 0.0
    %1674 = vmatprep.subr.mxu0 0.0
    %1675 = vmatpush1.msra.mxu0 0.0
    %1676 = vmatprep.subr.mxu0 0.0
    %1677 = vmatpush1.msra.mxu0 0.0
    %1678 = vmatprep.subr.mxu0 0.0
    %1679 = vmatpush1.msra.mxu0 0.0
    %1680 = vmatprep.subr.mxu0 0.0
    %1681 = vmatpush1.msra.mxu0 %v1648
    %1682 = vmatprep.subr.mxu0 0.0
    %1683 = vmatpush2.msra.mxu0 0.0
    %1684 = vmatprep.subr.mxu0 0.0
    %1685 = vmatpush2.msra.mxu0 0.0
    %1686 = vmatprep.subr.mxu0 0.0
    %1687 = vmatpush2.msra.mxu0 0.0
    %1688 = vmatprep.subr.mxu0 0.0
    %1689 = vmatpush2.msra.mxu0 0.0
    %1690 = vmatprep.subr.mxu0 0.0
    %1691 = vmatpush2.msra.mxu0 0.0
    %1692 = vmatprep.subr.mxu0 0.0
    %1693 = vmatpush2.msra.mxu0 0.0
    %1694 = vmatprep.subr.mxu0 0.0
    %1695 = vmatpush2.msra.mxu0 0.0
    %1696 = vmatprep.subr.mxu0 0.0
    %1697 = vmatpush2.msra.mxu0 0.0
    %1698 = vmatprep.subr.mxu0 0.0
    %1699 = vmatpush2.msra.mxu0 0.0
    %1700 = vmatprep.subr.mxu0 0.0
    %1701 = vmatpush2.msra.mxu0 0.0
    %1702 = vmatprep.subr.mxu0 0.0
    %1703 = vmatpush2.msra.mxu0 0.0
    %1704 = vmatprep.subr.mxu0 0.0
    %1705 = vmatpush2.msra.mxu0 0.0
    %1706 = vmatprep.subr.mxu0 0.0
    %1707 = vmatpush2.msra.mxu0 0.0
    %1708 = vmatprep.subr.mxu0 0.0
    %1709 = vmatpush2.msra.mxu0 0.0
    %1710 = vmatprep.subr.mxu0 0.0
    %1711 = vmatpush2.msra.mxu0 0.0
    %1712 = vmatprep.subr.mxu0 0.0
    %1713 = vmatpush2.msra.mxu0 0.0
    %1714 = vmatprep.mubr.f32.mxu0 0.0
    %1715 = vmatmul.mubr.f32.gmra.mxu0 %v1465
    %v1716 = vpop.f32.mrf.mxu0
    %v1717 = vadd.f32 0.0, %v1716
    %v1718 = vpop.f32.mrf.mxu0
    %1719 = vmatprep.mubr.f32.mxu0 0.0
    %1720 = vmatmul.mubr.f32.gmra.mxu0 %v1468
    %v1721 = vpop.f32.mrf.mxu0
    %v1722 = vadd.f32 0.0, %v1721
    %v1723 = vpop.f32.mrf.mxu0
    %1724 = vmatprep.mubr.f32.mxu0 0.0
    %1725 = vmatmul.mubr.f32.gmra.mxu0 %v1471
    %v1726 = vpop.f32.mrf.mxu0
    %v1727 = vadd.f32 0.0, %v1726
    %v1728 = vpop.f32.mrf.mxu0
    %1729 = vmatprep.mubr.f32.mxu0 0.0
    %1730 = vmatmul.mubr.f32.gmra.mxu0 %v1474
    %v1731 = vpop.f32.mrf.mxu0
    %v1732 = vadd.f32 0.0, %v1731
    %v1733 = vpop.f32.mrf.mxu0
    %1734 = vdwg.mxu0
    %v1735 = vmul.f32 %v1717, 0.0625
    %v1736 = vmul.f32 %v1722, 0.0625
    %v1737 = vmul.f32 %v1727, 0.0625
    %v1738 = vmul.f32 %v1732, 0.0625
    %v1739 = vadd.f32 %v1735, 1e-05
    %v1740 = vadd.f32 %v1736, 1e-05
    %v1741 = vadd.f32 %v1737, 1e-05
    %v1742 = vadd.f32 %v1738, 1e-05
    %v1743 = vrsqrt.pop %v1739
    %v1744 = vrsqrt.pop %v1740
    %v1745 = vrsqrt.pop %v1741
    %v1746 = vrsqrt.pop %v1742
    %v1747 = vmul.f32 %v1569, %v1743
    %v1748 = vmul.f32 %v1570, %v1744
    %v1749 = vmul.f32 %v1571, %v1745
    %v1750 = vmul.f32 %v1572, %v1746
    %v1751 = vld [vmem:[#allocation8 + $0x18] sm:$0x1]
    %v1752 = vlaneseq
    %v1753 = vshrl.u32 %v1752, 7
    %v1754 = vsub.s32 0, %v1753
    %v1755 = vrot.slane %v1751, %v1754
    %v1756 = vmul.f32 %v1747, %v1755
    %v1757 = vmul.f32 %v1748, %v1755
    %v1758 = vmul.f32 %v1749, %v1755
    %v1759 = vmul.f32 %v1750, %v1755
    %v1760 = vld [vmem:[#allocation8 + $0x19] sm:$0x1]
    %v1761 = vlaneseq
    %v1762 = vshrl.u32 %v1761, 7
    %v1763 = vsub.s32 0, %v1762
    %v1764 = vrot.slane %v1760, %v1763
    %v1765 = vadd.f32 %v1756, %v1764
    %v1766 = vadd.f32 %v1757, %v1764
    %v1767 = vadd.f32 %v1758, %v1764
    %v1768 = vadd.f32 %v1759, %v1764
    %v1769 = vxor.u32 %v1765, 2147483648
    %v1770 = vxor.u32 %v1766, 2147483648
    %v1771 = vxor.u32 %v1767, 2147483648
    %v1772 = vxor.u32 %v1768, 2147483648
    %v1773 = vmul.f32 %v1769, 1.442695
    %v1774 = vpow.pop %v1773
    %v1775 = vmul.f32 %v1770, 1.442695
    %v1776 = vpow.pop %v1775
    %v1777 = vmul.f32 %v1771, 1.442695
    %v1778 = vpow.pop %v1777
    %v1779 = vmul.f32 %v1772, 1.442695
    %v1780 = vpow.pop %v1779
    %v1781 = vadd.f32 %v1774, 1.0
    %v1782 = vadd.f32 %v1776, 1.0
    %v1783 = vadd.f32 %v1778, 1.0
    %v1784 = vadd.f32 %v1780, 1.0
    %v1785 = vrcp.pop %v1781
    %v1786 = vmul.f32 1.0, %v1785
    %v1787 = vrcp.pop %v1782
    %v1788 = vmul.f32 1.0, %v1787
    %v1789 = vrcp.pop %v1783
    %v1790 = vmul.f32 1.0, %v1789
    %v1791 = vrcp.pop %v1784
    %v1792 = vmul.f32 1.0, %v1791
    %v1793 = vmul.f32 %v1765, %v1786
    %v1794 = vmul.f32 %v1766, %v1788
    %v1795 = vmul.f32 %v1767, %v1790
    %v1796 = vmul.f32 %v1768, %v1792
    %v1797 = vpack.c.bf16 %v1794, %v1793
    %v1798 = vpack.c.bf16 %v1796, %v1795
    %v1799 = vld [vmem:[#allocation8 + $0x1a] sm:$0x1]
    %v1800 = vlaneseq
    %v1801 = vshrl.u32 %v1800, 7
    %v1802 = vsub.s32 0, %v1801
    %v1803 = vrot.slane %v1799, %v1802
    %1804 = vrot.lane.b32.xlu0 %v897, 64
    %v1805 = vpop.permute.xlu0 %1804
    %1806 = vrot.lane.b32.xlu0 %v898, 64
    %v1807 = vpop.permute.xlu0 %1806
    %v1811 = vsel %vm237, %v1797, 0
    %v1814 = vsel %vm237, %v1798, 0
    %1816 = vmatprep.subr.bf16.mxu0 0
    %1817 = vmatpush1.bf16.msra.mxu0 0
    %1818 = vmatprep.subr.bf16.mxu0 0
    %1819 = vmatpush1.bf16.msra.mxu0 0
    %1820 = vmatprep.subr.bf16.mxu0 0
    %1821 = vmatpush1.bf16.msra.mxu0 0
    %1822 = vmatprep.subr.bf16.mxu0 0
    %1823 = vmatpush1.bf16.msra.mxu0 0
    %1824 = vmatprep.subr.bf16.mxu0 0
    %1825 = vmatpush1.bf16.msra.mxu0 0
    %1826 = vmatprep.subr.bf16.mxu0 0
    %1827 = vmatpush1.bf16.msra.mxu0 0
    %1828 = vmatprep.subr.bf16.mxu0 0
    %1829 = vmatpush1.bf16.msra.mxu0 %v1807
    %1830 = vmatprep.subr.bf16.mxu0 0
    %1831 = vmatpush1.bf16.msra.mxu0 %v1805
    %1832 = vmatprep.subr.bf16.mxu0 0
    %1833 = vmatpush2.bf16.msra.mxu0 0
    %1834 = vmatprep.subr.bf16.mxu0 0
    %1835 = vmatpush2.bf16.msra.mxu0 0
    %1836 = vmatprep.subr.bf16.mxu0 0
    %1837 = vmatpush2.bf16.msra.mxu0 0
    %1838 = vmatprep.subr.bf16.mxu0 0
    %1839 = vmatpush2.bf16.msra.mxu0 0
    %1840 = vmatprep.subr.bf16.mxu0 0
    %1841 = vmatpush2.bf16.msra.mxu0 0
    %1842 = vmatprep.subr.bf16.mxu0 0
    %1843 = vmatpush2.bf16.msra.mxu0 0
    %1844 = vmatprep.subr.bf16.mxu0 0
    %1845 = vmatpush2.bf16.msra.mxu0 0
    %1846 = vmatprep.subr.bf16.mxu0 0
    %1847 = vmatpush2.bf16.msra.mxu0 0
    %1848 = vmatprep.mubr.bf16.mxu0 0
    %1849 = vmatmul.mubr.bf16.gmra.mxu0 %v1811
    %v1850 = vpop.f32.mrf.mxu0
    %v1851 = vadd.f32 %v1803, %v1850
    %v1852 = vpop.f32.mrf.mxu0
    %v1853 = vpop.f32.mrf.mxu0
    %v1854 = vadd.f32 %v1803, %v1853
    %v1855 = vpop.f32.mrf.mxu0
    %1856 = vmatprep.mubr.bf16.mxu0 0
    %1857 = vmatmul.mubr.bf16.gmra.mxu0 %v1814
    %v1858 = vpop.f32.mrf.mxu0
    %v1859 = vadd.f32 %v1803, %v1858
    %v1860 = vpop.f32.mrf.mxu0
    %v1861 = vpop.f32.mrf.mxu0
    %v1862 = vadd.f32 %v1803, %v1861
    %v1863 = vpop.f32.mrf.mxu0
    %1864 = vdwg.mxu0
    %v1865 = vadd.f32 %v485, %v1851
    %v1866 = vadd.f32 %v486, %v1854
    %v1867 = vadd.f32 %v487, %v1859
    %v1868 = vadd.f32 %v488, %v1862
    %v1869 = vld [vmem:[#allocation8 + $0x1b] sm:$0x1]
    %v1870 = vld [vmem:[#allocation8 + $0x1c] sm:$0x1]
    %v1871 = vsel %vm237, %v802, 0.0
    %1872 = vadd.xlane.f32.xlu0 %v1871
    %v1873 = vpop.xlane.xlu0 %1872
    %v1874 = vsel %vm237, %v803, 0.0
    %1875 = vadd.xlane.f32.xlu0 %v1874
    %v1876 = vpop.xlane.xlu0 %1875
    %v1877 = vsel %vm237, %v804, 0.0
    %1878 = vadd.xlane.f32.xlu0 %v1877
    %v1879 = vpop.xlane.xlu0 %1878
    %v1880 = vsel %vm237, %v805, 0.0
    %1881 = vadd.xlane.f32.xlu0 %v1880
    %v1882 = vpop.xlane.xlu0 %1881
    %v1883 = vsel %vm237, %v806, 0.0
    %1884 = vadd.xlane.f32.xlu0 %v1883
    %v1885 = vpop.xlane.xlu0 %1884
    %v1886 = vsel %vm237, %v807, 0.0
    %1887 = vadd.xlane.f32.xlu0 %v1886
    %v1888 = vpop.xlane.xlu0 %1887
    %v1889 = vmul.f32 %v1873, %v250
    %v1890 = vmul.f32 %v1876, %v250
    %v1891 = vmul.f32 %v1879, %v250
    %v1892 = vmul.f32 %v1882, %v250
    %v1893 = vmul.f32 %v1885, %v250
    %v1894 = vmul.f32 %v1888, %v250
    %v1895 = vsub.f32 %v802, %v1889
    %v1896 = vsub.f32 %v803, %v1890
    %v1897 = vsub.f32 %v804, %v1891
    %v1898 = vsub.f32 %v805, %v1892
    %v1899 = vsub.f32 %v806, %v1893
    %v1900 = vsub.f32 %v807, %v1894
    %v1901 = vmul.f32 %v1895, %v1895
    %v1902 = vmul.f32 %v1896, %v1896
    %v1903 = vmul.f32 %v1897, %v1897
    %v1904 = vmul.f32 %v1898, %v1898
    %v1905 = vmul.f32 %v1899, %v1899
    %v1906 = vmul.f32 %v1900, %v1900
    %v1907 = vsel %vm237, %v1901, 0.0
    %1908 = vadd.xlane.f32.xlu0 %v1907
    %v1909 = vpop.xlane.xlu0 %1908
    %v1910 = vsel %vm237, %v1902, 0.0
    %1911 = vadd.xlane.f32.xlu0 %v1910
    %v1912 = vpop.xlane.xlu0 %1911
    %v1913 = vsel %vm237, %v1903, 0.0
    %1914 = vadd.xlane.f32.xlu0 %v1913
    %v1915 = vpop.xlane.xlu0 %1914
    %v1916 = vsel %vm237, %v1904, 0.0
    %1917 = vadd.xlane.f32.xlu0 %v1916
    %v1918 = vpop.xlane.xlu0 %1917
    %v1919 = vsel %vm237, %v1905, 0.0
    %1920 = vadd.xlane.f32.xlu0 %v1919
    %v1921 = vpop.xlane.xlu0 %1920
    %v1922 = vsel %vm237, %v1906, 0.0
    %1923 = vadd.xlane.f32.xlu0 %v1922
    %v1924 = vpop.xlane.xlu0 %1923
    %v1925 = vmul.f32 %v1909, %v250
    %v1926 = vmul.f32 %v1912, %v250
    %v1927 = vmul.f32 %v1915, %v250
    %v1928 = vmul.f32 %v1918, %v250
    %v1929 = vmul.f32 %v1921, %v250
    %v1930 = vmul.f32 %v1924, %v250
    %v1931 = vadd.f32 %v1925, 1e-05
    %v1932 = vadd.f32 %v1926, 1e-05
    %v1933 = vadd.f32 %v1927, 1e-05
    %v1934 = vadd.f32 %v1928, 1e-05
    %v1935 = vadd.f32 %v1929, 1e-05
    %v1936 = vadd.f32 %v1930, 1e-05
    %v1937 = vrsqrt.pop %v1931
    %v1938 = vrsqrt.pop %v1932
    %v1939 = vrsqrt.pop %v1933
    %v1940 = vrsqrt.pop %v1934
    %v1941 = vrsqrt.pop %v1935
    %v1942 = vrsqrt.pop %v1936
    %v1943 = vmul.f32 %v1895, %v1937
    %v1944 = vmul.f32 %v1896, %v1938
    %v1945 = vmul.f32 %v1897, %v1939
    %v1946 = vmul.f32 %v1898, %v1940
    %v1947 = vmul.f32 %v1899, %v1941
    %v1948 = vmul.f32 %v1900, %v1942
    %v1949 = vlaneseq
    %v1950 = vshrl.u32 %v1949, 7
    %v1951 = vsub.s32 0, %v1950
    %v1952 = vrot.slane %v1869, %v1951
    %v1953 = vmul.f32 %v1943, %v1952
    %v1954 = vmul.f32 %v1944, %v1952
    %v1955 = vmul.f32 %v1945, %v1952
    %v1956 = vmul.f32 %v1946, %v1952
    %v1957 = vmul.f32 %v1947, %v1952
    %v1958 = vmul.f32 %v1948, %v1952
    %v1959 = vlaneseq
    %v1960 = vshrl.u32 %v1959, 7
    %v1961 = vsub.s32 0, %v1960
    %v1962 = vrot.slane %v1870, %v1961
    %v1963 = vadd.f32 %v1953, %v1962
    %v1964 = vadd.f32 %v1954, %v1962
    %v1965 = vadd.f32 %v1955, %v1962
    %v1966 = vadd.f32 %v1956, %v1962
    %v1967 = vadd.f32 %v1957, %v1962
    %v1968 = vadd.f32 %v1958, %v1962
    %v1969 = vpack.c.bf16 %v1964, %v1963
    %v1970 = vpack.c.bf16 %v1966, %v1965
    %v1971 = vpack.c.bf16 %v1968, %v1967
    %v1972 = vld [vmem:[#allocation7 + $0x70] sm:$0xf]
    %v1973 = vld [vmem:[#allocation7 + $0x74] sm:$0xf]
    %v1974 = vld [vmem:[#allocation7 + $0x78] sm:$0xf]
    %v1975 = vld [vmem:[#allocation7 + $0x7c] sm:$0xf]
    %v1976 = vld [vmem:[#allocation8 + $0x1d] sm:$0x1]
    %v1977 = vlaneseq
    %v1978 = vshrl.u32 %v1977, 7
    %v1979 = vsub.s32 0, %v1978
    %v1980 = vrot.slane %v1976, %v1979
    %v1985 = vunpack.c.l.b16 %v1972
    %v1986 = vunpack.c.l.b16 %v1973
    %v1987 = vunpack.c.l.b16 %v1974
    %v1988 = vunpack.c.l.b16 %v1975
    %v1989 = vpack.c.b16 %v1986, %v1985
    %v1990 = vpack.c.b16 %v1988, %v1987
    %v1994 = vsel %vm237, %v1969, 0
    %v1997 = vsel %vm237, %v1970, 0
    %v2000 = vsel %vm237, %v1971, 0
    %2002 = vmatprep.subr.bf16.mxu0 0
    %2003 = vmatpush1.bf16.msra.mxu0 0
    %2004 = vmatprep.subr.bf16.mxu0 0
    %2005 = vmatpush1.bf16.msra.mxu0 0
    %2006 = vmatprep.subr.bf16.mxu0 0
    %2007 = vmatpush1.bf16.msra.mxu0 0
    %2008 = vmatprep.subr.bf16.mxu0 0
    %2009 = vmatpush1.bf16.msra.mxu0 0
    %2010 = vmatprep.subr.bf16.mxu0 0
    %2011 = vmatpush1.bf16.msra.mxu0 0
    %2012 = vmatprep.subr.bf16.mxu0 0
    %2013 = vmatpush1.bf16.msra.mxu0 0
    %2014 = vmatprep.subr.bf16.mxu0 0
    %2015 = vmatpush1.bf16.msra.mxu0 %v1990
    %2016 = vmatprep.subr.bf16.mxu0 0
    %2017 = vmatpush1.bf16.msra.mxu0 %v1989
    %2018 = vmatprep.subr.bf16.mxu0 0
    %2019 = vmatpush2.bf16.msra.mxu0 0
    %2020 = vmatprep.subr.bf16.mxu0 0
    %2021 = vmatpush2.bf16.msra.mxu0 0
    %2022 = vmatprep.subr.bf16.mxu0 0
    %2023 = vmatpush2.bf16.msra.mxu0 0
    %2024 = vmatprep.subr.bf16.mxu0 0
    %2025 = vmatpush2.bf16.msra.mxu0 0
    %2026 = vmatprep.subr.bf16.mxu0 0
    %2027 = vmatpush2.bf16.msra.mxu0 0
    %2028 = vmatprep.subr.bf16.mxu0 0
    %2029 = vmatpush2.bf16.msra.mxu0 0
    %2030 = vmatprep.subr.bf16.mxu0 0
    %2031 = vmatpush2.bf16.msra.mxu0 0
    %2032 = vmatprep.subr.bf16.mxu0 0
    %2033 = vmatpush2.bf16.msra.mxu0 0
    %2034 = vmatprep.mubr.bf16.mxu0 0
    %2035 = vmatmul.mubr.bf16.gmra.mxu0 %v1994
    %v2036 = vpop.f32.mrf.mxu0
    %v2037 = vadd.f32 %v1980, %v2036
    %v2038 = vpop.f32.mrf.mxu0
    %v2039 = vpop.f32.mrf.mxu0
    %v2040 = vadd.f32 %v1980, %v2039
    %v2041 = vpop.f32.mrf.mxu0
    %2042 = vmatprep.mubr.bf16.mxu0 0
    %2043 = vmatmul.mubr.bf16.gmra.mxu0 %v1997
    %v2044 = vpop.f32.mrf.mxu0
    %v2045 = vadd.f32 %v1980, %v2044
    %v2046 = vpop.f32.mrf.mxu0
    %v2047 = vpop.f32.mrf.mxu0
    %v2048 = vadd.f32 %v1980, %v2047
    %v2049 = vpop.f32.mrf.mxu0
    %2050 = vmatprep.mubr.bf16.mxu0 0
    %2051 = vmatmul.mubr.bf16.gmra.mxu0 %v2000
    %v2052 = vpop.f32.mrf.mxu0
    %v2053 = vadd.f32 %v1980, %v2052
    %v2054 = vpop.f32.mrf.mxu0
    %v2055 = vpop.f32.mrf.mxu0
    %v2056 = vadd.f32 %v1980, %v2055
    %v2057 = vpop.f32.mrf.mxu0
    %2058 = vdwg.mxu0
    %v2059 = vld [vmem:[#allocation8 + $0x1e] sm:$0x1]
    %v2060 = vlaneseq
    %v2061 = vshrl.u32 %v2060, 7
    %v2062 = vsub.s32 0, %v2061
    %v2063 = vrot.slane %v2059, %v2062
    %2064 = vrot.lane.b32.xlu0 %v1989, 96
    %v2065 = vpop.permute.xlu0 %2064
    %2066 = vrot.lane.b32.xlu0 %v1990, 96
    %v2067 = vpop.permute.xlu0 %2066
    %2070 = vmatprep.subr.bf16.mxu0 0
    %2071 = vmatpush1.bf16.msra.mxu0 0
    %2072 = vmatprep.subr.bf16.mxu0 0
    %2073 = vmatpush1.bf16.msra.mxu0 0
    %2074 = vmatprep.subr.bf16.mxu0 0
    %2075 = vmatpush1.bf16.msra.mxu0 0
    %2076 = vmatprep.subr.bf16.mxu0 0
    %2077 = vmatpush1.bf16.msra.mxu0 0
    %2078 = vmatprep.subr.bf16.mxu0 0
    %2079 = vmatpush1.bf16.msra.mxu0 0
    %2080 = vmatprep.subr.bf16.mxu0 0
    %2081 = vmatpush1.bf16.msra.mxu0 0
    %2082 = vmatprep.subr.bf16.mxu0 0
    %2083 = vmatpush1.bf16.msra.mxu0 %v2067
    %2084 = vmatprep.subr.bf16.mxu0 0
    %2085 = vmatpush1.bf16.msra.mxu0 %v2065
    %2086 = vmatprep.subr.bf16.mxu0 0
    %2087 = vmatpush2.bf16.msra.mxu0 0
    %2088 = vmatprep.subr.bf16.mxu0 0
    %2089 = vmatpush2.bf16.msra.mxu0 0
    %2090 = vmatprep.subr.bf16.mxu0 0
    %2091 = vmatpush2.bf16.msra.mxu0 0
    %2092 = vmatprep.subr.bf16.mxu0 0
    %2093 = vmatpush2.bf16.msra.mxu0 0
    %2094 = vmatprep.subr.bf16.mxu0 0
    %2095 = vmatpush2.bf16.msra.mxu0 0
    %2096 = vmatprep.subr.bf16.mxu0 0
    %2097 = vmatpush2.bf16.msra.mxu0 0
    %2098 = vmatprep.subr.bf16.mxu0 0
    %2099 = vmatpush2.bf16.msra.mxu0 0
    %2100 = vmatprep.subr.bf16.mxu0 0
    %2101 = vmatpush2.bf16.msra.mxu0 0
    %2102 = vmatprep.mubr.bf16.mxu0 0
    %2103 = vmatmul.mubr.bf16.gmra.mxu0 %v1994
    %v2104 = vpop.f32.mrf.mxu0
    %v2105 = vadd.f32 %v2063, %v2104
    %v2106 = vpop.f32.mrf.mxu0
    %v2107 = vpop.f32.mrf.mxu0
    %v2108 = vadd.f32 %v2063, %v2107
    %v2109 = vpop.f32.mrf.mxu0
    %2110 = vmatprep.mubr.bf16.mxu0 0
    %2111 = vmatmul.mubr.bf16.gmra.mxu0 %v1997
    %v2112 = vpop.f32.mrf.mxu0
    %v2113 = vadd.f32 %v2063, %v2112
    %v2114 = vpop.f32.mrf.mxu0
    %v2115 = vpop.f32.mrf.mxu0
    %v2116 = vadd.f32 %v2063, %v2115
    %v2117 = vpop.f32.mrf.mxu0
    %2118 = vmatprep.mubr.bf16.mxu0 0
    %2119 = vmatmul.mubr.bf16.gmra.mxu0 %v2000
    %v2120 = vpop.f32.mrf.mxu0
    %v2121 = vadd.f32 %v2063, %v2120
    %v2122 = vpop.f32.mrf.mxu0
    %v2123 = vpop.f32.mrf.mxu0
    %v2124 = vadd.f32 %v2063, %v2123
    %v2125 = vpop.f32.mrf.mxu0
    %2126 = vdwg.mxu0
    %v2127 = vxor.u32 %v2105, 2147483648
    %v2128 = vxor.u32 %v2108, 2147483648
    %v2129 = vxor.u32 %v2113, 2147483648
    %v2130 = vxor.u32 %v2116, 2147483648
    %v2131 = vxor.u32 %v2121, 2147483648
    %v2132 = vxor.u32 %v2124, 2147483648
    %v2133 = vmul.f32 %v2127, 1.442695
    %v2134 = vpow.pop %v2133
    %v2135 = vmul.f32 %v2128, 1.442695
    %v2136 = vpow.pop %v2135
    %v2137 = vmul.f32 %v2129, 1.442695
    %v2138 = vpow.pop %v2137
    %v2139 = vmul.f32 %v2130, 1.442695
    %v2140 = vpow.pop %v2139
    %v2141 = vmul.f32 %v2131, 1.442695
    %v2142 = vpow.pop %v2141
    %v2143 = vmul.f32 %v2132, 1.442695
    %v2144 = vpow.pop %v2143
    %v2145 = vadd.f32 %v2134, 1.0
    %v2146 = vadd.f32 %v2136, 1.0
    %v2147 = vadd.f32 %v2138, 1.0
    %v2148 = vadd.f32 %v2140, 1.0
    %v2149 = vadd.f32 %v2142, 1.0
    %v2150 = vadd.f32 %v2144, 1.0
    %v2151 = vrcp.pop %v2145
    %v2152 = vmul.f32 1.0, %v2151
    %v2153 = vrcp.pop %v2146
    %v2154 = vmul.f32 1.0, %v2153
    %v2155 = vrcp.pop %v2147
    %v2156 = vmul.f32 1.0, %v2155
    %v2157 = vrcp.pop %v2148
    %v2158 = vmul.f32 1.0, %v2157
    %v2159 = vrcp.pop %v2149
    %v2160 = vmul.f32 1.0, %v2159
    %v2161 = vrcp.pop %v2150
    %v2162 = vmul.f32 1.0, %v2161
    %v2163 = vmul.f32 %v2037, %v2152
    %v2164 = vmul.f32 %v2040, %v2154
    %v2165 = vmul.f32 %v2045, %v2156
    %v2166 = vmul.f32 %v2048, %v2158
    %v2167 = vmul.f32 %v2053, %v2160
    %v2168 = vmul.f32 %v2056, %v2162
    %v2169 = vrot.slane %v2163, 5
    %v2170 = vrot.slane %v2164, 5
    %v2171 = vrot.slane %v2165, 5
    %v2172 = vrot.slane %v2166, 5
    %v2173 = vrot.slane %v2167, 5
    %v2174 = vrot.slane %v2168, 5
    %v2175 = vsel %vm1048, %v2173, %v2174
    %v2176 = vsel %vm1048, %v2172, %v2173
    %v2177 = vsel %vm1048, %v2171, %v2172
    %v2178 = vsel %vm1048, %v2170, %v2171
    %v2179 = vsel %vm1048, %v2169, %v2170
    %v2180 = vsel %vm1048, %v2174, %v2169
    %v2181 = vadd.s32 %v146, 4294967293
    %v2182 = vadd.s32 %v147, 4294967293
    %v2183 = vadd.s32 %v148, 4294967293
    %v2184 = vadd.s32 %v149, 4294967293
    %v2185 = vadd.s32 %v150, 4294967293
    %v2186 = vadd.s32 %v151, 4294967293
    %vm2187 = vcmp.ge.s32.totalorder %v2181, 0
    %vm2188 = vcmp.ge.s32.totalorder %v2182, 0
    %vm2189 = vcmp.ge.s32.totalorder %v2183, 0
    %vm2190 = vcmp.ge.s32.totalorder %v2184, 0
    %vm2191 = vcmp.ge.s32.totalorder %v2185, 0
    %vm2192 = vcmp.ge.s32.totalorder %v2186, 0
    %vm2193 = vcmp.lt.s32.totalorder %v2181, 24
    %vm2194 = vcmp.lt.s32.totalorder %v2182, 24
    %vm2195 = vcmp.lt.s32.totalorder %v2183, 24
    %vm2196 = vcmp.lt.s32.totalorder %v2184, 24
    %vm2197 = vcmp.lt.s32.totalorder %v2185, 24
    %vm2198 = vcmp.lt.s32.totalorder %v2186, 24
    %vm2199 = vmand %vm2187, %vm2193
    %vm2200 = vmand %vm2188, %vm2194
    %vm2201 = vmand %vm2189, %vm2195
    %vm2202 = vmand %vm2190, %vm2196
    %vm2203 = vmand %vm2191, %vm2197
    %vm2204 = vmand %vm2192, %vm2198
    %v2205 = vld [vmem:[#allocation8 + $0x1f] sm:$0x1]
    %v2206 = vsel %vm2199, 1, 0
    %v2207 = vsel %vm2200, 1, 0
    %v2208 = vsel %vm2201, 1, 0
    %v2209 = vsel %vm2202, 1, 0
    %v2210 = vsel %vm2203, 1, 0
    %v2211 = vsel %vm2204, 1, 0
    %vm2212 = vcmp.eq.s32.totalorder %v2206, 1
    %vm2213 = vcmp.eq.s32.totalorder %v2207, 1
    %vm2214 = vcmp.eq.s32.totalorder %v2208, 1
    %vm2215 = vcmp.eq.s32.totalorder %v2209, 1
    %vm2216 = vcmp.eq.s32.totalorder %v2210, 1
    %vm2217 = vcmp.eq.s32.totalorder %v2211, 1
    %v2218 = vsel %vm2212, %v2180, 0.0
    %v2219 = vsel %vm2213, %v2179, 0.0
    %v2220 = vsel %vm2214, %v2178, 0.0
    %v2221 = vsel %vm2215, %v2177, 0.0
    %v2222 = vsel %vm2216, %v2176, 0.0
    %v2223 = vsel %vm2217, %v2175, 0.0
    %v2224 = vlaneseq
    %v2225 = vshrl.u32 %v2224, 7
    %v2226 = vsub.s32 0, %v2225
    %v2227 = vrot.slane %v2205, %v2226
    %v2228 = vmul.f32 %v2218, %v2227
    %v2229 = vmul.f32 %v2219, %v2227
    %v2230 = vmul.f32 %v2220, %v2227
    %v2231 = vmul.f32 %v2221, %v2227
    %v2232 = vmul.f32 %v2222, %v2227
    %v2233 = vmul.f32 %v2223, %v2227
    %v2234 = vadd.f32 %v2228, 0.0
    %v2235 = vadd.f32 %v2229, 0.0
    %v2236 = vadd.f32 %v2230, 0.0
    %v2237 = vadd.f32 %v2231, 0.0
    %v2238 = vadd.f32 %v2232, 0.0
    %v2239 = vadd.f32 %v2233, 0.0
    %v2240 = vrot.slane %v2163, 6
    %v2241 = vrot.slane %v2164, 6
    %v2242 = vrot.slane %v2165, 6
    %v2243 = vrot.slane %v2166, 6
    %v2244 = vrot.slane %v2167, 6
    %v2245 = vrot.slane %v2168, 6
    %v2246 = vsel %vm1098, %v2244, %v2245
    %v2247 = vsel %vm1098, %v2243, %v2244
    %v2248 = vsel %vm1098, %v2242, %v2243
    %v2249 = vsel %vm1098, %v2241, %v2242
    %v2250 = vsel %vm1098, %v2240, %v2241
    %v2251 = vsel %vm1098, %v2245, %v2240
    %v2252 = vadd.s32 %v146, 4294967294
    %v2253 = vadd.s32 %v147, 4294967294
    %v2254 = vadd.s32 %v148, 4294967294
    %v2255 = vadd.s32 %v149, 4294967294
    %v2256 = vadd.s32 %v150, 4294967294
    %v2257 = vadd.s32 %v151, 4294967294
    %vm2258 = vcmp.ge.s32.totalorder %v2252, 0
    %vm2259 = vcmp.ge.s32.totalorder %v2253, 0
    %vm2260 = vcmp.ge.s32.totalorder %v2254, 0
    %vm2261 = vcmp.ge.s32.totalorder %v2255, 0
    %vm2262 = vcmp.ge.s32.totalorder %v2256, 0
    %vm2263 = vcmp.ge.s32.totalorder %v2257, 0
    %vm2264 = vcmp.lt.s32.totalorder %v2252, 24
    %vm2265 = vcmp.lt.s32.totalorder %v2253, 24
    %vm2266 = vcmp.lt.s32.totalorder %v2254, 24
    %vm2267 = vcmp.lt.s32.totalorder %v2255, 24
    %vm2268 = vcmp.lt.s32.totalorder %v2256, 24
    %vm2269 = vcmp.lt.s32.totalorder %v2257, 24
    %vm2270 = vmand %vm2258, %vm2264
    %vm2271 = vmand %vm2259, %vm2265
    %vm2272 = vmand %vm2260, %vm2266
    %vm2273 = vmand %vm2261, %vm2267
    %vm2274 = vmand %vm2262, %vm2268
    %vm2275 = vmand %vm2263, %vm2269
    %v2276 = vld [vmem:[#allocation8 + $0x20] sm:$0x1]
    %v2277 = vsel %vm2270, 1, 0
    %v2278 = vsel %vm2271, 1, 0
    %v2279 = vsel %vm2272, 1, 0
    %v2280 = vsel %vm2273, 1, 0
    %v2281 = vsel %vm2274, 1, 0
    %v2282 = vsel %vm2275, 1, 0
    %vm2283 = vcmp.eq.s32.totalorder %v2277, 1
    %vm2284 = vcmp.eq.s32.totalorder %v2278, 1
    %vm2285 = vcmp.eq.s32.totalorder %v2279, 1
    %vm2286 = vcmp.eq.s32.totalorder %v2280, 1
    %vm2287 = vcmp.eq.s32.totalorder %v2281, 1
    %vm2288 = vcmp.eq.s32.totalorder %v2282, 1
    %v2289 = vsel %vm2283, %v2251, 0.0
    %v2290 = vsel %vm2284, %v2250, 0.0
    %v2291 = vsel %vm2285, %v2249, 0.0
    %v2292 = vsel %vm2286, %v2248, 0.0
    %v2293 = vsel %vm2287, %v2247, 0.0
    %v2294 = vsel %vm2288, %v2246, 0.0
    %v2295 = vlaneseq
    %v2296 = vshrl.u32 %v2295, 7
    %v2297 = vsub.s32 0, %v2296
    %v2298 = vrot.slane %v2276, %v2297
    %v2299 = vmul.f32 %v2289, %v2298
    %v2300 = vmul.f32 %v2290, %v2298
    %v2301 = vmul.f32 %v2291, %v2298
    %v2302 = vmul.f32 %v2292, %v2298
    %v2303 = vmul.f32 %v2293, %v2298
    %v2304 = vmul.f32 %v2294, %v2298
    %v2305 = vadd.f32 %v2234, %v2299
    %v2306 = vadd.f32 %v2235, %v2300
    %v2307 = vadd.f32 %v2236, %v2301
    %v2308 = vadd.f32 %v2237, %v2302
    %v2309 = vadd.f32 %v2238, %v2303
    %v2310 = vadd.f32 %v2239, %v2304
    %v2311 = vrot.slane %v2163, 7
    %v2312 = vrot.slane %v2164, 7
    %v2313 = vrot.slane %v2165, 7
    %v2314 = vrot.slane %v2166, 7
    %v2315 = vrot.slane %v2167, 7
    %v2316 = vrot.slane %v2168, 7
    %v2317 = vsel %vm1148, %v2315, %v2316
    %v2318 = vsel %vm1148, %v2314, %v2315
    %v2319 = vsel %vm1148, %v2313, %v2314
    %v2320 = vsel %vm1148, %v2312, %v2313
    %v2321 = vsel %vm1148, %v2311, %v2312
    %v2322 = vsel %vm1148, %v2316, %v2311
    %v2323 = vadd.s32 %v146, 4294967295
    %v2324 = vadd.s32 %v147, 4294967295
    %v2325 = vadd.s32 %v148, 4294967295
    %v2326 = vadd.s32 %v149, 4294967295
    %v2327 = vadd.s32 %v150, 4294967295
    %v2328 = vadd.s32 %v151, 4294967295
    %vm2329 = vcmp.ge.s32.totalorder %v2323, 0
    %vm2330 = vcmp.ge.s32.totalorder %v2324, 0
    %vm2331 = vcmp.ge.s32.totalorder %v2325, 0
    %vm2332 = vcmp.ge.s32.totalorder %v2326, 0
    %vm2333 = vcmp.ge.s32.totalorder %v2327, 0
    %vm2334 = vcmp.ge.s32.totalorder %v2328, 0
    %vm2335 = vcmp.lt.s32.totalorder %v2323, 24
    %vm2336 = vcmp.lt.s32.totalorder %v2324, 24
    %vm2337 = vcmp.lt.s32.totalorder %v2325, 24
    %vm2338 = vcmp.lt.s32.totalorder %v2326, 24
    %vm2339 = vcmp.lt.s32.totalorder %v2327, 24
    %vm2340 = vcmp.lt.s32.totalorder %v2328, 24
    %vm2341 = vmand %vm2329, %vm2335
    %vm2342 = vmand %vm2330, %vm2336
    %vm2343 = vmand %vm2331, %vm2337
    %vm2344 = vmand %vm2332, %vm2338
    %vm2345 = vmand %vm2333, %vm2339
    %vm2346 = vmand %vm2334, %vm2340
    %v2347 = vld [vmem:[#allocation8 + $0x21] sm:$0x1]
    %v2348 = vsel %vm2341, 1, 0
    %v2349 = vsel %vm2342, 1, 0
    %v2350 = vsel %vm2343, 1, 0
    %v2351 = vsel %vm2344, 1, 0
    %v2352 = vsel %vm2345, 1, 0
    %v2353 = vsel %vm2346, 1, 0
    %vm2354 = vcmp.eq.s32.totalorder %v2348, 1
    %vm2355 = vcmp.eq.s32.totalorder %v2349, 1
    %vm2356 = vcmp.eq.s32.totalorder %v2350, 1
    %vm2357 = vcmp.eq.s32.totalorder %v2351, 1
    %vm2358 = vcmp.eq.s32.totalorder %v2352, 1
    %vm2359 = vcmp.eq.s32.totalorder %v2353, 1
    %v2360 = vsel %vm2354, %v2322, 0.0
    %v2361 = vsel %vm2355, %v2321, 0.0
    %v2362 = vsel %vm2356, %v2320, 0.0
    %v2363 = vsel %vm2357, %v2319, 0.0
    %v2364 = vsel %vm2358, %v2318, 0.0
    %v2365 = vsel %vm2359, %v2317, 0.0
    %v2366 = vlaneseq
    %v2367 = vshrl.u32 %v2366, 7
    %v2368 = vsub.s32 0, %v2367
    %v2369 = vrot.slane %v2347, %v2368
    %v2370 = vmul.f32 %v2360, %v2369
    %v2371 = vmul.f32 %v2361, %v2369
    %v2372 = vmul.f32 %v2362, %v2369
    %v2373 = vmul.f32 %v2363, %v2369
    %v2374 = vmul.f32 %v2364, %v2369
    %v2375 = vmul.f32 %v2365, %v2369
    %v2376 = vadd.f32 %v2305, %v2370
    %v2377 = vadd.f32 %v2306, %v2371
    %v2378 = vadd.f32 %v2307, %v2372
    %v2379 = vadd.f32 %v2308, %v2373
    %v2380 = vadd.f32 %v2309, %v2374
    %v2381 = vadd.f32 %v2310, %v2375
    %vm2382 = vcmp.ge.s32.totalorder %v146, 0
    %vm2383 = vcmp.ge.s32.totalorder %v147, 0
    %vm2384 = vcmp.ge.s32.totalorder %v148, 0
    %vm2385 = vcmp.ge.s32.totalorder %v149, 0
    %vm2386 = vcmp.ge.s32.totalorder %v150, 0
    %vm2387 = vcmp.ge.s32.totalorder %v151, 0
    %vm2388 = vcmp.lt.s32.totalorder %v146, 24
    %vm2389 = vcmp.lt.s32.totalorder %v147, 24
    %vm2390 = vcmp.lt.s32.totalorder %v148, 24
    %vm2391 = vcmp.lt.s32.totalorder %v149, 24
    %vm2392 = vcmp.lt.s32.totalorder %v150, 24
    %vm2393 = vcmp.lt.s32.totalorder %v151, 24
    %vm2394 = vmand %vm2382, %vm2388
    %vm2395 = vmand %vm2383, %vm2389
    %vm2396 = vmand %vm2384, %vm2390
    %vm2397 = vmand %vm2385, %vm2391
    %vm2398 = vmand %vm2386, %vm2392
    %vm2399 = vmand %vm2387, %vm2393
    %v2400 = vld [vmem:[#allocation8 + $0x22] sm:$0x1]
    %v2401 = vsel %vm2394, 1, 0
    %v2402 = vsel %vm2395, 1, 0
    %v2403 = vsel %vm2396, 1, 0
    %v2404 = vsel %vm2397, 1, 0
    %v2405 = vsel %vm2398, 1, 0
    %v2406 = vsel %vm2399, 1, 0
    %vm2407 = vcmp.eq.s32.totalorder %v2401, 1
    %vm2408 = vcmp.eq.s32.totalorder %v2402, 1
    %vm2409 = vcmp.eq.s32.totalorder %v2403, 1
    %vm2410 = vcmp.eq.s32.totalorder %v2404, 1
    %vm2411 = vcmp.eq.s32.totalorder %v2405, 1
    %vm2412 = vcmp.eq.s32.totalorder %v2406, 1
    %v2413 = vsel %vm2407, %v2163, 0.0
    %v2414 = vsel %vm2408, %v2164, 0.0
    %v2415 = vsel %vm2409, %v2165, 0.0
    %v2416 = vsel %vm2410, %v2166, 0.0
    %v2417 = vsel %vm2411, %v2167, 0.0
    %v2418 = vsel %vm2412, %v2168, 0.0
    %v2419 = vlaneseq
    %v2420 = vshrl.u32 %v2419, 7
    %v2421 = vsub.s32 0, %v2420
    %v2422 = vrot.slane %v2400, %v2421
    %v2423 = vmul.f32 %v2413, %v2422
    %v2424 = vmul.f32 %v2414, %v2422
    %v2425 = vmul.f32 %v2415, %v2422
    %v2426 = vmul.f32 %v2416, %v2422
    %v2427 = vmul.f32 %v2417, %v2422
    %v2428 = vmul.f32 %v2418, %v2422
    %v2429 = vadd.f32 %v2376, %v2423
    %v2430 = vadd.f32 %v2377, %v2424
    %v2431 = vadd.f32 %v2378, %v2425
    %v2432 = vadd.f32 %v2379, %v2426
    %v2433 = vadd.f32 %v2380, %v2427
    %v2434 = vadd.f32 %v2381, %v2428
    %v2435 = vrot.slane %v2163, 1
    %v2436 = vrot.slane %v2164, 1
    %v2437 = vrot.slane %v2165, 1
    %v2438 = vrot.slane %v2166, 1
    %v2439 = vrot.slane %v2167, 1
    %v2440 = vrot.slane %v2168, 1
    %v2441 = vsel %vm1235, %v2439, %v2440
    %v2442 = vsel %vm1235, %v2438, %v2439
    %v2443 = vsel %vm1235, %v2437, %v2438
    %v2444 = vsel %vm1235, %v2436, %v2437
    %v2445 = vsel %vm1235, %v2435, %v2436
    %v2446 = vsel %vm1235, %v2440, %v2435
    %v2447 = vadd.s32 %v146, 1
    %v2448 = vadd.s32 %v147, 1
    %v2449 = vadd.s32 %v148, 1
    %v2450 = vadd.s32 %v149, 1
    %v2451 = vadd.s32 %v150, 1
    %v2452 = vadd.s32 %v151, 1
    %vm2453 = vcmp.ge.s32.totalorder %v2447, 0
    %vm2454 = vcmp.ge.s32.totalorder %v2448, 0
    %vm2455 = vcmp.ge.s32.totalorder %v2449, 0
    %vm2456 = vcmp.ge.s32.totalorder %v2450, 0
    %vm2457 = vcmp.ge.s32.totalorder %v2451, 0
    %vm2458 = vcmp.ge.s32.totalorder %v2452, 0
    %vm2459 = vcmp.lt.s32.totalorder %v2447, 24
    %vm2460 = vcmp.lt.s32.totalorder %v2448, 24
    %vm2461 = vcmp.lt.s32.totalorder %v2449, 24
    %vm2462 = vcmp.lt.s32.totalorder %v2450, 24
    %vm2463 = vcmp.lt.s32.totalorder %v2451, 24
    %vm2464 = vcmp.lt.s32.totalorder %v2452, 24
    %vm2465 = vmand %vm2453, %vm2459
    %vm2466 = vmand %vm2454, %vm2460
    %vm2467 = vmand %vm2455, %vm2461
    %vm2468 = vmand %vm2456, %vm2462
    %vm2469 = vmand %vm2457, %vm2463
    %vm2470 = vmand %vm2458, %vm2464
    %v2471 = vld [vmem:[#allocation8 + $0x23] sm:$0x1]
    %v2472 = vsel %vm2465, 1, 0
    %v2473 = vsel %vm2466, 1, 0
    %v2474 = vsel %vm2467, 1, 0
    %v2475 = vsel %vm2468, 1, 0
    %v2476 = vsel %vm2469, 1, 0
    %v2477 = vsel %vm2470, 1, 0
    %vm2478 = vcmp.eq.s32.totalorder %v2472, 1
    %vm2479 = vcmp.eq.s32.totalorder %v2473, 1
    %vm2480 = vcmp.eq.s32.totalorder %v2474, 1
    %vm2481 = vcmp.eq.s32.totalorder %v2475, 1
    %vm2482 = vcmp.eq.s32.totalorder %v2476, 1
    %vm2483 = vcmp.eq.s32.totalorder %v2477, 1
    %v2484 = vsel %vm2478, %v2445, 0.0
    %v2485 = vsel %vm2479, %v2444, 0.0
    %v2486 = vsel %vm2480, %v2443, 0.0
    %v2487 = vsel %vm2481, %v2442, 0.0
    %v2488 = vsel %vm2482, %v2441, 0.0
    %v2489 = vsel %vm2483, %v2446, 0.0
    %v2490 = vlaneseq
    %v2491 = vshrl.u32 %v2490, 7
    %v2492 = vsub.s32 0, %v2491
    %v2493 = vrot.slane %v2471, %v2492
    %v2494 = vmul.f32 %v2484, %v2493
    %v2495 = vmul.f32 %v2485, %v2493
    %v2496 = vmul.f32 %v2486, %v2493
    %v2497 = vmul.f32 %v2487, %v2493
    %v2498 = vmul.f32 %v2488, %v2493
    %v2499 = vmul.f32 %v2489, %v2493
    %v2500 = vadd.f32 %v2429, %v2494
    %v2501 = vadd.f32 %v2430, %v2495
    %v2502 = vadd.f32 %v2431, %v2496
    %v2503 = vadd.f32 %v2432, %v2497
    %v2504 = vadd.f32 %v2433, %v2498
    %v2505 = vadd.f32 %v2434, %v2499
    %v2506 = vrot.slane %v2163, 2
    %v2507 = vrot.slane %v2164, 2
    %v2508 = vrot.slane %v2165, 2
    %v2509 = vrot.slane %v2166, 2
    %v2510 = vrot.slane %v2167, 2
    %v2511 = vrot.slane %v2168, 2
    %v2512 = vsel %vm1285, %v2510, %v2511
    %v2513 = vsel %vm1285, %v2509, %v2510
    %v2514 = vsel %vm1285, %v2508, %v2509
    %v2515 = vsel %vm1285, %v2507, %v2508
    %v2516 = vsel %vm1285, %v2506, %v2507
    %v2517 = vsel %vm1285, %v2511, %v2506
    %v2518 = vadd.s32 %v146, 2
    %v2519 = vadd.s32 %v147, 2
    %v2520 = vadd.s32 %v148, 2
    %v2521 = vadd.s32 %v149, 2
    %v2522 = vadd.s32 %v150, 2
    %v2523 = vadd.s32 %v151, 2
    %vm2524 = vcmp.ge.s32.totalorder %v2518, 0
    %vm2525 = vcmp.ge.s32.totalorder %v2519, 0
    %vm2526 = vcmp.ge.s32.totalorder %v2520, 0
    %vm2527 = vcmp.ge.s32.totalorder %v2521, 0
    %vm2528 = vcmp.ge.s32.totalorder %v2522, 0
    %vm2529 = vcmp.ge.s32.totalorder %v2523, 0
    %vm2530 = vcmp.lt.s32.totalorder %v2518, 24
    %vm2531 = vcmp.lt.s32.totalorder %v2519, 24
    %vm2532 = vcmp.lt.s32.totalorder %v2520, 24
    %vm2533 = vcmp.lt.s32.totalorder %v2521, 24
    %vm2534 = vcmp.lt.s32.totalorder %v2522, 24
    %vm2535 = vcmp.lt.s32.totalorder %v2523, 24
    %vm2536 = vmand %vm2524, %vm2530
    %vm2537 = vmand %vm2525, %vm2531
    %vm2538 = vmand %vm2526, %vm2532
    %vm2539 = vmand %vm2527, %vm2533
    %vm2540 = vmand %vm2528, %vm2534
    %vm2541 = vmand %vm2529, %vm2535
    %v2542 = vld [vmem:[#allocation8 + $0x24] sm:$0x1]
    %v2543 = vsel %vm2536, 1, 0
    %v2544 = vsel %vm2537, 1, 0
    %v2545 = vsel %vm2538, 1, 0
    %v2546 = vsel %vm2539, 1, 0
    %v2547 = vsel %vm2540, 1, 0
    %v2548 = vsel %vm2541, 1, 0
    %vm2549 = vcmp.eq.s32.totalorder %v2543, 1
    %vm2550 = vcmp.eq.s32.totalorder %v2544, 1
    %vm2551 = vcmp.eq.s32.totalorder %v2545, 1
    %vm2552 = vcmp.eq.s32.totalorder %v2546, 1
    %vm2553 = vcmp.eq.s32.totalorder %v2547, 1
    %vm2554 = vcmp.eq.s32.totalorder %v2548, 1
    %v2555 = vsel %vm2549, %v2516, 0.0
    %v2556 = vsel %vm2550, %v2515, 0.0
    %v2557 = vsel %vm2551, %v2514, 0.0
    %v2558 = vsel %vm2552, %v2513, 0.0
    %v2559 = vsel %vm2553, %v2512, 0.0
    %v2560 = vsel %vm2554, %v2517, 0.0
    %v2561 = vlaneseq
    %v2562 = vshrl.u32 %v2561, 7
    %v2563 = vsub.s32 0, %v2562
    %v2564 = vrot.slane %v2542, %v2563
    %v2565 = vmul.f32 %v2555, %v2564
    %v2566 = vmul.f32 %v2556, %v2564
    %v2567 = vmul.f32 %v2557, %v2564
    %v2568 = vmul.f32 %v2558, %v2564
    %v2569 = vmul.f32 %v2559, %v2564
    %v2570 = vmul.f32 %v2560, %v2564
    %v2571 = vadd.f32 %v2500, %v2565
    %v2572 = vadd.f32 %v2501, %v2566
    %v2573 = vadd.f32 %v2502, %v2567
    %v2574 = vadd.f32 %v2503, %v2568
    %v2575 = vadd.f32 %v2504, %v2569
    %v2576 = vadd.f32 %v2505, %v2570
    %v2577 = vrot.slane %v2163, 3
    %v2578 = vrot.slane %v2164, 3
    %v2579 = vrot.slane %v2165, 3
    %v2580 = vrot.slane %v2166, 3
    %v2581 = vrot.slane %v2167, 3
    %v2582 = vrot.slane %v2168, 3
    %v2583 = vsel %vm1335, %v2581, %v2582
    %v2584 = vsel %vm1335, %v2580, %v2581
    %v2585 = vsel %vm1335, %v2579, %v2580
    %v2586 = vsel %vm1335, %v2578, %v2579
    %v2587 = vsel %vm1335, %v2577, %v2578
    %v2588 = vsel %vm1335, %v2582, %v2577
    %v2589 = vadd.s32 %v146, 3
    %v2590 = vadd.s32 %v147, 3
    %v2591 = vadd.s32 %v148, 3
    %v2592 = vadd.s32 %v149, 3
    %v2593 = vadd.s32 %v150, 3
    %v2594 = vadd.s32 %v151, 3
    %vm2595 = vcmp.ge.s32.totalorder %v2589, 0
    %vm2596 = vcmp.ge.s32.totalorder %v2590, 0
    %vm2597 = vcmp.ge.s32.totalorder %v2591, 0
    %vm2598 = vcmp.ge.s32.totalorder %v2592, 0
    %vm2599 = vcmp.ge.s32.totalorder %v2593, 0
    %vm2600 = vcmp.ge.s32.totalorder %v2594, 0
    %vm2601 = vcmp.lt.s32.totalorder %v2589, 24
    %vm2602 = vcmp.lt.s32.totalorder %v2590, 24
    %vm2603 = vcmp.lt.s32.totalorder %v2591, 24
    %vm2604 = vcmp.lt.s32.totalorder %v2592, 24
    %vm2605 = vcmp.lt.s32.totalorder %v2593, 24
    %vm2606 = vcmp.lt.s32.totalorder %v2594, 24
    %vm2607 = vmand %vm2595, %vm2601
    %vm2608 = vmand %vm2596, %vm2602
    %vm2609 = vmand %vm2597, %vm2603
    %vm2610 = vmand %vm2598, %vm2604
    %vm2611 = vmand %vm2599, %vm2605
    %vm2612 = vmand %vm2600, %vm2606
    %v2613 = vld [vmem:[#allocation8 + $0x25] sm:$0x1]
    %v2614 = vsel %vm2607, 1, 0
    %v2615 = vsel %vm2608, 1, 0
    %v2616 = vsel %vm2609, 1, 0
    %v2617 = vsel %vm2610, 1, 0
    %v2618 = vsel %vm2611, 1, 0
    %v2619 = vsel %vm2612, 1, 0
    %vm2620 = vcmp.eq.s32.totalorder %v2614, 1
    %vm2621 = vcmp.eq.s32.totalorder %v2615, 1
    %vm2622 = vcmp.eq.s32.totalorder %v2616, 1
    %vm2623 = vcmp.eq.s32.totalorder %v2617, 1
    %vm2624 = vcmp.eq.s32.totalorder %v2618, 1
    %vm2625 = vcmp.eq.s32.totalorder %v2619, 1
    %v2626 = vsel %vm2620, %v2587, 0.0
    %v2627 = vsel %vm2621, %v2586, 0.0
    %v2628 = vsel %vm2622, %v2585, 0.0
    %v2629 = vsel %vm2623, %v2584, 0.0
    %v2630 = vsel %vm2624, %v2583, 0.0
    %v2631 = vsel %vm2625, %v2588, 0.0
    %v2632 = vlaneseq
    %v2633 = vshrl.u32 %v2632, 7
    %v2634 = vsub.s32 0, %v2633
    %v2635 = vrot.slane %v2613, %v2634
    %v2636 = vmul.f32 %v2626, %v2635
    %v2637 = vmul.f32 %v2627, %v2635
    %v2638 = vmul.f32 %v2628, %v2635
    %v2639 = vmul.f32 %v2629, %v2635
    %v2640 = vmul.f32 %v2630, %v2635
    %v2641 = vmul.f32 %v2631, %v2635
    %v2642 = vadd.f32 %v2571, %v2636
    %v2643 = vadd.f32 %v2572, %v2637
    %v2644 = vadd.f32 %v2573, %v2638
    %v2645 = vadd.f32 %v2574, %v2639
    %v2646 = vadd.f32 %v2575, %v2640
    %v2647 = vadd.f32 %v2576, %v2641
    %v2648 = vld [vmem:[#allocation8 + $0x26] sm:$0x1]
    %v2649 = vlaneseq
    %v2650 = vshrl.u32 %v2649, 7
    %v2651 = vsub.s32 0, %v2650
    %v2652 = vrot.slane %v2648, %v2651
    %v2653 = vadd.f32 %v2642, %v2652
    %v2654 = vadd.f32 %v2643, %v2652
    %v2655 = vadd.f32 %v2644, %v2652
    %v2656 = vadd.f32 %v2645, %v2652
    %v2657 = vadd.f32 %v2646, %v2652
    %v2658 = vadd.f32 %v2647, %v2652
    %vm2659 = vcmask 392192
    %v2661 = vsel %vm2659, %v190, 0
    %2663 = vmatprep.subr.mxu0 0.0
    %2664 = vmatpush1.msra.mxu0 0.0
    %2665 = vmatprep.subr.mxu0 0.0
    %2666 = vmatpush1.msra.mxu0 0.0
    %2667 = vmatprep.subr.mxu0 0.0
    %2668 = vmatpush1.msra.mxu0 0.0
    %2669 = vmatprep.subr.mxu0 0.0
    %2670 = vmatpush1.msra.mxu0 0.0
    %2671 = vmatprep.subr.mxu0 0.0
    %2672 = vmatpush1.msra.mxu0 0.0
    %2673 = vmatprep.subr.mxu0 0.0
    %2674 = vmatpush1.msra.mxu0 0.0
    %2675 = vmatprep.subr.mxu0 0.0
    %2676 = vmatpush1.msra.mxu0 0.0
    %2677 = vmatprep.subr.mxu0 0.0
    %2678 = vmatpush1.msra.mxu0 0.0
    %2679 = vmatprep.subr.mxu0 0.0
    %2680 = vmatpush1.msra.mxu0 0.0
    %2681 = vmatprep.subr.mxu0 0.0
    %2682 = vmatpush1.msra.mxu0 0.0
    %2683 = vmatprep.subr.mxu0 0.0
    %2684 = vmatpush1.msra.mxu0 %v2658
    %2685 = vmatprep.subr.mxu0 0.0
    %2686 = vmatpush1.msra.mxu0 %v2657
    %2687 = vmatprep.subr.mxu0 0.0
    %2688 = vmatpush1.msra.mxu0 %v2656
    %2689 = vmatprep.subr.mxu0 0.0
    %2690 = vmatpush1.msra.mxu0 %v2655
    %2691 = vmatprep.subr.mxu0 0.0
    %2692 = vmatpush1.msra.mxu0 %v2654
    %2693 = vmatprep.subr.mxu0 0.0
    %2694 = vmatpush1.msra.mxu0 %v2653
    %2695 = vmatprep.subr.mxu0 0.0
    %2696 = vmatpush2.msra.mxu0 0.0
    %2697 = vmatprep.subr.mxu0 0.0
    %2698 = vmatpush2.msra.mxu0 0.0
    %2699 = vmatprep.subr.mxu0 0.0
    %2700 = vmatpush2.msra.mxu0 0.0
    %2701 = vmatprep.subr.mxu0 0.0
    %2702 = vmatpush2.msra.mxu0 0.0
    %2703 = vmatprep.subr.mxu0 0.0
    %2704 = vmatpush2.msra.mxu0 0.0
    %2705 = vmatprep.subr.mxu0 0.0
    %2706 = vmatpush2.msra.mxu0 0.0
    %2707 = vmatprep.subr.mxu0 0.0
    %2708 = vmatpush2.msra.mxu0 0.0
    %2709 = vmatprep.subr.mxu0 0.0
    %2710 = vmatpush2.msra.mxu0 0.0
    %2711 = vmatprep.subr.mxu0 0.0
    %2712 = vmatpush2.msra.mxu0 0.0
    %2713 = vmatprep.subr.mxu0 0.0
    %2714 = vmatpush2.msra.mxu0 0.0
    %2715 = vmatprep.subr.mxu0 0.0
    %2716 = vmatpush2.msra.mxu0 0.0
    %2717 = vmatprep.subr.mxu0 0.0
    %2718 = vmatpush2.msra.mxu0 0.0
    %2719 = vmatprep.subr.mxu0 0.0
    %2720 = vmatpush2.msra.mxu0 0.0
    %2721 = vmatprep.subr.mxu0 0.0
    %2722 = vmatpush2.msra.mxu0 0.0
    %2723 = vmatprep.subr.mxu0 0.0
    %2724 = vmatpush2.msra.mxu0 0.0
    %2725 = vmatprep.subr.mxu0 0.0
    %2726 = vmatpush2.msra.mxu0 0.0
    %2727 = vmatprep.mubr.f32.mxu0 0.0
    %2728 = vmatmul.mubr.f32.gmra.mxu0 %v2661
    %v2729 = vpop.f32.mrf.mxu0
    %v2730 = vadd.f32 0.0, %v2729
    %v2731 = vpop.f32.mrf.mxu0
    %2732 = vdwg.mxu0
    %v2734 = vsel %vm1463, %v178, 0
    %v2737 = vsel %vm1463, %v179, 0
    %v2740 = vsel %vm1463, %v180, 0
    %v2743 = vsel %vm1463, %v181, 0
    %v2746 = vsel %vm1463, %v182, 0
    %v2749 = vsel %vm1463, %v183, 0
    %v2752 = vsel %vm1476, %v2730, 0
    %2754 = vmatprep.subr.mxu0 0.0
    %2755 = vmatpush1.msra.mxu0 0.0
    %2756 = vmatprep.subr.mxu0 0.0
    %2757 = vmatpush1.msra.mxu0 0.0
    %2758 = vmatprep.subr.mxu0 0.0
    %2759 = vmatpush1.msra.mxu0 0.0
    %2760 = vmatprep.subr.mxu0 0.0
    %2761 = vmatpush1.msra.mxu0 0.0
    %2762 = vmatprep.subr.mxu0 0.0
    %2763 = vmatpush1.msra.mxu0 0.0
    %2764 = vmatprep.subr.mxu0 0.0
    %2765 = vmatpush1.msra.mxu0 0.0
    %2766 = vmatprep.subr.mxu0 0.0
    %2767 = vmatpush1.msra.mxu0 0.0
    %2768 = vmatprep.subr.mxu0 0.0
    %2769 = vmatpush1.msra.mxu0 0.0
    %2770 = vmatprep.subr.mxu0 0.0
    %2771 = vmatpush1.msra.mxu0 0.0
    %2772 = vmatprep.subr.mxu0 0.0
    %2773 = vmatpush1.msra.mxu0 0.0
    %2774 = vmatprep.subr.mxu0 0.0
    %2775 = vmatpush1.msra.mxu0 0.0
    %2776 = vmatprep.subr.mxu0 0.0
    %2777 = vmatpush1.msra.mxu0 0.0
    %2778 = vmatprep.subr.mxu0 0.0
    %2779 = vmatpush1.msra.mxu0 0.0
    %2780 = vmatprep.subr.mxu0 0.0
    %2781 = vmatpush1.msra.mxu0 0.0
    %2782 = vmatprep.subr.mxu0 0.0
    %2783 = vmatpush1.msra.mxu0 0.0
    %2784 = vmatprep.subr.mxu0 0.0
    %2785 = vmatpush1.msra.mxu0 %v2752
    %2786 = vmatprep.subr.mxu0 0.0
    %2787 = vmatpush2.msra.mxu0 0.0
    %2788 = vmatprep.subr.mxu0 0.0
    %2789 = vmatpush2.msra.mxu0 0.0
    %2790 = vmatprep.subr.mxu0 0.0
    %2791 = vmatpush2.msra.mxu0 0.0
    %2792 = vmatprep.subr.mxu0 0.0
    %2793 = vmatpush2.msra.mxu0 0.0
    %2794 = vmatprep.subr.mxu0 0.0
    %2795 = vmatpush2.msra.mxu0 0.0
    %2796 = vmatprep.subr.mxu0 0.0
    %2797 = vmatpush2.msra.mxu0 0.0
    %2798 = vmatprep.subr.mxu0 0.0
    %2799 = vmatpush2.msra.mxu0 0.0
    %2800 = vmatprep.subr.mxu0 0.0
    %2801 = vmatpush2.msra.mxu0 0.0
    %2802 = vmatprep.subr.mxu0 0.0
    %2803 = vmatpush2.msra.mxu0 0.0
    %2804 = vmatprep.subr.mxu0 0.0
    %2805 = vmatpush2.msra.mxu0 0.0
    %2806 = vmatprep.subr.mxu0 0.0
    %2807 = vmatpush2.msra.mxu0 0.0
    %2808 = vmatprep.subr.mxu0 0.0
    %2809 = vmatpush2.msra.mxu0 0.0
    %2810 = vmatprep.subr.mxu0 0.0
    %2811 = vmatpush2.msra.mxu0 0.0
    %2812 = vmatprep.subr.mxu0 0.0
    %2813 = vmatpush2.msra.mxu0 0.0
    %2814 = vmatprep.subr.mxu0 0.0
    %2815 = vmatpush2.msra.mxu0 0.0
    %2816 = vmatprep.subr.mxu0 0.0
    %2817 = vmatpush2.msra.mxu0 0.0
    %2818 = vmatprep.mubr.f32.mxu0 0.0
    %2819 = vmatmul.mubr.f32.gmra.mxu0 %v2734
    %v2820 = vpop.f32.mrf.mxu0
    %v2821 = vadd.f32 0.0, %v2820
    %v2822 = vpop.f32.mrf.mxu0
    %2823 = vmatprep.mubr.f32.mxu0 0.0
    %2824 = vmatmul.mubr.f32.gmra.mxu0 %v2737
    %v2825 = vpop.f32.mrf.mxu0
    %v2826 = vadd.f32 0.0, %v2825
    %v2827 = vpop.f32.mrf.mxu0
    %2828 = vmatprep.mubr.f32.mxu0 0.0
    %2829 = vmatmul.mubr.f32.gmra.mxu0 %v2740
    %v2830 = vpop.f32.mrf.mxu0
    %v2831 = vadd.f32 0.0, %v2830
    %v2832 = vpop.f32.mrf.mxu0
    %2833 = vmatprep.mubr.f32.mxu0 0.0
    %2834 = vmatmul.mubr.f32.gmra.mxu0 %v2743
    %v2835 = vpop.f32.mrf.mxu0
    %v2836 = vadd.f32 0.0, %v2835
    %v2837 = vpop.f32.mrf.mxu0
    %2838 = vmatprep.mubr.f32.mxu0 0.0
    %2839 = vmatmul.mubr.f32.gmra.mxu0 %v2746
    %v2840 = vpop.f32.mrf.mxu0
    %v2841 = vadd.f32 0.0, %v2840
    %v2842 = vpop.f32.mrf.mxu0
    %2843 = vmatprep.mubr.f32.mxu0 0.0
    %2844 = vmatmul.mubr.f32.gmra.mxu0 %v2749
    %v2845 = vpop.f32.mrf.mxu0
    %v2846 = vadd.f32 0.0, %v2845
    %v2847 = vpop.f32.mrf.mxu0
    %2848 = vdwg.mxu0
    %v2849 = vmul.f32 %v2821, 0.041666668
    %v2850 = vmul.f32 %v2826, 0.041666668
    %v2851 = vmul.f32 %v2831, 0.041666668
    %v2852 = vmul.f32 %v2836, 0.041666668
    %v2853 = vmul.f32 %v2841, 0.041666668
    %v2854 = vmul.f32 %v2846, 0.041666668
    %v2855 = vsub.f32 %v2653, %v2849
    %v2856 = vsub.f32 %v2654, %v2850
    %v2857 = vsub.f32 %v2655, %v2851
    %v2858 = vsub.f32 %v2656, %v2852
    %v2859 = vsub.f32 %v2657, %v2853
    %v2860 = vsub.f32 %v2658, %v2854
    %v2861 = vmul.f32 %v2855, %v2855
    %v2862 = vmul.f32 %v2856, %v2856
    %v2863 = vmul.f32 %v2857, %v2857
    %v2864 = vmul.f32 %v2858, %v2858
    %v2865 = vmul.f32 %v2859, %v2859
    %v2866 = vmul.f32 %v2860, %v2860
    %2867 = vmatprep.subr.mxu0 0.0
    %2868 = vmatpush1.msra.mxu0 0.0
    %2869 = vmatprep.subr.mxu0 0.0
    %2870 = vmatpush1.msra.mxu0 0.0
    %2871 = vmatprep.subr.mxu0 0.0
    %2872 = vmatpush1.msra.mxu0 0.0
    %2873 = vmatprep.subr.mxu0 0.0
    %2874 = vmatpush1.msra.mxu0 0.0
    %2875 = vmatprep.subr.mxu0 0.0
    %2876 = vmatpush1.msra.mxu0 0.0
    %2877 = vmatprep.subr.mxu0 0.0
    %2878 = vmatpush1.msra.mxu0 0.0
    %2879 = vmatprep.subr.mxu0 0.0
    %2880 = vmatpush1.msra.mxu0 0.0
    %2881 = vmatprep.subr.mxu0 0.0
    %2882 = vmatpush1.msra.mxu0 0.0
    %2883 = vmatprep.subr.mxu0 0.0
    %2884 = vmatpush1.msra.mxu0 0.0
    %2885 = vmatprep.subr.mxu0 0.0
    %2886 = vmatpush1.msra.mxu0 0.0
    %2887 = vmatprep.subr.mxu0 0.0
    %2888 = vmatpush1.msra.mxu0 %v2866
    %2889 = vmatprep.subr.mxu0 0.0
    %2890 = vmatpush1.msra.mxu0 %v2865
    %2891 = vmatprep.subr.mxu0 0.0
    %2892 = vmatpush1.msra.mxu0 %v2864
    %2893 = vmatprep.subr.mxu0 0.0
    %2894 = vmatpush1.msra.mxu0 %v2863
    %2895 = vmatprep.subr.mxu0 0.0
    %2896 = vmatpush1.msra.mxu0 %v2862
    %2897 = vmatprep.subr.mxu0 0.0
    %2898 = vmatpush1.msra.mxu0 %v2861
    %2899 = vmatprep.subr.mxu0 0.0
    %2900 = vmatpush2.msra.mxu0 0.0
    %2901 = vmatprep.subr.mxu0 0.0
    %2902 = vmatpush2.msra.mxu0 0.0
    %2903 = vmatprep.subr.mxu0 0.0
    %2904 = vmatpush2.msra.mxu0 0.0
    %2905 = vmatprep.subr.mxu0 0.0
    %2906 = vmatpush2.msra.mxu0 0.0
    %2907 = vmatprep.subr.mxu0 0.0
    %2908 = vmatpush2.msra.mxu0 0.0
    %2909 = vmatprep.subr.mxu0 0.0
    %2910 = vmatpush2.msra.mxu0 0.0
    %2911 = vmatprep.subr.mxu0 0.0
    %2912 = vmatpush2.msra.mxu0 0.0
    %2913 = vmatprep.subr.mxu0 0.0
    %2914 = vmatpush2.msra.mxu0 0.0
    %2915 = vmatprep.subr.mxu0 0.0
    %2916 = vmatpush2.msra.mxu0 0.0
    %2917 = vmatprep.subr.mxu0 0.0
    %2918 = vmatpush2.msra.mxu0 0.0
    %2919 = vmatprep.subr.mxu0 0.0
    %2920 = vmatpush2.msra.mxu0 0.0
    %2921 = vmatprep.subr.mxu0 0.0
    %2922 = vmatpush2.msra.mxu0 0.0
    %2923 = vmatprep.subr.mxu0 0.0
    %2924 = vmatpush2.msra.mxu0 0.0
    %2925 = vmatprep.subr.mxu0 0.0
    %2926 = vmatpush2.msra.mxu0 0.0
    %2927 = vmatprep.subr.mxu0 0.0
    %2928 = vmatpush2.msra.mxu0 0.0
    %2929 = vmatprep.subr.mxu0 0.0
    %2930 = vmatpush2.msra.mxu0 0.0
    %2931 = vmatprep.mubr.f32.mxu0 0.0
    %2932 = vmatmul.mubr.f32.gmra.mxu0 %v2661
    %v2933 = vpop.f32.mrf.mxu0
    %v2934 = vadd.f32 0.0, %v2933
    %v2935 = vpop.f32.mrf.mxu0
    %2936 = vdwg.mxu0
    %v2938 = vsel %vm1476, %v2934, 0
    %2940 = vmatprep.subr.mxu0 0.0
    %2941 = vmatpush1.msra.mxu0 0.0
    %2942 = vmatprep.subr.mxu0 0.0
    %2943 = vmatpush1.msra.mxu0 0.0
    %2944 = vmatprep.subr.mxu0 0.0
    %2945 = vmatpush1.msra.mxu0 0.0
    %2946 = vmatprep.subr.mxu0 0.0
    %2947 = vmatpush1.msra.mxu0 0.0
    %2948 = vmatprep.subr.mxu0 0.0
    %2949 = vmatpush1.msra.mxu0 0.0
    %2950 = vmatprep.subr.mxu0 0.0
    %2951 = vmatpush1.msra.mxu0 0.0
    %2952 = vmatprep.subr.mxu0 0.0
    %2953 = vmatpush1.msra.mxu0 0.0
    %2954 = vmatprep.subr.mxu0 0.0
    %2955 = vmatpush1.msra.mxu0 0.0
    %2956 = vmatprep.subr.mxu0 0.0
    %2957 = vmatpush1.msra.mxu0 0.0
    %2958 = vmatprep.subr.mxu0 0.0
    %2959 = vmatpush1.msra.mxu0 0.0
    %2960 = vmatprep.subr.mxu0 0.0
    %2961 = vmatpush1.msra.mxu0 0.0
    %2962 = vmatprep.subr.mxu0 0.0
    %2963 = vmatpush1.msra.mxu0 0.0
    %2964 = vmatprep.subr.mxu0 0.0
    %2965 = vmatpush1.msra.mxu0 0.0
    %2966 = vmatprep.subr.mxu0 0.0
    %2967 = vmatpush1.msra.mxu0 0.0
    %2968 = vmatprep.subr.mxu0 0.0
    %2969 = vmatpush1.msra.mxu0 0.0
    %2970 = vmatprep.subr.mxu0 0.0
    %2971 = vmatpush1.msra.mxu0 %v2938
    %2972 = vmatprep.subr.mxu0 0.0
    %2973 = vmatpush2.msra.mxu0 0.0
    %2974 = vmatprep.subr.mxu0 0.0
    %2975 = vmatpush2.msra.mxu0 0.0
    %2976 = vmatprep.subr.mxu0 0.0
    %2977 = vmatpush2.msra.mxu0 0.0
    %2978 = vmatprep.subr.mxu0 0.0
    %2979 = vmatpush2.msra.mxu0 0.0
    %2980 = vmatprep.subr.mxu0 0.0
    %2981 = vmatpush2.msra.mxu0 0.0
    %2982 = vmatprep.subr.mxu0 0.0
    %2983 = vmatpush2.msra.mxu0 0.0
    %2984 = vmatprep.subr.mxu0 0.0
    %2985 = vmatpush2.msra.mxu0 0.0
    %2986 = vmatprep.subr.mxu0 0.0
    %2987 = vmatpush2.msra.mxu0 0.0
    %2988 = vmatprep.subr.mxu0 0.0
    %2989 = vmatpush2.msra.mxu0 0.0
    %2990 = vmatprep.subr.mxu0 0.0
    %2991 = vmatpush2.msra.mxu0 0.0
    %2992 = vmatprep.subr.mxu0 0.0
    %2993 = vmatpush2.msra.mxu0 0.0
    %2994 = vmatprep.subr.mxu0 0.0
    %2995 = vmatpush2.msra.mxu0 0.0
    %2996 = vmatprep.subr.mxu0 0.0
    %2997 = vmatpush2.msra.mxu0 0.0
    %2998 = vmatprep.subr.mxu0 0.0
    %2999 = vmatpush2.msra.mxu0 0.0
    %3000 = vmatprep.subr.mxu0 0.0
    %3001 = vmatpush2.msra.mxu0 0.0
    %3002 = vmatprep.subr.mxu0 0.0
    %3003 = vmatpush2.msra.mxu0 0.0
    %3004 = vmatprep.mubr.f32.mxu0 0.0
    %3005 = vmatmul.mubr.f32.gmra.mxu0 %v2734
    %v3006 = vpop.f32.mrf.mxu0
    %v3007 = vadd.f32 0.0, %v3006
    %v3008 = vpop.f32.mrf.mxu0
    %3009 = vmatprep.mubr.f32.mxu0 0.0
    %3010 = vmatmul.mubr.f32.gmra.mxu0 %v2737
    %v3011 = vpop.f32.mrf.mxu0
    %v3012 = vadd.f32 0.0, %v3011
    %v3013 = vpop.f32.mrf.mxu0
    %3014 = vmatprep.mubr.f32.mxu0 0.0
    %3015 = vmatmul.mubr.f32.gmra.mxu0 %v2740
    %v3016 = vpop.f32.mrf.mxu0
    %v3017 = vadd.f32 0.0, %v3016
    %v3018 = vpop.f32.mrf.mxu0
    %3019 = vmatprep.mubr.f32.mxu0 0.0
    %3020 = vmatmul.mubr.f32.gmra.mxu0 %v2743
    %v3021 = vpop.f32.mrf.mxu0
    %v3022 = vadd.f32 0.0, %v3021
    %v3023 = vpop.f32.mrf.mxu0
    %3024 = vmatprep.mubr.f32.mxu0 0.0
    %3025 = vmatmul.mubr.f32.gmra.mxu0 %v2746
    %v3026 = vpop.f32.mrf.mxu0
    %v3027 = vadd.f32 0.0, %v3026
    %v3028 = vpop.f32.mrf.mxu0
    %3029 = vmatprep.mubr.f32.mxu0 0.0
    %3030 = vmatmul.mubr.f32.gmra.mxu0 %v2749
    %v3031 = vpop.f32.mrf.mxu0
    %v3032 = vadd.f32 0.0, %v3031
    %v3033 = vpop.f32.mrf.mxu0
    %3034 = vdwg.mxu0
    %v3035 = vmul.f32 %v3007, 0.041666668
    %v3036 = vmul.f32 %v3012, 0.041666668
    %v3037 = vmul.f32 %v3017, 0.041666668
    %v3038 = vmul.f32 %v3022, 0.041666668
    %v3039 = vmul.f32 %v3027, 0.041666668
    %v3040 = vmul.f32 %v3032, 0.041666668
    %v3041 = vadd.f32 %v3035, 1e-05
    %v3042 = vadd.f32 %v3036, 1e-05
    %v3043 = vadd.f32 %v3037, 1e-05
    %v3044 = vadd.f32 %v3038, 1e-05
    %v3045 = vadd.f32 %v3039, 1e-05
    %v3046 = vadd.f32 %v3040, 1e-05
    %v3047 = vrsqrt.pop %v3041
    %v3048 = vrsqrt.pop %v3042
    %v3049 = vrsqrt.pop %v3043
    %v3050 = vrsqrt.pop %v3044
    %v3051 = vrsqrt.pop %v3045
    %v3052 = vrsqrt.pop %v3046
    %v3053 = vmul.f32 %v2855, %v3047
    %v3054 = vmul.f32 %v2856, %v3048
    %v3055 = vmul.f32 %v2857, %v3049
    %v3056 = vmul.f32 %v2858, %v3050
    %v3057 = vmul.f32 %v2859, %v3051
    %v3058 = vmul.f32 %v2860, %v3052
    %v3059 = vld [vmem:[#allocation8 + $0x27] sm:$0x1]
    %v3060 = vlaneseq
    %v3061 = vshrl.u32 %v3060, 7
    %v3062 = vsub.s32 0, %v3061
    %v3063 = vrot.slane %v3059, %v3062
    %v3064 = vmul.f32 %v3053, %v3063
    %v3065 = vmul.f32 %v3054, %v3063
    %v3066 = vmul.f32 %v3055, %v3063
    %v3067 = vmul.f32 %v3056, %v3063
    %v3068 = vmul.f32 %v3057, %v3063
    %v3069 = vmul.f32 %v3058, %v3063
    %v3070 = vld [vmem:[#allocation8 + $0x28] sm:$0x1]
    %v3071 = vlaneseq
    %v3072 = vshrl.u32 %v3071, 7
    %v3073 = vsub.s32 0, %v3072
    %v3074 = vrot.slane %v3070, %v3073
    %v3075 = vadd.f32 %v3064, %v3074
    %v3076 = vadd.f32 %v3065, %v3074
    %v3077 = vadd.f32 %v3066, %v3074
    %v3078 = vadd.f32 %v3067, %v3074
    %v3079 = vadd.f32 %v3068, %v3074
    %v3080 = vadd.f32 %v3069, %v3074
    %v3081 = vxor.u32 %v3075, 2147483648
    %v3082 = vxor.u32 %v3076, 2147483648
    %v3083 = vxor.u32 %v3077, 2147483648
    %v3084 = vxor.u32 %v3078, 2147483648
    %v3085 = vxor.u32 %v3079, 2147483648
    %v3086 = vxor.u32 %v3080, 2147483648
    %v3087 = vmul.f32 %v3081, 1.442695
    %v3088 = vpow.pop %v3087
    %v3089 = vmul.f32 %v3082, 1.442695
    %v3090 = vpow.pop %v3089
    %v3091 = vmul.f32 %v3083, 1.442695
    %v3092 = vpow.pop %v3091
    %v3093 = vmul.f32 %v3084, 1.442695
    %v3094 = vpow.pop %v3093
    %v3095 = vmul.f32 %v3085, 1.442695
    %v3096 = vpow.pop %v3095
    %v3097 = vmul.f32 %v3086, 1.442695
    %v3098 = vpow.pop %v3097
    %v3099 = vadd.f32 %v3088, 1.0
    %v3100 = vadd.f32 %v3090, 1.0
    %v3101 = vadd.f32 %v3092, 1.0
    %v3102 = vadd.f32 %v3094, 1.0
    %v3103 = vadd.f32 %v3096, 1.0
    %v3104 = vadd.f32 %v3098, 1.0
    %v3105 = vrcp.pop %v3099
    %v3106 = vmul.f32 1.0, %v3105
    %v3107 = vrcp.pop %v3100
    %v3108 = vmul.f32 1.0, %v3107
    %v3109 = vrcp.pop %v3101
    %v3110 = vmul.f32 1.0, %v3109
    %v3111 = vrcp.pop %v3102
    %v3112 = vmul.f32 1.0, %v3111
    %v3113 = vrcp.pop %v3103
    %v3114 = vmul.f32 1.0, %v3113
    %v3115 = vrcp.pop %v3104
    %v3116 = vmul.f32 1.0, %v3115
    %v3117 = vmul.f32 %v3075, %v3106
    %v3118 = vmul.f32 %v3076, %v3108
    %v3119 = vmul.f32 %v3077, %v3110
    %v3120 = vmul.f32 %v3078, %v3112
    %v3121 = vmul.f32 %v3079, %v3114
    %v3122 = vmul.f32 %v3080, %v3116
    %v3123 = vpack.c.bf16 %v3118, %v3117
    %v3124 = vpack.c.bf16 %v3120, %v3119
    %v3125 = vpack.c.bf16 %v3122, %v3121
    %v3126 = vld [vmem:[#allocation8 + $0x29] sm:$0x1]
    %v3127 = vlaneseq
    %v3128 = vshrl.u32 %v3127, 7
    %v3129 = vsub.s32 0, %v3128
    %v3130 = vrot.slane %v3126, %v3129
    %3131 = vrot.lane.b32.xlu0 %v1989, 64
    %v3132 = vpop.permute.xlu0 %3131
    %3133 = vrot.lane.b32.xlu0 %v1990, 64
    %v3134 = vpop.permute.xlu0 %3133
    %v3138 = vsel %vm237, %v3123, 0
    %v3141 = vsel %vm237, %v3124, 0
    %v3144 = vsel %vm237, %v3125, 0
    %3146 = vmatprep.subr.bf16.mxu0 0
    %3147 = vmatpush1.bf16.msra.mxu0 0
    %3148 = vmatprep.subr.bf16.mxu0 0
    %3149 = vmatpush1.bf16.msra.mxu0 0
    %3150 = vmatprep.subr.bf16.mxu0 0
    %3151 = vmatpush1.bf16.msra.mxu0 0
    %3152 = vmatprep.subr.bf16.mxu0 0
    %3153 = vmatpush1.bf16.msra.mxu0 0
    %3154 = vmatprep.subr.bf16.mxu0 0
    %3155 = vmatpush1.bf16.msra.mxu0 0
    %3156 = vmatprep.subr.bf16.mxu0 0
    %3157 = vmatpush1.bf16.msra.mxu0 0
    %3158 = vmatprep.subr.bf16.mxu0 0
    %3159 = vmatpush1.bf16.msra.mxu0 %v3134
    %3160 = vmatprep.subr.bf16.mxu0 0
    %3161 = vmatpush1.bf16.msra.mxu0 %v3132
    %3162 = vmatprep.subr.bf16.mxu0 0
    %3163 = vmatpush2.bf16.msra.mxu0 0
    %3164 = vmatprep.subr.bf16.mxu0 0
    %3165 = vmatpush2.bf16.msra.mxu0 0
    %3166 = vmatprep.subr.bf16.mxu0 0
    %3167 = vmatpush2.bf16.msra.mxu0 0
    %3168 = vmatprep.subr.bf16.mxu0 0
    %3169 = vmatpush2.bf16.msra.mxu0 0
    %3170 = vmatprep.subr.bf16.mxu0 0
    %3171 = vmatpush2.bf16.msra.mxu0 0
    %3172 = vmatprep.subr.bf16.mxu0 0
    %3173 = vmatpush2.bf16.msra.mxu0 0
    %3174 = vmatprep.subr.bf16.mxu0 0
    %3175 = vmatpush2.bf16.msra.mxu0 0
    %3176 = vmatprep.subr.bf16.mxu0 0
    %3177 = vmatpush2.bf16.msra.mxu0 0
    %3178 = vmatprep.mubr.bf16.mxu0 0
    %3179 = vmatmul.mubr.bf16.gmra.mxu0 %v3138
    %v3180 = vpop.f32.mrf.mxu0
    %v3181 = vadd.f32 %v3130, %v3180
    %v3182 = vpop.f32.mrf.mxu0
    %v3183 = vpop.f32.mrf.mxu0
    %v3184 = vadd.f32 %v3130, %v3183
    %v3185 = vpop.f32.mrf.mxu0
    %3186 = vmatprep.mubr.bf16.mxu0 0
    %3187 = vmatmul.mubr.bf16.gmra.mxu0 %v3141
    %v3188 = vpop.f32.mrf.mxu0
    %v3189 = vadd.f32 %v3130, %v3188
    %v3190 = vpop.f32.mrf.mxu0
    %v3191 = vpop.f32.mrf.mxu0
    %v3192 = vadd.f32 %v3130, %v3191
    %v3193 = vpop.f32.mrf.mxu0
    %3194 = vmatprep.mubr.bf16.mxu0 0
    %3195 = vmatmul.mubr.bf16.gmra.mxu0 %v3144
    %v3196 = vpop.f32.mrf.mxu0
    %v3197 = vadd.f32 %v3130, %v3196
    %v3198 = vpop.f32.mrf.mxu0
    %v3199 = vpop.f32.mrf.mxu0
    %v3200 = vadd.f32 %v3130, %v3199
    %v3201 = vpop.f32.mrf.mxu0
    %3202 = vdwg.mxu0
    %v3203 = vadd.f32 %v802, %v3181
    %v3204 = vadd.f32 %v803, %v3184
    %v3205 = vadd.f32 %v804, %v3189
    %v3206 = vadd.f32 %v805, %v3192
    %v3207 = vadd.f32 %v806, %v3197
    %v3208 = vadd.f32 %v807, %v3200
    %v3209 = vld [vmem:[#allocation8 + $0x2a] sm:$0x1]
    %v3210 = vld [vmem:[#allocation8 + $0x2b] sm:$0x1]
    %v3211 = vsel %vm237, %v1865, 0.0
    %3212 = vadd.xlane.f32.xlu0 %v3211
    %v3213 = vpop.xlane.xlu0 %3212
    %v3214 = vsel %vm237, %v1866, 0.0
    %3215 = vadd.xlane.f32.xlu0 %v3214
    %v3216 = vpop.xlane.xlu0 %3215
    %v3217 = vsel %vm237, %v1867, 0.0
    %3218 = vadd.xlane.f32.xlu0 %v3217
    %v3219 = vpop.xlane.xlu0 %3218
    %v3220 = vsel %vm237, %v1868, 0.0
    %3221 = vadd.xlane.f32.xlu0 %v3220
    %v3222 = vpop.xlane.xlu0 %3221
    %v3223 = vmul.f32 %v3213, %v250
    %v3224 = vmul.f32 %v3216, %v250
    %v3225 = vmul.f32 %v3219, %v250
    %v3226 = vmul.f32 %v3222, %v250
    %v3227 = vsub.f32 %v1865, %v3223
    %v3228 = vsub.f32 %v1866, %v3224
    %v3229 = vsub.f32 %v1867, %v3225
    %v3230 = vsub.f32 %v1868, %v3226
    %v3231 = vmul.f32 %v3227, %v3227
    %v3232 = vmul.f32 %v3228, %v3228
    %v3233 = vmul.f32 %v3229, %v3229
    %v3234 = vmul.f32 %v3230, %v3230
    %v3235 = vsel %vm237, %v3231, 0.0
    %3236 = vadd.xlane.f32.xlu0 %v3235
    %v3237 = vpop.xlane.xlu0 %3236
    %v3238 = vsel %vm237, %v3232, 0.0
    %3239 = vadd.xlane.f32.xlu0 %v3238
    %v3240 = vpop.xlane.xlu0 %3239
    %v3241 = vsel %vm237, %v3233, 0.0
    %3242 = vadd.xlane.f32.xlu0 %v3241
    %v3243 = vpop.xlane.xlu0 %3242
    %v3244 = vsel %vm237, %v3234, 0.0
    %3245 = vadd.xlane.f32.xlu0 %v3244
    %v3246 = vpop.xlane.xlu0 %3245
    %v3247 = vmul.f32 %v3237, %v250
    %v3248 = vmul.f32 %v3240, %v250
    %v3249 = vmul.f32 %v3243, %v250
    %v3250 = vmul.f32 %v3246, %v250
    %v3251 = vadd.f32 %v3247, 1e-05
    %v3252 = vadd.f32 %v3248, 1e-05
    %v3253 = vadd.f32 %v3249, 1e-05
    %v3254 = vadd.f32 %v3250, 1e-05
    %v3255 = vrsqrt.pop %v3251
    %v3256 = vrsqrt.pop %v3252
    %v3257 = vrsqrt.pop %v3253
    %v3258 = vrsqrt.pop %v3254
    %v3259 = vmul.f32 %v3227, %v3255
    %v3260 = vmul.f32 %v3228, %v3256
    %v3261 = vmul.f32 %v3229, %v3257
    %v3262 = vmul.f32 %v3230, %v3258
    %v3263 = vlaneseq
    %v3264 = vshrl.u32 %v3263, 7
    %v3265 = vsub.s32 0, %v3264
    %v3266 = vrot.slane %v3209, %v3265
    %v3267 = vmul.f32 %v3259, %v3266
    %v3268 = vmul.f32 %v3260, %v3266
    %v3269 = vmul.f32 %v3261, %v3266
    %v3270 = vmul.f32 %v3262, %v3266
    %v3271 = vlaneseq
    %v3272 = vshrl.u32 %v3271, 7
    %v3273 = vsub.s32 0, %v3272
    %v3274 = vrot.slane %v3210, %v3273
    %v3275 = vadd.f32 %v3267, %v3274
    %v3276 = vadd.f32 %v3268, %v3274
    %v3277 = vadd.f32 %v3269, %v3274
    %v3278 = vadd.f32 %v3270, %v3274
    %v3279 = vpack.c.bf16 %v3276, %v3275
    %v3280 = vpack.c.bf16 %v3278, %v3277
    %v3281 = vpack.c.bf16 %v3204, %v3203
    %v3282 = vpack.c.bf16 %v3206, %v3205
    %v3283 = vpack.c.bf16 %v3208, %v3207
    %v3284 = vld [vmem:[#allocation7 + $0x80] sm:$0xf]
    %v3285 = vld [vmem:[#allocation7 + $0x84] sm:$0xf]
    %v3286 = vld [vmem:[#allocation7 + $0x88] sm:$0xf]
    %v3287 = vld [vmem:[#allocation7 + $0x8c] sm:$0xf]
    %v3288 = vld [vmem:[#allocation7 + $0x90] sm:$0xf]
    %v3289 = vld [vmem:[#allocation7 + $0x94] sm:$0xf]
    %v3290 = vld [vmem:[#allocation7 + $0x98] sm:$0xf]
    %v3291 = vld [vmem:[#allocation7 + $0x9c] sm:$0xf]
    %v3292 = vld [vmem:[#allocation7 + $0xa0] sm:$0xf]
    %v3293 = vld [vmem:[#allocation7 + $0xa4] sm:$0xf]
    %v3294 = vld [vmem:[#allocation8 + $0x2c] sm:$0x1]
    %v3295 = vld [vmem:[#allocation8 + $0x2d] sm:$0x1]
    %v3296 = vld [vmem:[#allocation8 + $0x2e] sm:$0x1]
    %v3297 = vlaneseq
    %v3298 = vshrl.u32 %v3297, 7
    %v3299 = vsub.s32 0, %v3298
    %v3300 = vrot.slane %v3294, %v3299
    %v3305 = vunpack.c.l.b16 %v3284
    %v3306 = vunpack.c.l.b16 %v3285
    %v3307 = vunpack.c.l.b16 %v3286
    %v3308 = vunpack.c.l.b16 %v3287
    %v3309 = vpack.c.b16 %v3306, %v3305
    %v3310 = vpack.c.b16 %v3308, %v3307
    %v3314 = vsel %vm237, %v3279, 0
    %v3317 = vsel %vm237, %v3280, 0
    %3319 = vmatprep.subr.bf16.mxu0 0
    %3320 = vmatpush1.bf16.msra.mxu0 0
    %3321 = vmatprep.subr.bf16.mxu0 0
    %3322 = vmatpush1.bf16.msra.mxu0 0
    %3323 = vmatprep.subr.bf16.mxu0 0
    %3324 = vmatpush1.bf16.msra.mxu0 0
    %3325 = vmatprep.subr.bf16.mxu0 0
    %3326 = vmatpush1.bf16.msra.mxu0 0
    %3327 = vmatprep.subr.bf16.mxu0 0
    %3328 = vmatpush1.bf16.msra.mxu0 0
    %3329 = vmatprep.subr.bf16.mxu0 0
    %3330 = vmatpush1.bf16.msra.mxu0 0
    %3331 = vmatprep.subr.bf16.mxu0 0
    %3332 = vmatpush1.bf16.msra.mxu0 %v3310
    %3333 = vmatprep.subr.bf16.mxu0 0
    %3334 = vmatpush1.bf16.msra.mxu0 %v3309
    %3335 = vmatprep.subr.bf16.mxu0 0
    %3336 = vmatpush2.bf16.msra.mxu0 0
    %3337 = vmatprep.subr.bf16.mxu0 0
    %3338 = vmatpush2.bf16.msra.mxu0 0
    %3339 = vmatprep.subr.bf16.mxu0 0
    %3340 = vmatpush2.bf16.msra.mxu0 0
    %3341 = vmatprep.subr.bf16.mxu0 0
    %3342 = vmatpush2.bf16.msra.mxu0 0
    %3343 = vmatprep.subr.bf16.mxu0 0
    %3344 = vmatpush2.bf16.msra.mxu0 0
    %3345 = vmatprep.subr.bf16.mxu0 0
    %3346 = vmatpush2.bf16.msra.mxu0 0
    %3347 = vmatprep.subr.bf16.mxu0 0
    %3348 = vmatpush2.bf16.msra.mxu0 0
    %3349 = vmatprep.subr.bf16.mxu0 0
    %3350 = vmatpush2.bf16.msra.mxu0 0
    %3351 = vmatprep.mubr.bf16.mxu0 0
    %3352 = vmatmul.mubr.bf16.gmra.mxu0 %v3314
    %v3353 = vpop.f32.mrf.mxu0
    %v3354 = vadd.f32 %v3300, %v3353
    %v3355 = vpop.f32.mrf.mxu0
    %v3356 = vpop.f32.mrf.mxu0
    %v3357 = vadd.f32 %v3300, %v3356
    %v3358 = vpop.f32.mrf.mxu0
    %3359 = vmatprep.mubr.bf16.mxu0 0
    %3360 = vmatmul.mubr.bf16.gmra.mxu0 %v3317
    %v3361 = vpop.f32.mrf.mxu0
    %v3362 = vadd.f32 %v3300, %v3361
    %v3363 = vpop.f32.mrf.mxu0
    %v3364 = vpop.f32.mrf.mxu0
    %v3365 = vadd.f32 %v3300, %v3364
    %v3366 = vpop.f32.mrf.mxu0
    %3367 = vdwg.mxu0
    %v3368 = vlaneseq
    %v3369 = vshrl.u32 %v3368, 7
    %v3370 = vsub.s32 0, %v3369
    %v3371 = vrot.slane %v3295, %v3370
    %3372 = vrot.lane.b32.xlu0 %v3309, 64
    %v3373 = vpop.permute.xlu0 %3372
    %3374 = vrot.lane.b32.xlu0 %v3310, 64
    %v3375 = vpop.permute.xlu0 %3374
    %v3379 = vsel %vm237, %v3281, 0
    %v3382 = vsel %vm237, %v3282, 0
    %v3385 = vsel %vm237, %v3283, 0
    %3387 = vmatprep.subr.bf16.mxu0 0
    %3388 = vmatpush1.bf16.msra.mxu0 0
    %3389 = vmatprep.subr.bf16.mxu0 0
    %3390 = vmatpush1.bf16.msra.mxu0 0
    %3391 = vmatprep.subr.bf16.mxu0 0
    %3392 = vmatpush1.bf16.msra.mxu0 0
    %3393 = vmatprep.subr.bf16.mxu0 0
    %3394 = vmatpush1.bf16.msra.mxu0 0
    %3395 = vmatprep.subr.bf16.mxu0 0
    %3396 = vmatpush1.bf16.msra.mxu0 0
    %3397 = vmatprep.subr.bf16.mxu0 0
    %3398 = vmatpush1.bf16.msra.mxu0 0
    %3399 = vmatprep.subr.bf16.mxu0 0
    %3400 = vmatpush1.bf16.msra.mxu0 %v3375
    %3401 = vmatprep.subr.bf16.mxu0 0
    %3402 = vmatpush1.bf16.msra.mxu0 %v3373
    %3403 = vmatprep.subr.bf16.mxu0 0
    %3404 = vmatpush2.bf16.msra.mxu0 0
    %3405 = vmatprep.subr.bf16.mxu0 0
    %3406 = vmatpush2.bf16.msra.mxu0 0
    %3407 = vmatprep.subr.bf16.mxu0 0
    %3408 = vmatpush2.bf16.msra.mxu0 0
    %3409 = vmatprep.subr.bf16.mxu0 0
    %3410 = vmatpush2.bf16.msra.mxu0 0
    %3411 = vmatprep.subr.bf16.mxu0 0
    %3412 = vmatpush2.bf16.msra.mxu0 0
    %3413 = vmatprep.subr.bf16.mxu0 0
    %3414 = vmatpush2.bf16.msra.mxu0 0
    %3415 = vmatprep.subr.bf16.mxu0 0
    %3416 = vmatpush2.bf16.msra.mxu0 0
    %3417 = vmatprep.subr.bf16.mxu0 0
    %3418 = vmatpush2.bf16.msra.mxu0 0
    %3419 = vmatprep.mubr.bf16.mxu0 0
    %3420 = vmatmul.mubr.bf16.gmra.mxu0 %v3379
    %v3421 = vpop.f32.mrf.mxu0
    %v3422 = vadd.f32 %v3371, %v3421
    %v3423 = vpop.f32.mrf.mxu0
    %v3424 = vpop.f32.mrf.mxu0
    %v3425 = vadd.f32 %v3371, %v3424
    %v3426 = vpop.f32.mrf.mxu0
    %3427 = vmatprep.mubr.bf16.mxu0 0
    %3428 = vmatmul.mubr.bf16.gmra.mxu0 %v3382
    %v3429 = vpop.f32.mrf.mxu0
    %v3430 = vadd.f32 %v3371, %v3429
    %v3431 = vpop.f32.mrf.mxu0
    %v3432 = vpop.f32.mrf.mxu0
    %v3433 = vadd.f32 %v3371, %v3432
    %v3434 = vpop.f32.mrf.mxu0
    %3435 = vmatprep.mubr.bf16.mxu0 0
    %3436 = vmatmul.mubr.bf16.gmra.mxu0 %v3385
    %v3437 = vpop.f32.mrf.mxu0
    %v3438 = vadd.f32 %v3371, %v3437
    %v3439 = vpop.f32.mrf.mxu0
    %v3440 = vpop.f32.mrf.mxu0
    %v3441 = vadd.f32 %v3371, %v3440
    %v3442 = vpop.f32.mrf.mxu0
    %3443 = vdwg.mxu0
    %v3444 = vlaneseq
    %v3445 = vshrl.u32 %v3444, 7
    %v3446 = vsub.s32 0, %v3445
    %v3447 = vrot.slane %v3296, %v3446
    %v3452 = vunpack.c.l.b16 %v3288
    %v3453 = vunpack.c.l.b16 %v3289
    %v3454 = vunpack.c.l.b16 %v3290
    %v3455 = vunpack.c.l.b16 %v3291
    %v3456 = vpack.c.b16 %v3453, %v3452
    %v3457 = vpack.c.b16 %v3455, %v3454
    %3460 = vmatprep.subr.bf16.mxu0 0
    %3461 = vmatpush1.bf16.msra.mxu0 0
    %3462 = vmatprep.subr.bf16.mxu0 0
    %3463 = vmatpush1.bf16.msra.mxu0 0
    %3464 = vmatprep.subr.bf16.mxu0 0
    %3465 = vmatpush1.bf16.msra.mxu0 0
    %3466 = vmatprep.subr.bf16.mxu0 0
    %3467 = vmatpush1.bf16.msra.mxu0 0
    %3468 = vmatprep.subr.bf16.mxu0 0
    %3469 = vmatpush1.bf16.msra.mxu0 0
    %3470 = vmatprep.subr.bf16.mxu0 0
    %3471 = vmatpush1.bf16.msra.mxu0 0
    %3472 = vmatprep.subr.bf16.mxu0 0
    %3473 = vmatpush1.bf16.msra.mxu0 %v3457
    %3474 = vmatprep.subr.bf16.mxu0 0
    %3475 = vmatpush1.bf16.msra.mxu0 %v3456
    %3476 = vmatprep.subr.bf16.mxu0 0
    %3477 = vmatpush2.bf16.msra.mxu0 0
    %3478 = vmatprep.subr.bf16.mxu0 0
    %3479 = vmatpush2.bf16.msra.mxu0 0
    %3480 = vmatprep.subr.bf16.mxu0 0
    %3481 = vmatpush2.bf16.msra.mxu0 0
    %3482 = vmatprep.subr.bf16.mxu0 0
    %3483 = vmatpush2.bf16.msra.mxu0 0
    %3484 = vmatprep.subr.bf16.mxu0 0
    %3485 = vmatpush2.bf16.msra.mxu0 0
    %3486 = vmatprep.subr.bf16.mxu0 0
    %3487 = vmatpush2.bf16.msra.mxu0 0
    %3488 = vmatprep.subr.bf16.mxu0 0
    %3489 = vmatpush2.bf16.msra.mxu0 0
    %3490 = vmatprep.subr.bf16.mxu0 0
    %3491 = vmatpush2.bf16.msra.mxu0 0
    %3492 = vmatprep.mubr.bf16.mxu0 0
    %3493 = vmatmul.mubr.bf16.gmra.mxu0 %v3379
    %v3494 = vpop.f32.mrf.mxu0
    %v3495 = vadd.f32 %v3447, %v3494
    %v3496 = vpop.f32.mrf.mxu0
    %v3497 = vpop.f32.mrf.mxu0
    %v3498 = vadd.f32 %v3447, %v3497
    %v3499 = vpop.f32.mrf.mxu0
    %3500 = vmatprep.mubr.bf16.mxu0 0
    %3501 = vmatmul.mubr.bf16.gmra.mxu0 %v3382
    %v3502 = vpop.f32.mrf.mxu0
    %v3503 = vadd.f32 %v3447, %v3502
    %v3504 = vpop.f32.mrf.mxu0
    %v3505 = vpop.f32.mrf.mxu0
    %v3506 = vadd.f32 %v3447, %v3505
    %v3507 = vpop.f32.mrf.mxu0
    %3508 = vmatprep.mubr.bf16.mxu0 0
    %3509 = vmatmul.mubr.bf16.gmra.mxu0 %v3385
    %v3510 = vpop.f32.mrf.mxu0
    %v3511 = vadd.f32 %v3447, %v3510
    %v3512 = vpop.f32.mrf.mxu0
    %v3513 = vpop.f32.mrf.mxu0
    %v3514 = vadd.f32 %v3447, %v3513
    %v3515 = vpop.f32.mrf.mxu0
    %3516 = vdwg.mxu0
    %v3517 = vpack.c.bf16 %v3357, %v3354
    %v3518 = vpack.c.bf16 %v3365, %v3362
    %v3519 = vpack.c.bf16 %v3425, %v3422
    %v3520 = vpack.c.bf16 %v3433, %v3430
    %v3521 = vpack.c.bf16 %v3441, %v3438
    %vm3522 = vcmask 130048
    %v3524 = vsel %vm3522, %v3517, 0
    %v3527 = vsel %vm3522, %v3518, 0
    %v3530 = vsel %vm3522, %v3519, 0
    %v3533 = vsel %vm3522, %v3520, 0
    %v3536 = vsel %vm3522, %v3521, 0
    %3538 = vmatprep.subr.bf16.mxu0 0
    %3539 = vmatpush1.bf16.xpose.msra.mxu0 0
    %3540 = vmatprep.subr.bf16.mxu0 0
    %3541 = vmatpush1.bf16.xpose.msra.mxu0 0
    %3542 = vmatprep.subr.bf16.mxu0 0
    %3543 = vmatpush1.bf16.xpose.msra.mxu0 0
    %3544 = vmatprep.subr.bf16.mxu0 0
    %3545 = vmatpush1.bf16.xpose.msra.mxu0 0
    %3546 = vmatprep.subr.bf16.mxu0 0
    %3547 = vmatpush1.bf16.xpose.msra.mxu0 0
    %3548 = vmatprep.subr.bf16.mxu0 0
    %3549 = vmatpush1.bf16.xpose.msra.mxu0 %v3536
    %3550 = vmatprep.subr.bf16.mxu0 0
    %3551 = vmatpush1.bf16.xpose.msra.mxu0 %v3533
    %3552 = vmatprep.subr.bf16.mxu0 0
    %3553 = vmatpush1.bf16.xpose.msra.mxu0 %v3530
    %3554 = vmatprep.subr.bf16.mxu0 0
    %3555 = vmatpush2.bf16.xpose.msra.mxu0 0
    %3556 = vmatprep.subr.bf16.mxu0 0
    %3557 = vmatpush2.bf16.xpose.msra.mxu0 0
    %3558 = vmatprep.subr.bf16.mxu0 0
    %3559 = vmatpush2.bf16.xpose.msra.mxu0 0
    %3560 = vmatprep.subr.bf16.mxu0 0
    %3561 = vmatpush2.bf16.xpose.msra.mxu0 0
    %3562 = vmatprep.subr.bf16.mxu0 0
    %3563 = vmatpush2.bf16.xpose.msra.mxu0 0
    %3564 = vmatprep.subr.bf16.mxu0 0
    %3565 = vmatpush2.bf16.xpose.msra.mxu0 0
    %3566 = vmatprep.subr.bf16.mxu0 0
    %3567 = vmatpush2.bf16.xpose.msra.mxu0 0
    %3568 = vmatprep.subr.bf16.mxu0 0
    %3569 = vmatpush2.bf16.xpose.msra.mxu0 0
    %3570 = vmatprep.mubr.bf16.mxu0 0
    %3571 = vmatmul.mubr.bf16.gmra.mxu0 %v3524
    %v3572 = vpop.f32.mrf.mxu0
    %v3573 = vadd.f32 0.0, %v3572
    %v3574 = vpop.f32.mrf.mxu0
    %v3575 = vpop.f32.mrf.mxu0
    %v3576 = vadd.f32 0.0, %v3575
    %v3577 = vpop.f32.mrf.mxu0
    %3578 = vmatprep.mubr.bf16.mxu0 0
    %3579 = vmatmul.mubr.bf16.gmra.mxu0 %v3527
    %v3580 = vpop.f32.mrf.mxu0
    %v3581 = vadd.f32 0.0, %v3580
    %v3582 = vpop.f32.mrf.mxu0
    %v3583 = vpop.f32.mrf.mxu0
    %v3584 = vadd.f32 0.0, %v3583
    %v3585 = vpop.f32.mrf.mxu0
    %3586 = vdwg.mxu0
    %v3587 = vsel %vm231, %v3573, -1e+30
    %v3588 = vsel %vm232, %v3576, -1e+30
    %v3589 = vsel %vm233, %v3581, -1e+30
    %v3590 = vsel %vm234, %v3584, -1e+30
    %v3591 = vsel %vm2659, %v3587, -inf
    %3592 = vmax.xlane.f32.xlu0 %v3591
    %v3593 = vpop.xlane.xlu0 %3592
    %v3594 = vsel %vm2659, %v3588, -inf
    %3595 = vmax.xlane.f32.xlu0 %v3594
    %v3596 = vpop.xlane.xlu0 %3595
    %v3597 = vsel %vm2659, %v3589, -inf
    %3598 = vmax.xlane.f32.xlu0 %v3597
    %v3599 = vpop.xlane.xlu0 %3598
    %v3600 = vsel %vm2659, %v3590, -inf
    %3601 = vmax.xlane.f32.xlu0 %v3600
    %v3602 = vpop.xlane.xlu0 %3601
    %v3603 = vsub.f32 %v3587, %v3593
    %v3604 = vsub.f32 %v3588, %v3596
    %v3605 = vsub.f32 %v3589, %v3599
    %v3606 = vsub.f32 %v3590, %v3602
    %v3607 = vmul.f32 %v3603, 1.442695
    %v3608 = vpow.pop %v3607
    %v3609 = vmul.f32 %v3604, 1.442695
    %v3610 = vpow.pop %v3609
    %v3611 = vmul.f32 %v3605, 1.442695
    %v3612 = vpow.pop %v3611
    %v3613 = vmul.f32 %v3606, 1.442695
    %v3614 = vpow.pop %v3613
    %v3615 = vsel %vm2659, %v3608, 0.0
    %3616 = vadd.xlane.f32.xlu0 %v3615
    %v3617 = vpop.xlane.xlu0 %3616
    %v3618 = vsel %vm2659, %v3610, 0.0
    %3619 = vadd.xlane.f32.xlu0 %v3618
    %v3620 = vpop.xlane.xlu0 %3619
    %v3621 = vsel %vm2659, %v3612, 0.0
    %3622 = vadd.xlane.f32.xlu0 %v3621
    %v3623 = vpop.xlane.xlu0 %3622
    %v3624 = vsel %vm2659, %v3614, 0.0
    %3625 = vadd.xlane.f32.xlu0 %v3624
    %v3626 = vpop.xlane.xlu0 %3625
    %v3627 = vrcp.pop %v3617
    %v3628 = vmul.f32 %v3608, %v3627
    %v3629 = vrcp.pop %v3620
    %v3630 = vmul.f32 %v3610, %v3629
    %v3631 = vrcp.pop %v3623
    %v3632 = vmul.f32 %v3612, %v3631
    %v3633 = vrcp.pop %v3626
    %v3634 = vmul.f32 %v3614, %v3633
    %v3635 = vpack.c.bf16 %v3630, %v3628
    %v3636 = vpack.c.bf16 %v3634, %v3632
    %v3637 = vpack.c.bf16 %v3498, %v3495
    %v3638 = vpack.c.bf16 %v3506, %v3503
    %v3639 = vpack.c.bf16 %v3514, %v3511
    %v3641 = vsel %vm2659, %v3635, 0
    %v3644 = vsel %vm2659, %v3636, 0
    %3646 = vmatprep.subr.bf16.mxu0 0
    %3647 = vmatpush1.bf16.msra.mxu0 0
    %3648 = vmatprep.subr.bf16.mxu0 0
    %3649 = vmatpush1.bf16.msra.mxu0 0
    %3650 = vmatprep.subr.bf16.mxu0 0
    %3651 = vmatpush1.bf16.msra.mxu0 0
    %3652 = vmatprep.subr.bf16.mxu0 0
    %3653 = vmatpush1.bf16.msra.mxu0 0
    %3654 = vmatprep.subr.bf16.mxu0 0
    %3655 = vmatpush1.bf16.msra.mxu0 0
    %3656 = vmatprep.subr.bf16.mxu0 0
    %3657 = vmatpush1.bf16.msra.mxu0 %v3639
    %3658 = vmatprep.subr.bf16.mxu0 0
    %3659 = vmatpush1.bf16.msra.mxu0 %v3638
    %3660 = vmatprep.subr.bf16.mxu0 0
    %3661 = vmatpush1.bf16.msra.mxu0 %v3637
    %3662 = vmatprep.subr.bf16.mxu0 0
    %3663 = vmatpush2.bf16.msra.mxu0 0
    %3664 = vmatprep.subr.bf16.mxu0 0
    %3665 = vmatpush2.bf16.msra.mxu0 0
    %3666 = vmatprep.subr.bf16.mxu0 0
    %3667 = vmatpush2.bf16.msra.mxu0 0
    %3668 = vmatprep.subr.bf16.mxu0 0
    %3669 = vmatpush2.bf16.msra.mxu0 0
    %3670 = vmatprep.subr.bf16.mxu0 0
    %3671 = vmatpush2.bf16.msra.mxu0 0
    %3672 = vmatprep.subr.bf16.mxu0 0
    %3673 = vmatpush2.bf16.msra.mxu0 0
    %3674 = vmatprep.subr.bf16.mxu0 0
    %3675 = vmatpush2.bf16.msra.mxu0 0
    %3676 = vmatprep.subr.bf16.mxu0 0
    %3677 = vmatpush2.bf16.msra.mxu0 0
    %3678 = vmatprep.mubr.bf16.mxu0 0
    %3679 = vmatmul.mubr.bf16.gmra.mxu0 %v3641
    %v3680 = vpop.f32.mrf.mxu0
    %v3681 = vadd.f32 0.0, %v3680
    %v3682 = vpop.f32.mrf.mxu0
    %v3683 = vpop.f32.mrf.mxu0
    %v3684 = vadd.f32 0.0, %v3683
    %v3685 = vpop.f32.mrf.mxu0
    %3686 = vmatprep.mubr.bf16.mxu0 0
    %3687 = vmatmul.mubr.bf16.gmra.mxu0 %v3644
    %v3688 = vpop.f32.mrf.mxu0
    %v3689 = vadd.f32 0.0, %v3688
    %v3690 = vpop.f32.mrf.mxu0
    %v3691 = vpop.f32.mrf.mxu0
    %v3692 = vadd.f32 0.0, %v3691
    %v3693 = vpop.f32.mrf.mxu0
    %3694 = vdwg.mxu0
    %v3695 = vpack.c.bf16 %v3684, %v3681
    %v3696 = vpack.c.bf16 %v3692, %v3689
    %3697 = vrot.lane.b32.xlu0 %v3309, 112
    %v3698 = vpop.permute.xlu0 %3697
    %3699 = vrot.lane.b32.xlu0 %v3310, 112
    %v3700 = vpop.permute.xlu0 %3699
    %3704 = vrot.lane.b32.xlu0 %v3300, 112
    %v3705 = vpop.permute.xlu0 %3704
    %3707 = vmatprep.subr.bf16.mxu0 0
    %3708 = vmatpush1.bf16.msra.mxu0 0
    %3709 = vmatprep.subr.bf16.mxu0 0
    %3710 = vmatpush1.bf16.msra.mxu0 0
    %3711 = vmatprep.subr.bf16.mxu0 0
    %3712 = vmatpush1.bf16.msra.mxu0 0
    %3713 = vmatprep.subr.bf16.mxu0 0
    %3714 = vmatpush1.bf16.msra.mxu0 0
    %3715 = vmatprep.subr.bf16.mxu0 0
    %3716 = vmatpush1.bf16.msra.mxu0 0
    %3717 = vmatprep.subr.bf16.mxu0 0
    %3718 = vmatpush1.bf16.msra.mxu0 0
    %3719 = vmatprep.subr.bf16.mxu0 0
    %3720 = vmatpush1.bf16.msra.mxu0 %v3700
    %3721 = vmatprep.subr.bf16.mxu0 0
    %3722 = vmatpush1.bf16.msra.mxu0 %v3698
    %3723 = vmatprep.subr.bf16.mxu0 0
    %3724 = vmatpush2.bf16.msra.mxu0 0
    %3725 = vmatprep.subr.bf16.mxu0 0
    %3726 = vmatpush2.bf16.msra.mxu0 0
    %3727 = vmatprep.subr.bf16.mxu0 0
    %3728 = vmatpush2.bf16.msra.mxu0 0
    %3729 = vmatprep.subr.bf16.mxu0 0
    %3730 = vmatpush2.bf16.msra.mxu0 0
    %3731 = vmatprep.subr.bf16.mxu0 0
    %3732 = vmatpush2.bf16.msra.mxu0 0
    %3733 = vmatprep.subr.bf16.mxu0 0
    %3734 = vmatpush2.bf16.msra.mxu0 0
    %3735 = vmatprep.subr.bf16.mxu0 0
    %3736 = vmatpush2.bf16.msra.mxu0 0
    %3737 = vmatprep.subr.bf16.mxu0 0
    %3738 = vmatpush2.bf16.msra.mxu0 0
    %3739 = vmatprep.mubr.bf16.mxu0 0
    %3740 = vmatmul.mubr.bf16.gmra.mxu0 %v3314
    %v3741 = vpop.f32.mrf.mxu0
    %v3742 = vadd.f32 %v3705, %v3741
    %v3743 = vpop.f32.mrf.mxu0
    %v3744 = vpop.f32.mrf.mxu0
    %v3745 = vadd.f32 %v3705, %v3744
    %v3746 = vpop.f32.mrf.mxu0
    %3747 = vmatprep.mubr.bf16.mxu0 0
    %3748 = vmatmul.mubr.bf16.gmra.mxu0 %v3317
    %v3749 = vpop.f32.mrf.mxu0
    %v3750 = vadd.f32 %v3705, %v3749
    %v3751 = vpop.f32.mrf.mxu0
    %v3752 = vpop.f32.mrf.mxu0
    %v3753 = vadd.f32 %v3705, %v3752
    %v3754 = vpop.f32.mrf.mxu0
    %3755 = vdwg.mxu0
    %3756 = vrot.lane.b32.xlu0 %v3309, 48
    %v3757 = vpop.permute.xlu0 %3756
    %3758 = vrot.lane.b32.xlu0 %v3310, 48
    %v3759 = vpop.permute.xlu0 %3758
    %3763 = vrot.lane.b32.xlu0 %v3371, 112
    %v3764 = vpop.permute.xlu0 %3763
    %3766 = vmatprep.subr.bf16.mxu0 0
    %3767 = vmatpush1.bf16.msra.mxu0 0
    %3768 = vmatprep.subr.bf16.mxu0 0
    %3769 = vmatpush1.bf16.msra.mxu0 0
    %3770 = vmatprep.subr.bf16.mxu0 0
    %3771 = vmatpush1.bf16.msra.mxu0 0
    %3772 = vmatprep.subr.bf16.mxu0 0
    %3773 = vmatpush1.bf16.msra.mxu0 0
    %3774 = vmatprep.subr.bf16.mxu0 0
    %3775 = vmatpush1.bf16.msra.mxu0 0
    %3776 = vmatprep.subr.bf16.mxu0 0
    %3777 = vmatpush1.bf16.msra.mxu0 0
    %3778 = vmatprep.subr.bf16.mxu0 0
    %3779 = vmatpush1.bf16.msra.mxu0 %v3759
    %3780 = vmatprep.subr.bf16.mxu0 0
    %3781 = vmatpush1.bf16.msra.mxu0 %v3757
    %3782 = vmatprep.subr.bf16.mxu0 0
    %3783 = vmatpush2.bf16.msra.mxu0 0
    %3784 = vmatprep.subr.bf16.mxu0 0
    %3785 = vmatpush2.bf16.msra.mxu0 0
    %3786 = vmatprep.subr.bf16.mxu0 0
    %3787 = vmatpush2.bf16.msra.mxu0 0
    %3788 = vmatprep.subr.bf16.mxu0 0
    %3789 = vmatpush2.bf16.msra.mxu0 0
    %3790 = vmatprep.subr.bf16.mxu0 0
    %3791 = vmatpush2.bf16.msra.mxu0 0
    %3792 = vmatprep.subr.bf16.mxu0 0
    %3793 = vmatpush2.bf16.msra.mxu0 0
    %3794 = vmatprep.subr.bf16.mxu0 0
    %3795 = vmatpush2.bf16.msra.mxu0 0
    %3796 = vmatprep.subr.bf16.mxu0 0
    %3797 = vmatpush2.bf16.msra.mxu0 0
    %3798 = vmatprep.mubr.bf16.mxu0 0
    %3799 = vmatmul.mubr.bf16.gmra.mxu0 %v3379
    %v3800 = vpop.f32.mrf.mxu0
    %v3801 = vadd.f32 %v3764, %v3800
    %v3802 = vpop.f32.mrf.mxu0
    %v3803 = vpop.f32.mrf.mxu0
    %v3804 = vadd.f32 %v3764, %v3803
    %v3805 = vpop.f32.mrf.mxu0
    %3806 = vmatprep.mubr.bf16.mxu0 0
    %3807 = vmatmul.mubr.bf16.gmra.mxu0 %v3382
    %v3808 = vpop.f32.mrf.mxu0
    %v3809 = vadd.f32 %v3764, %v3808
    %v3810 = vpop.f32.mrf.mxu0
    %v3811 = vpop.f32.mrf.mxu0
    %v3812 = vadd.f32 %v3764, %v3811
    %v3813 = vpop.f32.mrf.mxu0
    %3814 = vmatprep.mubr.bf16.mxu0 0
    %3815 = vmatmul.mubr.bf16.gmra.mxu0 %v3385
    %v3816 = vpop.f32.mrf.mxu0
    %v3817 = vadd.f32 %v3764, %v3816
    %v3818 = vpop.f32.mrf.mxu0
    %v3819 = vpop.f32.mrf.mxu0
    %v3820 = vadd.f32 %v3764, %v3819
    %v3821 = vpop.f32.mrf.mxu0
    %3822 = vdwg.mxu0
    %3823 = vrot.lane.b32.xlu0 %v3456, 112
    %v3824 = vpop.permute.xlu0 %3823
    %3825 = vrot.lane.b32.xlu0 %v3457, 112
    %v3826 = vpop.permute.xlu0 %3825
    %3830 = vrot.lane.b32.xlu0 %v3447, 112
    %v3831 = vpop.permute.xlu0 %3830
    %3833 = vmatprep.subr.bf16.mxu0 0
    %3834 = vmatpush1.bf16.msra.mxu0 0
    %3835 = vmatprep.subr.bf16.mxu0 0
    %3836 = vmatpush1.bf16.msra.mxu0 0
    %3837 = vmatprep.subr.bf16.mxu0 0
    %3838 = vmatpush1.bf16.msra.mxu0 0
    %3839 = vmatprep.subr.bf16.mxu0 0
    %3840 = vmatpush1.bf16.msra.mxu0 0
    %3841 = vmatprep.subr.bf16.mxu0 0
    %3842 = vmatpush1.bf16.msra.mxu0 0
    %3843 = vmatprep.subr.bf16.mxu0 0
    %3844 = vmatpush1.bf16.msra.mxu0 0
    %3845 = vmatprep.subr.bf16.mxu0 0
    %3846 = vmatpush1.bf16.msra.mxu0 %v3826
    %3847 = vmatprep.subr.bf16.mxu0 0
    %3848 = vmatpush1.bf16.msra.mxu0 %v3824
    %3849 = vmatprep.subr.bf16.mxu0 0
    %3850 = vmatpush2.bf16.msra.mxu0 0
    %3851 = vmatprep.subr.bf16.mxu0 0
    %3852 = vmatpush2.bf16.msra.mxu0 0
    %3853 = vmatprep.subr.bf16.mxu0 0
    %3854 = vmatpush2.bf16.msra.mxu0 0
    %3855 = vmatprep.subr.bf16.mxu0 0
    %3856 = vmatpush2.bf16.msra.mxu0 0
    %3857 = vmatprep.subr.bf16.mxu0 0
    %3858 = vmatpush2.bf16.msra.mxu0 0
    %3859 = vmatprep.subr.bf16.mxu0 0
    %3860 = vmatpush2.bf16.msra.mxu0 0
    %3861 = vmatprep.subr.bf16.mxu0 0
    %3862 = vmatpush2.bf16.msra.mxu0 0
    %3863 = vmatprep.subr.bf16.mxu0 0
    %3864 = vmatpush2.bf16.msra.mxu0 0
    %3865 = vmatprep.mubr.bf16.mxu0 0
    %3866 = vmatmul.mubr.bf16.gmra.mxu0 %v3379
    %v3867 = vpop.f32.mrf.mxu0
    %v3868 = vadd.f32 %v3831, %v3867
    %v3869 = vpop.f32.mrf.mxu0
    %v3870 = vpop.f32.mrf.mxu0
    %v3871 = vadd.f32 %v3831, %v3870
    %v3872 = vpop.f32.mrf.mxu0
    %3873 = vmatprep.mubr.bf16.mxu0 0
    %3874 = vmatmul.mubr.bf16.gmra.mxu0 %v3382
    %v3875 = vpop.f32.mrf.mxu0
    %v3876 = vadd.f32 %v3831, %v3875
    %v3877 = vpop.f32.mrf.mxu0
    %v3878 = vpop.f32.mrf.mxu0
    %v3879 = vadd.f32 %v3831, %v3878
    %v3880 = vpop.f32.mrf.mxu0
    %3881 = vmatprep.mubr.bf16.mxu0 0
    %3882 = vmatmul.mubr.bf16.gmra.mxu0 %v3385
    %v3883 = vpop.f32.mrf.mxu0
    %v3884 = vadd.f32 %v3831, %v3883
    %v3885 = vpop.f32.mrf.mxu0
    %v3886 = vpop.f32.mrf.mxu0
    %v3887 = vadd.f32 %v3831, %v3886
    %v3888 = vpop.f32.mrf.mxu0
    %3889 = vdwg.mxu0
    %v3890 = vpack.c.bf16 %v3745, %v3742
    %v3891 = vpack.c.bf16 %v3753, %v3750
    %v3892 = vpack.c.bf16 %v3804, %v3801
    %v3893 = vpack.c.bf16 %v3812, %v3809
    %v3894 = vpack.c.bf16 %v3820, %v3817
    %v3896 = vsel %vm3522, %v3890, 0
    %v3899 = vsel %vm3522, %v3891, 0
    %v3902 = vsel %vm3522, %v3892, 0
    %v3905 = vsel %vm3522, %v3893, 0
    %v3908 = vsel %vm3522, %v3894, 0
    %3910 = vmatprep.subr.bf16.mxu0 0
    %3911 = vmatpush1.bf16.xpose.msra.mxu0 0
    %3912 = vmatprep.subr.bf16.mxu0 0
    %3913 = vmatpush1.bf16.xpose.msra.mxu0 0
    %3914 = vmatprep.subr.bf16.mxu0 0
    %3915 = vmatpush1.bf16.xpose.msra.mxu0 0
    %3916 = vmatprep.subr.bf16.mxu0 0
    %3917 = vmatpush1.bf16.xpose.msra.mxu0 0
    %3918 = vmatprep.subr.bf16.mxu0 0
    %3919 = vmatpush1.bf16.xpose.msra.mxu0 0
    %3920 = vmatprep.subr.bf16.mxu0 0
    %3921 = vmatpush1.bf16.xpose.msra.mxu0 %v3908
    %3922 = vmatprep.subr.bf16.mxu0 0
    %3923 = vmatpush1.bf16.xpose.msra.mxu0 %v3905
    %3924 = vmatprep.subr.bf16.mxu0 0
    %3925 = vmatpush1.bf16.xpose.msra.mxu0 %v3902
    %3926 = vmatprep.subr.bf16.mxu0 0
    %3927 = vmatpush2.bf16.xpose.msra.mxu0 0
    %3928 = vmatprep.subr.bf16.mxu0 0
    %3929 = vmatpush2.bf16.xpose.msra.mxu0 0
    %3930 = vmatprep.subr.bf16.mxu0 0
    %3931 = vmatpush2.bf16.xpose.msra.mxu0 0
    %3932 = vmatprep.subr.bf16.mxu0 0
    %3933 = vmatpush2.bf16.xpose.msra.mxu0 0
    %3934 = vmatprep.subr.bf16.mxu0 0
    %3935 = vmatpush2.bf16.xpose.msra.mxu0 0
    %3936 = vmatprep.subr.bf16.mxu0 0
    %3937 = vmatpush2.bf16.xpose.msra.mxu0 0
    %3938 = vmatprep.subr.bf16.mxu0 0
    %3939 = vmatpush2.bf16.xpose.msra.mxu0 0
    %3940 = vmatprep.subr.bf16.mxu0 0
    %3941 = vmatpush2.bf16.xpose.msra.mxu0 0
    %3942 = vmatprep.mubr.bf16.mxu0 0
    %3943 = vmatmul.mubr.bf16.gmra.mxu0 %v3896
    %v3944 = vpop.f32.mrf.mxu0
    %v3945 = vadd.f32 0.0, %v3944
    %v3946 = vpop.f32.mrf.mxu0
    %v3947 = vpop.f32.mrf.mxu0
    %v3948 = vadd.f32 0.0, %v3947
    %v3949 = vpop.f32.mrf.mxu0
    %3950 = vmatprep.mubr.bf16.mxu0 0
    %3951 = vmatmul.mubr.bf16.gmra.mxu0 %v3899
    %v3952 = vpop.f32.mrf.mxu0
    %v3953 = vadd.f32 0.0, %v3952
    %v3954 = vpop.f32.mrf.mxu0
    %v3955 = vpop.f32.mrf.mxu0
    %v3956 = vadd.f32 0.0, %v3955
    %v3957 = vpop.f32.mrf.mxu0
    %3958 = vdwg.mxu0
    %v3959 = vsel %vm231, %v3945, -1e+30
    %v3960 = vsel %vm232, %v3948, -1e+30
    %v3961 = vsel %vm233, %v3953, -1e+30
    %v3962 = vsel %vm234, %v3956, -1e+30
    %v3963 = vsel %vm2659, %v3959, -inf
    %3964 = vmax.xlane.f32.xlu0 %v3963
    %v3965 = vpop.xlane.xlu0 %3964
    %v3966 = vsel %vm2659, %v3960, -inf
    %3967 = vmax.xlane.f32.xlu0 %v3966
    %v3968 = vpop.xlane.xlu0 %3967
    %v3969 = vsel %vm2659, %v3961, -inf
    %3970 = vmax.xlane.f32.xlu0 %v3969
    %v3971 = vpop.xlane.xlu0 %3970
    %v3972 = vsel %vm2659, %v3962, -inf
    %3973 = vmax.xlane.f32.xlu0 %v3972
    %v3974 = vpop.xlane.xlu0 %3973
    %v3975 = vsub.f32 %v3959, %v3965
    %v3976 = vsub.f32 %v3960, %v3968
    %v3977 = vsub.f32 %v3961, %v3971
    %v3978 = vsub.f32 %v3962, %v3974
    %v3979 = vmul.f32 %v3975, 1.442695
    %v3980 = vpow.pop %v3979
    %v3981 = vmul.f32 %v3976, 1.442695
    %v3982 = vpow.pop %v3981
    %v3983 = vmul.f32 %v3977, 1.442695
    %v3984 = vpow.pop %v3983
    %v3985 = vmul.f32 %v3978, 1.442695
    %v3986 = vpow.pop %v3985
    %v3987 = vsel %vm2659, %v3980, 0.0
    %3988 = vadd.xlane.f32.xlu0 %v3987
    %v3989 = vpop.xlane.xlu0 %3988
    %v3990 = vsel %vm2659, %v3982, 0.0
    %3991 = vadd.xlane.f32.xlu0 %v3990
    %v3992 = vpop.xlane.xlu0 %3991
    %v3993 = vsel %vm2659, %v3984, 0.0
    %3994 = vadd.xlane.f32.xlu0 %v3993
    %v3995 = vpop.xlane.xlu0 %3994
    %v3996 = vsel %vm2659, %v3986, 0.0
    %3997 = vadd.xlane.f32.xlu0 %v3996
    %v3998 = vpop.xlane.xlu0 %3997
    %v3999 = vrcp.pop %v3989
    %v4000 = vmul.f32 %v3980, %v3999
    %v4001 = vrcp.pop %v3992
    %v4002 = vmul.f32 %v3982, %v4001
    %v4003 = vrcp.pop %v3995
    %v4004 = vmul.f32 %v3984, %v4003
    %v4005 = vrcp.pop %v3998
    %v4006 = vmul.f32 %v3986, %v4005
    %v4007 = vpack.c.bf16 %v4002, %v4000
    %v4008 = vpack.c.bf16 %v4006, %v4004
    %v4009 = vpack.c.bf16 %v3871, %v3868
    %v4010 = vpack.c.bf16 %v3879, %v3876
    %v4011 = vpack.c.bf16 %v3887, %v3884
    %v4013 = vsel %vm2659, %v4007, 0
    %v4016 = vsel %vm2659, %v4008, 0
    %4018 = vmatprep.subr.bf16.mxu0 0
    %4019 = vmatpush1.bf16.msra.mxu0 0
    %4020 = vmatprep.subr.bf16.mxu0 0
    %4021 = vmatpush1.bf16.msra.mxu0 0
    %4022 = vmatprep.subr.bf16.mxu0 0
    %4023 = vmatpush1.bf16.msra.mxu0 0
    %4024 = vmatprep.subr.bf16.mxu0 0
    %4025 = vmatpush1.bf16.msra.mxu0 0
    %4026 = vmatprep.subr.bf16.mxu0 0
    %4027 = vmatpush1.bf16.msra.mxu0 0
    %4028 = vmatprep.subr.bf16.mxu0 0
    %4029 = vmatpush1.bf16.msra.mxu0 %v4011
    %4030 = vmatprep.subr.bf16.mxu0 0
    %4031 = vmatpush1.bf16.msra.mxu0 %v4010
    %4032 = vmatprep.subr.bf16.mxu0 0
    %4033 = vmatpush1.bf16.msra.mxu0 %v4009
    %4034 = vmatprep.subr.bf16.mxu0 0
    %4035 = vmatpush2.bf16.msra.mxu0 0
    %4036 = vmatprep.subr.bf16.mxu0 0
    %4037 = vmatpush2.bf16.msra.mxu0 0
    %4038 = vmatprep.subr.bf16.mxu0 0
    %4039 = vmatpush2.bf16.msra.mxu0 0
    %4040 = vmatprep.subr.bf16.mxu0 0
    %4041 = vmatpush2.bf16.msra.mxu0 0
    %4042 = vmatprep.subr.bf16.mxu0 0
    %4043 = vmatpush2.bf16.msra.mxu0 0
    %4044 = vmatprep.subr.bf16.mxu0 0
    %4045 = vmatpush2.bf16.msra.mxu0 0
    %4046 = vmatprep.subr.bf16.mxu0 0
    %4047 = vmatpush2.bf16.msra.mxu0 0
    %4048 = vmatprep.subr.bf16.mxu0 0
    %4049 = vmatpush2.bf16.msra.mxu0 0
    %4050 = vmatprep.mubr.bf16.mxu0 0
    %4051 = vmatmul.mubr.bf16.gmra.mxu0 %v4013
    %v4052 = vpop.f32.mrf.mxu0
    %v4053 = vadd.f32 0.0, %v4052
    %v4054 = vpop.f32.mrf.mxu0
    %v4055 = vpop.f32.mrf.mxu0
    %v4056 = vadd.f32 0.0, %v4055
    %v4057 = vpop.f32.mrf.mxu0
    %4058 = vmatprep.mubr.bf16.mxu0 0
    %4059 = vmatmul.mubr.bf16.gmra.mxu0 %v4016
    %v4060 = vpop.f32.mrf.mxu0
    %v4061 = vadd.f32 0.0, %v4060
    %v4062 = vpop.f32.mrf.mxu0
    %v4063 = vpop.f32.mrf.mxu0
    %v4064 = vadd.f32 0.0, %v4063
    %v4065 = vpop.f32.mrf.mxu0
    %4066 = vdwg.mxu0
    %v4067 = vpack.c.bf16 %v4056, %v4053
    %v4068 = vpack.c.bf16 %v4064, %v4061
    %v4071 = vunpack.c.l.b16 %v3292
    %v4072 = vunpack.c.l.b16 %v3293
    %v4073 = vpack.c.b16 %v4072, %v4071
    %4074 = vrot.lane.b32.xlu0 %v4073, 96
    %v4075 = vpop.permute.xlu0 %4074
    %v4078 = vsel %vm3522, %v4067, 0
    %v4081 = vsel %vm3522, %v4068, 0
    %4083 = vmatprep.subr.bf16.mxu0 0
    %4084 = vmatpush1.bf16.msra.mxu0 0
    %4085 = vmatprep.subr.bf16.mxu0 0
    %4086 = vmatpush1.bf16.msra.mxu0 0
    %4087 = vmatprep.subr.bf16.mxu0 0
    %4088 = vmatpush1.bf16.msra.mxu0 0
    %4089 = vmatprep.subr.bf16.mxu0 0
    %4090 = vmatpush1.bf16.msra.mxu0 0
    %4091 = vmatprep.subr.bf16.mxu0 0
    %4092 = vmatpush1.bf16.msra.mxu0 0
    %4093 = vmatprep.subr.bf16.mxu0 0
    %4094 = vmatpush1.bf16.msra.mxu0 0
    %4095 = vmatprep.subr.bf16.mxu0 0
    %4096 = vmatpush1.bf16.msra.mxu0 0
    %4097 = vmatprep.subr.bf16.mxu0 0
    %4098 = vmatpush1.bf16.msra.mxu0 %v4075
    %4099 = vmatprep.subr.bf16.mxu0 0
    %4100 = vmatpush2.bf16.msra.mxu0 0
    %4101 = vmatprep.subr.bf16.mxu0 0
    %4102 = vmatpush2.bf16.msra.mxu0 0
    %4103 = vmatprep.subr.bf16.mxu0 0
    %4104 = vmatpush2.bf16.msra.mxu0 0
    %4105 = vmatprep.subr.bf16.mxu0 0
    %4106 = vmatpush2.bf16.msra.mxu0 0
    %4107 = vmatprep.subr.bf16.mxu0 0
    %4108 = vmatpush2.bf16.msra.mxu0 0
    %4109 = vmatprep.subr.bf16.mxu0 0
    %4110 = vmatpush2.bf16.msra.mxu0 0
    %4111 = vmatprep.subr.bf16.mxu0 0
    %4112 = vmatpush2.bf16.msra.mxu0 0
    %4113 = vmatprep.subr.bf16.mxu0 0
    %4114 = vmatpush2.bf16.msra.mxu0 0
    %4115 = vmatprep.mubr.bf16.mxu0 0
    %4116 = vmatmul.mubr.bf16.gmra.mxu0 %v4078
    %v4117 = vpop.f32.mrf.mxu0
    %v4118 = vadd.f32 0.0, %v4117
    %v4119 = vpop.f32.mrf.mxu0
    %v4120 = vpop.f32.mrf.mxu0
    %v4121 = vadd.f32 0.0, %v4120
    %v4122 = vpop.f32.mrf.mxu0
    %4123 = vmatprep.mubr.bf16.mxu0 0
    %4124 = vmatmul.mubr.bf16.gmra.mxu0 %v4081
    %v4125 = vpop.f32.mrf.mxu0
    %v4126 = vadd.f32 0.0, %v4125
    %v4127 = vpop.f32.mrf.mxu0
    %v4128 = vpop.f32.mrf.mxu0
    %v4129 = vadd.f32 0.0, %v4128
    %v4130 = vpop.f32.mrf.mxu0
    %4131 = vdwg.mxu0
    %v4134 = vsel %vm3522, %v3695, 0
    %v4137 = vsel %vm3522, %v3696, 0
    %4139 = vmatprep.subr.bf16.mxu0 0
    %4140 = vmatpush1.bf16.msra.mxu0 0
    %4141 = vmatprep.subr.bf16.mxu0 0
    %4142 = vmatpush1.bf16.msra.mxu0 0
    %4143 = vmatprep.subr.bf16.mxu0 0
    %4144 = vmatpush1.bf16.msra.mxu0 0
    %4145 = vmatprep.subr.bf16.mxu0 0
    %4146 = vmatpush1.bf16.msra.mxu0 0
    %4147 = vmatprep.subr.bf16.mxu0 0
    %4148 = vmatpush1.bf16.msra.mxu0 0
    %4149 = vmatprep.subr.bf16.mxu0 0
    %4150 = vmatpush1.bf16.msra.mxu0 0
    %4151 = vmatprep.subr.bf16.mxu0 0
    %4152 = vmatpush1.bf16.msra.mxu0 0
    %4153 = vmatprep.subr.bf16.mxu0 0
    %4154 = vmatpush1.bf16.msra.mxu0 %v4073
    %4155 = vmatprep.subr.bf16.mxu0 0
    %4156 = vmatpush2.bf16.msra.mxu0 0
    %4157 = vmatprep.subr.bf16.mxu0 0
    %4158 = vmatpush2.bf16.msra.mxu0 0
    %4159 = vmatprep.subr.bf16.mxu0 0
    %4160 = vmatpush2.bf16.msra.mxu0 0
    %4161 = vmatprep.subr.bf16.mxu0 0
    %4162 = vmatpush2.bf16.msra.mxu0 0
    %4163 = vmatprep.subr.bf16.mxu0 0
    %4164 = vmatpush2.bf16.msra.mxu0 0
    %4165 = vmatprep.subr.bf16.mxu0 0
    %4166 = vmatpush2.bf16.msra.mxu0 0
    %4167 = vmatprep.subr.bf16.mxu0 0
    %4168 = vmatpush2.bf16.msra.mxu0 0
    %4169 = vmatprep.subr.bf16.mxu0 0
    %4170 = vmatpush2.bf16.msra.mxu0 0
    %4171 = vmatprep.mubr.bf16.mxu0 0
    %4172 = vmatmul.mubr.bf16.gmra.mxu0 %v4134
    %v4173 = vpop.f32.mrf.mxu0
    %v4174 = vadd.f32 %v4118, %v4173
    %v4175 = vpop.f32.mrf.mxu0
    %v4176 = vpop.f32.mrf.mxu0
    %v4177 = vadd.f32 %v4121, %v4176
    %v4178 = vpop.f32.mrf.mxu0
    %4179 = vmatprep.mubr.bf16.mxu0 0
    %4180 = vmatmul.mubr.bf16.gmra.mxu0 %v4137
    %v4181 = vpop.f32.mrf.mxu0
    %v4182 = vadd.f32 %v4126, %v4181
    %v4183 = vpop.f32.mrf.mxu0
    %v4184 = vpop.f32.mrf.mxu0
    %v4185 = vadd.f32 %v4129, %v4184
    %v4186 = vpop.f32.mrf.mxu0
    %4187 = vdwg.mxu0
    %4188 = vrot.lane.b32.xlu0 %v3309, 96
    %v4189 = vpop.permute.xlu0 %4188
    %4190 = vrot.lane.b32.xlu0 %v3310, 96
    %v4191 = vpop.permute.xlu0 %4190
    %4194 = vrot.lane.b32.xlu0 %v3300, 96
    %v4195 = vpop.permute.xlu0 %4194
    %4197 = vmatprep.subr.bf16.mxu0 0
    %4198 = vmatpush1.bf16.msra.mxu0 0
    %4199 = vmatprep.subr.bf16.mxu0 0
    %4200 = vmatpush1.bf16.msra.mxu0 0
    %4201 = vmatprep.subr.bf16.mxu0 0
    %4202 = vmatpush1.bf16.msra.mxu0 0
    %4203 = vmatprep.subr.bf16.mxu0 0
    %4204 = vmatpush1.bf16.msra.mxu0 0
    %4205 = vmatprep.subr.bf16.mxu0 0
    %4206 = vmatpush1.bf16.msra.mxu0 0
    %4207 = vmatprep.subr.bf16.mxu0 0
    %4208 = vmatpush1.bf16.msra.mxu0 0
    %4209 = vmatprep.subr.bf16.mxu0 0
    %4210 = vmatpush1.bf16.msra.mxu0 %v4191
    %4211 = vmatprep.subr.bf16.mxu0 0
    %4212 = vmatpush1.bf16.msra.mxu0 %v4189
    %4213 = vmatprep.subr.bf16.mxu0 0
    %4214 = vmatpush2.bf16.msra.mxu0 0
    %4215 = vmatprep.subr.bf16.mxu0 0
    %4216 = vmatpush2.bf16.msra.mxu0 0
    %4217 = vmatprep.subr.bf16.mxu0 0
    %4218 = vmatpush2.bf16.msra.mxu0 0
    %4219 = vmatprep.subr.bf16.mxu0 0
    %4220 = vmatpush2.bf16.msra.mxu0 0
    %4221 = vmatprep.subr.bf16.mxu0 0
    %4222 = vmatpush2.bf16.msra.mxu0 0
    %4223 = vmatprep.subr.bf16.mxu0 0
    %4224 = vmatpush2.bf16.msra.mxu0 0
    %4225 = vmatprep.subr.bf16.mxu0 0
    %4226 = vmatpush2.bf16.msra.mxu0 0
    %4227 = vmatprep.subr.bf16.mxu0 0
    %4228 = vmatpush2.bf16.msra.mxu0 0
    %4229 = vmatprep.mubr.bf16.mxu0 0
    %4230 = vmatmul.mubr.bf16.gmra.mxu0 %v3314
    %v4231 = vpop.f32.mrf.mxu0
    %v4232 = vadd.f32 %v4195, %v4231
    %v4233 = vpop.f32.mrf.mxu0
    %v4234 = vpop.f32.mrf.mxu0
    %v4235 = vadd.f32 %v4195, %v4234
    %v4236 = vpop.f32.mrf.mxu0
    %4237 = vmatprep.mubr.bf16.mxu0 0
    %4238 = vmatmul.mubr.bf16.gmra.mxu0 %v3317
    %v4239 = vpop.f32.mrf.mxu0
    %v4240 = vadd.f32 %v4195, %v4239
    %v4241 = vpop.f32.mrf.mxu0
    %v4242 = vpop.f32.mrf.mxu0
    %v4243 = vadd.f32 %v4195, %v4242
    %v4244 = vpop.f32.mrf.mxu0
    %4245 = vdwg.mxu0
    %4246 = vrot.lane.b32.xlu0 %v3309, 32
    %v4247 = vpop.permute.xlu0 %4246
    %4248 = vrot.lane.b32.xlu0 %v3310, 32
    %v4249 = vpop.permute.xlu0 %4248
    %4252 = vrot.lane.b32.xlu0 %v3371, 96
    %v4253 = vpop.permute.xlu0 %4252
    %4255 = vmatprep.subr.bf16.mxu0 0
    %4256 = vmatpush1.bf16.msra.mxu0 0
    %4257 = vmatprep.subr.bf16.mxu0 0
    %4258 = vmatpush1.bf16.msra.mxu0 0
    %4259 = vmatprep.subr.bf16.mxu0 0
    %4260 = vmatpush1.bf16.msra.mxu0 0
    %4261 = vmatprep.subr.bf16.mxu0 0
    %4262 = vmatpush1.bf16.msra.mxu0 0
    %4263 = vmatprep.subr.bf16.mxu0 0
    %4264 = vmatpush1.bf16.msra.mxu0 0
    %4265 = vmatprep.subr.bf16.mxu0 0
    %4266 = vmatpush1.bf16.msra.mxu0 0
    %4267 = vmatprep.subr.bf16.mxu0 0
    %4268 = vmatpush1.bf16.msra.mxu0 %v4249
    %4269 = vmatprep.subr.bf16.mxu0 0
    %4270 = vmatpush1.bf16.msra.mxu0 %v4247
    %4271 = vmatprep.subr.bf16.mxu0 0
    %4272 = vmatpush2.bf16.msra.mxu0 0
    %4273 = vmatprep.subr.bf16.mxu0 0
    %4274 = vmatpush2.bf16.msra.mxu0 0
    %4275 = vmatprep.subr.bf16.mxu0 0
    %4276 = vmatpush2.bf16.msra.mxu0 0
    %4277 = vmatprep.subr.bf16.mxu0 0
    %4278 = vmatpush2.bf16.msra.mxu0 0
    %4279 = vmatprep.subr.bf16.mxu0 0
    %4280 = vmatpush2.bf16.msra.mxu0 0
    %4281 = vmatprep.subr.bf16.mxu0 0
    %4282 = vmatpush2.bf16.msra.mxu0 0
    %4283 = vmatprep.subr.bf16.mxu0 0
    %4284 = vmatpush2.bf16.msra.mxu0 0
    %4285 = vmatprep.subr.bf16.mxu0 0
    %4286 = vmatpush2.bf16.msra.mxu0 0
    %4287 = vmatprep.mubr.bf16.mxu0 0
    %4288 = vmatmul.mubr.bf16.gmra.mxu0 %v3379
    %v4289 = vpop.f32.mrf.mxu0
    %v4290 = vadd.f32 %v4253, %v4289
    %v4291 = vpop.f32.mrf.mxu0
    %v4292 = vpop.f32.mrf.mxu0
    %v4293 = vadd.f32 %v4253, %v4292
    %v4294 = vpop.f32.mrf.mxu0
    %4295 = vmatprep.mubr.bf16.mxu0 0
    %4296 = vmatmul.mubr.bf16.gmra.mxu0 %v3382
    %v4297 = vpop.f32.mrf.mxu0
    %v4298 = vadd.f32 %v4253, %v4297
    %v4299 = vpop.f32.mrf.mxu0
    %v4300 = vpop.f32.mrf.mxu0
    %v4301 = vadd.f32 %v4253, %v4300
    %v4302 = vpop.f32.mrf.mxu0
    %4303 = vmatprep.mubr.bf16.mxu0 0
    %4304 = vmatmul.mubr.bf16.gmra.mxu0 %v3385
    %v4305 = vpop.f32.mrf.mxu0
    %v4306 = vadd.f32 %v4253, %v4305
    %v4307 = vpop.f32.mrf.mxu0
    %v4308 = vpop.f32.mrf.mxu0
    %v4309 = vadd.f32 %v4253, %v4308
    %v4310 = vpop.f32.mrf.mxu0
    %4311 = vdwg.mxu0
    %4312 = vrot.lane.b32.xlu0 %v3456, 96
    %v4313 = vpop.permute.xlu0 %4312
    %4314 = vrot.lane.b32.xlu0 %v3457, 96
    %v4315 = vpop.permute.xlu0 %4314
    %4318 = vrot.lane.b32.xlu0 %v3447, 96
    %v4319 = vpop.permute.xlu0 %4318
    %4321 = vmatprep.subr.bf16.mxu0 0
    %4322 = vmatpush1.bf16.msra.mxu0 0
    %4323 = vmatprep.subr.bf16.mxu0 0
    %4324 = vmatpush1.bf16.msra.mxu0 0
    %4325 = vmatprep.subr.bf16.mxu0 0
    %4326 = vmatpush1.bf16.msra.mxu0 0
    %4327 = vmatprep.subr.bf16.mxu0 0
    %4328 = vmatpush1.bf16.msra.mxu0 0
    %4329 = vmatprep.subr.bf16.mxu0 0
    %4330 = vmatpush1.bf16.msra.mxu0 0
    %4331 = vmatprep.subr.bf16.mxu0 0
    %4332 = vmatpush1.bf16.msra.mxu0 0
    %4333 = vmatprep.subr.bf16.mxu0 0
    %4334 = vmatpush1.bf16.msra.mxu0 %v4315
    %4335 = vmatprep.subr.bf16.mxu0 0
    %4336 = vmatpush1.bf16.msra.mxu0 %v4313
    %4337 = vmatprep.subr.bf16.mxu0 0
    %4338 = vmatpush2.bf16.msra.mxu0 0
    %4339 = vmatprep.subr.bf16.mxu0 0
    %4340 = vmatpush2.bf16.msra.mxu0 0
    %4341 = vmatprep.subr.bf16.mxu0 0
    %4342 = vmatpush2.bf16.msra.mxu0 0
    %4343 = vmatprep.subr.bf16.mxu0 0
    %4344 = vmatpush2.bf16.msra.mxu0 0
    %4345 = vmatprep.subr.bf16.mxu0 0
    %4346 = vmatpush2.bf16.msra.mxu0 0
    %4347 = vmatprep.subr.bf16.mxu0 0
    %4348 = vmatpush2.bf16.msra.mxu0 0
    %4349 = vmatprep.subr.bf16.mxu0 0
    %4350 = vmatpush2.bf16.msra.mxu0 0
    %4351 = vmatprep.subr.bf16.mxu0 0
    %4352 = vmatpush2.bf16.msra.mxu0 0
    %4353 = vmatprep.mubr.bf16.mxu0 0
    %4354 = vmatmul.mubr.bf16.gmra.mxu0 %v3379
    %v4355 = vpop.f32.mrf.mxu0
    %v4356 = vadd.f32 %v4319, %v4355
    %v4357 = vpop.f32.mrf.mxu0
    %v4358 = vpop.f32.mrf.mxu0
    %v4359 = vadd.f32 %v4319, %v4358
    %v4360 = vpop.f32.mrf.mxu0
    %4361 = vmatprep.mubr.bf16.mxu0 0
    %4362 = vmatmul.mubr.bf16.gmra.mxu0 %v3382
    %v4363 = vpop.f32.mrf.mxu0
    %v4364 = vadd.f32 %v4319, %v4363
    %v4365 = vpop.f32.mrf.mxu0
    %v4366 = vpop.f32.mrf.mxu0
    %v4367 = vadd.f32 %v4319, %v4366
    %v4368 = vpop.f32.mrf.mxu0
    %4369 = vmatprep.mubr.bf16.mxu0 0
    %4370 = vmatmul.mubr.bf16.gmra.mxu0 %v3385
    %v4371 = vpop.f32.mrf.mxu0
    %v4372 = vadd.f32 %v4319, %v4371
    %v4373 = vpop.f32.mrf.mxu0
    %v4374 = vpop.f32.mrf.mxu0
    %v4375 = vadd.f32 %v4319, %v4374
    %v4376 = vpop.f32.mrf.mxu0
    %4377 = vdwg.mxu0
    %v4378 = vpack.c.bf16 %v4235, %v4232
    %v4379 = vpack.c.bf16 %v4243, %v4240
    %v4380 = vpack.c.bf16 %v4293, %v4290
    %v4381 = vpack.c.bf16 %v4301, %v4298
    %v4382 = vpack.c.bf16 %v4309, %v4306
    %v4384 = vsel %vm3522, %v4378, 0
    %v4387 = vsel %vm3522, %v4379, 0
    %v4390 = vsel %vm3522, %v4380, 0
    %v4393 = vsel %vm3522, %v4381, 0
    %v4396 = vsel %vm3522, %v4382, 0
    %4398 = vmatprep.subr.bf16.mxu0 0
    %4399 = vmatpush1.bf16.xpose.msra.mxu0 0
    %4400 = vmatprep.subr.bf16.mxu0 0
    %4401 = vmatpush1.bf16.xpose.msra.mxu0 0
    %4402 = vmatprep.subr.bf16.mxu0 0
    %4403 = vmatpush1.bf16.xpose.msra.mxu0 0
    %4404 = vmatprep.subr.bf16.mxu0 0
    %4405 = vmatpush1.bf16.xpose.msra.mxu0 0
    %4406 = vmatprep.subr.bf16.mxu0 0
    %4407 = vmatpush1.bf16.xpose.msra.mxu0 0
    %4408 = vmatprep.subr.bf16.mxu0 0
    %4409 = vmatpush1.bf16.xpose.msra.mxu0 %v4396
    %4410 = vmatprep.subr.bf16.mxu0 0
    %4411 = vmatpush1.bf16.xpose.msra.mxu0 %v4393
    %4412 = vmatprep.subr.bf16.mxu0 0
    %4413 = vmatpush1.bf16.xpose.msra.mxu0 %v4390
    %4414 = vmatprep.subr.bf16.mxu0 0
    %4415 = vmatpush2.bf16.xpose.msra.mxu0 0
    %4416 = vmatprep.subr.bf16.mxu0 0
    %4417 = vmatpush2.bf16.xpose.msra.mxu0 0
    %4418 = vmatprep.subr.bf16.mxu0 0
    %4419 = vmatpush2.bf16.xpose.msra.mxu0 0
    %4420 = vmatprep.subr.bf16.mxu0 0
    %4421 = vmatpush2.bf16.xpose.msra.mxu0 0
    %4422 = vmatprep.subr.bf16.mxu0 0
    %4423 = vmatpush2.bf16.xpose.msra.mxu0 0
    %4424 = vmatprep.subr.bf16.mxu0 0
    %4425 = vmatpush2.bf16.xpose.msra.mxu0 0
    %4426 = vmatprep.subr.bf16.mxu0 0
    %4427 = vmatpush2.bf16.xpose.msra.mxu0 0
    %4428 = vmatprep.subr.bf16.mxu0 0
    %4429 = vmatpush2.bf16.xpose.msra.mxu0 0
    %4430 = vmatprep.mubr.bf16.mxu0 0
    %4431 = vmatmul.mubr.bf16.gmra.mxu0 %v4384
    %v4432 = vpop.f32.mrf.mxu0
    %v4433 = vadd.f32 0.0, %v4432
    %v4434 = vpop.f32.mrf.mxu0
    %v4435 = vpop.f32.mrf.mxu0
    %v4436 = vadd.f32 0.0, %v4435
    %v4437 = vpop.f32.mrf.mxu0
    %4438 = vmatprep.mubr.bf16.mxu0 0
    %4439 = vmatmul.mubr.bf16.gmra.mxu0 %v4387
    %v4440 = vpop.f32.mrf.mxu0
    %v4441 = vadd.f32 0.0, %v4440
    %v4442 = vpop.f32.mrf.mxu0
    %v4443 = vpop.f32.mrf.mxu0
    %v4444 = vadd.f32 0.0, %v4443
    %v4445 = vpop.f32.mrf.mxu0
    %4446 = vdwg.mxu0
    %v4447 = vsel %vm231, %v4433, -1e+30
    %v4448 = vsel %vm232, %v4436, -1e+30
    %v4449 = vsel %vm233, %v4441, -1e+30
    %v4450 = vsel %vm234, %v4444, -1e+30
    %v4451 = vsel %vm2659, %v4447, -inf
    %4452 = vmax.xlane.f32.xlu0 %v4451
    %v4453 = vpop.xlane.xlu0 %4452
    %v4454 = vsel %vm2659, %v4448, -inf
    %4455 = vmax.xlane.f32.xlu0 %v4454
    %v4456 = vpop.xlane.xlu0 %4455
    %v4457 = vsel %vm2659, %v4449, -inf
    %4458 = vmax.xlane.f32.xlu0 %v4457
    %v4459 = vpop.xlane.xlu0 %4458
    %v4460 = vsel %vm2659, %v4450, -inf
    %4461 = vmax.xlane.f32.xlu0 %v4460
    %v4462 = vpop.xlane.xlu0 %4461
    %v4463 = vsub.f32 %v4447, %v4453
    %v4464 = vsub.f32 %v4448, %v4456
    %v4465 = vsub.f32 %v4449, %v4459
    %v4466 = vsub.f32 %v4450, %v4462
    %v4467 = vmul.f32 %v4463, 1.442695
    %v4468 = vpow.pop %v4467
    %v4469 = vmul.f32 %v4464, 1.442695
    %v4470 = vpow.pop %v4469
    %v4471 = vmul.f32 %v4465, 1.442695
    %v4472 = vpow.pop %v4471
    %v4473 = vmul.f32 %v4466, 1.442695
    %v4474 = vpow.pop %v4473
    %v4475 = vsel %vm2659, %v4468, 0.0
    %4476 = vadd.xlane.f32.xlu0 %v4475
    %v4477 = vpop.xlane.xlu0 %4476
    %v4478 = vsel %vm2659, %v4470, 0.0
    %4479 = vadd.xlane.f32.xlu0 %v4478
    %v4480 = vpop.xlane.xlu0 %4479
    %v4481 = vsel %vm2659, %v4472, 0.0
    %4482 = vadd.xlane.f32.xlu0 %v4481
    %v4483 = vpop.xlane.xlu0 %4482
    %v4484 = vsel %vm2659, %v4474, 0.0
    %4485 = vadd.xlane.f32.xlu0 %v4484
    %v4486 = vpop.xlane.xlu0 %4485
    %v4487 = vrcp.pop %v4477
    %v4488 = vmul.f32 %v4468, %v4487
    %v4489 = vrcp.pop %v4480
    %v4490 = vmul.f32 %v4470, %v4489
    %v4491 = vrcp.pop %v4483
    %v4492 = vmul.f32 %v4472, %v4491
    %v4493 = vrcp.pop %v4486
    %v4494 = vmul.f32 %v4474, %v4493
    %v4495 = vpack.c.bf16 %v4490, %v4488
    %v4496 = vpack.c.bf16 %v4494, %v4492
    %v4497 = vpack.c.bf16 %v4359, %v4356
    %v4498 = vpack.c.bf16 %v4367, %v4364
    %v4499 = vpack.c.bf16 %v4375, %v4372
    %v4501 = vsel %vm2659, %v4495, 0
    %v4504 = vsel %vm2659, %v4496, 0
    %4506 = vmatprep.subr.bf16.mxu0 0
    %4507 = vmatpush1.bf16.msra.mxu0 0
    %4508 = vmatprep.subr.bf16.mxu0 0
    %4509 = vmatpush1.bf16.msra.mxu0 0
    %4510 = vmatprep.subr.bf16.mxu0 0
    %4511 = vmatpush1.bf16.msra.mxu0 0
    %4512 = vmatprep.subr.bf16.mxu0 0
    %4513 = vmatpush1.bf16.msra.mxu0 0
    %4514 = vmatprep.subr.bf16.mxu0 0
    %4515 = vmatpush1.bf16.msra.mxu0 0
    %4516 = vmatprep.subr.bf16.mxu0 0
    %4517 = vmatpush1.bf16.msra.mxu0 %v4499
    %4518 = vmatprep.subr.bf16.mxu0 0
    %4519 = vmatpush1.bf16.msra.mxu0 %v4498
    %4520 = vmatprep.subr.bf16.mxu0 0
    %4521 = vmatpush1.bf16.msra.mxu0 %v4497
    %4522 = vmatprep.subr.bf16.mxu0 0
    %4523 = vmatpush2.bf16.msra.mxu0 0
    %4524 = vmatprep.subr.bf16.mxu0 0
    %4525 = vmatpush2.bf16.msra.mxu0 0
    %4526 = vmatprep.subr.bf16.mxu0 0
    %4527 = vmatpush2.bf16.msra.mxu0 0
    %4528 = vmatprep.subr.bf16.mxu0 0
    %4529 = vmatpush2.bf16.msra.mxu0 0
    %4530 = vmatprep.subr.bf16.mxu0 0
    %4531 = vmatpush2.bf16.msra.mxu0 0
    %4532 = vmatprep.subr.bf16.mxu0 0
    %4533 = vmatpush2.bf16.msra.mxu0 0
    %4534 = vmatprep.subr.bf16.mxu0 0
    %4535 = vmatpush2.bf16.msra.mxu0 0
    %4536 = vmatprep.subr.bf16.mxu0 0
    %4537 = vmatpush2.bf16.msra.mxu0 0
    %4538 = vmatprep.mubr.bf16.mxu0 0
    %4539 = vmatmul.mubr.bf16.gmra.mxu0 %v4501
    %v4540 = vpop.f32.mrf.mxu0
    %v4541 = vadd.f32 0.0, %v4540
    %v4542 = vpop.f32.mrf.mxu0
    %v4543 = vpop.f32.mrf.mxu0
    %v4544 = vadd.f32 0.0, %v4543
    %v4545 = vpop.f32.mrf.mxu0
    %4546 = vmatprep.mubr.bf16.mxu0 0
    %4547 = vmatmul.mubr.bf16.gmra.mxu0 %v4504
    %v4548 = vpop.f32.mrf.mxu0
    %v4549 = vadd.f32 0.0, %v4548
    %v4550 = vpop.f32.mrf.mxu0
    %v4551 = vpop.f32.mrf.mxu0
    %v4552 = vadd.f32 0.0, %v4551
    %v4553 = vpop.f32.mrf.mxu0
    %4554 = vdwg.mxu0
    %v4555 = vpack.c.bf16 %v4544, %v4541
    %v4556 = vpack.c.bf16 %v4552, %v4549
    %4557 = vrot.lane.b32.xlu0 %v4073, 64
    %v4558 = vpop.permute.xlu0 %4557
    %v4561 = vsel %vm3522, %v4555, 0
    %v4564 = vsel %vm3522, %v4556, 0
    %4566 = vmatprep.subr.bf16.mxu0 0
    %4567 = vmatpush1.bf16.msra.mxu0 0
    %4568 = vmatprep.subr.bf16.mxu0 0
    %4569 = vmatpush1.bf16.msra.mxu0 0
    %4570 = vmatprep.subr.bf16.mxu0 0
    %4571 = vmatpush1.bf16.msra.mxu0 0
    %4572 = vmatprep.subr.bf16.mxu0 0
    %4573 = vmatpush1.bf16.msra.mxu0 0
    %4574 = vmatprep.subr.bf16.mxu0 0
    %4575 = vmatpush1.bf16.msra.mxu0 0
    %4576 = vmatprep.subr.bf16.mxu0 0
    %4577 = vmatpush1.bf16.msra.mxu0 0
    %4578 = vmatprep.subr.bf16.mxu0 0
    %4579 = vmatpush1.bf16.msra.mxu0 0
    %4580 = vmatprep.subr.bf16.mxu0 0
    %4581 = vmatpush1.bf16.msra.mxu0 %v4558
    %4582 = vmatprep.subr.bf16.mxu0 0
    %4583 = vmatpush2.bf16.msra.mxu0 0
    %4584 = vmatprep.subr.bf16.mxu0 0
    %4585 = vmatpush2.bf16.msra.mxu0 0
    %4586 = vmatprep.subr.bf16.mxu0 0
    %4587 = vmatpush2.bf16.msra.mxu0 0
    %4588 = vmatprep.subr.bf16.mxu0 0
    %4589 = vmatpush2.bf16.msra.mxu0 0
    %4590 = vmatprep.subr.bf16.mxu0 0
    %4591 = vmatpush2.bf16.msra.mxu0 0
    %4592 = vmatprep.subr.bf16.mxu0 0
    %4593 = vmatpush2.bf16.msra.mxu0 0
    %4594 = vmatprep.subr.bf16.mxu0 0
    %4595 = vmatpush2.bf16.msra.mxu0 0
    %4596 = vmatprep.subr.bf16.mxu0 0
    %4597 = vmatpush2.bf16.msra.mxu0 0
    %4598 = vmatprep.mubr.bf16.mxu0 0
    %4599 = vmatmul.mubr.bf16.gmra.mxu0 %v4561
    %v4600 = vpop.f32.mrf.mxu0
    %v4601 = vadd.f32 0.0, %v4600
    %v4602 = vpop.f32.mrf.mxu0
    %v4603 = vpop.f32.mrf.mxu0
    %v4604 = vadd.f32 0.0, %v4603
    %v4605 = vpop.f32.mrf.mxu0
    %4606 = vmatprep.mubr.bf16.mxu0 0
    %4607 = vmatmul.mubr.bf16.gmra.mxu0 %v4564
    %v4608 = vpop.f32.mrf.mxu0
    %v4609 = vadd.f32 0.0, %v4608
    %v4610 = vpop.f32.mrf.mxu0
    %v4611 = vpop.f32.mrf.mxu0
    %v4612 = vadd.f32 0.0, %v4611
    %v4613 = vpop.f32.mrf.mxu0
    %4614 = vdwg.mxu0
    %v4615 = vadd.f32 %v4174, %v4601
    %v4616 = vadd.f32 %v4177, %v4604
    %v4617 = vadd.f32 %v4182, %v4609
    %v4618 = vadd.f32 %v4185, %v4612
    %4619 = vrot.lane.b32.xlu0 %v3309, 80
    %v4620 = vpop.permute.xlu0 %4619
    %4621 = vrot.lane.b32.xlu0 %v3310, 80
    %v4622 = vpop.permute.xlu0 %4621
    %4625 = vrot.lane.b32.xlu0 %v3300, 80
    %v4626 = vpop.permute.xlu0 %4625
    %4628 = vmatprep.subr.bf16.mxu0 0
    %4629 = vmatpush1.bf16.msra.mxu0 0
    %4630 = vmatprep.subr.bf16.mxu0 0
    %4631 = vmatpush1.bf16.msra.mxu0 0
    %4632 = vmatprep.subr.bf16.mxu0 0
    %4633 = vmatpush1.bf16.msra.mxu0 0
    %4634 = vmatprep.subr.bf16.mxu0 0
    %4635 = vmatpush1.bf16.msra.mxu0 0
    %4636 = vmatprep.subr.bf16.mxu0 0
    %4637 = vmatpush1.bf16.msra.mxu0 0
    %4638 = vmatprep.subr.bf16.mxu0 0
    %4639 = vmatpush1.bf16.msra.mxu0 0
    %4640 = vmatprep.subr.bf16.mxu0 0
    %4641 = vmatpush1.bf16.msra.mxu0 %v4622
    %4642 = vmatprep.subr.bf16.mxu0 0
    %4643 = vmatpush1.bf16.msra.mxu0 %v4620
    %4644 = vmatprep.subr.bf16.mxu0 0
    %4645 = vmatpush2.bf16.msra.mxu0 0
    %4646 = vmatprep.subr.bf16.mxu0 0
    %4647 = vmatpush2.bf16.msra.mxu0 0
    %4648 = vmatprep.subr.bf16.mxu0 0
    %4649 = vmatpush2.bf16.msra.mxu0 0
    %4650 = vmatprep.subr.bf16.mxu0 0
    %4651 = vmatpush2.bf16.msra.mxu0 0
    %4652 = vmatprep.subr.bf16.mxu0 0
    %4653 = vmatpush2.bf16.msra.mxu0 0
    %4654 = vmatprep.subr.bf16.mxu0 0
    %4655 = vmatpush2.bf16.msra.mxu0 0
    %4656 = vmatprep.subr.bf16.mxu0 0
    %4657 = vmatpush2.bf16.msra.mxu0 0
    %4658 = vmatprep.subr.bf16.mxu0 0
    %4659 = vmatpush2.bf16.msra.mxu0 0
    %4660 = vmatprep.mubr.bf16.mxu0 0
    %4661 = vmatmul.mubr.bf16.gmra.mxu0 %v3314
    %v4662 = vpop.f32.mrf.mxu0
    %v4663 = vadd.f32 %v4626, %v4662
    %v4664 = vpop.f32.mrf.mxu0
    %v4665 = vpop.f32.mrf.mxu0
    %v4666 = vadd.f32 %v4626, %v4665
    %v4667 = vpop.f32.mrf.mxu0
    %4668 = vmatprep.mubr.bf16.mxu0 0
    %4669 = vmatmul.mubr.bf16.gmra.mxu0 %v3317
    %v4670 = vpop.f32.mrf.mxu0
    %v4671 = vadd.f32 %v4626, %v4670
    %v4672 = vpop.f32.mrf.mxu0
    %v4673 = vpop.f32.mrf.mxu0
    %v4674 = vadd.f32 %v4626, %v4673
    %v4675 = vpop.f32.mrf.mxu0
    %4676 = vdwg.mxu0
    %4677 = vrot.lane.b32.xlu0 %v3309, 16
    %v4678 = vpop.permute.xlu0 %4677
    %4679 = vrot.lane.b32.xlu0 %v3310, 16
    %v4680 = vpop.permute.xlu0 %4679
    %4683 = vrot.lane.b32.xlu0 %v3371, 80
    %v4684 = vpop.permute.xlu0 %4683
    %4686 = vmatprep.subr.bf16.mxu0 0
    %4687 = vmatpush1.bf16.msra.mxu0 0
    %4688 = vmatprep.subr.bf16.mxu0 0
    %4689 = vmatpush1.bf16.msra.mxu0 0
    %4690 = vmatprep.subr.bf16.mxu0 0
    %4691 = vmatpush1.bf16.msra.mxu0 0
    %4692 = vmatprep.subr.bf16.mxu0 0
    %4693 = vmatpush1.bf16.msra.mxu0 0
    %4694 = vmatprep.subr.bf16.mxu0 0
    %4695 = vmatpush1.bf16.msra.mxu0 0
    %4696 = vmatprep.subr.bf16.mxu0 0
    %4697 = vmatpush1.bf16.msra.mxu0 0
    %4698 = vmatprep.subr.bf16.mxu0 0
    %4699 = vmatpush1.bf16.msra.mxu0 %v4680
    %4700 = vmatprep.subr.bf16.mxu0 0
    %4701 = vmatpush1.bf16.msra.mxu0 %v4678
    %4702 = vmatprep.subr.bf16.mxu0 0
    %4703 = vmatpush2.bf16.msra.mxu0 0
    %4704 = vmatprep.subr.bf16.mxu0 0
    %4705 = vmatpush2.bf16.msra.mxu0 0
    %4706 = vmatprep.subr.bf16.mxu0 0
    %4707 = vmatpush2.bf16.msra.mxu0 0
    %4708 = vmatprep.subr.bf16.mxu0 0
    %4709 = vmatpush2.bf16.msra.mxu0 0
    %4710 = vmatprep.subr.bf16.mxu0 0
    %4711 = vmatpush2.bf16.msra.mxu0 0
    %4712 = vmatprep.subr.bf16.mxu0 0
    %4713 = vmatpush2.bf16.msra.mxu0 0
    %4714 = vmatprep.subr.bf16.mxu0 0
    %4715 = vmatpush2.bf16.msra.mxu0 0
    %4716 = vmatprep.subr.bf16.mxu0 0
    %4717 = vmatpush2.bf16.msra.mxu0 0
    %4718 = vmatprep.mubr.bf16.mxu0 0
    %4719 = vmatmul.mubr.bf16.gmra.mxu0 %v3379
    %v4720 = vpop.f32.mrf.mxu0
    %v4721 = vadd.f32 %v4684, %v4720
    %v4722 = vpop.f32.mrf.mxu0
    %v4723 = vpop.f32.mrf.mxu0
    %v4724 = vadd.f32 %v4684, %v4723
    %v4725 = vpop.f32.mrf.mxu0
    %4726 = vmatprep.mubr.bf16.mxu0 0
    %4727 = vmatmul.mubr.bf16.gmra.mxu0 %v3382
    %v4728 = vpop.f32.mrf.mxu0
    %v4729 = vadd.f32 %v4684, %v4728
    %v4730 = vpop.f32.mrf.mxu0
    %v4731 = vpop.f32.mrf.mxu0
    %v4732 = vadd.f32 %v4684, %v4731
    %v4733 = vpop.f32.mrf.mxu0
    %4734 = vmatprep.mubr.bf16.mxu0 0
    %4735 = vmatmul.mubr.bf16.gmra.mxu0 %v3385
    %v4736 = vpop.f32.mrf.mxu0
    %v4737 = vadd.f32 %v4684, %v4736
    %v4738 = vpop.f32.mrf.mxu0
    %v4739 = vpop.f32.mrf.mxu0
    %v4740 = vadd.f32 %v4684, %v4739
    %v4741 = vpop.f32.mrf.mxu0
    %4742 = vdwg.mxu0
    %4743 = vrot.lane.b32.xlu0 %v3456, 80
    %v4744 = vpop.permute.xlu0 %4743
    %4745 = vrot.lane.b32.xlu0 %v3457, 80
    %v4746 = vpop.permute.xlu0 %4745
    %4749 = vrot.lane.b32.xlu0 %v3447, 80
    %v4750 = vpop.permute.xlu0 %4749
    %4752 = vmatprep.subr.bf16.mxu0 0
    %4753 = vmatpush1.bf16.msra.mxu0 0
    %4754 = vmatprep.subr.bf16.mxu0 0
    %4755 = vmatpush1.bf16.msra.mxu0 0
    %4756 = vmatprep.subr.bf16.mxu0 0
    %4757 = vmatpush1.bf16.msra.mxu0 0
    %4758 = vmatprep.subr.bf16.mxu0 0
    %4759 = vmatpush1.bf16.msra.mxu0 0
    %4760 = vmatprep.subr.bf16.mxu0 0
    %4761 = vmatpush1.bf16.msra.mxu0 0
    %4762 = vmatprep.subr.bf16.mxu0 0
    %4763 = vmatpush1.bf16.msra.mxu0 0
    %4764 = vmatprep.subr.bf16.mxu0 0
    %4765 = vmatpush1.bf16.msra.mxu0 %v4746
    %4766 = vmatprep.subr.bf16.mxu0 0
    %4767 = vmatpush1.bf16.msra.mxu0 %v4744
    %4768 = vmatprep.subr.bf16.mxu0 0
    %4769 = vmatpush2.bf16.msra.mxu0 0
    %4770 = vmatprep.subr.bf16.mxu0 0
    %4771 = vmatpush2.bf16.msra.mxu0 0
    %4772 = vmatprep.subr.bf16.mxu0 0
    %4773 = vmatpush2.bf16.msra.mxu0 0
    %4774 = vmatprep.subr.bf16.mxu0 0
    %4775 = vmatpush2.bf16.msra.mxu0 0
    %4776 = vmatprep.subr.bf16.mxu0 0
    %4777 = vmatpush2.bf16.msra.mxu0 0
    %4778 = vmatprep.subr.bf16.mxu0 0
    %4779 = vmatpush2.bf16.msra.mxu0 0
    %4780 = vmatprep.subr.bf16.mxu0 0
    %4781 = vmatpush2.bf16.msra.mxu0 0
    %4782 = vmatprep.subr.bf16.mxu0 0
    %4783 = vmatpush2.bf16.msra.mxu0 0
    %4784 = vmatprep.mubr.bf16.mxu0 0
    %4785 = vmatmul.mubr.bf16.gmra.mxu0 %v3379
    %v4786 = vpop.f32.mrf.mxu0
    %v4787 = vadd.f32 %v4750, %v4786
    %v4788 = vpop.f32.mrf.mxu0
    %v4789 = vpop.f32.mrf.mxu0
    %v4790 = vadd.f32 %v4750, %v4789
    %v4791 = vpop.f32.mrf.mxu0
    %4792 = vmatprep.mubr.bf16.mxu0 0
    %4793 = vmatmul.mubr.bf16.gmra.mxu0 %v3382
    %v4794 = vpop.f32.mrf.mxu0
    %v4795 = vadd.f32 %v4750, %v4794
    %v4796 = vpop.f32.mrf.mxu0
    %v4797 = vpop.f32.mrf.mxu0
    %v4798 = vadd.f32 %v4750, %v4797
    %v4799 = vpop.f32.mrf.mxu0
    %4800 = vmatprep.mubr.bf16.mxu0 0
    %4801 = vmatmul.mubr.bf16.gmra.mxu0 %v3385
    %v4802 = vpop.f32.mrf.mxu0
    %v4803 = vadd.f32 %v4750, %v4802
    %v4804 = vpop.f32.mrf.mxu0
    %v4805 = vpop.f32.mrf.mxu0
    %v4806 = vadd.f32 %v4750, %v4805
    %v4807 = vpop.f32.mrf.mxu0
    %4808 = vdwg.mxu0
    %v4809 = vpack.c.bf16 %v4666, %v4663
    %v4810 = vpack.c.bf16 %v4674, %v4671
    %v4811 = vpack.c.bf16 %v4724, %v4721
    %v4812 = vpack.c.bf16 %v4732, %v4729
    %v4813 = vpack.c.bf16 %v4740, %v4737
    %v4815 = vsel %vm3522, %v4809, 0
    %v4818 = vsel %vm3522, %v4810, 0
    %v4821 = vsel %vm3522, %v4811, 0
    %v4824 = vsel %vm3522, %v4812, 0
    %v4827 = vsel %vm3522, %v4813, 0
    %4829 = vmatprep.subr.bf16.mxu0 0
    %4830 = vmatpush1.bf16.xpose.msra.mxu0 0
    %4831 = vmatprep.subr.bf16.mxu0 0
    %4832 = vmatpush1.bf16.xpose.msra.mxu0 0
    %4833 = vmatprep.subr.bf16.mxu0 0
    %4834 = vmatpush1.bf16.xpose.msra.mxu0 0
    %4835 = vmatprep.subr.bf16.mxu0 0
    %4836 = vmatpush1.bf16.xpose.msra.mxu0 0
    %4837 = vmatprep.subr.bf16.mxu0 0
    %4838 = vmatpush1.bf16.xpose.msra.mxu0 0
    %4839 = vmatprep.subr.bf16.mxu0 0
    %4840 = vmatpush1.bf16.xpose.msra.mxu0 %v4827
    %4841 = vmatprep.subr.bf16.mxu0 0
    %4842 = vmatpush1.bf16.xpose.msra.mxu0 %v4824
    %4843 = vmatprep.subr.bf16.mxu0 0
    %4844 = vmatpush1.bf16.xpose.msra.mxu0 %v4821
    %4845 = vmatprep.subr.bf16.mxu0 0
    %4846 = vmatpush2.bf16.xpose.msra.mxu0 0
    %4847 = vmatprep.subr.bf16.mxu0 0
    %4848 = vmatpush2.bf16.xpose.msra.mxu0 0
    %4849 = vmatprep.subr.bf16.mxu0 0
    %4850 = vmatpush2.bf16.xpose.msra.mxu0 0
    %4851 = vmatprep.subr.bf16.mxu0 0
    %4852 = vmatpush2.bf16.xpose.msra.mxu0 0
    %4853 = vmatprep.subr.bf16.mxu0 0
    %4854 = vmatpush2.bf16.xpose.msra.mxu0 0
    %4855 = vmatprep.subr.bf16.mxu0 0
    %4856 = vmatpush2.bf16.xpose.msra.mxu0 0
    %4857 = vmatprep.subr.bf16.mxu0 0
    %4858 = vmatpush2.bf16.xpose.msra.mxu0 0
    %4859 = vmatprep.subr.bf16.mxu0 0
    %4860 = vmatpush2.bf16.xpose.msra.mxu0 0
    %4861 = vmatprep.mubr.bf16.mxu0 0
    %4862 = vmatmul.mubr.bf16.gmra.mxu0 %v4815
    %v4863 = vpop.f32.mrf.mxu0
    %v4864 = vadd.f32 0.0, %v4863
    %v4865 = vpop.f32.mrf.mxu0
    %v4866 = vpop.f32.mrf.mxu0
    %v4867 = vadd.f32 0.0, %v4866
    %v4868 = vpop.f32.mrf.mxu0
    %4869 = vmatprep.mubr.bf16.mxu0 0
    %4870 = vmatmul.mubr.bf16.gmra.mxu0 %v4818
    %v4871 = vpop.f32.mrf.mxu0
    %v4872 = vadd.f32 0.0, %v4871
    %v4873 = vpop.f32.mrf.mxu0
    %v4874 = vpop.f32.mrf.mxu0
    %v4875 = vadd.f32 0.0, %v4874
    %v4876 = vpop.f32.mrf.mxu0
    %4877 = vdwg.mxu0
    %v4878 = vsel %vm231, %v4864, -1e+30
    %v4879 = vsel %vm232, %v4867, -1e+30
    %v4880 = vsel %vm233, %v4872, -1e+30
    %v4881 = vsel %vm234, %v4875, -1e+30
    %v4882 = vsel %vm2659, %v4878, -inf
    %4883 = vmax.xlane.f32.xlu0 %v4882
    %v4884 = vpop.xlane.xlu0 %4883
    %v4885 = vsel %vm2659, %v4879, -inf
    %4886 = vmax.xlane.f32.xlu0 %v4885
    %v4887 = vpop.xlane.xlu0 %4886
    %v4888 = vsel %vm2659, %v4880, -inf
    %4889 = vmax.xlane.f32.xlu0 %v4888
    %v4890 = vpop.xlane.xlu0 %4889
    %v4891 = vsel %vm2659, %v4881, -inf
    %4892 = vmax.xlane.f32.xlu0 %v4891
    %v4893 = vpop.xlane.xlu0 %4892
    %v4894 = vsub.f32 %v4878, %v4884
    %v4895 = vsub.f32 %v4879, %v4887
    %v4896 = vsub.f32 %v4880, %v4890
    %v4897 = vsub.f32 %v4881, %v4893
    %v4898 = vmul.f32 %v4894, 1.442695
    %v4899 = vpow.pop %v4898
    %v4900 = vmul.f32 %v4895, 1.442695
    %v4901 = vpow.pop %v4900
    %v4902 = vmul.f32 %v4896, 1.442695
    %v4903 = vpow.pop %v4902
    %v4904 = vmul.f32 %v4897, 1.442695
    %v4905 = vpow.pop %v4904
    %v4906 = vsel %vm2659, %v4899, 0.0
    %4907 = vadd.xlane.f32.xlu0 %v4906
    %v4908 = vpop.xlane.xlu0 %4907
    %v4909 = vsel %vm2659, %v4901, 0.0
    %4910 = vadd.xlane.f32.xlu0 %v4909
    %v4911 = vpop.xlane.xlu0 %4910
    %v4912 = vsel %vm2659, %v4903, 0.0
    %4913 = vadd.xlane.f32.xlu0 %v4912
    %v4914 = vpop.xlane.xlu0 %4913
    %v4915 = vsel %vm2659, %v4905, 0.0
    %4916 = vadd.xlane.f32.xlu0 %v4915
    %v4917 = vpop.xlane.xlu0 %4916
    %v4918 = vrcp.pop %v4908
    %v4919 = vmul.f32 %v4899, %v4918
    %v4920 = vrcp.pop %v4911
    %v4921 = vmul.f32 %v4901, %v4920
    %v4922 = vrcp.pop %v4914
    %v4923 = vmul.f32 %v4903, %v4922
    %v4924 = vrcp.pop %v4917
    %v4925 = vmul.f32 %v4905, %v4924
    %v4926 = vpack.c.bf16 %v4921, %v4919
    %v4927 = vpack.c.bf16 %v4925, %v4923
    %v4928 = vpack.c.bf16 %v4790, %v4787
    %v4929 = vpack.c.bf16 %v4798, %v4795
    %v4930 = vpack.c.bf16 %v4806, %v4803
    %v4932 = vsel %vm2659, %v4926, 0
    %v4935 = vsel %vm2659, %v4927, 0
    %4937 = vmatprep.subr.bf16.mxu0 0
    %4938 = vmatpush1.bf16.msra.mxu0 0
    %4939 = vmatprep.subr.bf16.mxu0 0
    %4940 = vmatpush1.bf16.msra.mxu0 0
    %4941 = vmatprep.subr.bf16.mxu0 0
    %4942 = vmatpush1.bf16.msra.mxu0 0
    %4943 = vmatprep.subr.bf16.mxu0 0
    %4944 = vmatpush1.bf16.msra.mxu0 0
    %4945 = vmatprep.subr.bf16.mxu0 0
    %4946 = vmatpush1.bf16.msra.mxu0 0
    %4947 = vmatprep.subr.bf16.mxu0 0
    %4948 = vmatpush1.bf16.msra.mxu0 %v4930
    %4949 = vmatprep.subr.bf16.mxu0 0
    %4950 = vmatpush1.bf16.msra.mxu0 %v4929
    %4951 = vmatprep.subr.bf16.mxu0 0
    %4952 = vmatpush1.bf16.msra.mxu0 %v4928
    %4953 = vmatprep.subr.bf16.mxu0 0
    %4954 = vmatpush2.bf16.msra.mxu0 0
    %4955 = vmatprep.subr.bf16.mxu0 0
    %4956 = vmatpush2.bf16.msra.mxu0 0
    %4957 = vmatprep.subr.bf16.mxu0 0
    %4958 = vmatpush2.bf16.msra.mxu0 0
    %4959 = vmatprep.subr.bf16.mxu0 0
    %4960 = vmatpush2.bf16.msra.mxu0 0
    %4961 = vmatprep.subr.bf16.mxu0 0
    %4962 = vmatpush2.bf16.msra.mxu0 0
    %4963 = vmatprep.subr.bf16.mxu0 0
    %4964 = vmatpush2.bf16.msra.mxu0 0
    %4965 = vmatprep.subr.bf16.mxu0 0
    %4966 = vmatpush2.bf16.msra.mxu0 0
    %4967 = vmatprep.subr.bf16.mxu0 0
    %4968 = vmatpush2.bf16.msra.mxu0 0
    %4969 = vmatprep.mubr.bf16.mxu0 0
    %4970 = vmatmul.mubr.bf16.gmra.mxu0 %v4932
    %v4971 = vpop.f32.mrf.mxu0
    %v4972 = vadd.f32 0.0, %v4971
    %v4973 = vpop.f32.mrf.mxu0
    %v4974 = vpop.f32.mrf.mxu0
    %v4975 = vadd.f32 0.0, %v4974
    %v4976 = vpop.f32.mrf.mxu0
    %4977 = vmatprep.mubr.bf16.mxu0 0
    %4978 = vmatmul.mubr.bf16.gmra.mxu0 %v4935
    %v4979 = vpop.f32.mrf.mxu0
    %v4980 = vadd.f32 0.0, %v4979
    %v4981 = vpop.f32.mrf.mxu0
    %v4982 = vpop.f32.mrf.mxu0
    %v4983 = vadd.f32 0.0, %v4982
    %v4984 = vpop.f32.mrf.mxu0
    %4985 = vdwg.mxu0
    %v4986 = vpack.c.bf16 %v4975, %v4972
    %v4987 = vpack.c.bf16 %v4983, %v4980
    %4988 = vrot.lane.b32.xlu0 %v4073, 32
    %v4989 = vpop.permute.xlu0 %4988
    %v4992 = vsel %vm3522, %v4986, 0
    %v4995 = vsel %vm3522, %v4987, 0
    %4997 = vmatprep.subr.bf16.mxu0 0
    %4998 = vmatpush1.bf16.msra.mxu0 0
    %4999 = vmatprep.subr.bf16.mxu0 0
    %5000 = vmatpush1.bf16.msra.mxu0 0
    %5001 = vmatprep.subr.bf16.mxu0 0
    %5002 = vmatpush1.bf16.msra.mxu0 0
    %5003 = vmatprep.subr.bf16.mxu0 0
    %5004 = vmatpush1.bf16.msra.mxu0 0
    %5005 = vmatprep.subr.bf16.mxu0 0
    %5006 = vmatpush1.bf16.msra.mxu0 0
    %5007 = vmatprep.subr.bf16.mxu0 0
    %5008 = vmatpush1.bf16.msra.mxu0 0
    %5009 = vmatprep.subr.bf16.mxu0 0
    %5010 = vmatpush1.bf16.msra.mxu0 0
    %5011 = vmatprep.subr.bf16.mxu0 0
    %5012 = vmatpush1.bf16.msra.mxu0 %v4989
    %5013 = vmatprep.subr.bf16.mxu0 0
    %5014 = vmatpush2.bf16.msra.mxu0 0
    %5015 = vmatprep.subr.bf16.mxu0 0
    %5016 = vmatpush2.bf16.msra.mxu0 0
    %5017 = vmatprep.subr.bf16.mxu0 0
    %5018 = vmatpush2.bf16.msra.mxu0 0
    %5019 = vmatprep.subr.bf16.mxu0 0
    %5020 = vmatpush2.bf16.msra.mxu0 0
    %5021 = vmatprep.subr.bf16.mxu0 0
    %5022 = vmatpush2.bf16.msra.mxu0 0
    %5023 = vmatprep.subr.bf16.mxu0 0
    %5024 = vmatpush2.bf16.msra.mxu0 0
    %5025 = vmatprep.subr.bf16.mxu0 0
    %5026 = vmatpush2.bf16.msra.mxu0 0
    %5027 = vmatprep.subr.bf16.mxu0 0
    %5028 = vmatpush2.bf16.msra.mxu0 0
    %5029 = vmatprep.mubr.bf16.mxu0 0
    %5030 = vmatmul.mubr.bf16.gmra.mxu0 %v4992
    %v5031 = vpop.f32.mrf.mxu0
    %v5032 = vadd.f32 0.0, %v5031
    %v5033 = vpop.f32.mrf.mxu0
    %v5034 = vpop.f32.mrf.mxu0
    %v5035 = vadd.f32 0.0, %v5034
    %v5036 = vpop.f32.mrf.mxu0
    %5037 = vmatprep.mubr.bf16.mxu0 0
    %5038 = vmatmul.mubr.bf16.gmra.mxu0 %v4995
    %v5039 = vpop.f32.mrf.mxu0
    %v5040 = vadd.f32 0.0, %v5039
    %v5041 = vpop.f32.mrf.mxu0
    %v5042 = vpop.f32.mrf.mxu0
    %v5043 = vadd.f32 0.0, %v5042
    %v5044 = vpop.f32.mrf.mxu0
    %5045 = vdwg.mxu0
    %v5046 = vadd.f32 %v4615, %v5032
    %v5047 = vadd.f32 %v4616, %v5035
    %v5048 = vadd.f32 %v4617, %v5040
    %v5049 = vadd.f32 %v4618, %v5043
    %v5050 = vld [vmem:[#allocation8 + $0x2f] sm:$0x1]
    %v5051 = vlaneseq
    %v5052 = vshrl.u32 %v5051, 7
    %v5053 = vsub.s32 0, %v5052
    %v5054 = vrot.slane %v5050, %v5053
    %v5055 = vadd.f32 %v5046, %v5054
    %v5056 = vadd.f32 %v5047, %v5054
    %v5057 = vadd.f32 %v5048, %v5054
    %v5058 = vadd.f32 %v5049, %v5054
    %v5059 = vadd.f32 %v1865, %v5055
    %v5060 = vadd.f32 %v1866, %v5056
    %v5061 = vadd.f32 %v1867, %v5057
    %v5062 = vadd.f32 %v1868, %v5058
    %v5063 = vld [vmem:[#allocation8 + $0x8] sm:$0x1]
    %v5064 = vld [vmem:[#allocation8 + $0x9] sm:$0x1]
    %v5065 = vsel %vm237, %v5059, 0.0
    %5066 = vadd.xlane.f32.xlu0 %v5065
    %v5067 = vpop.xlane.xlu0 %5066
    %v5068 = vsel %vm237, %v5060, 0.0
    %5069 = vadd.xlane.f32.xlu0 %v5068
    %v5070 = vpop.xlane.xlu0 %5069
    %v5071 = vsel %vm237, %v5061, 0.0
    %5072 = vadd.xlane.f32.xlu0 %v5071
    %v5073 = vpop.xlane.xlu0 %5072
    %v5074 = vsel %vm237, %v5062, 0.0
    %5075 = vadd.xlane.f32.xlu0 %v5074
    %v5076 = vpop.xlane.xlu0 %5075
    %v5077 = vmul.f32 %v5067, %v250
    %v5078 = vmul.f32 %v5070, %v250
    %v5079 = vmul.f32 %v5073, %v250
    %v5080 = vmul.f32 %v5076, %v250
    %v5081 = vsub.f32 %v5059, %v5077
    %v5082 = vsub.f32 %v5060, %v5078
    %v5083 = vsub.f32 %v5061, %v5079
    %v5084 = vsub.f32 %v5062, %v5080
    %v5085 = vmul.f32 %v5081, %v5081
    %v5086 = vmul.f32 %v5082, %v5082
    %v5087 = vmul.f32 %v5083, %v5083
    %v5088 = vmul.f32 %v5084, %v5084
    %v5089 = vsel %vm237, %v5085, 0.0
    %5090 = vadd.xlane.f32.xlu0 %v5089
    %v5091 = vpop.xlane.xlu0 %5090
    %v5092 = vsel %vm237, %v5086, 0.0
    %5093 = vadd.xlane.f32.xlu0 %v5092
    %v5094 = vpop.xlane.xlu0 %5093
    %v5095 = vsel %vm237, %v5087, 0.0
    %5096 = vadd.xlane.f32.xlu0 %v5095
    %v5097 = vpop.xlane.xlu0 %5096
    %v5098 = vsel %vm237, %v5088, 0.0
    %5099 = vadd.xlane.f32.xlu0 %v5098
    %v5100 = vpop.xlane.xlu0 %5099
    %v5101 = vmul.f32 %v5091, %v250
    %v5102 = vmul.f32 %v5094, %v250
    %v5103 = vmul.f32 %v5097, %v250
    %v5104 = vmul.f32 %v5100, %v250
    %v5105 = vadd.f32 %v5101, 1e-05
    %v5106 = vadd.f32 %v5102, 1e-05
    %v5107 = vadd.f32 %v5103, 1e-05
    %v5108 = vadd.f32 %v5104, 1e-05
    %v5109 = vrsqrt.pop %v5105
    %v5110 = vrsqrt.pop %v5106
    %v5111 = vrsqrt.pop %v5107
    %v5112 = vrsqrt.pop %v5108
    %v5113 = vmul.f32 %v5081, %v5109
    %v5114 = vmul.f32 %v5082, %v5110
    %v5115 = vmul.f32 %v5083, %v5111
    %v5116 = vmul.f32 %v5084, %v5112
    %v5117 = vlaneseq
    %v5118 = vshrl.u32 %v5117, 7
    %v5119 = vsub.s32 0, %v5118
    %v5120 = vrot.slane %v5063, %v5119
    %v5121 = vmul.f32 %v5113, %v5120
    %v5122 = vmul.f32 %v5114, %v5120
    %v5123 = vmul.f32 %v5115, %v5120
    %v5124 = vmul.f32 %v5116, %v5120
    %v5125 = vlaneseq
    %v5126 = vshrl.u32 %v5125, 7
    %v5127 = vsub.s32 0, %v5126
    %v5128 = vrot.slane %v5064, %v5127
    %v5129 = vadd.f32 %v5121, %v5128
    %v5130 = vadd.f32 %v5122, %v5128
    %v5131 = vadd.f32 %v5123, %v5128
    %v5132 = vadd.f32 %v5124, %v5128
    %v5133 = vld [vmem:[#allocation7 + $0x40] sm:$0xf]
    %v5134 = vld [vmem:[#allocation7 + $0x44] sm:$0xf]
    %v5135 = vld [vmem:[#allocation7 + $0x48] sm:$0xf]
    %v5136 = vld [vmem:[#allocation7 + $0x4c] sm:$0xf]
    %v5137 = vpack.c.bf16 %v5130, %v5129
    %v5138 = vpack.c.bf16 %v5132, %v5131
    %v5139 = vld [vmem:[#allocation8 + $0xa] sm:$0x1]
    %v5140 = vlaneseq
    %v5141 = vshrl.u32 %v5140, 7
    %v5142 = vsub.s32 0, %v5141
    %v5143 = vrot.slane %v5139, %v5142
    %v5148 = vunpack.c.l.b16 %v5133
    %v5149 = vunpack.c.l.b16 %v5134
    %v5150 = vunpack.c.l.b16 %v5135
    %v5151 = vunpack.c.l.b16 %v5136
    %v5152 = vpack.c.b16 %v5149, %v5148
    %v5153 = vpack.c.b16 %v5151, %v5150
    %v5157 = vsel %vm237, %v5137, 0
    %v5160 = vsel %vm237, %v5138, 0
    %5162 = vmatprep.subr.bf16.mxu0 0
    %5163 = vmatpush1.bf16.msra.mxu0 0
    %5164 = vmatprep.subr.bf16.mxu0 0
    %5165 = vmatpush1.bf16.msra.mxu0 0
    %5166 = vmatprep.subr.bf16.mxu0 0
    %5167 = vmatpush1.bf16.msra.mxu0 0
    %5168 = vmatprep.subr.bf16.mxu0 0
    %5169 = vmatpush1.bf16.msra.mxu0 0
    %5170 = vmatprep.subr.bf16.mxu0 0
    %5171 = vmatpush1.bf16.msra.mxu0 0
    %5172 = vmatprep.subr.bf16.mxu0 0
    %5173 = vmatpush1.bf16.msra.mxu0 0
    %5174 = vmatprep.subr.bf16.mxu0 0
    %5175 = vmatpush1.bf16.msra.mxu0 %v5153
    %5176 = vmatprep.subr.bf16.mxu0 0
    %5177 = vmatpush1.bf16.msra.mxu0 %v5152
    %5178 = vmatprep.subr.bf16.mxu0 0
    %5179 = vmatpush2.bf16.msra.mxu0 0
    %5180 = vmatprep.subr.bf16.mxu0 0
    %5181 = vmatpush2.bf16.msra.mxu0 0
    %5182 = vmatprep.subr.bf16.mxu0 0
    %5183 = vmatpush2.bf16.msra.mxu0 0
    %5184 = vmatprep.subr.bf16.mxu0 0
    %5185 = vmatpush2.bf16.msra.mxu0 0
    %5186 = vmatprep.subr.bf16.mxu0 0
    %5187 = vmatpush2.bf16.msra.mxu0 0
    %5188 = vmatprep.subr.bf16.mxu0 0
    %5189 = vmatpush2.bf16.msra.mxu0 0
    %5190 = vmatprep.subr.bf16.mxu0 0
    %5191 = vmatpush2.bf16.msra.mxu0 0
    %5192 = vmatprep.subr.bf16.mxu0 0
    %5193 = vmatpush2.bf16.msra.mxu0 0
    %5194 = vmatprep.mubr.bf16.mxu0 0
    %5195 = vmatmul.mubr.bf16.gmra.mxu0 %v5157
    %v5196 = vpop.f32.mrf.mxu0
    %v5197 = vadd.f32 %v5143, %v5196
    %v5198 = vpop.f32.mrf.mxu0
    %v5199 = vpop.f32.mrf.mxu0
    %v5200 = vadd.f32 %v5143, %v5199
    %v5201 = vpop.f32.mrf.mxu0
    %5202 = vmatprep.mubr.bf16.mxu0 0
    %5203 = vmatmul.mubr.bf16.gmra.mxu0 %v5160
    %v5204 = vpop.f32.mrf.mxu0
    %v5205 = vadd.f32 %v5143, %v5204
    %v5206 = vpop.f32.mrf.mxu0
    %v5207 = vpop.f32.mrf.mxu0
    %v5208 = vadd.f32 %v5143, %v5207
    %v5209 = vpop.f32.mrf.mxu0
    %5210 = vdwg.mxu0
    %v5211 = vxor.u32 %v5197, 2147483648
    %v5212 = vxor.u32 %v5200, 2147483648
    %v5213 = vxor.u32 %v5205, 2147483648
    %v5214 = vxor.u32 %v5208, 2147483648
    %v5215 = vmul.f32 %v5211, 1.442695
    %v5216 = vpow.pop %v5215
    %v5217 = vmul.f32 %v5212, 1.442695
    %v5218 = vpow.pop %v5217
    %v5219 = vmul.f32 %v5213, 1.442695
    %v5220 = vpow.pop %v5219
    %v5221 = vmul.f32 %v5214, 1.442695
    %v5222 = vpow.pop %v5221
    %v5223 = vadd.f32 %v5216, 1.0
    %v5224 = vadd.f32 %v5218, 1.0
    %v5225 = vadd.f32 %v5220, 1.0
    %v5226 = vadd.f32 %v5222, 1.0
    %v5227 = vrcp.pop %v5223
    %v5228 = vmul.f32 1.0, %v5227
    %v5229 = vrcp.pop %v5224
    %v5230 = vmul.f32 1.0, %v5229
    %v5231 = vrcp.pop %v5225
    %v5232 = vmul.f32 1.0, %v5231
    %v5233 = vrcp.pop %v5226
    %v5234 = vmul.f32 1.0, %v5233
    %v5235 = vmul.f32 %v5197, %v5228
    %v5236 = vmul.f32 %v5200, %v5230
    %v5237 = vmul.f32 %v5205, %v5232
    %v5238 = vmul.f32 %v5208, %v5234
    %v5239 = vpack.c.bf16 %v5236, %v5235
    %v5240 = vpack.c.bf16 %v5238, %v5237
    %v5241 = vld [vmem:[#allocation7 + $0x50] sm:$0xf]
    %v5242 = vld [vmem:[#allocation7 + $0x54] sm:$0xf]
    %v5243 = vld [vmem:[#allocation7 + $0x58] sm:$0xf]
    %v5244 = vld [vmem:[#allocation7 + $0x5c] sm:$0xf]
    %v5245 = vld [vmem:[#allocation8 + $0xb] sm:$0x1]
    %v5246 = vlaneseq
    %v5247 = vshrl.u32 %v5246, 7
    %v5248 = vsub.s32 0, %v5247
    %v5249 = vrot.slane %v5245, %v5248
    %v5254 = vunpack.c.l.b16 %v5241
    %v5255 = vunpack.c.l.b16 %v5242
    %v5256 = vunpack.c.l.b16 %v5243
    %v5257 = vunpack.c.l.b16 %v5244
    %v5258 = vpack.c.b16 %v5255, %v5254
    %v5259 = vpack.c.b16 %v5257, %v5256
    %5262 = vmatprep.subr.bf16.mxu0 0
    %5263 = vmatpush1.bf16.xpose.msra.mxu0 0
    %5264 = vmatprep.subr.bf16.mxu0 0
    %5265 = vmatpush1.bf16.xpose.msra.mxu0 0
    %5266 = vmatprep.subr.bf16.mxu0 0
    %5267 = vmatpush1.bf16.xpose.msra.mxu0 0
    %5268 = vmatprep.subr.bf16.mxu0 0
    %5269 = vmatpush1.bf16.xpose.msra.mxu0 0
    %5270 = vmatprep.subr.bf16.mxu0 0
    %5271 = vmatpush1.bf16.xpose.msra.mxu0 0
    %5272 = vmatprep.subr.bf16.mxu0 0
    %5273 = vmatpush1.bf16.xpose.msra.mxu0 0
    %5274 = vmatprep.subr.bf16.mxu0 0
    %5275 = vmatpush1.bf16.xpose.msra.mxu0 %v5259
    %5276 = vmatprep.subr.bf16.mxu0 0
    %5277 = vmatpush1.bf16.xpose.msra.mxu0 %v5258
    %5278 = vmatprep.subr.bf16.mxu0 0
    %5279 = vmatpush2.bf16.xpose.msra.mxu0 0
    %5280 = vmatprep.subr.bf16.mxu0 0
    %5281 = vmatpush2.bf16.xpose.msra.mxu0 0
    %5282 = vmatprep.subr.bf16.mxu0 0
    %5283 = vmatpush2.bf16.xpose.msra.mxu0 0
    %5284 = vmatprep.subr.bf16.mxu0 0
    %5285 = vmatpush2.bf16.xpose.msra.mxu0 0
    %5286 = vmatprep.subr.bf16.mxu0 0
    %5287 = vmatpush2.bf16.xpose.msra.mxu0 0
    %5288 = vmatprep.subr.bf16.mxu0 0
    %5289 = vmatpush2.bf16.xpose.msra.mxu0 0
    %5290 = vmatprep.subr.bf16.mxu0 0
    %5291 = vmatpush2.bf16.xpose.msra.mxu0 0
    %5292 = vmatprep.subr.bf16.mxu0 0
    %5293 = vmatpush2.bf16.xpose.msra.mxu0 0
    %5294 = vmatprep.mubr.bf16.mxu0 0
    %5295 = vmatmul.mubr.bf16.gmra.mxu0 %v5239
    %v5296 = vpop.f32.mrf.mxu0
    %v5297 = vadd.f32 %v5249, %v5296
    %v5298 = vpop.f32.mrf.mxu0
    %v5299 = vpop.f32.mrf.mxu0
    %v5300 = vadd.f32 %v5249, %v5299
    %v5301 = vpop.f32.mrf.mxu0
    %5302 = vmatprep.mubr.bf16.mxu0 0
    %5303 = vmatmul.mubr.bf16.gmra.mxu0 %v5240
    %v5304 = vpop.f32.mrf.mxu0
    %v5305 = vadd.f32 %v5249, %v5304
    %v5306 = vpop.f32.mrf.mxu0
    %v5307 = vpop.f32.mrf.mxu0
    %v5308 = vadd.f32 %v5249, %v5307
    %v5309 = vpop.f32.mrf.mxu0
    %5310 = vdwg.mxu0
    %v5311 = vadd.f32 %v5059, %v5297
    %v5312 = vadd.f32 %v5060, %v5300
    %v5313 = vadd.f32 %v5061, %v5305
    %v5314 = vadd.f32 %v5062, %v5308
    %v5315 = vld [vmem:[#allocation8 + $0x30] sm:$0x1]
    %v5316 = vld [vmem:[#allocation8 + $0x31] sm:$0x1]
    %v5317 = vsel %vm237, %v5311, 0.0
    %5318 = vadd.xlane.f32.xlu0 %v5317
    %v5319 = vpop.xlane.xlu0 %5318
    %v5320 = vsel %vm237, %v5312, 0.0
    %5321 = vadd.xlane.f32.xlu0 %v5320
    %v5322 = vpop.xlane.xlu0 %5321
    %v5323 = vsel %vm237, %v5313, 0.0
    %5324 = vadd.xlane.f32.xlu0 %v5323
    %v5325 = vpop.xlane.xlu0 %5324
    %v5326 = vsel %vm237, %v5314, 0.0
    %5327 = vadd.xlane.f32.xlu0 %v5326
    %v5328 = vpop.xlane.xlu0 %5327
    %v5329 = vmul.f32 %v5319, %v250
    %v5330 = vmul.f32 %v5322, %v250
    %v5331 = vmul.f32 %v5325, %v250
    %v5332 = vmul.f32 %v5328, %v250
    %v5333 = vsub.f32 %v5311, %v5329
    %v5334 = vsub.f32 %v5312, %v5330
    %v5335 = vsub.f32 %v5313, %v5331
    %v5336 = vsub.f32 %v5314, %v5332
    %v5337 = vmul.f32 %v5333, %v5333
    %v5338 = vmul.f32 %v5334, %v5334
    %v5339 = vmul.f32 %v5335, %v5335
    %v5340 = vmul.f32 %v5336, %v5336
    %v5341 = vsel %vm237, %v5337, 0.0
    %5342 = vadd.xlane.f32.xlu0 %v5341
    %v5343 = vpop.xlane.xlu0 %5342
    %v5344 = vsel %vm237, %v5338, 0.0
    %5345 = vadd.xlane.f32.xlu0 %v5344
    %v5346 = vpop.xlane.xlu0 %5345
    %v5347 = vsel %vm237, %v5339, 0.0
    %5348 = vadd.xlane.f32.xlu0 %v5347
    %v5349 = vpop.xlane.xlu0 %5348
    %v5350 = vsel %vm237, %v5340, 0.0
    %5351 = vadd.xlane.f32.xlu0 %v5350
    %v5352 = vpop.xlane.xlu0 %5351
    %v5353 = vmul.f32 %v5343, %v250
    %v5354 = vmul.f32 %v5346, %v250
    %v5355 = vmul.f32 %v5349, %v250
    %v5356 = vmul.f32 %v5352, %v250
    %v5357 = vadd.f32 %v5353, 1e-05
    %v5358 = vadd.f32 %v5354, 1e-05
    %v5359 = vadd.f32 %v5355, 1e-05
    %v5360 = vadd.f32 %v5356, 1e-05
    %v5361 = vrsqrt.pop %v5357
    %v5362 = vrsqrt.pop %v5358
    %v5363 = vrsqrt.pop %v5359
    %v5364 = vrsqrt.pop %v5360
    %v5365 = vmul.f32 %v5333, %v5361
    %v5366 = vmul.f32 %v5334, %v5362
    %v5367 = vmul.f32 %v5335, %v5363
    %v5368 = vmul.f32 %v5336, %v5364
    %v5369 = vlaneseq
    %v5370 = vshrl.u32 %v5369, 7
    %v5371 = vsub.s32 0, %v5370
    %v5372 = vrot.slane %v5315, %v5371
    %v5373 = vmul.f32 %v5365, %v5372
    %v5374 = vmul.f32 %v5366, %v5372
    %v5375 = vmul.f32 %v5367, %v5372
    %v5376 = vmul.f32 %v5368, %v5372
    %v5377 = vlaneseq
    %v5378 = vshrl.u32 %v5377, 7
    %v5379 = vsub.s32 0, %v5378
    %v5380 = vrot.slane %v5316, %v5379
    %v5381 = vadd.f32 %v5373, %v5380
    %v5382 = vadd.f32 %v5374, %v5380
    %v5383 = vadd.f32 %v5375, %v5380
    %v5384 = vadd.f32 %v5376, %v5380
    %5385 = vst.msk [vmem:[#allocation10] sm:$0xff] %vm237, %v5381
    %5386 = vst.msk [vmem:[#allocation10 + $0x8] sm:$0xff] %vm237, %v5382
    %5387 = vst.msk [vmem:[#allocation10 + $0x10] sm:$0xff] %vm237, %v5383
    %5388 = vst.msk [vmem:[#allocation10 + $0x18] sm:$0xff] %vm237, %v5384
    // Predicated region
    $region34: #{cross_conformer_block.1} parent=1 // pred_check
      _
    $region35: #{cross_conformer_block.1} parent=1 // pred_check_branch
      %5390 = sbr.rel (0) target = $region37
    $region36: #{cross_conformer_block.1} parent=1 // pred_region
      %s5392 = ssub.s32 512, 512
      %5393 = vsyncadd [#allocation4], %s5392
      %s5394 = sshll.u32 [#allocation10], 4
      %s5395 = int_to_ptr.vmem [resolvable:$true] %s5394
      %5400 = dma.vmem_to_hbm [thread:$0]  %s5395, 512, %s4, [#allocation4], 128, 128, 8
    $region37: #{cross_conformer_block.1} parent=1 // pred_fallthru
      _
    // Predicated region
    $region38: #{cross_conformer_block.1} parent=1 // pred_check
      _
    $region39: #{cross_conformer_block.1} parent=1 // pred_check_branch
      %5402 = sbr.rel (0) target = $region41
    $region40: #{cross_conformer_block.1} parent=1 // pred_region
      %5403 = dma.done [#allocation4], 512
    $region41: #{cross_conformer_block.1} parent=1 // pred_fallthru
      _
    %5404 = vsyncpa [#allocation3], 1
    %5405 = vsyncpa [#allocation6], 1
    %5406 = vsyncpa [#allocation9], 1
    %5407 = vsyncpa [#allocation4], 1

</llo_original>
